<compile_context>
chip_gen: v7x
topology: tpu7x:2x2x1
jax: 0.10.0
libtpu: 0.0.40
codegen_flags: <defaults>
</compile_context>

<pallas_src>
import jax
import jax.numpy as jnp
import numpy as np
from jax.experimental import pallas as pl
from jax.experimental.pallas import tpu as pltpu

EPS = 1e-5
LANE = 128


def _round_up(x, m):
    return (x + m - 1) // m * m


def basic_block_kernel(xpad_ref, xres_ref, w1_ref, w2_ref,
                       g1_ref, b1_ref, g2_ref, b2_ref,
                       out_ref, patch_scr, pad2_scr):
    # xpad_ref : (N, H+2, W+2, Cp)  spatially pre-padded input, NHWC, Cp lane-dense
    # xres_ref : (M, Cp)            unpadded residual, lane-dense
    # w*_ref   : (9*Cp, Cp)         im2col-concatenated conv weights
    # g/b refs : (1, Cp)            batchnorm gamma / beta (zero in padded lanes)
    # out_ref  : (M, Cp)            lane-dense output slab
    # patch_scr: (M, 9*Cp)          im2col patch buffer (reused for both convs)
    # pad2_scr : (N, H+2, W+2, Cp)  padded intermediate (halo zeroed only)
    N, Hp, Wp, Cp = xpad_ref.shape
    H, W = Hp - 2, Wp - 2
    M = N * H * W

    def build_patch(src_ref):
        # im2col: concatenate the 9 shifted windows along the lane (channel)
        # axis; each write targets a lane-aligned 128-wide column block.
        for kh in range(3):
            for kw in range(3):
                k = kh * 3 + kw
                patch_scr[:, k * Cp:(k + 1) * Cp] = (
                    src_ref[:, kh:kh + H, kw:kw + W, :].reshape(M, Cp))

    def batchnorm(x, g_ref, b_ref):
        # training-mode BN: biased batch statistics over (N, H, W) per channel.
        # Two-pass variance (no E[x^2]-mean^2 cancellation risk).
        mean = jnp.mean(x, axis=0, keepdims=True)
        var = jnp.mean((x - mean) ** 2, axis=0, keepdims=True)
        inv = jax.lax.rsqrt(var + EPS)
        return (x - mean) * (inv * g_ref[...]) + b_ref[...]

    # ---- conv1 (single wide MXU matmul) -> bn1 -> relu ----
    build_patch(xpad_ref)
    c1 = jnp.dot(patch_scr[...], w1_ref[...], preferred_element_type=jnp.float32)
    out1 = jnp.maximum(batchnorm(c1, g1_ref, b1_ref), 0.0)

    # ---- re-pad the intermediate: zero the halo only, then write interior ----
    pad2_scr[:, 0:1, :, :] = jnp.zeros((N, 1, Wp, Cp), jnp.float32)
    pad2_scr[:, Hp - 1:Hp, :, :] = jnp.zeros((N, 1, Wp, Cp), jnp.float32)
    pad2_scr[:, :, 0:1, :] = jnp.zeros((N, Hp, 1, Cp), jnp.float32)
    pad2_scr[:, :, Wp - 1:Wp, :] = jnp.zeros((N, Hp, 1, Cp), jnp.float32)
    pad2_scr[:, 1:1 + H, 1:1 + W, :] = out1.reshape(N, H, W, Cp)

    # ---- conv2 (single wide MXU matmul) -> bn2 ----
    build_patch(pad2_scr)
    c2 = jnp.dot(patch_scr[...], w2_ref[...], preferred_element_type=jnp.float32)
    out2 = batchnorm(c2, g2_ref, b2_ref)

    # ---- residual add + relu, lane-dense full-width store ----
    out_ref[...] = jnp.maximum(out2 + xres_ref[...], 0.0)


def _pack_conv_weight(w_oihw, cp):
    """(Cout, Cin, 3, 3) OIHW -> (9*cp, cp) im2col weight, zero-padded lanes."""
    w = jnp.asarray(w_oihw, jnp.float32)
    cout, cin = w.shape[0], w.shape[1]
    w_hwio = jnp.transpose(w, (2, 3, 1, 0))                 # (3, 3, Cin, Cout)
    w_full = jnp.zeros((3, 3, cp, cp), jnp.float32)
    w_full = w_full.at[:, :, :cin, :cout].set(w_hwio)
    return w_full.reshape(9 * cp, cp)


def _pack_bn_param(v, cp):
    v = jnp.asarray(v, jnp.float32).reshape(-1)
    out = jnp.zeros((1, cp), jnp.float32)
    return out.at[0, :v.shape[0]].set(v)


def basic_block(x_nchw, w1, w2, g1, b1, g2, b2):
    """x_nchw: (N, C, H, W) f32; w*: (C, C, 3, 3) OIHW; g*/b*: (C,)."""
    N, C, H, W = x_nchw.shape
    Cp = max(LANE, _round_up(C, LANE))
    M = N * H * W

    x_nhwc = jnp.transpose(x_nchw, (0, 2, 3, 1)).astype(jnp.float32)
    # lane-dense channel padding; spatial padding by 1 for the conv input only
    x_pad = jnp.pad(x_nhwc, ((0, 0), (1, 1), (1, 1), (0, Cp - C)))
    x_res = jnp.pad(x_nhwc, ((0, 0), (0, 0), (0, 0), (0, Cp - C))).reshape(M, Cp)

    w1_cat = _pack_conv_weight(w1, Cp)
    w2_cat = _pack_conv_weight(w2, Cp)
    g1p, b1p = _pack_bn_param(g1, Cp), _pack_bn_param(b1, Cp)
    g2p, b2p = _pack_bn_param(g2, Cp), _pack_bn_param(b2, Cp)

    vspec = pl.BlockSpec(memory_space=pltpu.MemorySpace.VMEM)

    flops = 4 * M * (9 * Cp) * Cp                       # two convs, 2*M*K*N each
    bytes_accessed = 4 * (x_pad.size + x_res.size + w1_cat.size + w2_cat.size
                          + 4 * Cp + M * Cp)

    out_flat = pl.pallas_call(
        basic_block_kernel,
        out_shape=jax.ShapeDtypeStruct((M, Cp), jnp.float32),
        in_specs=[vspec] * 8,
        out_specs=vspec,
        scratch_shapes=[
            pltpu.VMEM((M, 9 * Cp), jnp.float32),               # im2col patch
            pltpu.VMEM((N, H + 2, W + 2, Cp), jnp.float32),     # padded intermediate
        ],
        compiler_params=pltpu.CompilerParams(vmem_limit_bytes=32 * 1024 * 1024),
        cost_estimate=pl.CostEstimate(flops=flops, transcendentals=2 * Cp,
                                      bytes_accessed=bytes_accessed),
    )(x_pad, x_res, w1_cat, w2_cat, g1p, b1p, g2p, b2p)

    out = out_flat.reshape(N, H, W, Cp)[..., :C]
    return jnp.transpose(out, (0, 3, 1, 2))


def basic_block_reference(x, w1, w2, g1, b1, g2, b2):
    """Pure-JAX reference (NCHW, matching PyTorch training-mode forward)."""
    def conv(x, w):
        return jax.lax.conv_general_dilated(
            x, w, window_strides=(1, 1), padding=((1, 1), (1, 1)),
            dimension_numbers=("NCHW", "OIHW", "NCHW"))

    def bn(x, g, b):
        mean = x.mean(axis=(0, 2, 3), keepdims=True)
        var = ((x - mean) ** 2).mean(axis=(0, 2, 3), keepdims=True)
        return (x - mean) / jnp.sqrt(var + EPS) * g.reshape(1, -1, 1, 1) \
            + b.reshape(1, -1, 1, 1)

    out = jax.nn.relu(bn(conv(x, w1), g1, b1))
    out = bn(conv(out, w2), g2, b2)
    return jax.nn.relu(out + x)


if __name__ == "__main__":
    # inplanes = planes = 4, stride = 1, downsample = None
    N, C, H, W = 2, 4, 16, 16
    key = jax.random.PRNGKey(0)
    kx, kw1, kw2 = jax.random.split(key, 3)

    x = jax.random.normal(kx, (N, C, H, W), dtype=jnp.float32)
    w1 = jax.random.normal(kw1, (C, C, 3, 3), dtype=jnp.float32) * 0.1
    w2 = jax.random.normal(kw2, (C, C, 3, 3), dtype=jnp.float32) * 0.1
    g1 = 1.0 + 0.1 * jnp.arange(C, dtype=jnp.float32)
    b1 = 0.05 * jnp.arange(C, dtype=jnp.float32)
    g2 = 1.0 - 0.05 * jnp.arange(C, dtype=jnp.float32)
    b2 = -0.02 * jnp.arange(C, dtype=jnp.float32)

    out = jax.block_until_ready(basic_block(x, w1, w2, g1, b1, g2, b2))

    ref = basic_block_reference(x, w1, w2, g1, b1, g2, b2)
    np.testing.assert_allclose(np.asarray(out), np.asarray(ref),
                               rtol=1e-4, atol=1e-4)
    print("KERNEL_OK")
</pallas_src>

<mosaic_0001>
module attributes {stable_mosaic.version = 11 : i64} {
  func.func @basic_block_kernel(%arg0: memref<2x18x18x128xf32, #tpu.memory_space<vmem>>, %arg1: memref<512x128xf32, #tpu.memory_space<vmem>>, %arg2: memref<1152x128xf32, #tpu.memory_space<vmem>>, %arg3: memref<1152x128xf32, #tpu.memory_space<vmem>>, %arg4: memref<1x128xf32, #tpu.memory_space<vmem>>, %arg5: memref<1x128xf32, #tpu.memory_space<vmem>>, %arg6: memref<1x128xf32, #tpu.memory_space<vmem>>, %arg7: memref<1x128xf32, #tpu.memory_space<vmem>>, %arg8: memref<512x128xf32, #tpu.memory_space<vmem>>, %arg9: memref<512x1152xf32, #tpu.memory_space<vmem>>, %arg10: memref<2x18x18x128xf32, #tpu.memory_space<vmem>>) attributes {dimension_semantics = [], scalar_prefetch = 0 : i64, scratch_operands = 2 : i64, tpu.core_type = #tpu.core_type<tc>} {
    %c0 = arith.constant 0 : index
    %c0_0 = arith.constant 0 : index
    %c0_1 = arith.constant 0 : index
    %c0_2 = arith.constant 0 : index
    %0 = vector.load %arg0[%c0, %c0_0, %c0_1, %c0_2] : memref<2x18x18x128xf32, #tpu.memory_space<vmem>>, vector<2x16x16x128xf32>
    %1 = vector.shape_cast %0 : vector<2x16x16x128xf32> to vector<512x128xf32>
    %c0_3 = arith.constant 0 : index
    %c0_4 = arith.constant 0 : index
    %2 = vector.load %arg9[%c0_3, %c0_4] : memref<512x1152xf32, #tpu.memory_space<vmem>>, vector<512x128xf32>
    tpu.vector_store %arg9[%c0_3, %c0_4], %1 {strides = array<i32>} : memref<512x1152xf32, #tpu.memory_space<vmem>>, vector<512x128xf32>,
    %c0_5 = arith.constant 0 : index
    %c0_6 = arith.constant 0 : index
    %c1 = arith.constant 1 : index
    %c0_7 = arith.constant 0 : index
    %3 = vector.load %arg0[%c0_5, %c0_6, %c1, %c0_7] : memref<2x18x18x128xf32, #tpu.memory_space<vmem>>, vector<2x16x16x128xf32>
    %4 = vector.shape_cast %3 : vector<2x16x16x128xf32> to vector<512x128xf32>
    %c0_8 = arith.constant 0 : index
    %c128 = arith.constant 128 : index
    %5 = vector.load %arg9[%c0_8, %c128] : memref<512x1152xf32, #tpu.memory_space<vmem>>, vector<512x128xf32>
    tpu.vector_store %arg9[%c0_8, %c128], %4 {strides = array<i32>} : memref<512x1152xf32, #tpu.memory_space<vmem>>, vector<512x128xf32>,
    %c0_9 = arith.constant 0 : index
    %c0_10 = arith.constant 0 : index
    %c2 = arith.constant 2 : index
    %c0_11 = arith.constant 0 : index
    %6 = vector.load %arg0[%c0_9, %c0_10, %c2, %c0_11] : memref<2x18x18x128xf32, #tpu.memory_space<vmem>>, vector<2x16x16x128xf32>
    %7 = vector.shape_cast %6 : vector<2x16x16x128xf32> to vector<512x128xf32>
    %c0_12 = arith.constant 0 : index
    %c256 = arith.constant 256 : index
    %8 = vector.load %arg9[%c0_12, %c256] : memref<512x1152xf32, #tpu.memory_space<vmem>>, vector<512x128xf32>
    tpu.vector_store %arg9[%c0_12, %c256], %7 {strides = array<i32>} : memref<512x1152xf32, #tpu.memory_space<vmem>>, vector<512x128xf32>,
    %c0_13 = arith.constant 0 : index
    %c1_14 = arith.constant 1 : index
    %c0_15 = arith.constant 0 : index
    %c0_16 = arith.constant 0 : index
    %9 = vector.load %arg0[%c0_13, %c1_14, %c0_15, %c0_16] : memref<2x18x18x128xf32, #tpu.memory_space<vmem>>, vector<2x16x16x128xf32>
    %10 = vector.shape_cast %9 : vector<2x16x16x128xf32> to vector<512x128xf32>
    %c0_17 = arith.constant 0 : index
    %c384 = arith.constant 384 : index
    %11 = vector.load %arg9[%c0_17, %c384] : memref<512x1152xf32, #tpu.memory_space<vmem>>, vector<512x128xf32>
    tpu.vector_store %arg9[%c0_17, %c384], %10 {strides = array<i32>} : memref<512x1152xf32, #tpu.memory_space<vmem>>, vector<512x128xf32>,
    %c0_18 = arith.constant 0 : index
    %c1_19 = arith.constant 1 : index
    %c1_20 = arith.constant 1 : index
    %c0_21 = arith.constant 0 : index
    %12 = vector.load %arg0[%c0_18, %c1_19, %c1_20, %c0_21] : memref<2x18x18x128xf32, #tpu.memory_space<vmem>>, vector<2x16x16x128xf32>
    %13 = vector.shape_cast %12 : vector<2x16x16x128xf32> to vector<512x128xf32>
    %c0_22 = arith.constant 0 : index
    %c512 = arith.constant 512 : index
    %14 = vector.load %arg9[%c0_22, %c512] : memref<512x1152xf32, #tpu.memory_space<vmem>>, vector<512x128xf32>
    tpu.vector_store %arg9[%c0_22, %c512], %13 {strides = array<i32>} : memref<512x1152xf32, #tpu.memory_space<vmem>>, vector<512x128xf32>,
    %c0_23 = arith.constant 0 : index
    %c1_24 = arith.constant 1 : index
    %c2_25 = arith.constant 2 : index
    %c0_26 = arith.constant 0 : index
    %15 = vector.load %arg0[%c0_23, %c1_24, %c2_25, %c0_26] : memref<2x18x18x128xf32, #tpu.memory_space<vmem>>, vector<2x16x16x128xf32>
    %16 = vector.shape_cast %15 : vector<2x16x16x128xf32> to vector<512x128xf32>
    %c0_27 = arith.constant 0 : index
    %c640 = arith.constant 640 : index
    %17 = vector.load %arg9[%c0_27, %c640] : memref<512x1152xf32, #tpu.memory_space<vmem>>, vector<512x128xf32>
    tpu.vector_store %arg9[%c0_27, %c640], %16 {strides = array<i32>} : memref<512x1152xf32, #tpu.memory_space<vmem>>, vector<512x128xf32>,
    %c0_28 = arith.constant 0 : index
    %c2_29 = arith.constant 2 : index
    %c0_30 = arith.constant 0 : index
    %c0_31 = arith.constant 0 : index
    %18 = vector.load %arg0[%c0_28, %c2_29, %c0_30, %c0_31] : memref<2x18x18x128xf32, #tpu.memory_space<vmem>>, vector<2x16x16x128xf32>
    %19 = vector.shape_cast %18 : vector<2x16x16x128xf32> to vector<512x128xf32>
    %c0_32 = arith.constant 0 : index
    %c768 = arith.constant 768 : index
    %20 = vector.load %arg9[%c0_32, %c768] : memref<512x1152xf32, #tpu.memory_space<vmem>>, vector<512x128xf32>
    tpu.vector_store %arg9[%c0_32, %c768], %19 {strides = array<i32>} : memref<512x1152xf32, #tpu.memory_space<vmem>>, vector<512x128xf32>,
    %c0_33 = arith.constant 0 : index
    %c2_34 = arith.constant 2 : index
    %c1_35 = arith.constant 1 : index
    %c0_36 = arith.constant 0 : index
    %21 = vector.load %arg0[%c0_33, %c2_34, %c1_35, %c0_36] : memref<2x18x18x128xf32, #tpu.memory_space<vmem>>, vector<2x16x16x128xf32>
    %22 = vector.shape_cast %21 : vector<2x16x16x128xf32> to vector<512x128xf32>
    %c0_37 = arith.constant 0 : index
    %c896 = arith.constant 896 : index
    %23 = vector.load %arg9[%c0_37, %c896] : memref<512x1152xf32, #tpu.memory_space<vmem>>, vector<512x128xf32>
    tpu.vector_store %arg9[%c0_37, %c896], %22 {strides = array<i32>} : memref<512x1152xf32, #tpu.memory_space<vmem>>, vector<512x128xf32>,
    %c0_38 = arith.constant 0 : index
    %c2_39 = arith.constant 2 : index
    %c2_40 = arith.constant 2 : index
    %c0_41 = arith.constant 0 : index
    %24 = vector.load %arg0[%c0_38, %c2_39, %c2_40, %c0_41] : memref<2x18x18x128xf32, #tpu.memory_space<vmem>>, vector<2x16x16x128xf32>
    %25 = vector.shape_cast %24 : vector<2x16x16x128xf32> to vector<512x128xf32>
    %c0_42 = arith.constant 0 : index
    %c1024 = arith.constant 1024 : index
    %26 = vector.load %arg9[%c0_42, %c1024] : memref<512x1152xf32, #tpu.memory_space<vmem>>, vector<512x128xf32>
    tpu.vector_store %arg9[%c0_42, %c1024], %25 {strides = array<i32>} : memref<512x1152xf32, #tpu.memory_space<vmem>>, vector<512x128xf32>,
    %c0_43 = arith.constant 0 : index
    %c0_44 = arith.constant 0 : index
    %27 = vector.load %arg9[%c0_43, %c0_44] : memref<512x1152xf32, #tpu.memory_space<vmem>>, vector<512x1152xf32>
    %c0_45 = arith.constant 0 : index
    %c0_46 = arith.constant 0 : index
    %28 = vector.load %arg2[%c0_45, %c0_46] : memref<1152x128xf32, #tpu.memory_space<vmem>>, vector<1152x128xf32>
    %cst = arith.constant dense<0.000000e+00> : vector<512x128xf32>
    %29 = tpu.matmul %27, %28, %cst {dimension_numbers = #tpu.dot_dimension_numbers<[1], [0], [0], [1], [0, 0, 1, 1], [], []>} : vector<512x1152xf32>, vector<1152x128xf32>, vector<512x128xf32> -> vector<512x128xf32>
    %cst_47 = arith.constant dense<0.000000e+00> : vector<128xf32>
    %30 = vector.multi_reduction <add>, %29, %cst_47 [0] : vector<512x128xf32> to vector<128xf32>
    %31 = vector.shape_cast %30 : vector<128xf32> to vector<1x128xf32>
    %cst_48 = arith.constant 5.120000e+02 : f32
    %32 = vector.broadcast %cst_48 : f32 to vector<1x128xf32>
    %33 = arith.divf %31, %32 : vector<1x128xf32>
    %34 = vector.broadcast %33 : vector<1x128xf32> to vector<512x128xf32>
    %35 = arith.subf %29, %34 : vector<512x128xf32>
    %36 = arith.mulf %35, %35 : vector<512x128xf32>
    %cst_49 = arith.constant dense<0.000000e+00> : vector<128xf32>
    %37 = vector.multi_reduction <add>, %36, %cst_49 [0] : vector<512x128xf32> to vector<128xf32>
    %38 = vector.shape_cast %37 : vector<128xf32> to vector<1x128xf32>
    %cst_50 = arith.constant 5.120000e+02 : f32
    %39 = vector.broadcast %cst_50 : f32 to vector<1x128xf32>
    %40 = arith.divf %38, %39 : vector<1x128xf32>
    %cst_51 = arith.constant 9.99999974E-6 : f32
    %41 = vector.broadcast %cst_51 : f32 to vector<1x128xf32>
    %42 = arith.addf %40, %41 : vector<1x128xf32>
    %43 = math.rsqrt %42 : vector<1x128xf32>
    %44 = vector.broadcast %33 : vector<1x128xf32> to vector<512x128xf32>
    %45 = arith.subf %29, %44 : vector<512x128xf32>
    %c0_52 = arith.constant 0 : index
    %c0_53 = arith.constant 0 : index
    %46 = vector.load %arg4[%c0_52, %c0_53] : memref<1x128xf32, #tpu.memory_space<vmem>>, vector<1x128xf32>
    %47 = arith.mulf %43, %46 : vector<1x128xf32>
    %48 = vector.broadcast %47 : vector<1x128xf32> to vector<512x128xf32>
    %49 = arith.mulf %45, %48 : vector<512x128xf32>
    %c0_54 = arith.constant 0 : index
    %c0_55 = arith.constant 0 : index
    %50 = vector.load %arg5[%c0_54, %c0_55] : memref<1x128xf32, #tpu.memory_space<vmem>>, vector<1x128xf32>
    %51 = vector.broadcast %50 : vector<1x128xf32> to vector<512x128xf32>
    %52 = arith.addf %49, %51 : vector<512x128xf32>
    %cst_56 = arith.constant 0.000000e+00 : f32
    %53 = vector.broadcast %cst_56 : f32 to vector<512x128xf32>
    %54 = arith.maximumf %52, %53 : vector<512x128xf32>
    %cst_57 = arith.constant 0.000000e+00 : f32
    %55 = vector.broadcast %cst_57 : f32 to vector<2x1x18x128xf32>
    %c0_58 = arith.constant 0 : index
    %c0_59 = arith.constant 0 : index
    %c0_60 = arith.constant 0 : index
    %c0_61 = arith.constant 0 : index
    %56 = vector.load %arg10[%c0_58, %c0_59, %c0_60, %c0_61] : memref<2x18x18x128xf32, #tpu.memory_space<vmem>>, vector<2x1x18x128xf32>
    tpu.vector_store %arg10[%c0_58, %c0_59, %c0_60, %c0_61], %55 {strides = array<i32>} : memref<2x18x18x128xf32, #tpu.memory_space<vmem>>, vector<2x1x18x128xf32>,
    %cst_62 = arith.constant 0.000000e+00 : f32
    %57 = vector.broadcast %cst_62 : f32 to vector<2x1x18x128xf32>
    %c0_63 = arith.constant 0 : index
    %c17 = arith.constant 17 : index
    %c0_64 = arith.constant 0 : index
    %c0_65 = arith.constant 0 : index
    %58 = vector.load %arg10[%c0_63, %c17, %c0_64, %c0_65] : memref<2x18x18x128xf32, #tpu.memory_space<vmem>>, vector<2x1x18x128xf32>
    tpu.vector_store %arg10[%c0_63, %c17, %c0_64, %c0_65], %57 {strides = array<i32>} : memref<2x18x18x128xf32, #tpu.memory_space<vmem>>, vector<2x1x18x128xf32>,
    %cst_66 = arith.constant 0.000000e+00 : f32
    %59 = vector.broadcast %cst_66 : f32 to vector<2x18x1x128xf32>
    %c0_67 = arith.constant 0 : index
    %c0_68 = arith.constant 0 : index
    %c0_69 = arith.constant 0 : index
    %c0_70 = arith.constant 0 : index
    %60 = vector.load %arg10[%c0_67, %c0_68, %c0_69, %c0_70] : memref<2x18x18x128xf32, #tpu.memory_space<vmem>>, vector<2x18x1x128xf32>
    tpu.vector_store %arg10[%c0_67, %c0_68, %c0_69, %c0_70], %59 {strides = array<i32>} : memref<2x18x18x128xf32, #tpu.memory_space<vmem>>, vector<2x18x1x128xf32>,
    %cst_71 = arith.constant 0.000000e+00 : f32
    %61 = vector.broadcast %cst_71 : f32 to vector<2x18x1x128xf32>
    %c0_72 = arith.constant 0 : index
    %c0_73 = arith.constant 0 : index
    %c17_74 = arith.constant 17 : index
    %c0_75 = arith.constant 0 : index
    %62 = vector.load %arg10[%c0_72, %c0_73, %c17_74, %c0_75] : memref<2x18x18x128xf32, #tpu.memory_space<vmem>>, vector<2x18x1x128xf32>
    tpu.vector_store %arg10[%c0_72, %c0_73, %c17_74, %c0_75], %61 {strides = array<i32>} : memref<2x18x18x128xf32, #tpu.memory_space<vmem>>, vector<2x18x1x128xf32>,
    %63 = vector.shape_cast %54 : vector<512x128xf32> to vector<2x16x16x128xf32>
    %c0_76 = arith.constant 0 : index
    %c1_77 = arith.constant 1 : index
    %c1_78 = arith.constant 1 : index
    %c0_79 = arith.constant 0 : index
    %64 = vector.load %arg10[%c0_76, %c1_77, %c1_78, %c0_79] : memref<2x18x18x128xf32, #tpu.memory_space<vmem>>, vector<2x16x16x128xf32>
    tpu.vector_store %arg10[%c0_76, %c1_77, %c1_78, %c0_79], %63 {strides = array<i32>} : memref<2x18x18x128xf32, #tpu.memory_space<vmem>>, vector<2x16x16x128xf32>,
    %c0_80 = arith.constant 0 : index
    %c0_81 = arith.constant 0 : index
    %c0_82 = arith.constant 0 : index
    %c0_83 = arith.constant 0 : index
    %65 = vector.load %arg10[%c0_80, %c0_81, %c0_82, %c0_83] : memref<2x18x18x128xf32, #tpu.memory_space<vmem>>, vector<2x16x16x128xf32>
    %66 = vector.shape_cast %65 : vector<2x16x16x128xf32> to vector<512x128xf32>
    %c0_84 = arith.constant 0 : index
    %c0_85 = arith.constant 0 : index
    %67 = vector.load %arg9[%c0_84, %c0_85] : memref<512x1152xf32, #tpu.memory_space<vmem>>, vector<512x128xf32>
    tpu.vector_store %arg9[%c0_84, %c0_85], %66 {strides = array<i32>} : memref<512x1152xf32, #tpu.memory_space<vmem>>, vector<512x128xf32>,
    %c0_86 = arith.constant 0 : index
    %c0_87 = arith.constant 0 : index
    %c1_88 = arith.constant 1 : index
    %c0_89 = arith.constant 0 : index
    %68 = vector.load %arg10[%c0_86, %c0_87, %c1_88, %c0_89] : memref<2x18x18x128xf32, #tpu.memory_space<vmem>>, vector<2x16x16x128xf32>
    %69 = vector.shape_cast %68 : vector<2x16x16x128xf32> to vector<512x128xf32>
    %c0_90 = arith.constant 0 : index
    %c128_91 = arith.constant 128 : index
    %70 = vector.load %arg9[%c0_90, %c128_91] : memref<512x1152xf32, #tpu.memory_space<vmem>>, vector<512x128xf32>
    tpu.vector_store %arg9[%c0_90, %c128_91], %69 {strides = array<i32>} : memref<512x1152xf32, #tpu.memory_space<vmem>>, vector<512x128xf32>,
    %c0_92 = arith.constant 0 : index
    %c0_93 = arith.constant 0 : index
    %c2_94 = arith.constant 2 : index
    %c0_95 = arith.constant 0 : index
    %71 = vector.load %arg10[%c0_92, %c0_93, %c2_94, %c0_95] : memref<2x18x18x128xf32, #tpu.memory_space<vmem>>, vector<2x16x16x128xf32>
    %72 = vector.shape_cast %71 : vector<2x16x16x128xf32> to vector<512x128xf32>
    %c0_96 = arith.constant 0 : index
    %c256_97 = arith.constant 256 : index
    %73 = vector.load %arg9[%c0_96, %c256_97] : memref<512x1152xf32, #tpu.memory_space<vmem>>, vector<512x128xf32>
    tpu.vector_store %arg9[%c0_96, %c256_97], %72 {strides = array<i32>} : memref<512x1152xf32, #tpu.memory_space<vmem>>, vector<512x128xf32>,
    %c0_98 = arith.constant 0 : index
    %c1_99 = arith.constant 1 : index
    %c0_100 = arith.constant 0 : index
    %c0_101 = arith.constant 0 : index
    %74 = vector.load %arg10[%c0_98, %c1_99, %c0_100, %c0_101] : memref<2x18x18x128xf32, #tpu.memory_space<vmem>>, vector<2x16x16x128xf32>
    %75 = vector.shape_cast %74 : vector<2x16x16x128xf32> to vector<512x128xf32>
    %c0_102 = arith.constant 0 : index
    %c384_103 = arith.constant 384 : index
    %76 = vector.load %arg9[%c0_102, %c384_103] : memref<512x1152xf32, #tpu.memory_space<vmem>>, vector<512x128xf32>
    tpu.vector_store %arg9[%c0_102, %c384_103], %75 {strides = array<i32>} : memref<512x1152xf32, #tpu.memory_space<vmem>>, vector<512x128xf32>,
    %c0_104 = arith.constant 0 : index
    %c1_105 = arith.constant 1 : index
    %c1_106 = arith.constant 1 : index
    %c0_107 = arith.constant 0 : index
    %77 = vector.load %arg10[%c0_104, %c1_105, %c1_106, %c0_107] : memref<2x18x18x128xf32, #tpu.memory_space<vmem>>, vector<2x16x16x128xf32>
    %78 = vector.shape_cast %77 : vector<2x16x16x128xf32> to vector<512x128xf32>
    %c0_108 = arith.constant 0 : index
    %c512_109 = arith.constant 512 : index
    %79 = vector.load %arg9[%c0_108, %c512_109] : memref<512x1152xf32, #tpu.memory_space<vmem>>, vector<512x128xf32>
    tpu.vector_store %arg9[%c0_108, %c512_109], %78 {strides = array<i32>} : memref<512x1152xf32, #tpu.memory_space<vmem>>, vector<512x128xf32>,
    %c0_110 = arith.constant 0 : index
    %c1_111 = arith.constant 1 : index
    %c2_112 = arith.constant 2 : index
    %c0_113 = arith.constant 0 : index
    %80 = vector.load %arg10[%c0_110, %c1_111, %c2_112, %c0_113] : memref<2x18x18x128xf32, #tpu.memory_space<vmem>>, vector<2x16x16x128xf32>
    %81 = vector.shape_cast %80 : vector<2x16x16x128xf32> to vector<512x128xf32>
    %c0_114 = arith.constant 0 : index
    %c640_115 = arith.constant 640 : index
    %82 = vector.load %arg9[%c0_114, %c640_115] : memref<512x1152xf32, #tpu.memory_space<vmem>>, vector<512x128xf32>
    tpu.vector_store %arg9[%c0_114, %c640_115], %81 {strides = array<i32>} : memref<512x1152xf32, #tpu.memory_space<vmem>>, vector<512x128xf32>,
    %c0_116 = arith.constant 0 : index
    %c2_117 = arith.constant 2 : index
    %c0_118 = arith.constant 0 : index
    %c0_119 = arith.constant 0 : index
    %83 = vector.load %arg10[%c0_116, %c2_117, %c0_118, %c0_119] : memref<2x18x18x128xf32, #tpu.memory_space<vmem>>, vector<2x16x16x128xf32>
    %84 = vector.shape_cast %83 : vector<2x16x16x128xf32> to vector<512x128xf32>
    %c0_120 = arith.constant 0 : index
    %c768_121 = arith.constant 768 : index
    %85 = vector.load %arg9[%c0_120, %c768_121] : memref<512x1152xf32, #tpu.memory_space<vmem>>, vector<512x128xf32>
    tpu.vector_store %arg9[%c0_120, %c768_121], %84 {strides = array<i32>} : memref<512x1152xf32, #tpu.memory_space<vmem>>, vector<512x128xf32>,
    %c0_122 = arith.constant 0 : index
    %c2_123 = arith.constant 2 : index
    %c1_124 = arith.constant 1 : index
    %c0_125 = arith.constant 0 : index
    %86 = vector.load %arg10[%c0_122, %c2_123, %c1_124, %c0_125] : memref<2x18x18x128xf32, #tpu.memory_space<vmem>>, vector<2x16x16x128xf32>
    %87 = vector.shape_cast %86 : vector<2x16x16x128xf32> to vector<512x128xf32>
    %c0_126 = arith.constant 0 : index
    %c896_127 = arith.constant 896 : index
    %88 = vector.load %arg9[%c0_126, %c896_127] : memref<512x1152xf32, #tpu.memory_space<vmem>>, vector<512x128xf32>
    tpu.vector_store %arg9[%c0_126, %c896_127], %87 {strides = array<i32>} : memref<512x1152xf32, #tpu.memory_space<vmem>>, vector<512x128xf32>,
    %c0_128 = arith.constant 0 : index
    %c2_129 = arith.constant 2 : index
    %c2_130 = arith.constant 2 : index
    %c0_131 = arith.constant 0 : index
    %89 = vector.load %arg10[%c0_128, %c2_129, %c2_130, %c0_131] : memref<2x18x18x128xf32, #tpu.memory_space<vmem>>, vector<2x16x16x128xf32>
    %90 = vector.shape_cast %89 : vector<2x16x16x128xf32> to vector<512x128xf32>
    %c0_132 = arith.constant 0 : index
    %c1024_133 = arith.constant 1024 : index
    %91 = vector.load %arg9[%c0_132, %c1024_133] : memref<512x1152xf32, #tpu.memory_space<vmem>>, vector<512x128xf32>
    tpu.vector_store %arg9[%c0_132, %c1024_133], %90 {strides = array<i32>} : memref<512x1152xf32, #tpu.memory_space<vmem>>, vector<512x128xf32>,
    %c0_134 = arith.constant 0 : index
    %c0_135 = arith.constant 0 : index
    %92 = vector.load %arg9[%c0_134, %c0_135] : memref<512x1152xf32, #tpu.memory_space<vmem>>, vector<512x1152xf32>
    %c0_136 = arith.constant 0 : index
    %c0_137 = arith.constant 0 : index
    %93 = vector.load %arg3[%c0_136, %c0_137] : memref<1152x128xf32, #tpu.memory_space<vmem>>, vector<1152x128xf32>
    %cst_138 = arith.constant dense<0.000000e+00> : vector<512x128xf32>
    %94 = tpu.matmul %92, %93, %cst_138 {dimension_numbers = #tpu.dot_dimension_numbers<[1], [0], [0], [1], [0, 0, 1, 1], [], []>} : vector<512x1152xf32>, vector<1152x128xf32>, vector<512x128xf32> -> vector<512x128xf32>
    %cst_139 = arith.constant dense<0.000000e+00> : vector<128xf32>
    %95 = vector.multi_reduction <add>, %94, %cst_139 [0] : vector<512x128xf32> to vector<128xf32>
    %96 = vector.shape_cast %95 : vector<128xf32> to vector<1x128xf32>
    %cst_140 = arith.constant 5.120000e+02 : f32
    %97 = vector.broadcast %cst_140 : f32 to vector<1x128xf32>
    %98 = arith.divf %96, %97 : vector<1x128xf32>
    %99 = vector.broadcast %98 : vector<1x128xf32> to vector<512x128xf32>
    %100 = arith.subf %94, %99 : vector<512x128xf32>
    %101 = arith.mulf %100, %100 : vector<512x128xf32>
    %cst_141 = arith.constant dense<0.000000e+00> : vector<128xf32>
    %102 = vector.multi_reduction <add>, %101, %cst_141 [0] : vector<512x128xf32> to vector<128xf32>
    %103 = vector.shape_cast %102 : vector<128xf32> to vector<1x128xf32>
    %cst_142 = arith.constant 5.120000e+02 : f32
    %104 = vector.broadcast %cst_142 : f32 to vector<1x128xf32>
    %105 = arith.divf %103, %104 : vector<1x128xf32>
    %cst_143 = arith.constant 9.99999974E-6 : f32
    %106 = vector.broadcast %cst_143 : f32 to vector<1x128xf32>
    %107 = arith.addf %105, %106 : vector<1x128xf32>
    %108 = math.rsqrt %107 : vector<1x128xf32>
    %109 = vector.broadcast %98 : vector<1x128xf32> to vector<512x128xf32>
    %110 = arith.subf %94, %109 : vector<512x128xf32>
    %c0_144 = arith.constant 0 : index
    %c0_145 = arith.constant 0 : index
    %111 = vector.load %arg6[%c0_144, %c0_145] : memref<1x128xf32, #tpu.memory_space<vmem>>, vector<1x128xf32>
    %112 = arith.mulf %108, %111 : vector<1x128xf32>
    %113 = vector.broadcast %112 : vector<1x128xf32> to vector<512x128xf32>
    %114 = arith.mulf %110, %113 : vector<512x128xf32>
    %c0_146 = arith.constant 0 : index
    %c0_147 = arith.constant 0 : index
    %115 = vector.load %arg7[%c0_146, %c0_147] : memref<1x128xf32, #tpu.memory_space<vmem>>, vector<1x128xf32>
    %116 = vector.broadcast %115 : vector<1x128xf32> to vector<512x128xf32>
    %117 = arith.addf %114, %116 : vector<512x128xf32>
    %c0_148 = arith.constant 0 : index
    %c0_149 = arith.constant 0 : index
    %118 = vector.load %arg1[%c0_148, %c0_149] : memref<512x128xf32, #tpu.memory_space<vmem>>, vector<512x128xf32>
    %119 = arith.addf %117, %118 : vector<512x128xf32>
    %cst_150 = arith.constant 0.000000e+00 : f32
    %120 = vector.broadcast %cst_150 : f32 to vector<512x128xf32>
    %121 = arith.maximumf %119, %120 : vector<512x128xf32>
    %c0_151 = arith.constant 0 : index
    %c0_152 = arith.constant 0 : index
    %122 = vector.load %arg8[%c0_151, %c0_152] : memref<512x128xf32, #tpu.memory_space<vmem>>, vector<512x128xf32>
    tpu.vector_store %arg8[%c0_151, %c0_152], %121 {strides = array<i32>} : memref<512x128xf32, #tpu.memory_space<vmem>>, vector<512x128xf32>,
    return
  }
}

</mosaic_0001>

<llo_original>
// kernel: tpu_custom_call.1
$region0: #{tpu_custom_call.1}
  #allocation0 [shape = 'u32[]', space=smem, size = 0x4, offset = 0x4, fixed_abs, tag = 'smem constant byte address 0x4 - core index']
  #allocation1 [shape = 'u32[144,128]{1,0:T(1,128)}', space=vmem, size = 0x12000, scoped, tag = 'internal scratch']
  #allocation2 [shape = 'f32[512,1152]{1,0:T(8,128)}', space=vmem, size = 0x240000, scoped, tag = 'scratch operand']
  #allocation3 [shape = 'f32[2,18,18,128]{3,2,1,0:T(8,128)}', space=vmem, size = 0x6c000, scoped, tag = 'scratch operand']
  %s0 = inlined_call_operand.vmem [shape: f32[2,18,18,128], index: 0, kind: input, shape index: {}]
  %s1 = inlined_call_operand.hbm [shape: f32[512,128], index: 1, kind: input, shape index: {}]
  %s2 = inlined_call_operand.vmem [shape: f32[1152,128], index: 2, kind: input, shape index: {}]
  %s3 = inlined_call_operand.hbm [shape: f32[1152,128], index: 3, kind: input, shape index: {}]
  %s4 = inlined_call_operand.vmem [shape: f32[1,128], index: 4, kind: input, shape index: {}]
  %s5 = inlined_call_operand.vmem [shape: f32[1,128], index: 5, kind: input, shape index: {}]
  %s6 = inlined_call_operand.vmem [shape: f32[1,128], index: 6, kind: input, shape index: {}]
  %s7 = inlined_call_operand.vmem [shape: f32[1,128], index: 7, kind: input, shape index: {}]
  %s8 = inlined_call_operand.hbm [shape: f32[512,128], index: 8, kind: output, shape index: {}]
  %s9 = sld [smem:[#allocation0]]
  $region50: #{tpu_custom_call.1} parent=0
    _
  %s11 = ssub.s32 1, %s9
  %s12 = scalar_select 0, %s11, %s9
  $region1: #{tpu_custom_call.1} parent=0
    #allocation4 [shape = 'u8[262144]{0}', space=vmem, size = 0x40000, scoped, tag = 'input window, operand 1, single buffered']
    #allocation5 [shape = 's32[1]{0}', space=sflag, size = 0x4, scoped, tag = 'scoped memory for tpu_custom_call.1']
    #allocation6 [shape = 's32[1]{0}', space=sflag, size = 0x4, scoped, tag = 'scoped memory for tpu_custom_call.1']
    #allocation7 [shape = 'u8[589824]{0}', space=vmem, size = 0x90000, scoped, tag = 'input window, operand 3, single buffered']
    #allocation8 [shape = 's32[1]{0}', space=sflag, size = 0x4, scoped, tag = 'scoped memory for tpu_custom_call.1']
    #allocation9 [shape = 'u8[262144]{0}', space=vmem, size = 0x40000, scoped, tag = 'output window, operand 0, single buffered']
    %13 = vsyncpa [#allocation5], 0
    %14 = vsyncpa [#allocation8], 0
    %15 = vsyncpa [#allocation6], 0
    // Predicated region
    $region2: #{tpu_custom_call.1} parent=1 // pred_check
      _
    $region3: #{tpu_custom_call.1} parent=1 // pred_check_branch
      %17 = sbr.rel (0) target = $region5
    $region4: #{tpu_custom_call.1} parent=1 // pred_region
      _
    $region5: #{tpu_custom_call.1} parent=1 // pred_fallthru
      _
    // Predicated region
    $region6: #{tpu_custom_call.1} parent=1 // pred_check
      _
    $region7: #{tpu_custom_call.1} parent=1 // pred_check_branch
      %19 = sbr.rel (0) target = $region9
    $region8: #{tpu_custom_call.1} parent=1 // pred_region
      %s21 = ssub.s32 8192, 8192
      %22 = vsyncadd [#allocation5], %s21
      %s23 = sshll.u32 [#allocation4], 4
      %s24 = int_to_ptr.vmem [resolvable:$true] %s23
      %29 = dma.hbm_to_vmem [thread:$0]  %s1, 8192, %s24, [#allocation5], 128, 128, 8
    $region9: #{tpu_custom_call.1} parent=1 // pred_fallthru
      _
    // Predicated region
    $region10: #{tpu_custom_call.1} parent=1 // pred_check
      _
    $region11: #{tpu_custom_call.1} parent=1 // pred_check_branch
      %31 = sbr.rel (0) target = $region13
    $region12: #{tpu_custom_call.1} parent=1 // pred_region
      _
    $region13: #{tpu_custom_call.1} parent=1 // pred_fallthru
      _
    // Predicated region
    $region14: #{tpu_custom_call.1} parent=1 // pred_check
      _
    $region15: #{tpu_custom_call.1} parent=1 // pred_check_branch
      %33 = sbr.rel (0) target = $region17
    $region16: #{tpu_custom_call.1} parent=1 // pred_region
      %s35 = ssub.s32 18432, 18432
      %36 = vsyncadd [#allocation8], %s35
      %s37 = sshll.u32 [#allocation7], 4
      %s38 = int_to_ptr.vmem [resolvable:$true] %s37
      %43 = dma.hbm_to_vmem [thread:$0]  %s3, 18432, %s38, [#allocation8], 128, 128, 8
    $region17: #{tpu_custom_call.1} parent=1 // pred_fallthru
      _
    // Predicated region
    $region18: #{tpu_custom_call.1} parent=1 // pred_check
      _
    $region19: #{tpu_custom_call.1} parent=1 // pred_check_branch
      %45 = sbr.rel (0) target = $region21
    $region20: #{tpu_custom_call.1} parent=1 // pred_region
      _
    $region21: #{tpu_custom_call.1} parent=1 // pred_fallthru
      _
    // Predicated region
    $region22: #{tpu_custom_call.1} parent=1 // pred_check
      _
    $region23: #{tpu_custom_call.1} parent=1 // pred_check_branch
      %47 = sbr.rel (0) target = $region25
    $region24: #{tpu_custom_call.1} parent=1 // pred_region
      _
    $region25: #{tpu_custom_call.1} parent=1 // pred_fallthru
      _
    // Predicated region
    $region26: #{tpu_custom_call.1} parent=1 // pred_check
      _
    $region27: #{tpu_custom_call.1} parent=1 // pred_check_branch
      %49 = sbr.rel (0) target = $region29
    $region28: #{tpu_custom_call.1} parent=1 // pred_region
      _
    $region29: #{tpu_custom_call.1} parent=1 // pred_fallthru
      _
    // Predicated region
    $region30: #{tpu_custom_call.1} parent=1 // pred_check
      _
    $region31: #{tpu_custom_call.1} parent=1 // pred_check_branch
      %51 = sbr.rel (0) target = $region33
    $region32: #{tpu_custom_call.1} parent=1 // pred_region
      _
    $region33: #{tpu_custom_call.1} parent=1 // pred_fallthru
      _
    // Predicated region
    $region34: #{tpu_custom_call.1} parent=1 // pred_check
      _
    $region35: #{tpu_custom_call.1} parent=1 // pred_check_branch
      %53 = sbr.rel (0) target = $region37
    $region36: #{tpu_custom_call.1} parent=1 // pred_region
      %54 = dma.done [#allocation5], 8192
    $region37: #{tpu_custom_call.1} parent=1 // pred_fallthru
      _
    // Predicated region
    $region38: #{tpu_custom_call.1} parent=1 // pred_check
      _
    $region39: #{tpu_custom_call.1} parent=1 // pred_check_branch
      %56 = sbr.rel (0) target = $region41
    $region40: #{tpu_custom_call.1} parent=1 // pred_region
      %57 = dma.done [#allocation8], 18432
    $region41: #{tpu_custom_call.1} parent=1 // pred_fallthru
      _
    %v58 = vld [vmem:[%s0] sm:$0xff]
    %v59 = vld [vmem:[%s0 + $0x8] sm:$0xff]
    %v60 = vld [vmem:[%s0 + $0x18] sm:$0xff]
    %v61 = vld [vmem:[%s0 + $0x20] sm:$0xff]
    %v62 = vld [vmem:[%s0 + $0x30] sm:$0xff]
    %v63 = vld [vmem:[%s0 + $0x38] sm:$0xff]
    %v64 = vld [vmem:[%s0 + $0x48] sm:$0xff]
    %v65 = vld [vmem:[%s0 + $0x50] sm:$0xff]
    %v66 = vld [vmem:[%s0 + $0x60] sm:$0xff]
    %v67 = vld [vmem:[%s0 + $0x68] sm:$0xff]
    %v68 = vld [vmem:[%s0 + $0x78] sm:$0xff]
    %v69 = vld [vmem:[%s0 + $0x80] sm:$0xff]
    %v70 = vld [vmem:[%s0 + $0x90] sm:$0xff]
    %v71 = vld [vmem:[%s0 + $0x98] sm:$0xff]
    %v72 = vld [vmem:[%s0 + $0xa8] sm:$0xff]
    %v73 = vld [vmem:[%s0 + $0xb0] sm:$0xff]
    %v74 = vld [vmem:[%s0 + $0xc0] sm:$0xff]
    %v75 = vld [vmem:[%s0 + $0xc8] sm:$0xff]
    %v76 = vld [vmem:[%s0 + $0xd8] sm:$0xff]
    %v77 = vld [vmem:[%s0 + $0xe0] sm:$0xff]
    %v78 = vld [vmem:[%s0 + $0xf0] sm:$0xff]
    %v79 = vld [vmem:[%s0 + $0xf8] sm:$0xff]
    %v80 = vld [vmem:[%s0 + $0x108] sm:$0xff]
    %v81 = vld [vmem:[%s0 + $0x110] sm:$0xff]
    %v82 = vld [vmem:[%s0 + $0x120] sm:$0xff]
    %v83 = vld [vmem:[%s0 + $0x128] sm:$0xff]
    %v84 = vld [vmem:[%s0 + $0x138] sm:$0xff]
    %v85 = vld [vmem:[%s0 + $0x140] sm:$0xff]
    %v86 = vld [vmem:[%s0 + $0x150] sm:$0xff]
    %v87 = vld [vmem:[%s0 + $0x158] sm:$0xff]
    %v88 = vld [vmem:[%s0 + $0x168] sm:$0xff]
    %v89 = vld [vmem:[%s0 + $0x170] sm:$0xff]
    %v90 = vld [vmem:[%s0 + $0x1b0] sm:$0xff]
    %v91 = vld [vmem:[%s0 + $0x1b8] sm:$0xff]
    %v92 = vld [vmem:[%s0 + $0x1c8] sm:$0xff]
    %v93 = vld [vmem:[%s0 + $0x1d0] sm:$0xff]
    %v94 = vld [vmem:[%s0 + $0x1e0] sm:$0xff]
    %v95 = vld [vmem:[%s0 + $0x1e8] sm:$0xff]
    %v96 = vld [vmem:[%s0 + $0x1f8] sm:$0xff]
    %v97 = vld [vmem:[%s0 + $0x200] sm:$0xff]
    %v98 = vld [vmem:[%s0 + $0x210] sm:$0xff]
    %v99 = vld [vmem:[%s0 + $0x218] sm:$0xff]
    %v100 = vld [vmem:[%s0 + $0x228] sm:$0xff]
    %v101 = vld [vmem:[%s0 + $0x230] sm:$0xff]
    %v102 = vld [vmem:[%s0 + $0x240] sm:$0xff]
    %v103 = vld [vmem:[%s0 + $0x248] sm:$0xff]
    %v104 = vld [vmem:[%s0 + $0x258] sm:$0xff]
    %v105 = vld [vmem:[%s0 + $0x260] sm:$0xff]
    %v106 = vld [vmem:[%s0 + $0x270] sm:$0xff]
    %v107 = vld [vmem:[%s0 + $0x278] sm:$0xff]
    %v108 = vld [vmem:[%s0 + $0x288] sm:$0xff]
    %v109 = vld [vmem:[%s0 + $0x290] sm:$0xff]
    %v110 = vld [vmem:[%s0 + $0x2a0] sm:$0xff]
    %v111 = vld [vmem:[%s0 + $0x2a8] sm:$0xff]
    %v112 = vld [vmem:[%s0 + $0x2b8] sm:$0xff]
    %v113 = vld [vmem:[%s0 + $0x2c0] sm:$0xff]
    %v114 = vld [vmem:[%s0 + $0x2d0] sm:$0xff]
    %v115 = vld [vmem:[%s0 + $0x2d8] sm:$0xff]
    %v116 = vld [vmem:[%s0 + $0x2e8] sm:$0xff]
    %v117 = vld [vmem:[%s0 + $0x2f0] sm:$0xff]
    %v118 = vld [vmem:[%s0 + $0x300] sm:$0xff]
    %v119 = vld [vmem:[%s0 + $0x308] sm:$0xff]
    %v120 = vld [vmem:[%s0 + $0x318] sm:$0xff]
    %v121 = vld [vmem:[%s0 + $0x320] sm:$0xff]
    %122 = vst [vmem:[#allocation2] sm:$0xff] %v58
    %123 = vst [vmem:[#allocation2 + $0x48] sm:$0xff] %v59
    %124 = vst [vmem:[#allocation2 + $0x90] sm:$0xff] %v60
    %125 = vst [vmem:[#allocation2 + $0xd8] sm:$0xff] %v61
    %126 = vst [vmem:[#allocation2 + $0x120] sm:$0xff] %v62
    %127 = vst [vmem:[#allocation2 + $0x168] sm:$0xff] %v63
    %128 = vst [vmem:[#allocation2 + $0x1b0] sm:$0xff] %v64
    %129 = vst [vmem:[#allocation2 + $0x1f8] sm:$0xff] %v65
    %130 = vst [vmem:[#allocation2 + $0x240] sm:$0xff] %v66
    %131 = vst [vmem:[#allocation2 + $0x288] sm:$0xff] %v67
    %132 = vst [vmem:[#allocation2 + $0x2d0] sm:$0xff] %v68
    %133 = vst [vmem:[#allocation2 + $0x318] sm:$0xff] %v69
    %134 = vst [vmem:[#allocation2 + $0x360] sm:$0xff] %v70
    %135 = vst [vmem:[#allocation2 + $0x3a8] sm:$0xff] %v71
    %136 = vst [vmem:[#allocation2 + $0x3f0] sm:$0xff] %v72
    %137 = vst [vmem:[#allocation2 + $0x438] sm:$0xff] %v73
    %138 = vst [vmem:[#allocation2 + $0x480] sm:$0xff] %v74
    %139 = vst [vmem:[#allocation2 + $0x4c8] sm:$0xff] %v75
    %140 = vst [vmem:[#allocation2 + $0x510] sm:$0xff] %v76
    %141 = vst [vmem:[#allocation2 + $0x558] sm:$0xff] %v77
    %142 = vst [vmem:[#allocation2 + $0x5a0] sm:$0xff] %v78
    %143 = vst [vmem:[#allocation2 + $0x5e8] sm:$0xff] %v79
    %144 = vst [vmem:[#allocation2 + $0x630] sm:$0xff] %v80
    %145 = vst [vmem:[#allocation2 + $0x678] sm:$0xff] %v81
    %146 = vst [vmem:[#allocation2 + $0x6c0] sm:$0xff] %v82
    %147 = vst [vmem:[#allocation2 + $0x708] sm:$0xff] %v83
    %148 = vst [vmem:[#allocation2 + $0x750] sm:$0xff] %v84
    %149 = vst [vmem:[#allocation2 + $0x798] sm:$0xff] %v85
    %150 = vst [vmem:[#allocation2 + $0x7e0] sm:$0xff] %v86
    %151 = vst [vmem:[#allocation2 + $0x828] sm:$0xff] %v87
    %152 = vst [vmem:[#allocation2 + $0x870] sm:$0xff] %v88
    %153 = vst [vmem:[#allocation2 + $0x8b8] sm:$0xff] %v89
    %154 = vst [vmem:[#allocation2 + $0x900] sm:$0xff] %v90
    %155 = vst [vmem:[#allocation2 + $0x948] sm:$0xff] %v91
    %156 = vst [vmem:[#allocation2 + $0x990] sm:$0xff] %v92
    %157 = vst [vmem:[#allocation2 + $0x9d8] sm:$0xff] %v93
    %158 = vst [vmem:[#allocation2 + $0xa20] sm:$0xff] %v94
    %159 = vst [vmem:[#allocation2 + $0xa68] sm:$0xff] %v95
    %160 = vst [vmem:[#allocation2 + $0xab0] sm:$0xff] %v96
    %161 = vst [vmem:[#allocation2 + $0xaf8] sm:$0xff] %v97
    %162 = vst [vmem:[#allocation2 + $0xb40] sm:$0xff] %v98
    %163 = vst [vmem:[#allocation2 + $0xb88] sm:$0xff] %v99
    %164 = vst [vmem:[#allocation2 + $0xbd0] sm:$0xff] %v100
    %165 = vst [vmem:[#allocation2 + $0xc18] sm:$0xff] %v101
    %166 = vst [vmem:[#allocation2 + $0xc60] sm:$0xff] %v102
    %167 = vst [vmem:[#allocation2 + $0xca8] sm:$0xff] %v103
    %168 = vst [vmem:[#allocation2 + $0xcf0] sm:$0xff] %v104
    %169 = vst [vmem:[#allocation2 + $0xd38] sm:$0xff] %v105
    %170 = vst [vmem:[#allocation2 + $0xd80] sm:$0xff] %v106
    %171 = vst [vmem:[#allocation2 + $0xdc8] sm:$0xff] %v107
    %172 = vst [vmem:[#allocation2 + $0xe10] sm:$0xff] %v108
    %173 = vst [vmem:[#allocation2 + $0xe58] sm:$0xff] %v109
    %174 = vst [vmem:[#allocation2 + $0xea0] sm:$0xff] %v110
    %175 = vst [vmem:[#allocation2 + $0xee8] sm:$0xff] %v111
    %176 = vst [vmem:[#allocation2 + $0xf30] sm:$0xff] %v112
    %177 = vst [vmem:[#allocation2 + $0xf78] sm:$0xff] %v113
    %178 = vst [vmem:[#allocation2 + $0xfc0] sm:$0xff] %v114
    %179 = vst [vmem:[#allocation2 + $0x1008] sm:$0xff] %v115
    %180 = vst [vmem:[#allocation2 + $0x1050] sm:$0xff] %v116
    %181 = vst [vmem:[#allocation2 + $0x1098] sm:$0xff] %v117
    %182 = vst [vmem:[#allocation2 + $0x10e0] sm:$0xff] %v118
    %183 = vst [vmem:[#allocation2 + $0x1128] sm:$0xff] %v119
    %184 = vst [vmem:[#allocation2 + $0x1170] sm:$0xff] %v120
    %185 = vst [vmem:[#allocation2 + $0x11b8] sm:$0xff] %v121
    %v186 = vld [vmem:[%s0 + $0x1] sm:$0xff]
    %v187 = vld [vmem:[%s0 + $0x9] sm:$0xff]
    %v188 = vld [vmem:[%s0 + $0x19] sm:$0xff]
    %v189 = vld [vmem:[%s0 + $0x21] sm:$0xff]
    %v190 = vld [vmem:[%s0 + $0x31] sm:$0xff]
    %v191 = vld [vmem:[%s0 + $0x39] sm:$0xff]
    %v192 = vld [vmem:[%s0 + $0x49] sm:$0xff]
    %v193 = vld [vmem:[%s0 + $0x51] sm:$0xff]
    %v194 = vld [vmem:[%s0 + $0x61] sm:$0xff]
    %v195 = vld [vmem:[%s0 + $0x69] sm:$0xff]
    %v196 = vld [vmem:[%s0 + $0x79] sm:$0xff]
    %v197 = vld [vmem:[%s0 + $0x81] sm:$0xff]
    %v198 = vld [vmem:[%s0 + $0x91] sm:$0xff]
    %v199 = vld [vmem:[%s0 + $0x99] sm:$0xff]
    %v200 = vld [vmem:[%s0 + $0xa9] sm:$0xff]
    %v201 = vld [vmem:[%s0 + $0xb1] sm:$0xff]
    %v202 = vld [vmem:[%s0 + $0xc1] sm:$0xff]
    %v203 = vld [vmem:[%s0 + $0xc9] sm:$0xff]
    %v204 = vld [vmem:[%s0 + $0xd9] sm:$0xff]
    %v205 = vld [vmem:[%s0 + $0xe1] sm:$0xff]
    %v206 = vld [vmem:[%s0 + $0xf1] sm:$0xff]
    %v207 = vld [vmem:[%s0 + $0xf9] sm:$0xff]
    %v208 = vld [vmem:[%s0 + $0x109] sm:$0xff]
    %v209 = vld [vmem:[%s0 + $0x111] sm:$0xff]
    %v210 = vld [vmem:[%s0 + $0x121] sm:$0xff]
    %v211 = vld [vmem:[%s0 + $0x129] sm:$0xff]
    %v212 = vld [vmem:[%s0 + $0x139] sm:$0xff]
    %v213 = vld [vmem:[%s0 + $0x141] sm:$0xff]
    %v214 = vld [vmem:[%s0 + $0x151] sm:$0xff]
    %v215 = vld [vmem:[%s0 + $0x159] sm:$0xff]
    %v216 = vld [vmem:[%s0 + $0x169] sm:$0xff]
    %v217 = vld [vmem:[%s0 + $0x171] sm:$0xff]
    %v218 = vld [vmem:[%s0 + $0x1b1] sm:$0xff]
    %v219 = vld [vmem:[%s0 + $0x1b9] sm:$0xff]
    %v220 = vld [vmem:[%s0 + $0x1c9] sm:$0xff]
    %v221 = vld [vmem:[%s0 + $0x1d1] sm:$0xff]
    %v222 = vld [vmem:[%s0 + $0x1e1] sm:$0xff]
    %v223 = vld [vmem:[%s0 + $0x1e9] sm:$0xff]
    %v224 = vld [vmem:[%s0 + $0x1f9] sm:$0xff]
    %v225 = vld [vmem:[%s0 + $0x201] sm:$0xff]
    %v226 = vld [vmem:[%s0 + $0x211] sm:$0xff]
    %v227 = vld [vmem:[%s0 + $0x219] sm:$0xff]
    %v228 = vld [vmem:[%s0 + $0x229] sm:$0xff]
    %v229 = vld [vmem:[%s0 + $0x231] sm:$0xff]
    %v230 = vld [vmem:[%s0 + $0x241] sm:$0xff]
    %v231 = vld [vmem:[%s0 + $0x249] sm:$0xff]
    %v232 = vld [vmem:[%s0 + $0x259] sm:$0xff]
    %v233 = vld [vmem:[%s0 + $0x261] sm:$0xff]
    %v234 = vld [vmem:[%s0 + $0x271] sm:$0xff]
    %v235 = vld [vmem:[%s0 + $0x279] sm:$0xff]
    %v236 = vld [vmem:[%s0 + $0x289] sm:$0xff]
    %v237 = vld [vmem:[%s0 + $0x291] sm:$0xff]
    %v238 = vld [vmem:[%s0 + $0x2a1] sm:$0xff]
    %v239 = vld [vmem:[%s0 + $0x2a9] sm:$0xff]
    %v240 = vld [vmem:[%s0 + $0x2b9] sm:$0xff]
    %v241 = vld [vmem:[%s0 + $0x2c1] sm:$0xff]
    %v242 = vld [vmem:[%s0 + $0x2d1] sm:$0xff]
    %v243 = vld [vmem:[%s0 + $0x2d9] sm:$0xff]
    %v244 = vld [vmem:[%s0 + $0x2e9] sm:$0xff]
    %v245 = vld [vmem:[%s0 + $0x2f1] sm:$0xff]
    %v246 = vld [vmem:[%s0 + $0x301] sm:$0xff]
    %v247 = vld [vmem:[%s0 + $0x309] sm:$0xff]
    %v248 = vld [vmem:[%s0 + $0x319] sm:$0xff]
    %v249 = vld [vmem:[%s0 + $0x321] sm:$0xff]
    %250 = vst [vmem:[#allocation2 + $0x8] sm:$0xff] %v186
    %251 = vst [vmem:[#allocation2 + $0x50] sm:$0xff] %v187
    %252 = vst [vmem:[#allocation2 + $0x98] sm:$0xff] %v188
    %253 = vst [vmem:[#allocation2 + $0xe0] sm:$0xff] %v189
    %254 = vst [vmem:[#allocation2 + $0x128] sm:$0xff] %v190
    %255 = vst [vmem:[#allocation2 + $0x170] sm:$0xff] %v191
    %256 = vst [vmem:[#allocation2 + $0x1b8] sm:$0xff] %v192
    %257 = vst [vmem:[#allocation2 + $0x200] sm:$0xff] %v193
    %258 = vst [vmem:[#allocation2 + $0x248] sm:$0xff] %v194
    %259 = vst [vmem:[#allocation2 + $0x290] sm:$0xff] %v195
    %260 = vst [vmem:[#allocation2 + $0x2d8] sm:$0xff] %v196
    %261 = vst [vmem:[#allocation2 + $0x320] sm:$0xff] %v197
    %262 = vst [vmem:[#allocation2 + $0x368] sm:$0xff] %v198
    %263 = vst [vmem:[#allocation2 + $0x3b0] sm:$0xff] %v199
    %264 = vst [vmem:[#allocation2 + $0x3f8] sm:$0xff] %v200
    %265 = vst [vmem:[#allocation2 + $0x440] sm:$0xff] %v201
    %266 = vst [vmem:[#allocation2 + $0x488] sm:$0xff] %v202
    %267 = vst [vmem:[#allocation2 + $0x4d0] sm:$0xff] %v203
    %268 = vst [vmem:[#allocation2 + $0x518] sm:$0xff] %v204
    %269 = vst [vmem:[#allocation2 + $0x560] sm:$0xff] %v205
    %270 = vst [vmem:[#allocation2 + $0x5a8] sm:$0xff] %v206
    %271 = vst [vmem:[#allocation2 + $0x5f0] sm:$0xff] %v207
    %272 = vst [vmem:[#allocation2 + $0x638] sm:$0xff] %v208
    %273 = vst [vmem:[#allocation2 + $0x680] sm:$0xff] %v209
    %274 = vst [vmem:[#allocation2 + $0x6c8] sm:$0xff] %v210
    %275 = vst [vmem:[#allocation2 + $0x710] sm:$0xff] %v211
    %276 = vst [vmem:[#allocation2 + $0x758] sm:$0xff] %v212
    %277 = vst [vmem:[#allocation2 + $0x7a0] sm:$0xff] %v213
    %278 = vst [vmem:[#allocation2 + $0x7e8] sm:$0xff] %v214
    %279 = vst [vmem:[#allocation2 + $0x830] sm:$0xff] %v215
    %280 = vst [vmem:[#allocation2 + $0x878] sm:$0xff] %v216
    %281 = vst [vmem:[#allocation2 + $0x8c0] sm:$0xff] %v217
    %282 = vst [vmem:[#allocation2 + $0x908] sm:$0xff] %v218
    %283 = vst [vmem:[#allocation2 + $0x950] sm:$0xff] %v219
    %284 = vst [vmem:[#allocation2 + $0x998] sm:$0xff] %v220
    %285 = vst [vmem:[#allocation2 + $0x9e0] sm:$0xff] %v221
    %286 = vst [vmem:[#allocation2 + $0xa28] sm:$0xff] %v222
    %287 = vst [vmem:[#allocation2 + $0xa70] sm:$0xff] %v223
    %288 = vst [vmem:[#allocation2 + $0xab8] sm:$0xff] %v224
    %289 = vst [vmem:[#allocation2 + $0xb00] sm:$0xff] %v225
    %290 = vst [vmem:[#allocation2 + $0xb48] sm:$0xff] %v226
    %291 = vst [vmem:[#allocation2 + $0xb90] sm:$0xff] %v227
    %292 = vst [vmem:[#allocation2 + $0xbd8] sm:$0xff] %v228
    %293 = vst [vmem:[#allocation2 + $0xc20] sm:$0xff] %v229
    %294 = vst [vmem:[#allocation2 + $0xc68] sm:$0xff] %v230
    %295 = vst [vmem:[#allocation2 + $0xcb0] sm:$0xff] %v231
    %296 = vst [vmem:[#allocation2 + $0xcf8] sm:$0xff] %v232
    %297 = vst [vmem:[#allocation2 + $0xd40] sm:$0xff] %v233
    %298 = vst [vmem:[#allocation2 + $0xd88] sm:$0xff] %v234
    %299 = vst [vmem:[#allocation2 + $0xdd0] sm:$0xff] %v235
    %300 = vst [vmem:[#allocation2 + $0xe18] sm:$0xff] %v236
    %301 = vst [vmem:[#allocation2 + $0xe60] sm:$0xff] %v237
    %302 = vst [vmem:[#allocation2 + $0xea8] sm:$0xff] %v238
    %303 = vst [vmem:[#allocation2 + $0xef0] sm:$0xff] %v239
    %304 = vst [vmem:[#allocation2 + $0xf38] sm:$0xff] %v240
    %305 = vst [vmem:[#allocation2 + $0xf80] sm:$0xff] %v241
    %306 = vst [vmem:[#allocation2 + $0xfc8] sm:$0xff] %v242
    %307 = vst [vmem:[#allocation2 + $0x1010] sm:$0xff] %v243
    %308 = vst [vmem:[#allocation2 + $0x1058] sm:$0xff] %v244
    %309 = vst [vmem:[#allocation2 + $0x10a0] sm:$0xff] %v245
    %310 = vst [vmem:[#allocation2 + $0x10e8] sm:$0xff] %v246
    %311 = vst [vmem:[#allocation2 + $0x1130] sm:$0xff] %v247
    %312 = vst [vmem:[#allocation2 + $0x1178] sm:$0xff] %v248
    %313 = vst [vmem:[#allocation2 + $0x11c0] sm:$0xff] %v249
    %v314 = vld [vmem:[%s0 + $0x2] sm:$0xff]
    %v315 = vld [vmem:[%s0 + $0xa] sm:$0xff]
    %v316 = vld [vmem:[%s0 + $0x1a] sm:$0xff]
    %v317 = vld [vmem:[%s0 + $0x22] sm:$0xff]
    %v318 = vld [vmem:[%s0 + $0x32] sm:$0xff]
    %v319 = vld [vmem:[%s0 + $0x3a] sm:$0xff]
    %v320 = vld [vmem:[%s0 + $0x4a] sm:$0xff]
    %v321 = vld [vmem:[%s0 + $0x52] sm:$0xff]
    %v322 = vld [vmem:[%s0 + $0x62] sm:$0xff]
    %v323 = vld [vmem:[%s0 + $0x6a] sm:$0xff]
    %v324 = vld [vmem:[%s0 + $0x7a] sm:$0xff]
    %v325 = vld [vmem:[%s0 + $0x82] sm:$0xff]
    %v326 = vld [vmem:[%s0 + $0x92] sm:$0xff]
    %v327 = vld [vmem:[%s0 + $0x9a] sm:$0xff]
    %v328 = vld [vmem:[%s0 + $0xaa] sm:$0xff]
    %v329 = vld [vmem:[%s0 + $0xb2] sm:$0xff]
    %v330 = vld [vmem:[%s0 + $0xc2] sm:$0xff]
    %v331 = vld [vmem:[%s0 + $0xca] sm:$0xff]
    %v332 = vld [vmem:[%s0 + $0xda] sm:$0xff]
    %v333 = vld [vmem:[%s0 + $0xe2] sm:$0xff]
    %v334 = vld [vmem:[%s0 + $0xf2] sm:$0xff]
    %v335 = vld [vmem:[%s0 + $0xfa] sm:$0xff]
    %v336 = vld [vmem:[%s0 + $0x10a] sm:$0xff]
    %v337 = vld [vmem:[%s0 + $0x112] sm:$0xff]
    %v338 = vld [vmem:[%s0 + $0x122] sm:$0xff]
    %v339 = vld [vmem:[%s0 + $0x12a] sm:$0xff]
    %v340 = vld [vmem:[%s0 + $0x13a] sm:$0xff]
    %v341 = vld [vmem:[%s0 + $0x142] sm:$0xff]
    %v342 = vld [vmem:[%s0 + $0x152] sm:$0xff]
    %v343 = vld [vmem:[%s0 + $0x15a] sm:$0xff]
    %v344 = vld [vmem:[%s0 + $0x16a] sm:$0xff]
    %v345 = vld [vmem:[%s0 + $0x172] sm:$0xff]
    %v346 = vld [vmem:[%s0 + $0x1b2] sm:$0xff]
    %v347 = vld [vmem:[%s0 + $0x1ba] sm:$0xff]
    %v348 = vld [vmem:[%s0 + $0x1ca] sm:$0xff]
    %v349 = vld [vmem:[%s0 + $0x1d2] sm:$0xff]
    %v350 = vld [vmem:[%s0 + $0x1e2] sm:$0xff]
    %v351 = vld [vmem:[%s0 + $0x1ea] sm:$0xff]
    %v352 = vld [vmem:[%s0 + $0x1fa] sm:$0xff]
    %v353 = vld [vmem:[%s0 + $0x202] sm:$0xff]
    %v354 = vld [vmem:[%s0 + $0x212] sm:$0xff]
    %v355 = vld [vmem:[%s0 + $0x21a] sm:$0xff]
    %v356 = vld [vmem:[%s0 + $0x22a] sm:$0xff]
    %v357 = vld [vmem:[%s0 + $0x232] sm:$0xff]
    %v358 = vld [vmem:[%s0 + $0x242] sm:$0xff]
    %v359 = vld [vmem:[%s0 + $0x24a] sm:$0xff]
    %v360 = vld [vmem:[%s0 + $0x25a] sm:$0xff]
    %v361 = vld [vmem:[%s0 + $0x262] sm:$0xff]
    %v362 = vld [vmem:[%s0 + $0x272] sm:$0xff]
    %v363 = vld [vmem:[%s0 + $0x27a] sm:$0xff]
    %v364 = vld [vmem:[%s0 + $0x28a] sm:$0xff]
    %v365 = vld [vmem:[%s0 + $0x292] sm:$0xff]
    %v366 = vld [vmem:[%s0 + $0x2a2] sm:$0xff]
    %v367 = vld [vmem:[%s0 + $0x2aa] sm:$0xff]
    %v368 = vld [vmem:[%s0 + $0x2ba] sm:$0xff]
    %v369 = vld [vmem:[%s0 + $0x2c2] sm:$0xff]
    %v370 = vld [vmem:[%s0 + $0x2d2] sm:$0xff]
    %v371 = vld [vmem:[%s0 + $0x2da] sm:$0xff]
    %v372 = vld [vmem:[%s0 + $0x2ea] sm:$0xff]
    %v373 = vld [vmem:[%s0 + $0x2f2] sm:$0xff]
    %v374 = vld [vmem:[%s0 + $0x302] sm:$0xff]
    %v375 = vld [vmem:[%s0 + $0x30a] sm:$0xff]
    %v376 = vld [vmem:[%s0 + $0x31a] sm:$0xff]
    %v377 = vld [vmem:[%s0 + $0x322] sm:$0xff]
    %378 = vst [vmem:[#allocation2 + $0x10] sm:$0xff] %v314
    %379 = vst [vmem:[#allocation2 + $0x58] sm:$0xff] %v315
    %380 = vst [vmem:[#allocation2 + $0xa0] sm:$0xff] %v316
    %381 = vst [vmem:[#allocation2 + $0xe8] sm:$0xff] %v317
    %382 = vst [vmem:[#allocation2 + $0x130] sm:$0xff] %v318
    %383 = vst [vmem:[#allocation2 + $0x178] sm:$0xff] %v319
    %384 = vst [vmem:[#allocation2 + $0x1c0] sm:$0xff] %v320
    %385 = vst [vmem:[#allocation2 + $0x208] sm:$0xff] %v321
    %386 = vst [vmem:[#allocation2 + $0x250] sm:$0xff] %v322
    %387 = vst [vmem:[#allocation2 + $0x298] sm:$0xff] %v323
    %388 = vst [vmem:[#allocation2 + $0x2e0] sm:$0xff] %v324
    %389 = vst [vmem:[#allocation2 + $0x328] sm:$0xff] %v325
    %390 = vst [vmem:[#allocation2 + $0x370] sm:$0xff] %v326
    %391 = vst [vmem:[#allocation2 + $0x3b8] sm:$0xff] %v327
    %392 = vst [vmem:[#allocation2 + $0x400] sm:$0xff] %v328
    %393 = vst [vmem:[#allocation2 + $0x448] sm:$0xff] %v329
    %394 = vst [vmem:[#allocation2 + $0x490] sm:$0xff] %v330
    %395 = vst [vmem:[#allocation2 + $0x4d8] sm:$0xff] %v331
    %396 = vst [vmem:[#allocation2 + $0x520] sm:$0xff] %v332
    %397 = vst [vmem:[#allocation2 + $0x568] sm:$0xff] %v333
    %398 = vst [vmem:[#allocation2 + $0x5b0] sm:$0xff] %v334
    %399 = vst [vmem:[#allocation2 + $0x5f8] sm:$0xff] %v335
    %400 = vst [vmem:[#allocation2 + $0x640] sm:$0xff] %v336
    %401 = vst [vmem:[#allocation2 + $0x688] sm:$0xff] %v337
    %402 = vst [vmem:[#allocation2 + $0x6d0] sm:$0xff] %v338
    %403 = vst [vmem:[#allocation2 + $0x718] sm:$0xff] %v339
    %404 = vst [vmem:[#allocation2 + $0x760] sm:$0xff] %v340
    %405 = vst [vmem:[#allocation2 + $0x7a8] sm:$0xff] %v341
    %406 = vst [vmem:[#allocation2 + $0x7f0] sm:$0xff] %v342
    %407 = vst [vmem:[#allocation2 + $0x838] sm:$0xff] %v343
    %408 = vst [vmem:[#allocation2 + $0x880] sm:$0xff] %v344
    %409 = vst [vmem:[#allocation2 + $0x8c8] sm:$0xff] %v345
    %410 = vst [vmem:[#allocation2 + $0x910] sm:$0xff] %v346
    %411 = vst [vmem:[#allocation2 + $0x958] sm:$0xff] %v347
    %412 = vst [vmem:[#allocation2 + $0x9a0] sm:$0xff] %v348
    %413 = vst [vmem:[#allocation2 + $0x9e8] sm:$0xff] %v349
    %414 = vst [vmem:[#allocation2 + $0xa30] sm:$0xff] %v350
    %415 = vst [vmem:[#allocation2 + $0xa78] sm:$0xff] %v351
    %416 = vst [vmem:[#allocation2 + $0xac0] sm:$0xff] %v352
    %417 = vst [vmem:[#allocation2 + $0xb08] sm:$0xff] %v353
    %418 = vst [vmem:[#allocation2 + $0xb50] sm:$0xff] %v354
    %419 = vst [vmem:[#allocation2 + $0xb98] sm:$0xff] %v355
    %420 = vst [vmem:[#allocation2 + $0xbe0] sm:$0xff] %v356
    %421 = vst [vmem:[#allocation2 + $0xc28] sm:$0xff] %v357
    %422 = vst [vmem:[#allocation2 + $0xc70] sm:$0xff] %v358
    %423 = vst [vmem:[#allocation2 + $0xcb8] sm:$0xff] %v359
    %424 = vst [vmem:[#allocation2 + $0xd00] sm:$0xff] %v360
    %425 = vst [vmem:[#allocation2 + $0xd48] sm:$0xff] %v361
    %426 = vst [vmem:[#allocation2 + $0xd90] sm:$0xff] %v362
    %427 = vst [vmem:[#allocation2 + $0xdd8] sm:$0xff] %v363
    %428 = vst [vmem:[#allocation2 + $0xe20] sm:$0xff] %v364
    %429 = vst [vmem:[#allocation2 + $0xe68] sm:$0xff] %v365
    %430 = vst [vmem:[#allocation2 + $0xeb0] sm:$0xff] %v366
    %431 = vst [vmem:[#allocation2 + $0xef8] sm:$0xff] %v367
    %432 = vst [vmem:[#allocation2 + $0xf40] sm:$0xff] %v368
    %433 = vst [vmem:[#allocation2 + $0xf88] sm:$0xff] %v369
    %434 = vst [vmem:[#allocation2 + $0xfd0] sm:$0xff] %v370
    %435 = vst [vmem:[#allocation2 + $0x1018] sm:$0xff] %v371
    %436 = vst [vmem:[#allocation2 + $0x1060] sm:$0xff] %v372
    %437 = vst [vmem:[#allocation2 + $0x10a8] sm:$0xff] %v373
    %438 = vst [vmem:[#allocation2 + $0x10f0] sm:$0xff] %v374
    %439 = vst [vmem:[#allocation2 + $0x1138] sm:$0xff] %v375
    %440 = vst [vmem:[#allocation2 + $0x1180] sm:$0xff] %v376
    %441 = vst [vmem:[#allocation2 + $0x11c8] sm:$0xff] %v377
    %s442 = scalar_lea.vmem %s0, 24
    %v443 = vld [vmem:[%s442] sm:$0xff]
    %v444 = vld [vmem:[%s442 + $0x8] sm:$0xff]
    %v445 = vld [vmem:[%s442 + $0x18] sm:$0xff]
    %v446 = vld [vmem:[%s442 + $0x20] sm:$0xff]
    %v447 = vld [vmem:[%s442 + $0x30] sm:$0xff]
    %v448 = vld [vmem:[%s442 + $0x38] sm:$0xff]
    %v449 = vld [vmem:[%s442 + $0x48] sm:$0xff]
    %v450 = vld [vmem:[%s442 + $0x50] sm:$0xff]
    %v451 = vld [vmem:[%s442 + $0x60] sm:$0xff]
    %v452 = vld [vmem:[%s442 + $0x68] sm:$0xff]
    %v453 = vld [vmem:[%s442 + $0x78] sm:$0xff]
    %v454 = vld [vmem:[%s442 + $0x80] sm:$0xff]
    %v455 = vld [vmem:[%s442 + $0x90] sm:$0xff]
    %v456 = vld [vmem:[%s442 + $0x98] sm:$0xff]
    %v457 = vld [vmem:[%s442 + $0xa8] sm:$0xff]
    %v458 = vld [vmem:[%s442 + $0xb0] sm:$0xff]
    %v459 = vld [vmem:[%s442 + $0xc0] sm:$0xff]
    %v460 = vld [vmem:[%s442 + $0xc8] sm:$0xff]
    %v461 = vld [vmem:[%s442 + $0xd8] sm:$0xff]
    %v462 = vld [vmem:[%s442 + $0xe0] sm:$0xff]
    %v463 = vld [vmem:[%s442 + $0xf0] sm:$0xff]
    %v464 = vld [vmem:[%s442 + $0xf8] sm:$0xff]
    %v465 = vld [vmem:[%s442 + $0x108] sm:$0xff]
    %v466 = vld [vmem:[%s442 + $0x110] sm:$0xff]
    %v467 = vld [vmem:[%s442 + $0x120] sm:$0xff]
    %v468 = vld [vmem:[%s442 + $0x128] sm:$0xff]
    %v469 = vld [vmem:[%s442 + $0x138] sm:$0xff]
    %v470 = vld [vmem:[%s442 + $0x140] sm:$0xff]
    %v471 = vld [vmem:[%s442 + $0x150] sm:$0xff]
    %v472 = vld [vmem:[%s442 + $0x158] sm:$0xff]
    %v473 = vld [vmem:[%s442 + $0x168] sm:$0xff]
    %v474 = vld [vmem:[%s442 + $0x170] sm:$0xff]
    %v475 = vld [vmem:[%s442 + $0x1b0] sm:$0xff]
    %v476 = vld [vmem:[%s442 + $0x1b8] sm:$0xff]
    %v477 = vld [vmem:[%s442 + $0x1c8] sm:$0xff]
    %v478 = vld [vmem:[%s442 + $0x1d0] sm:$0xff]
    %v479 = vld [vmem:[%s442 + $0x1e0] sm:$0xff]
    %v480 = vld [vmem:[%s442 + $0x1e8] sm:$0xff]
    %v481 = vld [vmem:[%s442 + $0x1f8] sm:$0xff]
    %v482 = vld [vmem:[%s442 + $0x200] sm:$0xff]
    %v483 = vld [vmem:[%s442 + $0x210] sm:$0xff]
    %v484 = vld [vmem:[%s442 + $0x218] sm:$0xff]
    %v485 = vld [vmem:[%s442 + $0x228] sm:$0xff]
    %v486 = vld [vmem:[%s442 + $0x230] sm:$0xff]
    %v487 = vld [vmem:[%s442 + $0x240] sm:$0xff]
    %v488 = vld [vmem:[%s442 + $0x248] sm:$0xff]
    %v489 = vld [vmem:[%s442 + $0x258] sm:$0xff]
    %v490 = vld [vmem:[%s442 + $0x260] sm:$0xff]
    %v491 = vld [vmem:[%s442 + $0x270] sm:$0xff]
    %v492 = vld [vmem:[%s442 + $0x278] sm:$0xff]
    %v493 = vld [vmem:[%s442 + $0x288] sm:$0xff]
    %v494 = vld [vmem:[%s442 + $0x290] sm:$0xff]
    %v495 = vld [vmem:[%s442 + $0x2a0] sm:$0xff]
    %v496 = vld [vmem:[%s442 + $0x2a8] sm:$0xff]
    %v497 = vld [vmem:[%s442 + $0x2b8] sm:$0xff]
    %v498 = vld [vmem:[%s442 + $0x2c0] sm:$0xff]
    %v499 = vld [vmem:[%s442 + $0x2d0] sm:$0xff]
    %v500 = vld [vmem:[%s442 + $0x2d8] sm:$0xff]
    %v501 = vld [vmem:[%s442 + $0x2e8] sm:$0xff]
    %v502 = vld [vmem:[%s442 + $0x2f0] sm:$0xff]
    %v503 = vld [vmem:[%s442 + $0x300] sm:$0xff]
    %v504 = vld [vmem:[%s442 + $0x308] sm:$0xff]
    %v505 = vld [vmem:[%s442 + $0x318] sm:$0xff]
    %v506 = vld [vmem:[%s442 + $0x320] sm:$0xff]
    %507 = vst [vmem:[#allocation2 + $0x18] sm:$0xff] %v443
    %508 = vst [vmem:[#allocation2 + $0x60] sm:$0xff] %v444
    %509 = vst [vmem:[#allocation2 + $0xa8] sm:$0xff] %v445
    %510 = vst [vmem:[#allocation2 + $0xf0] sm:$0xff] %v446
    %511 = vst [vmem:[#allocation2 + $0x138] sm:$0xff] %v447
    %512 = vst [vmem:[#allocation2 + $0x180] sm:$0xff] %v448
    %513 = vst [vmem:[#allocation2 + $0x1c8] sm:$0xff] %v449
    %514 = vst [vmem:[#allocation2 + $0x210] sm:$0xff] %v450
    %515 = vst [vmem:[#allocation2 + $0x258] sm:$0xff] %v451
    %516 = vst [vmem:[#allocation2 + $0x2a0] sm:$0xff] %v452
    %517 = vst [vmem:[#allocation2 + $0x2e8] sm:$0xff] %v453
    %518 = vst [vmem:[#allocation2 + $0x330] sm:$0xff] %v454
    %519 = vst [vmem:[#allocation2 + $0x378] sm:$0xff] %v455
    %520 = vst [vmem:[#allocation2 + $0x3c0] sm:$0xff] %v456
    %521 = vst [vmem:[#allocation2 + $0x408] sm:$0xff] %v457
    %522 = vst [vmem:[#allocation2 + $0x450] sm:$0xff] %v458
    %523 = vst [vmem:[#allocation2 + $0x498] sm:$0xff] %v459
    %524 = vst [vmem:[#allocation2 + $0x4e0] sm:$0xff] %v460
    %525 = vst [vmem:[#allocation2 + $0x528] sm:$0xff] %v461
    %526 = vst [vmem:[#allocation2 + $0x570] sm:$0xff] %v462
    %527 = vst [vmem:[#allocation2 + $0x5b8] sm:$0xff] %v463
    %528 = vst [vmem:[#allocation2 + $0x600] sm:$0xff] %v464
    %529 = vst [vmem:[#allocation2 + $0x648] sm:$0xff] %v465
    %530 = vst [vmem:[#allocation2 + $0x690] sm:$0xff] %v466
    %531 = vst [vmem:[#allocation2 + $0x6d8] sm:$0xff] %v467
    %532 = vst [vmem:[#allocation2 + $0x720] sm:$0xff] %v468
    %533 = vst [vmem:[#allocation2 + $0x768] sm:$0xff] %v469
    %534 = vst [vmem:[#allocation2 + $0x7b0] sm:$0xff] %v470
    %535 = vst [vmem:[#allocation2 + $0x7f8] sm:$0xff] %v471
    %536 = vst [vmem:[#allocation2 + $0x840] sm:$0xff] %v472
    %537 = vst [vmem:[#allocation2 + $0x888] sm:$0xff] %v473
    %538 = vst [vmem:[#allocation2 + $0x8d0] sm:$0xff] %v474
    %539 = vst [vmem:[#allocation2 + $0x918] sm:$0xff] %v475
    %540 = vst [vmem:[#allocation2 + $0x960] sm:$0xff] %v476
    %541 = vst [vmem:[#allocation2 + $0x9a8] sm:$0xff] %v477
    %542 = vst [vmem:[#allocation2 + $0x9f0] sm:$0xff] %v478
    %543 = vst [vmem:[#allocation2 + $0xa38] sm:$0xff] %v479
    %544 = vst [vmem:[#allocation2 + $0xa80] sm:$0xff] %v480
    %545 = vst [vmem:[#allocation2 + $0xac8] sm:$0xff] %v481
    %546 = vst [vmem:[#allocation2 + $0xb10] sm:$0xff] %v482
    %547 = vst [vmem:[#allocation2 + $0xb58] sm:$0xff] %v483
    %548 = vst [vmem:[#allocation2 + $0xba0] sm:$0xff] %v484
    %549 = vst [vmem:[#allocation2 + $0xbe8] sm:$0xff] %v485
    %550 = vst [vmem:[#allocation2 + $0xc30] sm:$0xff] %v486
    %551 = vst [vmem:[#allocation2 + $0xc78] sm:$0xff] %v487
    %552 = vst [vmem:[#allocation2 + $0xcc0] sm:$0xff] %v488
    %553 = vst [vmem:[#allocation2 + $0xd08] sm:$0xff] %v489
    %554 = vst [vmem:[#allocation2 + $0xd50] sm:$0xff] %v490
    %555 = vst [vmem:[#allocation2 + $0xd98] sm:$0xff] %v491
    %556 = vst [vmem:[#allocation2 + $0xde0] sm:$0xff] %v492
    %557 = vst [vmem:[#allocation2 + $0xe28] sm:$0xff] %v493
    %558 = vst [vmem:[#allocation2 + $0xe70] sm:$0xff] %v494
    %559 = vst [vmem:[#allocation2 + $0xeb8] sm:$0xff] %v495
    %560 = vst [vmem:[#allocation2 + $0xf00] sm:$0xff] %v496
    %561 = vst [vmem:[#allocation2 + $0xf48] sm:$0xff] %v497
    %562 = vst [vmem:[#allocation2 + $0xf90] sm:$0xff] %v498
    %563 = vst [vmem:[#allocation2 + $0xfd8] sm:$0xff] %v499
    %564 = vst [vmem:[#allocation2 + $0x1020] sm:$0xff] %v500
    %565 = vst [vmem:[#allocation2 + $0x1068] sm:$0xff] %v501
    %566 = vst [vmem:[#allocation2 + $0x10b0] sm:$0xff] %v502
    %567 = vst [vmem:[#allocation2 + $0x10f8] sm:$0xff] %v503
    %568 = vst [vmem:[#allocation2 + $0x1140] sm:$0xff] %v504
    %569 = vst [vmem:[#allocation2 + $0x1188] sm:$0xff] %v505
    %570 = vst [vmem:[#allocation2 + $0x11d0] sm:$0xff] %v506
    %v571 = vld [vmem:[%s442 + $0x1] sm:$0xff]
    %v572 = vld [vmem:[%s442 + $0x9] sm:$0xff]
    %v573 = vld [vmem:[%s442 + $0x19] sm:$0xff]
    %v574 = vld [vmem:[%s442 + $0x21] sm:$0xff]
    %v575 = vld [vmem:[%s442 + $0x31] sm:$0xff]
    %v576 = vld [vmem:[%s442 + $0x39] sm:$0xff]
    %v577 = vld [vmem:[%s442 + $0x49] sm:$0xff]
    %v578 = vld [vmem:[%s442 + $0x51] sm:$0xff]
    %v579 = vld [vmem:[%s442 + $0x61] sm:$0xff]
    %v580 = vld [vmem:[%s442 + $0x69] sm:$0xff]
    %v581 = vld [vmem:[%s442 + $0x79] sm:$0xff]
    %v582 = vld [vmem:[%s442 + $0x81] sm:$0xff]
    %v583 = vld [vmem:[%s442 + $0x91] sm:$0xff]
    %v584 = vld [vmem:[%s442 + $0x99] sm:$0xff]
    %v585 = vld [vmem:[%s442 + $0xa9] sm:$0xff]
    %v586 = vld [vmem:[%s442 + $0xb1] sm:$0xff]
    %v587 = vld [vmem:[%s442 + $0xc1] sm:$0xff]
    %v588 = vld [vmem:[%s442 + $0xc9] sm:$0xff]
    %v589 = vld [vmem:[%s442 + $0xd9] sm:$0xff]
    %v590 = vld [vmem:[%s442 + $0xe1] sm:$0xff]
    %v591 = vld [vmem:[%s442 + $0xf1] sm:$0xff]
    %v592 = vld [vmem:[%s442 + $0xf9] sm:$0xff]
    %v593 = vld [vmem:[%s442 + $0x109] sm:$0xff]
    %v594 = vld [vmem:[%s442 + $0x111] sm:$0xff]
    %v595 = vld [vmem:[%s442 + $0x121] sm:$0xff]
    %v596 = vld [vmem:[%s442 + $0x129] sm:$0xff]
    %v597 = vld [vmem:[%s442 + $0x139] sm:$0xff]
    %v598 = vld [vmem:[%s442 + $0x141] sm:$0xff]
    %v599 = vld [vmem:[%s442 + $0x151] sm:$0xff]
    %v600 = vld [vmem:[%s442 + $0x159] sm:$0xff]
    %v601 = vld [vmem:[%s442 + $0x169] sm:$0xff]
    %v602 = vld [vmem:[%s442 + $0x171] sm:$0xff]
    %v603 = vld [vmem:[%s442 + $0x1b1] sm:$0xff]
    %v604 = vld [vmem:[%s442 + $0x1b9] sm:$0xff]
    %v605 = vld [vmem:[%s442 + $0x1c9] sm:$0xff]
    %v606 = vld [vmem:[%s442 + $0x1d1] sm:$0xff]
    %v607 = vld [vmem:[%s442 + $0x1e1] sm:$0xff]
    %v608 = vld [vmem:[%s442 + $0x1e9] sm:$0xff]
    %v609 = vld [vmem:[%s442 + $0x1f9] sm:$0xff]
    %v610 = vld [vmem:[%s442 + $0x201] sm:$0xff]
    %v611 = vld [vmem:[%s442 + $0x211] sm:$0xff]
    %v612 = vld [vmem:[%s442 + $0x219] sm:$0xff]
    %v613 = vld [vmem:[%s442 + $0x229] sm:$0xff]
    %v614 = vld [vmem:[%s442 + $0x231] sm:$0xff]
    %v615 = vld [vmem:[%s442 + $0x241] sm:$0xff]
    %v616 = vld [vmem:[%s442 + $0x249] sm:$0xff]
    %v617 = vld [vmem:[%s442 + $0x259] sm:$0xff]
    %v618 = vld [vmem:[%s442 + $0x261] sm:$0xff]
    %v619 = vld [vmem:[%s442 + $0x271] sm:$0xff]
    %v620 = vld [vmem:[%s442 + $0x279] sm:$0xff]
    %v621 = vld [vmem:[%s442 + $0x289] sm:$0xff]
    %v622 = vld [vmem:[%s442 + $0x291] sm:$0xff]
    %v623 = vld [vmem:[%s442 + $0x2a1] sm:$0xff]
    %v624 = vld [vmem:[%s442 + $0x2a9] sm:$0xff]
    %v625 = vld [vmem:[%s442 + $0x2b9] sm:$0xff]
    %v626 = vld [vmem:[%s442 + $0x2c1] sm:$0xff]
    %v627 = vld [vmem:[%s442 + $0x2d1] sm:$0xff]
    %v628 = vld [vmem:[%s442 + $0x2d9] sm:$0xff]
    %v629 = vld [vmem:[%s442 + $0x2e9] sm:$0xff]
    %v630 = vld [vmem:[%s442 + $0x2f1] sm:$0xff]
    %v631 = vld [vmem:[%s442 + $0x301] sm:$0xff]
    %v632 = vld [vmem:[%s442 + $0x309] sm:$0xff]
    %v633 = vld [vmem:[%s442 + $0x319] sm:$0xff]
    %v634 = vld [vmem:[%s442 + $0x321] sm:$0xff]
    %635 = vst [vmem:[#allocation2 + $0x20] sm:$0xff] %v571
    %636 = vst [vmem:[#allocation2 + $0x68] sm:$0xff] %v572
    %637 = vst [vmem:[#allocation2 + $0xb0] sm:$0xff] %v573
    %638 = vst [vmem:[#allocation2 + $0xf8] sm:$0xff] %v574
    %639 = vst [vmem:[#allocation2 + $0x140] sm:$0xff] %v575
    %640 = vst [vmem:[#allocation2 + $0x188] sm:$0xff] %v576
    %641 = vst [vmem:[#allocation2 + $0x1d0] sm:$0xff] %v577
    %642 = vst [vmem:[#allocation2 + $0x218] sm:$0xff] %v578
    %643 = vst [vmem:[#allocation2 + $0x260] sm:$0xff] %v579
    %644 = vst [vmem:[#allocation2 + $0x2a8] sm:$0xff] %v580
    %645 = vst [vmem:[#allocation2 + $0x2f0] sm:$0xff] %v581
    %646 = vst [vmem:[#allocation2 + $0x338] sm:$0xff] %v582
    %647 = vst [vmem:[#allocation2 + $0x380] sm:$0xff] %v583
    %648 = vst [vmem:[#allocation2 + $0x3c8] sm:$0xff] %v584
    %649 = vst [vmem:[#allocation2 + $0x410] sm:$0xff] %v585
    %650 = vst [vmem:[#allocation2 + $0x458] sm:$0xff] %v586
    %651 = vst [vmem:[#allocation2 + $0x4a0] sm:$0xff] %v587
    %652 = vst [vmem:[#allocation2 + $0x4e8] sm:$0xff] %v588
    %653 = vst [vmem:[#allocation2 + $0x530] sm:$0xff] %v589
    %654 = vst [vmem:[#allocation2 + $0x578] sm:$0xff] %v590
    %655 = vst [vmem:[#allocation2 + $0x5c0] sm:$0xff] %v591
    %656 = vst [vmem:[#allocation2 + $0x608] sm:$0xff] %v592
    %657 = vst [vmem:[#allocation2 + $0x650] sm:$0xff] %v593
    %658 = vst [vmem:[#allocation2 + $0x698] sm:$0xff] %v594
    %659 = vst [vmem:[#allocation2 + $0x6e0] sm:$0xff] %v595
    %660 = vst [vmem:[#allocation2 + $0x728] sm:$0xff] %v596
    %661 = vst [vmem:[#allocation2 + $0x770] sm:$0xff] %v597
    %662 = vst [vmem:[#allocation2 + $0x7b8] sm:$0xff] %v598
    %663 = vst [vmem:[#allocation2 + $0x800] sm:$0xff] %v599
    %664 = vst [vmem:[#allocation2 + $0x848] sm:$0xff] %v600
    %665 = vst [vmem:[#allocation2 + $0x890] sm:$0xff] %v601
    %666 = vst [vmem:[#allocation2 + $0x8d8] sm:$0xff] %v602
    %667 = vst [vmem:[#allocation2 + $0x920] sm:$0xff] %v603
    %668 = vst [vmem:[#allocation2 + $0x968] sm:$0xff] %v604
    %669 = vst [vmem:[#allocation2 + $0x9b0] sm:$0xff] %v605
    %670 = vst [vmem:[#allocation2 + $0x9f8] sm:$0xff] %v606
    %671 = vst [vmem:[#allocation2 + $0xa40] sm:$0xff] %v607
    %672 = vst [vmem:[#allocation2 + $0xa88] sm:$0xff] %v608
    %673 = vst [vmem:[#allocation2 + $0xad0] sm:$0xff] %v609
    %674 = vst [vmem:[#allocation2 + $0xb18] sm:$0xff] %v610
    %675 = vst [vmem:[#allocation2 + $0xb60] sm:$0xff] %v611
    %676 = vst [vmem:[#allocation2 + $0xba8] sm:$0xff] %v612
    %677 = vst [vmem:[#allocation2 + $0xbf0] sm:$0xff] %v613
    %678 = vst [vmem:[#allocation2 + $0xc38] sm:$0xff] %v614
    %679 = vst [vmem:[#allocation2 + $0xc80] sm:$0xff] %v615
    %680 = vst [vmem:[#allocation2 + $0xcc8] sm:$0xff] %v616
    %681 = vst [vmem:[#allocation2 + $0xd10] sm:$0xff] %v617
    %682 = vst [vmem:[#allocation2 + $0xd58] sm:$0xff] %v618
    %683 = vst [vmem:[#allocation2 + $0xda0] sm:$0xff] %v619
    %684 = vst [vmem:[#allocation2 + $0xde8] sm:$0xff] %v620
    %685 = vst [vmem:[#allocation2 + $0xe30] sm:$0xff] %v621
    %686 = vst [vmem:[#allocation2 + $0xe78] sm:$0xff] %v622
    %687 = vst [vmem:[#allocation2 + $0xec0] sm:$0xff] %v623
    %688 = vst [vmem:[#allocation2 + $0xf08] sm:$0xff] %v624
    %689 = vst [vmem:[#allocation2 + $0xf50] sm:$0xff] %v625
    %690 = vst [vmem:[#allocation2 + $0xf98] sm:$0xff] %v626
    %691 = vst [vmem:[#allocation2 + $0xfe0] sm:$0xff] %v627
    %692 = vst [vmem:[#allocation2 + $0x1028] sm:$0xff] %v628
    %693 = vst [vmem:[#allocation2 + $0x1070] sm:$0xff] %v629
    %694 = vst [vmem:[#allocation2 + $0x10b8] sm:$0xff] %v630
    %695 = vst [vmem:[#allocation2 + $0x1100] sm:$0xff] %v631
    %696 = vst [vmem:[#allocation2 + $0x1148] sm:$0xff] %v632
    %697 = vst [vmem:[#allocation2 + $0x1190] sm:$0xff] %v633
    %698 = vst [vmem:[#allocation2 + $0x11d8] sm:$0xff] %v634
    %v699 = vld [vmem:[%s442 + $0x2] sm:$0xff]
    %v700 = vld [vmem:[%s442 + $0xa] sm:$0xff]
    %v701 = vld [vmem:[%s442 + $0x1a] sm:$0xff]
    %v702 = vld [vmem:[%s442 + $0x22] sm:$0xff]
    %v703 = vld [vmem:[%s442 + $0x32] sm:$0xff]
    %v704 = vld [vmem:[%s442 + $0x3a] sm:$0xff]
    %v705 = vld [vmem:[%s442 + $0x4a] sm:$0xff]
    %v706 = vld [vmem:[%s442 + $0x52] sm:$0xff]
    %v707 = vld [vmem:[%s442 + $0x62] sm:$0xff]
    %v708 = vld [vmem:[%s442 + $0x6a] sm:$0xff]
    %v709 = vld [vmem:[%s442 + $0x7a] sm:$0xff]
    %v710 = vld [vmem:[%s442 + $0x82] sm:$0xff]
    %v711 = vld [vmem:[%s442 + $0x92] sm:$0xff]
    %v712 = vld [vmem:[%s442 + $0x9a] sm:$0xff]
    %v713 = vld [vmem:[%s442 + $0xaa] sm:$0xff]
    %v714 = vld [vmem:[%s442 + $0xb2] sm:$0xff]
    %v715 = vld [vmem:[%s442 + $0xc2] sm:$0xff]
    %v716 = vld [vmem:[%s442 + $0xca] sm:$0xff]
    %v717 = vld [vmem:[%s442 + $0xda] sm:$0xff]
    %v718 = vld [vmem:[%s442 + $0xe2] sm:$0xff]
    %v719 = vld [vmem:[%s442 + $0xf2] sm:$0xff]
    %v720 = vld [vmem:[%s442 + $0xfa] sm:$0xff]
    %v721 = vld [vmem:[%s442 + $0x10a] sm:$0xff]
    %v722 = vld [vmem:[%s442 + $0x112] sm:$0xff]
    %v723 = vld [vmem:[%s442 + $0x122] sm:$0xff]
    %v724 = vld [vmem:[%s442 + $0x12a] sm:$0xff]
    %v725 = vld [vmem:[%s442 + $0x13a] sm:$0xff]
    %v726 = vld [vmem:[%s442 + $0x142] sm:$0xff]
    %v727 = vld [vmem:[%s442 + $0x152] sm:$0xff]
    %v728 = vld [vmem:[%s442 + $0x15a] sm:$0xff]
    %v729 = vld [vmem:[%s442 + $0x16a] sm:$0xff]
    %v730 = vld [vmem:[%s442 + $0x172] sm:$0xff]
    %v731 = vld [vmem:[%s442 + $0x1b2] sm:$0xff]
    %v732 = vld [vmem:[%s442 + $0x1ba] sm:$0xff]
    %v733 = vld [vmem:[%s442 + $0x1ca] sm:$0xff]
    %v734 = vld [vmem:[%s442 + $0x1d2] sm:$0xff]
    %v735 = vld [vmem:[%s442 + $0x1e2] sm:$0xff]
    %v736 = vld [vmem:[%s442 + $0x1ea] sm:$0xff]
    %v737 = vld [vmem:[%s442 + $0x1fa] sm:$0xff]
    %v738 = vld [vmem:[%s442 + $0x202] sm:$0xff]
    %v739 = vld [vmem:[%s442 + $0x212] sm:$0xff]
    %v740 = vld [vmem:[%s442 + $0x21a] sm:$0xff]
    %v741 = vld [vmem:[%s442 + $0x22a] sm:$0xff]
    %v742 = vld [vmem:[%s442 + $0x232] sm:$0xff]
    %v743 = vld [vmem:[%s442 + $0x242] sm:$0xff]
    %v744 = vld [vmem:[%s442 + $0x24a] sm:$0xff]
    %v745 = vld [vmem:[%s442 + $0x25a] sm:$0xff]
    %v746 = vld [vmem:[%s442 + $0x262] sm:$0xff]
    %v747 = vld [vmem:[%s442 + $0x272] sm:$0xff]
    %v748 = vld [vmem:[%s442 + $0x27a] sm:$0xff]
    %v749 = vld [vmem:[%s442 + $0x28a] sm:$0xff]
    %v750 = vld [vmem:[%s442 + $0x292] sm:$0xff]
    %v751 = vld [vmem:[%s442 + $0x2a2] sm:$0xff]
    %v752 = vld [vmem:[%s442 + $0x2aa] sm:$0xff]
    %v753 = vld [vmem:[%s442 + $0x2ba] sm:$0xff]
    %v754 = vld [vmem:[%s442 + $0x2c2] sm:$0xff]
    %v755 = vld [vmem:[%s442 + $0x2d2] sm:$0xff]
    %v756 = vld [vmem:[%s442 + $0x2da] sm:$0xff]
    %v757 = vld [vmem:[%s442 + $0x2ea] sm:$0xff]
    %v758 = vld [vmem:[%s442 + $0x2f2] sm:$0xff]
    %v759 = vld [vmem:[%s442 + $0x302] sm:$0xff]
    %v760 = vld [vmem:[%s442 + $0x30a] sm:$0xff]
    %v761 = vld [vmem:[%s442 + $0x31a] sm:$0xff]
    %v762 = vld [vmem:[%s442 + $0x322] sm:$0xff]
    %763 = vst [vmem:[#allocation2 + $0x28] sm:$0xff] %v699
    %764 = vst [vmem:[#allocation2 + $0x70] sm:$0xff] %v700
    %765 = vst [vmem:[#allocation2 + $0xb8] sm:$0xff] %v701
    %766 = vst [vmem:[#allocation2 + $0x100] sm:$0xff] %v702
    %767 = vst [vmem:[#allocation2 + $0x148] sm:$0xff] %v703
    %768 = vst [vmem:[#allocation2 + $0x190] sm:$0xff] %v704
    %769 = vst [vmem:[#allocation2 + $0x1d8] sm:$0xff] %v705
    %770 = vst [vmem:[#allocation2 + $0x220] sm:$0xff] %v706
    %771 = vst [vmem:[#allocation2 + $0x268] sm:$0xff] %v707
    %772 = vst [vmem:[#allocation2 + $0x2b0] sm:$0xff] %v708
    %773 = vst [vmem:[#allocation2 + $0x2f8] sm:$0xff] %v709
    %774 = vst [vmem:[#allocation2 + $0x340] sm:$0xff] %v710
    %775 = vst [vmem:[#allocation2 + $0x388] sm:$0xff] %v711
    %776 = vst [vmem:[#allocation2 + $0x3d0] sm:$0xff] %v712
    %777 = vst [vmem:[#allocation2 + $0x418] sm:$0xff] %v713
    %778 = vst [vmem:[#allocation2 + $0x460] sm:$0xff] %v714
    %779 = vst [vmem:[#allocation2 + $0x4a8] sm:$0xff] %v715
    %780 = vst [vmem:[#allocation2 + $0x4f0] sm:$0xff] %v716
    %781 = vst [vmem:[#allocation2 + $0x538] sm:$0xff] %v717
    %782 = vst [vmem:[#allocation2 + $0x580] sm:$0xff] %v718
    %783 = vst [vmem:[#allocation2 + $0x5c8] sm:$0xff] %v719
    %784 = vst [vmem:[#allocation2 + $0x610] sm:$0xff] %v720
    %785 = vst [vmem:[#allocation2 + $0x658] sm:$0xff] %v721
    %786 = vst [vmem:[#allocation2 + $0x6a0] sm:$0xff] %v722
    %787 = vst [vmem:[#allocation2 + $0x6e8] sm:$0xff] %v723
    %788 = vst [vmem:[#allocation2 + $0x730] sm:$0xff] %v724
    %789 = vst [vmem:[#allocation2 + $0x778] sm:$0xff] %v725
    %790 = vst [vmem:[#allocation2 + $0x7c0] sm:$0xff] %v726
    %791 = vst [vmem:[#allocation2 + $0x808] sm:$0xff] %v727
    %792 = vst [vmem:[#allocation2 + $0x850] sm:$0xff] %v728
    %793 = vst [vmem:[#allocation2 + $0x898] sm:$0xff] %v729
    %794 = vst [vmem:[#allocation2 + $0x8e0] sm:$0xff] %v730
    %795 = vst [vmem:[#allocation2 + $0x928] sm:$0xff] %v731
    %796 = vst [vmem:[#allocation2 + $0x970] sm:$0xff] %v732
    %797 = vst [vmem:[#allocation2 + $0x9b8] sm:$0xff] %v733
    %798 = vst [vmem:[#allocation2 + $0xa00] sm:$0xff] %v734
    %799 = vst [vmem:[#allocation2 + $0xa48] sm:$0xff] %v735
    %800 = vst [vmem:[#allocation2 + $0xa90] sm:$0xff] %v736
    %801 = vst [vmem:[#allocation2 + $0xad8] sm:$0xff] %v737
    %802 = vst [vmem:[#allocation2 + $0xb20] sm:$0xff] %v738
    %803 = vst [vmem:[#allocation2 + $0xb68] sm:$0xff] %v739
    %804 = vst [vmem:[#allocation2 + $0xbb0] sm:$0xff] %v740
    %805 = vst [vmem:[#allocation2 + $0xbf8] sm:$0xff] %v741
    %806 = vst [vmem:[#allocation2 + $0xc40] sm:$0xff] %v742
    %807 = vst [vmem:[#allocation2 + $0xc88] sm:$0xff] %v743
    %808 = vst [vmem:[#allocation2 + $0xcd0] sm:$0xff] %v744
    %809 = vst [vmem:[#allocation2 + $0xd18] sm:$0xff] %v745
    %810 = vst [vmem:[#allocation2 + $0xd60] sm:$0xff] %v746
    %811 = vst [vmem:[#allocation2 + $0xda8] sm:$0xff] %v747
    %812 = vst [vmem:[#allocation2 + $0xdf0] sm:$0xff] %v748
    %813 = vst [vmem:[#allocation2 + $0xe38] sm:$0xff] %v749
    %814 = vst [vmem:[#allocation2 + $0xe80] sm:$0xff] %v750
    %815 = vst [vmem:[#allocation2 + $0xec8] sm:$0xff] %v751
    %816 = vst [vmem:[#allocation2 + $0xf10] sm:$0xff] %v752
    %817 = vst [vmem:[#allocation2 + $0xf58] sm:$0xff] %v753
    %818 = vst [vmem:[#allocation2 + $0xfa0] sm:$0xff] %v754
    %819 = vst [vmem:[#allocation2 + $0xfe8] sm:$0xff] %v755
    %820 = vst [vmem:[#allocation2 + $0x1030] sm:$0xff] %v756
    %821 = vst [vmem:[#allocation2 + $0x1078] sm:$0xff] %v757
    %822 = vst [vmem:[#allocation2 + $0x10c0] sm:$0xff] %v758
    %823 = vst [vmem:[#allocation2 + $0x1108] sm:$0xff] %v759
    %824 = vst [vmem:[#allocation2 + $0x1150] sm:$0xff] %v760
    %825 = vst [vmem:[#allocation2 + $0x1198] sm:$0xff] %v761
    %826 = vst [vmem:[#allocation2 + $0x11e0] sm:$0xff] %v762
    %s827 = scalar_lea.vmem %s0, 48
    %v828 = vld [vmem:[%s827] sm:$0xff]
    %v829 = vld [vmem:[%s827 + $0x8] sm:$0xff]
    %v830 = vld [vmem:[%s827 + $0x18] sm:$0xff]
    %v831 = vld [vmem:[%s827 + $0x20] sm:$0xff]
    %v832 = vld [vmem:[%s827 + $0x30] sm:$0xff]
    %v833 = vld [vmem:[%s827 + $0x38] sm:$0xff]
    %v834 = vld [vmem:[%s827 + $0x48] sm:$0xff]
    %v835 = vld [vmem:[%s827 + $0x50] sm:$0xff]
    %v836 = vld [vmem:[%s827 + $0x60] sm:$0xff]
    %v837 = vld [vmem:[%s827 + $0x68] sm:$0xff]
    %v838 = vld [vmem:[%s827 + $0x78] sm:$0xff]
    %v839 = vld [vmem:[%s827 + $0x80] sm:$0xff]
    %v840 = vld [vmem:[%s827 + $0x90] sm:$0xff]
    %v841 = vld [vmem:[%s827 + $0x98] sm:$0xff]
    %v842 = vld [vmem:[%s827 + $0xa8] sm:$0xff]
    %v843 = vld [vmem:[%s827 + $0xb0] sm:$0xff]
    %v844 = vld [vmem:[%s827 + $0xc0] sm:$0xff]
    %v845 = vld [vmem:[%s827 + $0xc8] sm:$0xff]
    %v846 = vld [vmem:[%s827 + $0xd8] sm:$0xff]
    %v847 = vld [vmem:[%s827 + $0xe0] sm:$0xff]
    %v848 = vld [vmem:[%s827 + $0xf0] sm:$0xff]
    %v849 = vld [vmem:[%s827 + $0xf8] sm:$0xff]
    %v850 = vld [vmem:[%s827 + $0x108] sm:$0xff]
    %v851 = vld [vmem:[%s827 + $0x110] sm:$0xff]
    %v852 = vld [vmem:[%s827 + $0x120] sm:$0xff]
    %v853 = vld [vmem:[%s827 + $0x128] sm:$0xff]
    %v854 = vld [vmem:[%s827 + $0x138] sm:$0xff]
    %v855 = vld [vmem:[%s827 + $0x140] sm:$0xff]
    %v856 = vld [vmem:[%s827 + $0x150] sm:$0xff]
    %v857 = vld [vmem:[%s827 + $0x158] sm:$0xff]
    %v858 = vld [vmem:[%s827 + $0x168] sm:$0xff]
    %v859 = vld [vmem:[%s827 + $0x170] sm:$0xff]
    %v860 = vld [vmem:[%s827 + $0x1b0] sm:$0xff]
    %v861 = vld [vmem:[%s827 + $0x1b8] sm:$0xff]
    %v862 = vld [vmem:[%s827 + $0x1c8] sm:$0xff]
    %v863 = vld [vmem:[%s827 + $0x1d0] sm:$0xff]
    %v864 = vld [vmem:[%s827 + $0x1e0] sm:$0xff]
    %v865 = vld [vmem:[%s827 + $0x1e8] sm:$0xff]
    %v866 = vld [vmem:[%s827 + $0x1f8] sm:$0xff]
    %v867 = vld [vmem:[%s827 + $0x200] sm:$0xff]
    %v868 = vld [vmem:[%s827 + $0x210] sm:$0xff]
    %v869 = vld [vmem:[%s827 + $0x218] sm:$0xff]
    %v870 = vld [vmem:[%s827 + $0x228] sm:$0xff]
    %v871 = vld [vmem:[%s827 + $0x230] sm:$0xff]
    %v872 = vld [vmem:[%s827 + $0x240] sm:$0xff]
    %v873 = vld [vmem:[%s827 + $0x248] sm:$0xff]
    %v874 = vld [vmem:[%s827 + $0x258] sm:$0xff]
    %v875 = vld [vmem:[%s827 + $0x260] sm:$0xff]
    %v876 = vld [vmem:[%s827 + $0x270] sm:$0xff]
    %v877 = vld [vmem:[%s827 + $0x278] sm:$0xff]
    %v878 = vld [vmem:[%s827 + $0x288] sm:$0xff]
    %v879 = vld [vmem:[%s827 + $0x290] sm:$0xff]
    %v880 = vld [vmem:[%s827 + $0x2a0] sm:$0xff]
    %v881 = vld [vmem:[%s827 + $0x2a8] sm:$0xff]
    %v882 = vld [vmem:[%s827 + $0x2b8] sm:$0xff]
    %v883 = vld [vmem:[%s827 + $0x2c0] sm:$0xff]
    %v884 = vld [vmem:[%s827 + $0x2d0] sm:$0xff]
    %v885 = vld [vmem:[%s827 + $0x2d8] sm:$0xff]
    %v886 = vld [vmem:[%s827 + $0x2e8] sm:$0xff]
    %v887 = vld [vmem:[%s827 + $0x2f0] sm:$0xff]
    %v888 = vld [vmem:[%s827 + $0x300] sm:$0xff]
    %v889 = vld [vmem:[%s827 + $0x308] sm:$0xff]
    %v890 = vld [vmem:[%s827 + $0x318] sm:$0xff]
    %v891 = vld [vmem:[%s827 + $0x320] sm:$0xff]
    %892 = vst [vmem:[#allocation2 + $0x30] sm:$0xff] %v828
    %893 = vst [vmem:[#allocation2 + $0x78] sm:$0xff] %v829
    %894 = vst [vmem:[#allocation2 + $0xc0] sm:$0xff] %v830
    %895 = vst [vmem:[#allocation2 + $0x108] sm:$0xff] %v831
    %896 = vst [vmem:[#allocation2 + $0x150] sm:$0xff] %v832
    %897 = vst [vmem:[#allocation2 + $0x198] sm:$0xff] %v833
    %898 = vst [vmem:[#allocation2 + $0x1e0] sm:$0xff] %v834
    %899 = vst [vmem:[#allocation2 + $0x228] sm:$0xff] %v835
    %900 = vst [vmem:[#allocation2 + $0x270] sm:$0xff] %v836
    %901 = vst [vmem:[#allocation2 + $0x2b8] sm:$0xff] %v837
    %902 = vst [vmem:[#allocation2 + $0x300] sm:$0xff] %v838
    %903 = vst [vmem:[#allocation2 + $0x348] sm:$0xff] %v839
    %904 = vst [vmem:[#allocation2 + $0x390] sm:$0xff] %v840
    %905 = vst [vmem:[#allocation2 + $0x3d8] sm:$0xff] %v841
    %906 = vst [vmem:[#allocation2 + $0x420] sm:$0xff] %v842
    %907 = vst [vmem:[#allocation2 + $0x468] sm:$0xff] %v843
    %908 = vst [vmem:[#allocation2 + $0x4b0] sm:$0xff] %v844
    %909 = vst [vmem:[#allocation2 + $0x4f8] sm:$0xff] %v845
    %910 = vst [vmem:[#allocation2 + $0x540] sm:$0xff] %v846
    %911 = vst [vmem:[#allocation2 + $0x588] sm:$0xff] %v847
    %912 = vst [vmem:[#allocation2 + $0x5d0] sm:$0xff] %v848
    %913 = vst [vmem:[#allocation2 + $0x618] sm:$0xff] %v849
    %914 = vst [vmem:[#allocation2 + $0x660] sm:$0xff] %v850
    %915 = vst [vmem:[#allocation2 + $0x6a8] sm:$0xff] %v851
    %916 = vst [vmem:[#allocation2 + $0x6f0] sm:$0xff] %v852
    %917 = vst [vmem:[#allocation2 + $0x738] sm:$0xff] %v853
    %918 = vst [vmem:[#allocation2 + $0x780] sm:$0xff] %v854
    %919 = vst [vmem:[#allocation2 + $0x7c8] sm:$0xff] %v855
    %920 = vst [vmem:[#allocation2 + $0x810] sm:$0xff] %v856
    %921 = vst [vmem:[#allocation2 + $0x858] sm:$0xff] %v857
    %922 = vst [vmem:[#allocation2 + $0x8a0] sm:$0xff] %v858
    %923 = vst [vmem:[#allocation2 + $0x8e8] sm:$0xff] %v859
    %924 = vst [vmem:[#allocation2 + $0x930] sm:$0xff] %v860
    %925 = vst [vmem:[#allocation2 + $0x978] sm:$0xff] %v861
    %926 = vst [vmem:[#allocation2 + $0x9c0] sm:$0xff] %v862
    %927 = vst [vmem:[#allocation2 + $0xa08] sm:$0xff] %v863
    %928 = vst [vmem:[#allocation2 + $0xa50] sm:$0xff] %v864
    %929 = vst [vmem:[#allocation2 + $0xa98] sm:$0xff] %v865
    %930 = vst [vmem:[#allocation2 + $0xae0] sm:$0xff] %v866
    %931 = vst [vmem:[#allocation2 + $0xb28] sm:$0xff] %v867
    %932 = vst [vmem:[#allocation2 + $0xb70] sm:$0xff] %v868
    %933 = vst [vmem:[#allocation2 + $0xbb8] sm:$0xff] %v869
    %934 = vst [vmem:[#allocation2 + $0xc00] sm:$0xff] %v870
    %935 = vst [vmem:[#allocation2 + $0xc48] sm:$0xff] %v871
    %936 = vst [vmem:[#allocation2 + $0xc90] sm:$0xff] %v872
    %937 = vst [vmem:[#allocation2 + $0xcd8] sm:$0xff] %v873
    %938 = vst [vmem:[#allocation2 + $0xd20] sm:$0xff] %v874
    %939 = vst [vmem:[#allocation2 + $0xd68] sm:$0xff] %v875
    %940 = vst [vmem:[#allocation2 + $0xdb0] sm:$0xff] %v876
    %941 = vst [vmem:[#allocation2 + $0xdf8] sm:$0xff] %v877
    %942 = vst [vmem:[#allocation2 + $0xe40] sm:$0xff] %v878
    %943 = vst [vmem:[#allocation2 + $0xe88] sm:$0xff] %v879
    %944 = vst [vmem:[#allocation2 + $0xed0] sm:$0xff] %v880
    %945 = vst [vmem:[#allocation2 + $0xf18] sm:$0xff] %v881
    %946 = vst [vmem:[#allocation2 + $0xf60] sm:$0xff] %v882
    %947 = vst [vmem:[#allocation2 + $0xfa8] sm:$0xff] %v883
    %948 = vst [vmem:[#allocation2 + $0xff0] sm:$0xff] %v884
    %949 = vst [vmem:[#allocation2 + $0x1038] sm:$0xff] %v885
    %950 = vst [vmem:[#allocation2 + $0x1080] sm:$0xff] %v886
    %951 = vst [vmem:[#allocation2 + $0x10c8] sm:$0xff] %v887
    %952 = vst [vmem:[#allocation2 + $0x1110] sm:$0xff] %v888
    %953 = vst [vmem:[#allocation2 + $0x1158] sm:$0xff] %v889
    %954 = vst [vmem:[#allocation2 + $0x11a0] sm:$0xff] %v890
    %955 = vst [vmem:[#allocation2 + $0x11e8] sm:$0xff] %v891
    %v956 = vld [vmem:[%s827 + $0x1] sm:$0xff]
    %v957 = vld [vmem:[%s827 + $0x9] sm:$0xff]
    %v958 = vld [vmem:[%s827 + $0x19] sm:$0xff]
    %v959 = vld [vmem:[%s827 + $0x21] sm:$0xff]
    %v960 = vld [vmem:[%s827 + $0x31] sm:$0xff]
    %v961 = vld [vmem:[%s827 + $0x39] sm:$0xff]
    %v962 = vld [vmem:[%s827 + $0x49] sm:$0xff]
    %v963 = vld [vmem:[%s827 + $0x51] sm:$0xff]
    %v964 = vld [vmem:[%s827 + $0x61] sm:$0xff]
    %v965 = vld [vmem:[%s827 + $0x69] sm:$0xff]
    %v966 = vld [vmem:[%s827 + $0x79] sm:$0xff]
    %v967 = vld [vmem:[%s827 + $0x81] sm:$0xff]
    %v968 = vld [vmem:[%s827 + $0x91] sm:$0xff]
    %v969 = vld [vmem:[%s827 + $0x99] sm:$0xff]
    %v970 = vld [vmem:[%s827 + $0xa9] sm:$0xff]
    %v971 = vld [vmem:[%s827 + $0xb1] sm:$0xff]
    %v972 = vld [vmem:[%s827 + $0xc1] sm:$0xff]
    %v973 = vld [vmem:[%s827 + $0xc9] sm:$0xff]
    %v974 = vld [vmem:[%s827 + $0xd9] sm:$0xff]
    %v975 = vld [vmem:[%s827 + $0xe1] sm:$0xff]
    %v976 = vld [vmem:[%s827 + $0xf1] sm:$0xff]
    %v977 = vld [vmem:[%s827 + $0xf9] sm:$0xff]
    %v978 = vld [vmem:[%s827 + $0x109] sm:$0xff]
    %v979 = vld [vmem:[%s827 + $0x111] sm:$0xff]
    %v980 = vld [vmem:[%s827 + $0x121] sm:$0xff]
    %v981 = vld [vmem:[%s827 + $0x129] sm:$0xff]
    %v982 = vld [vmem:[%s827 + $0x139] sm:$0xff]
    %v983 = vld [vmem:[%s827 + $0x141] sm:$0xff]
    %v984 = vld [vmem:[%s827 + $0x151] sm:$0xff]
    %v985 = vld [vmem:[%s827 + $0x159] sm:$0xff]
    %v986 = vld [vmem:[%s827 + $0x169] sm:$0xff]
    %v987 = vld [vmem:[%s827 + $0x171] sm:$0xff]
    %v988 = vld [vmem:[%s827 + $0x1b1] sm:$0xff]
    %v989 = vld [vmem:[%s827 + $0x1b9] sm:$0xff]
    %v990 = vld [vmem:[%s827 + $0x1c9] sm:$0xff]
    %v991 = vld [vmem:[%s827 + $0x1d1] sm:$0xff]
    %v992 = vld [vmem:[%s827 + $0x1e1] sm:$0xff]
    %v993 = vld [vmem:[%s827 + $0x1e9] sm:$0xff]
    %v994 = vld [vmem:[%s827 + $0x1f9] sm:$0xff]
    %v995 = vld [vmem:[%s827 + $0x201] sm:$0xff]
    %v996 = vld [vmem:[%s827 + $0x211] sm:$0xff]
    %v997 = vld [vmem:[%s827 + $0x219] sm:$0xff]
    %v998 = vld [vmem:[%s827 + $0x229] sm:$0xff]
    %v999 = vld [vmem:[%s827 + $0x231] sm:$0xff]
    %v1000 = vld [vmem:[%s827 + $0x241] sm:$0xff]
    %v1001 = vld [vmem:[%s827 + $0x249] sm:$0xff]
    %v1002 = vld [vmem:[%s827 + $0x259] sm:$0xff]
    %v1003 = vld [vmem:[%s827 + $0x261] sm:$0xff]
    %v1004 = vld [vmem:[%s827 + $0x271] sm:$0xff]
    %v1005 = vld [vmem:[%s827 + $0x279] sm:$0xff]
    %v1006 = vld [vmem:[%s827 + $0x289] sm:$0xff]
    %v1007 = vld [vmem:[%s827 + $0x291] sm:$0xff]
    %v1008 = vld [vmem:[%s827 + $0x2a1] sm:$0xff]
    %v1009 = vld [vmem:[%s827 + $0x2a9] sm:$0xff]
    %v1010 = vld [vmem:[%s827 + $0x2b9] sm:$0xff]
    %v1011 = vld [vmem:[%s827 + $0x2c1] sm:$0xff]
    %v1012 = vld [vmem:[%s827 + $0x2d1] sm:$0xff]
    %v1013 = vld [vmem:[%s827 + $0x2d9] sm:$0xff]
    %v1014 = vld [vmem:[%s827 + $0x2e9] sm:$0xff]
    %v1015 = vld [vmem:[%s827 + $0x2f1] sm:$0xff]
    %v1016 = vld [vmem:[%s827 + $0x301] sm:$0xff]
    %v1017 = vld [vmem:[%s827 + $0x309] sm:$0xff]
    %v1018 = vld [vmem:[%s827 + $0x319] sm:$0xff]
    %v1019 = vld [vmem:[%s827 + $0x321] sm:$0xff]
    %1020 = vst [vmem:[#allocation2 + $0x38] sm:$0xff] %v956
    %1021 = vst [vmem:[#allocation2 + $0x80] sm:$0xff] %v957
    %1022 = vst [vmem:[#allocation2 + $0xc8] sm:$0xff] %v958
    %1023 = vst [vmem:[#allocation2 + $0x110] sm:$0xff] %v959
    %1024 = vst [vmem:[#allocation2 + $0x158] sm:$0xff] %v960
    %1025 = vst [vmem:[#allocation2 + $0x1a0] sm:$0xff] %v961
    %1026 = vst [vmem:[#allocation2 + $0x1e8] sm:$0xff] %v962
    %1027 = vst [vmem:[#allocation2 + $0x230] sm:$0xff] %v963
    %1028 = vst [vmem:[#allocation2 + $0x278] sm:$0xff] %v964
    %1029 = vst [vmem:[#allocation2 + $0x2c0] sm:$0xff] %v965
    %1030 = vst [vmem:[#allocation2 + $0x308] sm:$0xff] %v966
    %1031 = vst [vmem:[#allocation2 + $0x350] sm:$0xff] %v967
    %1032 = vst [vmem:[#allocation2 + $0x398] sm:$0xff] %v968
    %1033 = vst [vmem:[#allocation2 + $0x3e0] sm:$0xff] %v969
    %1034 = vst [vmem:[#allocation2 + $0x428] sm:$0xff] %v970
    %1035 = vst [vmem:[#allocation2 + $0x470] sm:$0xff] %v971
    %1036 = vst [vmem:[#allocation2 + $0x4b8] sm:$0xff] %v972
    %1037 = vst [vmem:[#allocation2 + $0x500] sm:$0xff] %v973
    %1038 = vst [vmem:[#allocation2 + $0x548] sm:$0xff] %v974
    %1039 = vst [vmem:[#allocation2 + $0x590] sm:$0xff] %v975
    %1040 = vst [vmem:[#allocation2 + $0x5d8] sm:$0xff] %v976
    %1041 = vst [vmem:[#allocation2 + $0x620] sm:$0xff] %v977
    %1042 = vst [vmem:[#allocation2 + $0x668] sm:$0xff] %v978
    %1043 = vst [vmem:[#allocation2 + $0x6b0] sm:$0xff] %v979
    %1044 = vst [vmem:[#allocation2 + $0x6f8] sm:$0xff] %v980
    %1045 = vst [vmem:[#allocation2 + $0x740] sm:$0xff] %v981
    %1046 = vst [vmem:[#allocation2 + $0x788] sm:$0xff] %v982
    %1047 = vst [vmem:[#allocation2 + $0x7d0] sm:$0xff] %v983
    %1048 = vst [vmem:[#allocation2 + $0x818] sm:$0xff] %v984
    %1049 = vst [vmem:[#allocation2 + $0x860] sm:$0xff] %v985
    %1050 = vst [vmem:[#allocation2 + $0x8a8] sm:$0xff] %v986
    %1051 = vst [vmem:[#allocation2 + $0x8f0] sm:$0xff] %v987
    %1052 = vst [vmem:[#allocation2 + $0x938] sm:$0xff] %v988
    %1053 = vst [vmem:[#allocation2 + $0x980] sm:$0xff] %v989
    %1054 = vst [vmem:[#allocation2 + $0x9c8] sm:$0xff] %v990
    %1055 = vst [vmem:[#allocation2 + $0xa10] sm:$0xff] %v991
    %1056 = vst [vmem:[#allocation2 + $0xa58] sm:$0xff] %v992
    %1057 = vst [vmem:[#allocation2 + $0xaa0] sm:$0xff] %v993
    %1058 = vst [vmem:[#allocation2 + $0xae8] sm:$0xff] %v994
    %1059 = vst [vmem:[#allocation2 + $0xb30] sm:$0xff] %v995
    %1060 = vst [vmem:[#allocation2 + $0xb78] sm:$0xff] %v996
    %1061 = vst [vmem:[#allocation2 + $0xbc0] sm:$0xff] %v997
    %1062 = vst [vmem:[#allocation2 + $0xc08] sm:$0xff] %v998
    %1063 = vst [vmem:[#allocation2 + $0xc50] sm:$0xff] %v999
    %1064 = vst [vmem:[#allocation2 + $0xc98] sm:$0xff] %v1000
    %1065 = vst [vmem:[#allocation2 + $0xce0] sm:$0xff] %v1001
    %1066 = vst [vmem:[#allocation2 + $0xd28] sm:$0xff] %v1002
    %1067 = vst [vmem:[#allocation2 + $0xd70] sm:$0xff] %v1003
    %1068 = vst [vmem:[#allocation2 + $0xdb8] sm:$0xff] %v1004
    %1069 = vst [vmem:[#allocation2 + $0xe00] sm:$0xff] %v1005
    %1070 = vst [vmem:[#allocation2 + $0xe48] sm:$0xff] %v1006
    %1071 = vst [vmem:[#allocation2 + $0xe90] sm:$0xff] %v1007
    %1072 = vst [vmem:[#allocation2 + $0xed8] sm:$0xff] %v1008
    %1073 = vst [vmem:[#allocation2 + $0xf20] sm:$0xff] %v1009
    %1074 = vst [vmem:[#allocation2 + $0xf68] sm:$0xff] %v1010
    %1075 = vst [vmem:[#allocation2 + $0xfb0] sm:$0xff] %v1011
    %1076 = vst [vmem:[#allocation2 + $0xff8] sm:$0xff] %v1012
    %1077 = vst [vmem:[#allocation2 + $0x1040] sm:$0xff] %v1013
    %1078 = vst [vmem:[#allocation2 + $0x1088] sm:$0xff] %v1014
    %1079 = vst [vmem:[#allocation2 + $0x10d0] sm:$0xff] %v1015
    %1080 = vst [vmem:[#allocation2 + $0x1118] sm:$0xff] %v1016
    %1081 = vst [vmem:[#allocation2 + $0x1160] sm:$0xff] %v1017
    %1082 = vst [vmem:[#allocation2 + $0x11a8] sm:$0xff] %v1018
    %1083 = vst [vmem:[#allocation2 + $0x11f0] sm:$0xff] %v1019
    %v1084 = vld [vmem:[%s827 + $0x2] sm:$0xff]
    %v1085 = vld [vmem:[%s827 + $0xa] sm:$0xff]
    %v1086 = vld [vmem:[%s827 + $0x1a] sm:$0xff]
    %v1087 = vld [vmem:[%s827 + $0x22] sm:$0xff]
    %v1088 = vld [vmem:[%s827 + $0x32] sm:$0xff]
    %v1089 = vld [vmem:[%s827 + $0x3a] sm:$0xff]
    %v1090 = vld [vmem:[%s827 + $0x4a] sm:$0xff]
    %v1091 = vld [vmem:[%s827 + $0x52] sm:$0xff]
    %v1092 = vld [vmem:[%s827 + $0x62] sm:$0xff]
    %v1093 = vld [vmem:[%s827 + $0x6a] sm:$0xff]
    %v1094 = vld [vmem:[%s827 + $0x7a] sm:$0xff]
    %v1095 = vld [vmem:[%s827 + $0x82] sm:$0xff]
    %v1096 = vld [vmem:[%s827 + $0x92] sm:$0xff]
    %v1097 = vld [vmem:[%s827 + $0x9a] sm:$0xff]
    %v1098 = vld [vmem:[%s827 + $0xaa] sm:$0xff]
    %v1099 = vld [vmem:[%s827 + $0xb2] sm:$0xff]
    %v1100 = vld [vmem:[%s827 + $0xc2] sm:$0xff]
    %v1101 = vld [vmem:[%s827 + $0xca] sm:$0xff]
    %v1102 = vld [vmem:[%s827 + $0xda] sm:$0xff]
    %v1103 = vld [vmem:[%s827 + $0xe2] sm:$0xff]
    %v1104 = vld [vmem:[%s827 + $0xf2] sm:$0xff]
    %v1105 = vld [vmem:[%s827 + $0xfa] sm:$0xff]
    %v1106 = vld [vmem:[%s827 + $0x10a] sm:$0xff]
    %v1107 = vld [vmem:[%s827 + $0x112] sm:$0xff]
    %v1108 = vld [vmem:[%s827 + $0x122] sm:$0xff]
    %v1109 = vld [vmem:[%s827 + $0x12a] sm:$0xff]
    %v1110 = vld [vmem:[%s827 + $0x13a] sm:$0xff]
    %v1111 = vld [vmem:[%s827 + $0x142] sm:$0xff]
    %v1112 = vld [vmem:[%s827 + $0x152] sm:$0xff]
    %v1113 = vld [vmem:[%s827 + $0x15a] sm:$0xff]
    %v1114 = vld [vmem:[%s827 + $0x16a] sm:$0xff]
    %v1115 = vld [vmem:[%s827 + $0x172] sm:$0xff]
    %v1116 = vld [vmem:[%s827 + $0x1b2] sm:$0xff]
    %v1117 = vld [vmem:[%s827 + $0x1ba] sm:$0xff]
    %v1118 = vld [vmem:[%s827 + $0x1ca] sm:$0xff]
    %v1119 = vld [vmem:[%s827 + $0x1d2] sm:$0xff]
    %v1120 = vld [vmem:[%s827 + $0x1e2] sm:$0xff]
    %v1121 = vld [vmem:[%s827 + $0x1ea] sm:$0xff]
    %v1122 = vld [vmem:[%s827 + $0x1fa] sm:$0xff]
    %v1123 = vld [vmem:[%s827 + $0x202] sm:$0xff]
    %v1124 = vld [vmem:[%s827 + $0x212] sm:$0xff]
    %v1125 = vld [vmem:[%s827 + $0x21a] sm:$0xff]
    %v1126 = vld [vmem:[%s827 + $0x22a] sm:$0xff]
    %v1127 = vld [vmem:[%s827 + $0x232] sm:$0xff]
    %v1128 = vld [vmem:[%s827 + $0x242] sm:$0xff]
    %v1129 = vld [vmem:[%s827 + $0x24a] sm:$0xff]
    %v1130 = vld [vmem:[%s827 + $0x25a] sm:$0xff]
    %v1131 = vld [vmem:[%s827 + $0x262] sm:$0xff]
    %v1132 = vld [vmem:[%s827 + $0x272] sm:$0xff]
    %v1133 = vld [vmem:[%s827 + $0x27a] sm:$0xff]
    %v1134 = vld [vmem:[%s827 + $0x28a] sm:$0xff]
    %v1135 = vld [vmem:[%s827 + $0x292] sm:$0xff]
    %v1136 = vld [vmem:[%s827 + $0x2a2] sm:$0xff]
    %v1137 = vld [vmem:[%s827 + $0x2aa] sm:$0xff]
    %v1138 = vld [vmem:[%s827 + $0x2ba] sm:$0xff]
    %v1139 = vld [vmem:[%s827 + $0x2c2] sm:$0xff]
    %v1140 = vld [vmem:[%s827 + $0x2d2] sm:$0xff]
    %v1141 = vld [vmem:[%s827 + $0x2da] sm:$0xff]
    %v1142 = vld [vmem:[%s827 + $0x2ea] sm:$0xff]
    %v1143 = vld [vmem:[%s827 + $0x2f2] sm:$0xff]
    %v1144 = vld [vmem:[%s827 + $0x302] sm:$0xff]
    %v1145 = vld [vmem:[%s827 + $0x30a] sm:$0xff]
    %v1146 = vld [vmem:[%s827 + $0x31a] sm:$0xff]
    %v1147 = vld [vmem:[%s827 + $0x322] sm:$0xff]
    %1148 = vst [vmem:[#allocation2 + $0x40] sm:$0xff] %v1084
    %1149 = vst [vmem:[#allocation2 + $0x88] sm:$0xff] %v1085
    %1150 = vst [vmem:[#allocation2 + $0xd0] sm:$0xff] %v1086
    %1151 = vst [vmem:[#allocation2 + $0x118] sm:$0xff] %v1087
    %1152 = vst [vmem:[#allocation2 + $0x160] sm:$0xff] %v1088
    %1153 = vst [vmem:[#allocation2 + $0x1a8] sm:$0xff] %v1089
    %1154 = vst [vmem:[#allocation2 + $0x1f0] sm:$0xff] %v1090
    %1155 = vst [vmem:[#allocation2 + $0x238] sm:$0xff] %v1091
    %1156 = vst [vmem:[#allocation2 + $0x280] sm:$0xff] %v1092
    %1157 = vst [vmem:[#allocation2 + $0x2c8] sm:$0xff] %v1093
    %1158 = vst [vmem:[#allocation2 + $0x310] sm:$0xff] %v1094
    %1159 = vst [vmem:[#allocation2 + $0x358] sm:$0xff] %v1095
    %1160 = vst [vmem:[#allocation2 + $0x3a0] sm:$0xff] %v1096
    %1161 = vst [vmem:[#allocation2 + $0x3e8] sm:$0xff] %v1097
    %1162 = vst [vmem:[#allocation2 + $0x430] sm:$0xff] %v1098
    %1163 = vst [vmem:[#allocation2 + $0x478] sm:$0xff] %v1099
    %1164 = vst [vmem:[#allocation2 + $0x4c0] sm:$0xff] %v1100
    %1165 = vst [vmem:[#allocation2 + $0x508] sm:$0xff] %v1101
    %1166 = vst [vmem:[#allocation2 + $0x550] sm:$0xff] %v1102
    %1167 = vst [vmem:[#allocation2 + $0x598] sm:$0xff] %v1103
    %1168 = vst [vmem:[#allocation2 + $0x5e0] sm:$0xff] %v1104
    %1169 = vst [vmem:[#allocation2 + $0x628] sm:$0xff] %v1105
    %1170 = vst [vmem:[#allocation2 + $0x670] sm:$0xff] %v1106
    %1171 = vst [vmem:[#allocation2 + $0x6b8] sm:$0xff] %v1107
    %1172 = vst [vmem:[#allocation2 + $0x700] sm:$0xff] %v1108
    %1173 = vst [vmem:[#allocation2 + $0x748] sm:$0xff] %v1109
    %1174 = vst [vmem:[#allocation2 + $0x790] sm:$0xff] %v1110
    %1175 = vst [vmem:[#allocation2 + $0x7d8] sm:$0xff] %v1111
    %1176 = vst [vmem:[#allocation2 + $0x820] sm:$0xff] %v1112
    %1177 = vst [vmem:[#allocation2 + $0x868] sm:$0xff] %v1113
    %1178 = vst [vmem:[#allocation2 + $0x8b0] sm:$0xff] %v1114
    %1179 = vst [vmem:[#allocation2 + $0x8f8] sm:$0xff] %v1115
    %1180 = vst [vmem:[#allocation2 + $0x940] sm:$0xff] %v1116
    %1181 = vst [vmem:[#allocation2 + $0x988] sm:$0xff] %v1117
    %1182 = vst [vmem:[#allocation2 + $0x9d0] sm:$0xff] %v1118
    %1183 = vst [vmem:[#allocation2 + $0xa18] sm:$0xff] %v1119
    %1184 = vst [vmem:[#allocation2 + $0xa60] sm:$0xff] %v1120
    %1185 = vst [vmem:[#allocation2 + $0xaa8] sm:$0xff] %v1121
    %1186 = vst [vmem:[#allocation2 + $0xaf0] sm:$0xff] %v1122
    %1187 = vst [vmem:[#allocation2 + $0xb38] sm:$0xff] %v1123
    %1188 = vst [vmem:[#allocation2 + $0xb80] sm:$0xff] %v1124
    %1189 = vst [vmem:[#allocation2 + $0xbc8] sm:$0xff] %v1125
    %1190 = vst [vmem:[#allocation2 + $0xc10] sm:$0xff] %v1126
    %1191 = vst [vmem:[#allocation2 + $0xc58] sm:$0xff] %v1127
    %1192 = vst [vmem:[#allocation2 + $0xca0] sm:$0xff] %v1128
    %1193 = vst [vmem:[#allocation2 + $0xce8] sm:$0xff] %v1129
    %1194 = vst [vmem:[#allocation2 + $0xd30] sm:$0xff] %v1130
    %1195 = vst [vmem:[#allocation2 + $0xd78] sm:$0xff] %v1131
    %1196 = vst [vmem:[#allocation2 + $0xdc0] sm:$0xff] %v1132
    %1197 = vst [vmem:[#allocation2 + $0xe08] sm:$0xff] %v1133
    %1198 = vst [vmem:[#allocation2 + $0xe50] sm:$0xff] %v1134
    %1199 = vst [vmem:[#allocation2 + $0xe98] sm:$0xff] %v1135
    %1200 = vst [vmem:[#allocation2 + $0xee0] sm:$0xff] %v1136
    %1201 = vst [vmem:[#allocation2 + $0xf28] sm:$0xff] %v1137
    %1202 = vst [vmem:[#allocation2 + $0xf70] sm:$0xff] %v1138
    %1203 = vst [vmem:[#allocation2 + $0xfb8] sm:$0xff] %v1139
    %1204 = vst [vmem:[#allocation2 + $0x1000] sm:$0xff] %v1140
    %1205 = vst [vmem:[#allocation2 + $0x1048] sm:$0xff] %v1141
    %1206 = vst [vmem:[#allocation2 + $0x1090] sm:$0xff] %v1142
    %1207 = vst [vmem:[#allocation2 + $0x10d8] sm:$0xff] %v1143
    %1208 = vst [vmem:[#allocation2 + $0x1120] sm:$0xff] %v1144
    %1209 = vst [vmem:[#allocation2 + $0x1168] sm:$0xff] %v1145
    %1210 = vst [vmem:[#allocation2 + $0x11b0] sm:$0xff] %v1146
    %1211 = vst [vmem:[#allocation2 + $0x11f8] sm:$0xff] %v1147
    %v1212 = vld [vmem:[#allocation2] sm:$0xff]
    %v1213 = vld [vmem:[#allocation2 + $0x8] sm:$0xff]
    %v1214 = vld [vmem:[#allocation2 + $0x10] sm:$0xff]
    %v1215 = vld [vmem:[#allocation2 + $0x18] sm:$0xff]
    %v1216 = vld [vmem:[#allocation2 + $0x20] sm:$0xff]
    %v1217 = vld [vmem:[#allocation2 + $0x28] sm:$0xff]
    %v1218 = vld [vmem:[#allocation2 + $0x30] sm:$0xff]
    %v1219 = vld [vmem:[#allocation2 + $0x38] sm:$0xff]
    %v1220 = vld [vmem:[#allocation2 + $0x40] sm:$0xff]
    %v1221 = vld [vmem:[#allocation2 + $0x48] sm:$0xff]
    %v1222 = vld [vmem:[#allocation2 + $0x50] sm:$0xff]
    %v1223 = vld [vmem:[#allocation2 + $0x58] sm:$0xff]
    %v1224 = vld [vmem:[#allocation2 + $0x60] sm:$0xff]
    %v1225 = vld [vmem:[#allocation2 + $0x68] sm:$0xff]
    %v1226 = vld [vmem:[#allocation2 + $0x70] sm:$0xff]
    %v1227 = vld [vmem:[#allocation2 + $0x78] sm:$0xff]
    %v1228 = vld [vmem:[#allocation2 + $0x80] sm:$0xff]
    %v1229 = vld [vmem:[#allocation2 + $0x88] sm:$0xff]
    %v1230 = vld [vmem:[#allocation2 + $0x90] sm:$0xff]
    %v1231 = vld [vmem:[#allocation2 + $0x98] sm:$0xff]
    %v1232 = vld [vmem:[#allocation2 + $0xa0] sm:$0xff]
    %v1233 = vld [vmem:[#allocation2 + $0xa8] sm:$0xff]
    %v1234 = vld [vmem:[#allocation2 + $0xb0] sm:$0xff]
    %v1235 = vld [vmem:[#allocation2 + $0xb8] sm:$0xff]
    %v1236 = vld [vmem:[#allocation2 + $0xc0] sm:$0xff]
    %v1237 = vld [vmem:[#allocation2 + $0xc8] sm:$0xff]
    %v1238 = vld [vmem:[#allocation2 + $0xd0] sm:$0xff]
    %v1239 = vld [vmem:[#allocation2 + $0xd8] sm:$0xff]
    %v1240 = vld [vmem:[#allocation2 + $0xe0] sm:$0xff]
    %v1241 = vld [vmem:[#allocation2 + $0xe8] sm:$0xff]
    %v1242 = vld [vmem:[#allocation2 + $0xf0] sm:$0xff]
    %v1243 = vld [vmem:[#allocation2 + $0xf8] sm:$0xff]
    %v1244 = vld [vmem:[#allocation2 + $0x100] sm:$0xff]
    %v1245 = vld [vmem:[#allocation2 + $0x108] sm:$0xff]
    %v1246 = vld [vmem:[#allocation2 + $0x110] sm:$0xff]
    %v1247 = vld [vmem:[#allocation2 + $0x118] sm:$0xff]
    %v1248 = vld [vmem:[#allocation2 + $0x120] sm:$0xff]
    %v1249 = vld [vmem:[#allocation2 + $0x128] sm:$0xff]
    %v1250 = vld [vmem:[#allocation2 + $0x130] sm:$0xff]
    %v1251 = vld [vmem:[#allocation2 + $0x138] sm:$0xff]
    %v1252 = vld [vmem:[#allocation2 + $0x140] sm:$0xff]
    %v1253 = vld [vmem:[#allocation2 + $0x148] sm:$0xff]
    %v1254 = vld [vmem:[#allocation2 + $0x150] sm:$0xff]
    %v1255 = vld [vmem:[#allocation2 + $0x158] sm:$0xff]
    %v1256 = vld [vmem:[#allocation2 + $0x160] sm:$0xff]
    %v1257 = vld [vmem:[#allocation2 + $0x168] sm:$0xff]
    %v1258 = vld [vmem:[#allocation2 + $0x170] sm:$0xff]
    %v1259 = vld [vmem:[#allocation2 + $0x178] sm:$0xff]
    %v1260 = vld [vmem:[#allocation2 + $0x180] sm:$0xff]
    %v1261 = vld [vmem:[#allocation2 + $0x188] sm:$0xff]
    %v1262 = vld [vmem:[#allocation2 + $0x190] sm:$0xff]
    %v1263 = vld [vmem:[#allocation2 + $0x198] sm:$0xff]
    %v1264 = vld [vmem:[#allocation2 + $0x1a0] sm:$0xff]
    %v1265 = vld [vmem:[#allocation2 + $0x1a8] sm:$0xff]
    %v1266 = vld [vmem:[#allocation2 + $0x1b0] sm:$0xff]
    %v1267 = vld [vmem:[#allocation2 + $0x1b8] sm:$0xff]
    %v1268 = vld [vmem:[#allocation2 + $0x1c0] sm:$0xff]
    %v1269 = vld [vmem:[#allocation2 + $0x1c8] sm:$0xff]
    %v1270 = vld [vmem:[#allocation2 + $0x1d0] sm:$0xff]
    %v1271 = vld [vmem:[#allocation2 + $0x1d8] sm:$0xff]
    %v1272 = vld [vmem:[#allocation2 + $0x1e0] sm:$0xff]
    %v1273 = vld [vmem:[#allocation2 + $0x1e8] sm:$0xff]
    %v1274 = vld [vmem:[#allocation2 + $0x1f0] sm:$0xff]
    %v1275 = vld [vmem:[#allocation2 + $0x1f8] sm:$0xff]
    %v1276 = vld [vmem:[#allocation2 + $0x200] sm:$0xff]
    %v1277 = vld [vmem:[#allocation2 + $0x208] sm:$0xff]
    %v1278 = vld [vmem:[#allocation2 + $0x210] sm:$0xff]
    %v1279 = vld [vmem:[#allocation2 + $0x218] sm:$0xff]
    %v1280 = vld [vmem:[#allocation2 + $0x220] sm:$0xff]
    %v1281 = vld [vmem:[#allocation2 + $0x228] sm:$0xff]
    %v1282 = vld [vmem:[#allocation2 + $0x230] sm:$0xff]
    %v1283 = vld [vmem:[#allocation2 + $0x238] sm:$0xff]
    %v1284 = vld [vmem:[#allocation2 + $0x240] sm:$0xff]
    %v1285 = vld [vmem:[#allocation2 + $0x248] sm:$0xff]
    %v1286 = vld [vmem:[#allocation2 + $0x250] sm:$0xff]
    %v1287 = vld [vmem:[#allocation2 + $0x258] sm:$0xff]
    %v1288 = vld [vmem:[#allocation2 + $0x260] sm:$0xff]
    %v1289 = vld [vmem:[#allocation2 + $0x268] sm:$0xff]
    %v1290 = vld [vmem:[#allocation2 + $0x270] sm:$0xff]
    %v1291 = vld [vmem:[#allocation2 + $0x278] sm:$0xff]
    %v1292 = vld [vmem:[#allocation2 + $0x280] sm:$0xff]
    %v1293 = vld [vmem:[#allocation2 + $0x288] sm:$0xff]
    %v1294 = vld [vmem:[#allocation2 + $0x290] sm:$0xff]
    %v1295 = vld [vmem:[#allocation2 + $0x298] sm:$0xff]
    %v1296 = vld [vmem:[#allocation2 + $0x2a0] sm:$0xff]
    %v1297 = vld [vmem:[#allocation2 + $0x2a8] sm:$0xff]
    %v1298 = vld [vmem:[#allocation2 + $0x2b0] sm:$0xff]
    %v1299 = vld [vmem:[#allocation2 + $0x2b8] sm:$0xff]
    %v1300 = vld [vmem:[#allocation2 + $0x2c0] sm:$0xff]
    %v1301 = vld [vmem:[#allocation2 + $0x2c8] sm:$0xff]
    %v1302 = vld [vmem:[#allocation2 + $0x2d0] sm:$0xff]
    %v1303 = vld [vmem:[#allocation2 + $0x2d8] sm:$0xff]
    %v1304 = vld [vmem:[#allocation2 + $0x2e0] sm:$0xff]
    %v1305 = vld [vmem:[#allocation2 + $0x2e8] sm:$0xff]
    %v1306 = vld [vmem:[#allocation2 + $0x2f0] sm:$0xff]
    %v1307 = vld [vmem:[#allocation2 + $0x2f8] sm:$0xff]
    %v1308 = vld [vmem:[#allocation2 + $0x300] sm:$0xff]
    %v1309 = vld [vmem:[#allocation2 + $0x308] sm:$0xff]
    %v1310 = vld [vmem:[#allocation2 + $0x310] sm:$0xff]
    %v1311 = vld [vmem:[#allocation2 + $0x318] sm:$0xff]
    %v1312 = vld [vmem:[#allocation2 + $0x320] sm:$0xff]
    %v1313 = vld [vmem:[#allocation2 + $0x328] sm:$0xff]
    %v1314 = vld [vmem:[#allocation2 + $0x330] sm:$0xff]
    %v1315 = vld [vmem:[#allocation2 + $0x338] sm:$0xff]
    %v1316 = vld [vmem:[#allocation2 + $0x340] sm:$0xff]
    %v1317 = vld [vmem:[#allocation2 + $0x348] sm:$0xff]
    %v1318 = vld [vmem:[#allocation2 + $0x350] sm:$0xff]
    %v1319 = vld [vmem:[#allocation2 + $0x358] sm:$0xff]
    %v1320 = vld [vmem:[#allocation2 + $0x360] sm:$0xff]
    %v1321 = vld [vmem:[#allocation2 + $0x368] sm:$0xff]
    %v1322 = vld [vmem:[#allocation2 + $0x370] sm:$0xff]
    %v1323 = vld [vmem:[#allocation2 + $0x378] sm:$0xff]
    %v1324 = vld [vmem:[#allocation2 + $0x380] sm:$0xff]
    %v1325 = vld [vmem:[#allocation2 + $0x388] sm:$0xff]
    %v1326 = vld [vmem:[#allocation2 + $0x390] sm:$0xff]
    %v1327 = vld [vmem:[#allocation2 + $0x398] sm:$0xff]
    %v1328 = vld [vmem:[#allocation2 + $0x3a0] sm:$0xff]
    %v1329 = vld [vmem:[#allocation2 + $0x3a8] sm:$0xff]
    %v1330 = vld [vmem:[#allocation2 + $0x3b0] sm:$0xff]
    %v1331 = vld [vmem:[#allocation2 + $0x3b8] sm:$0xff]
    %v1332 = vld [vmem:[#allocation2 + $0x3c0] sm:$0xff]
    %v1333 = vld [vmem:[#allocation2 + $0x3c8] sm:$0xff]
    %v1334 = vld [vmem:[#allocation2 + $0x3d0] sm:$0xff]
    %v1335 = vld [vmem:[#allocation2 + $0x3d8] sm:$0xff]
    %v1336 = vld [vmem:[#allocation2 + $0x3e0] sm:$0xff]
    %v1337 = vld [vmem:[#allocation2 + $0x3e8] sm:$0xff]
    %v1338 = vld [vmem:[#allocation2 + $0x3f0] sm:$0xff]
    %v1339 = vld [vmem:[#allocation2 + $0x3f8] sm:$0xff]
    %v1340 = vld [vmem:[#allocation2 + $0x400] sm:$0xff]
    %v1341 = vld [vmem:[#allocation2 + $0x408] sm:$0xff]
    %v1342 = vld [vmem:[#allocation2 + $0x410] sm:$0xff]
    %v1343 = vld [vmem:[#allocation2 + $0x418] sm:$0xff]
    %v1344 = vld [vmem:[#allocation2 + $0x420] sm:$0xff]
    %v1345 = vld [vmem:[#allocation2 + $0x428] sm:$0xff]
    %v1346 = vld [vmem:[#allocation2 + $0x430] sm:$0xff]
    %v1347 = vld [vmem:[#allocation2 + $0x438] sm:$0xff]
    %v1348 = vld [vmem:[#allocation2 + $0x440] sm:$0xff]
    %v1349 = vld [vmem:[#allocation2 + $0x448] sm:$0xff]
    %v1350 = vld [vmem:[#allocation2 + $0x450] sm:$0xff]
    %v1351 = vld [vmem:[#allocation2 + $0x458] sm:$0xff]
    %v1352 = vld [vmem:[#allocation2 + $0x460] sm:$0xff]
    %v1353 = vld [vmem:[#allocation2 + $0x468] sm:$0xff]
    %v1354 = vld [vmem:[#allocation2 + $0x470] sm:$0xff]
    %v1355 = vld [vmem:[#allocation2 + $0x478] sm:$0xff]
    %v1356 = vld [vmem:[#allocation2 + $0x480] sm:$0xff]
    %v1357 = vld [vmem:[#allocation2 + $0x488] sm:$0xff]
    %v1358 = vld [vmem:[#allocation2 + $0x490] sm:$0xff]
    %v1359 = vld [vmem:[#allocation2 + $0x498] sm:$0xff]
    %v1360 = vld [vmem:[#allocation2 + $0x4a0] sm:$0xff]
    %v1361 = vld [vmem:[#allocation2 + $0x4a8] sm:$0xff]
    %v1362 = vld [vmem:[#allocation2 + $0x4b0] sm:$0xff]
    %v1363 = vld [vmem:[#allocation2 + $0x4b8] sm:$0xff]
    %v1364 = vld [vmem:[#allocation2 + $0x4c0] sm:$0xff]
    %v1365 = vld [vmem:[#allocation2 + $0x4c8] sm:$0xff]
    %v1366 = vld [vmem:[#allocation2 + $0x4d0] sm:$0xff]
    %v1367 = vld [vmem:[#allocation2 + $0x4d8] sm:$0xff]
    %v1368 = vld [vmem:[#allocation2 + $0x4e0] sm:$0xff]
    %v1369 = vld [vmem:[#allocation2 + $0x4e8] sm:$0xff]
    %v1370 = vld [vmem:[#allocation2 + $0x4f0] sm:$0xff]
    %v1371 = vld [vmem:[#allocation2 + $0x4f8] sm:$0xff]
    %v1372 = vld [vmem:[#allocation2 + $0x500] sm:$0xff]
    %v1373 = vld [vmem:[#allocation2 + $0x508] sm:$0xff]
    %v1374 = vld [vmem:[#allocation2 + $0x510] sm:$0xff]
    %v1375 = vld [vmem:[#allocation2 + $0x518] sm:$0xff]
    %v1376 = vld [vmem:[#allocation2 + $0x520] sm:$0xff]
    %v1377 = vld [vmem:[#allocation2 + $0x528] sm:$0xff]
    %v1378 = vld [vmem:[#allocation2 + $0x530] sm:$0xff]
    %v1379 = vld [vmem:[#allocation2 + $0x538] sm:$0xff]
    %v1380 = vld [vmem:[#allocation2 + $0x540] sm:$0xff]
    %v1381 = vld [vmem:[#allocation2 + $0x548] sm:$0xff]
    %v1382 = vld [vmem:[#allocation2 + $0x550] sm:$0xff]
    %v1383 = vld [vmem:[#allocation2 + $0x558] sm:$0xff]
    %v1384 = vld [vmem:[#allocation2 + $0x560] sm:$0xff]
    %v1385 = vld [vmem:[#allocation2 + $0x568] sm:$0xff]
    %v1386 = vld [vmem:[#allocation2 + $0x570] sm:$0xff]
    %v1387 = vld [vmem:[#allocation2 + $0x578] sm:$0xff]
    %v1388 = vld [vmem:[#allocation2 + $0x580] sm:$0xff]
    %v1389 = vld [vmem:[#allocation2 + $0x588] sm:$0xff]
    %v1390 = vld [vmem:[#allocation2 + $0x590] sm:$0xff]
    %v1391 = vld [vmem:[#allocation2 + $0x598] sm:$0xff]
    %v1392 = vld [vmem:[#allocation2 + $0x5a0] sm:$0xff]
    %v1393 = vld [vmem:[#allocation2 + $0x5a8] sm:$0xff]
    %v1394 = vld [vmem:[#allocation2 + $0x5b0] sm:$0xff]
    %v1395 = vld [vmem:[#allocation2 + $0x5b8] sm:$0xff]
    %v1396 = vld [vmem:[#allocation2 + $0x5c0] sm:$0xff]
    %v1397 = vld [vmem:[#allocation2 + $0x5c8] sm:$0xff]
    %v1398 = vld [vmem:[#allocation2 + $0x5d0] sm:$0xff]
    %v1399 = vld [vmem:[#allocation2 + $0x5d8] sm:$0xff]
    %v1400 = vld [vmem:[#allocation2 + $0x5e0] sm:$0xff]
    %v1401 = vld [vmem:[#allocation2 + $0x5e8] sm:$0xff]
    %v1402 = vld [vmem:[#allocation2 + $0x5f0] sm:$0xff]
    %v1403 = vld [vmem:[#allocation2 + $0x5f8] sm:$0xff]
    %v1404 = vld [vmem:[#allocation2 + $0x600] sm:$0xff]
    %v1405 = vld [vmem:[#allocation2 + $0x608] sm:$0xff]
    %v1406 = vld [vmem:[#allocation2 + $0x610] sm:$0xff]
    %v1407 = vld [vmem:[#allocation2 + $0x618] sm:$0xff]
    %v1408 = vld [vmem:[#allocation2 + $0x620] sm:$0xff]
    %v1409 = vld [vmem:[#allocation2 + $0x628] sm:$0xff]
    %v1410 = vld [vmem:[#allocation2 + $0x630] sm:$0xff]
    %v1411 = vld [vmem:[#allocation2 + $0x638] sm:$0xff]
    %v1412 = vld [vmem:[#allocation2 + $0x640] sm:$0xff]
    %v1413 = vld [vmem:[#allocation2 + $0x648] sm:$0xff]
    %v1414 = vld [vmem:[#allocation2 + $0x650] sm:$0xff]
    %v1415 = vld [vmem:[#allocation2 + $0x658] sm:$0xff]
    %v1416 = vld [vmem:[#allocation2 + $0x660] sm:$0xff]
    %v1417 = vld [vmem:[#allocation2 + $0x668] sm:$0xff]
    %v1418 = vld [vmem:[#allocation2 + $0x670] sm:$0xff]
    %v1419 = vld [vmem:[#allocation2 + $0x678] sm:$0xff]
    %v1420 = vld [vmem:[#allocation2 + $0x680] sm:$0xff]
    %v1421 = vld [vmem:[#allocation2 + $0x688] sm:$0xff]
    %v1422 = vld [vmem:[#allocation2 + $0x690] sm:$0xff]
    %v1423 = vld [vmem:[#allocation2 + $0x698] sm:$0xff]
    %v1424 = vld [vmem:[#allocation2 + $0x6a0] sm:$0xff]
    %v1425 = vld [vmem:[#allocation2 + $0x6a8] sm:$0xff]
    %v1426 = vld [vmem:[#allocation2 + $0x6b0] sm:$0xff]
    %v1427 = vld [vmem:[#allocation2 + $0x6b8] sm:$0xff]
    %v1428 = vld [vmem:[#allocation2 + $0x6c0] sm:$0xff]
    %v1429 = vld [vmem:[#allocation2 + $0x6c8] sm:$0xff]
    %v1430 = vld [vmem:[#allocation2 + $0x6d0] sm:$0xff]
    %v1431 = vld [vmem:[#allocation2 + $0x6d8] sm:$0xff]
    %v1432 = vld [vmem:[#allocation2 + $0x6e0] sm:$0xff]
    %v1433 = vld [vmem:[#allocation2 + $0x6e8] sm:$0xff]
    %v1434 = vld [vmem:[#allocation2 + $0x6f0] sm:$0xff]
    %v1435 = vld [vmem:[#allocation2 + $0x6f8] sm:$0xff]
    %v1436 = vld [vmem:[#allocation2 + $0x700] sm:$0xff]
    %v1437 = vld [vmem:[#allocation2 + $0x708] sm:$0xff]
    %v1438 = vld [vmem:[#allocation2 + $0x710] sm:$0xff]
    %v1439 = vld [vmem:[#allocation2 + $0x718] sm:$0xff]
    %v1440 = vld [vmem:[#allocation2 + $0x720] sm:$0xff]
    %v1441 = vld [vmem:[#allocation2 + $0x728] sm:$0xff]
    %v1442 = vld [vmem:[#allocation2 + $0x730] sm:$0xff]
    %v1443 = vld [vmem:[#allocation2 + $0x738] sm:$0xff]
    %v1444 = vld [vmem:[#allocation2 + $0x740] sm:$0xff]
    %v1445 = vld [vmem:[#allocation2 + $0x748] sm:$0xff]
    %v1446 = vld [vmem:[#allocation2 + $0x750] sm:$0xff]
    %v1447 = vld [vmem:[#allocation2 + $0x758] sm:$0xff]
    %v1448 = vld [vmem:[#allocation2 + $0x760] sm:$0xff]
    %v1449 = vld [vmem:[#allocation2 + $0x768] sm:$0xff]
    %v1450 = vld [vmem:[#allocation2 + $0x770] sm:$0xff]
    %v1451 = vld [vmem:[#allocation2 + $0x778] sm:$0xff]
    %v1452 = vld [vmem:[#allocation2 + $0x780] sm:$0xff]
    %v1453 = vld [vmem:[#allocation2 + $0x788] sm:$0xff]
    %v1454 = vld [vmem:[#allocation2 + $0x790] sm:$0xff]
    %v1455 = vld [vmem:[#allocation2 + $0x798] sm:$0xff]
    %v1456 = vld [vmem:[#allocation2 + $0x7a0] sm:$0xff]
    %v1457 = vld [vmem:[#allocation2 + $0x7a8] sm:$0xff]
    %v1458 = vld [vmem:[#allocation2 + $0x7b0] sm:$0xff]
    %v1459 = vld [vmem:[#allocation2 + $0x7b8] sm:$0xff]
    %v1460 = vld [vmem:[#allocation2 + $0x7c0] sm:$0xff]
    %v1461 = vld [vmem:[#allocation2 + $0x7c8] sm:$0xff]
    %v1462 = vld [vmem:[#allocation2 + $0x7d0] sm:$0xff]
    %v1463 = vld [vmem:[#allocation2 + $0x7d8] sm:$0xff]
    %v1464 = vld [vmem:[#allocation2 + $0x7e0] sm:$0xff]
    %v1465 = vld [vmem:[#allocation2 + $0x7e8] sm:$0xff]
    %v1466 = vld [vmem:[#allocation2 + $0x7f0] sm:$0xff]
    %v1467 = vld [vmem:[#allocation2 + $0x7f8] sm:$0xff]
    %v1468 = vld [vmem:[#allocation2 + $0x800] sm:$0xff]
    %v1469 = vld [vmem:[#allocation2 + $0x808] sm:$0xff]
    %v1470 = vld [vmem:[#allocation2 + $0x810] sm:$0xff]
    %v1471 = vld [vmem:[#allocation2 + $0x818] sm:$0xff]
    %v1472 = vld [vmem:[#allocation2 + $0x820] sm:$0xff]
    %v1473 = vld [vmem:[#allocation2 + $0x828] sm:$0xff]
    %v1474 = vld [vmem:[#allocation2 + $0x830] sm:$0xff]
    %v1475 = vld [vmem:[#allocation2 + $0x838] sm:$0xff]
    %v1476 = vld [vmem:[#allocation2 + $0x840] sm:$0xff]
    %v1477 = vld [vmem:[#allocation2 + $0x848] sm:$0xff]
    %v1478 = vld [vmem:[#allocation2 + $0x850] sm:$0xff]
    %v1479 = vld [vmem:[#allocation2 + $0x858] sm:$0xff]
    %v1480 = vld [vmem:[#allocation2 + $0x860] sm:$0xff]
    %v1481 = vld [vmem:[#allocation2 + $0x868] sm:$0xff]
    %v1482 = vld [vmem:[#allocation2 + $0x870] sm:$0xff]
    %v1483 = vld [vmem:[#allocation2 + $0x878] sm:$0xff]
    %v1484 = vld [vmem:[#allocation2 + $0x880] sm:$0xff]
    %v1485 = vld [vmem:[#allocation2 + $0x888] sm:$0xff]
    %v1486 = vld [vmem:[#allocation2 + $0x890] sm:$0xff]
    %v1487 = vld [vmem:[#allocation2 + $0x898] sm:$0xff]
    %v1488 = vld [vmem:[#allocation2 + $0x8a0] sm:$0xff]
    %v1489 = vld [vmem:[#allocation2 + $0x8a8] sm:$0xff]
    %v1490 = vld [vmem:[#allocation2 + $0x8b0] sm:$0xff]
    %v1491 = vld [vmem:[#allocation2 + $0x8b8] sm:$0xff]
    %v1492 = vld [vmem:[#allocation2 + $0x8c0] sm:$0xff]
    %v1493 = vld [vmem:[#allocation2 + $0x8c8] sm:$0xff]
    %v1494 = vld [vmem:[#allocation2 + $0x8d0] sm:$0xff]
    %v1495 = vld [vmem:[#allocation2 + $0x8d8] sm:$0xff]
    %v1496 = vld [vmem:[#allocation2 + $0x8e0] sm:$0xff]
    %v1497 = vld [vmem:[#allocation2 + $0x8e8] sm:$0xff]
    %v1498 = vld [vmem:[#allocation2 + $0x8f0] sm:$0xff]
    %v1499 = vld [vmem:[#allocation2 + $0x8f8] sm:$0xff]
    %v1500 = vld [vmem:[#allocation2 + $0x900] sm:$0xff]
    %v1501 = vld [vmem:[#allocation2 + $0x908] sm:$0xff]
    %v1502 = vld [vmem:[#allocation2 + $0x910] sm:$0xff]
    %v1503 = vld [vmem:[#allocation2 + $0x918] sm:$0xff]
    %v1504 = vld [vmem:[#allocation2 + $0x920] sm:$0xff]
    %v1505 = vld [vmem:[#allocation2 + $0x928] sm:$0xff]
    %v1506 = vld [vmem:[#allocation2 + $0x930] sm:$0xff]
    %v1507 = vld [vmem:[#allocation2 + $0x938] sm:$0xff]
    %v1508 = vld [vmem:[#allocation2 + $0x940] sm:$0xff]
    %v1509 = vld [vmem:[#allocation2 + $0x948] sm:$0xff]
    %v1510 = vld [vmem:[#allocation2 + $0x950] sm:$0xff]
    %v1511 = vld [vmem:[#allocation2 + $0x958] sm:$0xff]
    %v1512 = vld [vmem:[#allocation2 + $0x960] sm:$0xff]
    %v1513 = vld [vmem:[#allocation2 + $0x968] sm:$0xff]
    %v1514 = vld [vmem:[#allocation2 + $0x970] sm:$0xff]
    %v1515 = vld [vmem:[#allocation2 + $0x978] sm:$0xff]
    %v1516 = vld [vmem:[#allocation2 + $0x980] sm:$0xff]
    %v1517 = vld [vmem:[#allocation2 + $0x988] sm:$0xff]
    %v1518 = vld [vmem:[#allocation2 + $0x990] sm:$0xff]
    %v1519 = vld [vmem:[#allocation2 + $0x998] sm:$0xff]
    %v1520 = vld [vmem:[#allocation2 + $0x9a0] sm:$0xff]
    %v1521 = vld [vmem:[#allocation2 + $0x9a8] sm:$0xff]
    %v1522 = vld [vmem:[#allocation2 + $0x9b0] sm:$0xff]
    %v1523 = vld [vmem:[#allocation2 + $0x9b8] sm:$0xff]
    %v1524 = vld [vmem:[#allocation2 + $0x9c0] sm:$0xff]
    %v1525 = vld [vmem:[#allocation2 + $0x9c8] sm:$0xff]
    %v1526 = vld [vmem:[#allocation2 + $0x9d0] sm:$0xff]
    %v1527 = vld [vmem:[#allocation2 + $0x9d8] sm:$0xff]
    %v1528 = vld [vmem:[#allocation2 + $0x9e0] sm:$0xff]
    %v1529 = vld [vmem:[#allocation2 + $0x9e8] sm:$0xff]
    %v1530 = vld [vmem:[#allocation2 + $0x9f0] sm:$0xff]
    %v1531 = vld [vmem:[#allocation2 + $0x9f8] sm:$0xff]
    %v1532 = vld [vmem:[#allocation2 + $0xa00] sm:$0xff]
    %v1533 = vld [vmem:[#allocation2 + $0xa08] sm:$0xff]
    %v1534 = vld [vmem:[#allocation2 + $0xa10] sm:$0xff]
    %v1535 = vld [vmem:[#allocation2 + $0xa18] sm:$0xff]
    %v1536 = vld [vmem:[#allocation2 + $0xa20] sm:$0xff]
    %v1537 = vld [vmem:[#allocation2 + $0xa28] sm:$0xff]
    %v1538 = vld [vmem:[#allocation2 + $0xa30] sm:$0xff]
    %v1539 = vld [vmem:[#allocation2 + $0xa38] sm:$0xff]
    %v1540 = vld [vmem:[#allocation2 + $0xa40] sm:$0xff]
    %v1541 = vld [vmem:[#allocation2 + $0xa48] sm:$0xff]
    %v1542 = vld [vmem:[#allocation2 + $0xa50] sm:$0xff]
    %v1543 = vld [vmem:[#allocation2 + $0xa58] sm:$0xff]
    %v1544 = vld [vmem:[#allocation2 + $0xa60] sm:$0xff]
    %v1545 = vld [vmem:[#allocation2 + $0xa68] sm:$0xff]
    %v1546 = vld [vmem:[#allocation2 + $0xa70] sm:$0xff]
    %v1547 = vld [vmem:[#allocation2 + $0xa78] sm:$0xff]
    %v1548 = vld [vmem:[#allocation2 + $0xa80] sm:$0xff]
    %v1549 = vld [vmem:[#allocation2 + $0xa88] sm:$0xff]
    %v1550 = vld [vmem:[#allocation2 + $0xa90] sm:$0xff]
    %v1551 = vld [vmem:[#allocation2 + $0xa98] sm:$0xff]
    %v1552 = vld [vmem:[#allocation2 + $0xaa0] sm:$0xff]
    %v1553 = vld [vmem:[#allocation2 + $0xaa8] sm:$0xff]
    %v1554 = vld [vmem:[#allocation2 + $0xab0] sm:$0xff]
    %v1555 = vld [vmem:[#allocation2 + $0xab8] sm:$0xff]
    %v1556 = vld [vmem:[#allocation2 + $0xac0] sm:$0xff]
    %v1557 = vld [vmem:[#allocation2 + $0xac8] sm:$0xff]
    %v1558 = vld [vmem:[#allocation2 + $0xad0] sm:$0xff]
    %v1559 = vld [vmem:[#allocation2 + $0xad8] sm:$0xff]
    %v1560 = vld [vmem:[#allocation2 + $0xae0] sm:$0xff]
    %v1561 = vld [vmem:[#allocation2 + $0xae8] sm:$0xff]
    %v1562 = vld [vmem:[#allocation2 + $0xaf0] sm:$0xff]
    %v1563 = vld [vmem:[#allocation2 + $0xaf8] sm:$0xff]
    %v1564 = vld [vmem:[#allocation2 + $0xb00] sm:$0xff]
    %v1565 = vld [vmem:[#allocation2 + $0xb08] sm:$0xff]
    %v1566 = vld [vmem:[#allocation2 + $0xb10] sm:$0xff]
    %v1567 = vld [vmem:[#allocation2 + $0xb18] sm:$0xff]
    %v1568 = vld [vmem:[#allocation2 + $0xb20] sm:$0xff]
    %v1569 = vld [vmem:[#allocation2 + $0xb28] sm:$0xff]
    %v1570 = vld [vmem:[#allocation2 + $0xb30] sm:$0xff]
    %v1571 = vld [vmem:[#allocation2 + $0xb38] sm:$0xff]
    %v1572 = vld [vmem:[#allocation2 + $0xb40] sm:$0xff]
    %v1573 = vld [vmem:[#allocation2 + $0xb48] sm:$0xff]
    %v1574 = vld [vmem:[#allocation2 + $0xb50] sm:$0xff]
    %v1575 = vld [vmem:[#allocation2 + $0xb58] sm:$0xff]
    %v1576 = vld [vmem:[#allocation2 + $0xb60] sm:$0xff]
    %v1577 = vld [vmem:[#allocation2 + $0xb68] sm:$0xff]
    %v1578 = vld [vmem:[#allocation2 + $0xb70] sm:$0xff]
    %v1579 = vld [vmem:[#allocation2 + $0xb78] sm:$0xff]
    %v1580 = vld [vmem:[#allocation2 + $0xb80] sm:$0xff]
    %v1581 = vld [vmem:[#allocation2 + $0xb88] sm:$0xff]
    %v1582 = vld [vmem:[#allocation2 + $0xb90] sm:$0xff]
    %v1583 = vld [vmem:[#allocation2 + $0xb98] sm:$0xff]
    %v1584 = vld [vmem:[#allocation2 + $0xba0] sm:$0xff]
    %v1585 = vld [vmem:[#allocation2 + $0xba8] sm:$0xff]
    %v1586 = vld [vmem:[#allocation2 + $0xbb0] sm:$0xff]
    %v1587 = vld [vmem:[#allocation2 + $0xbb8] sm:$0xff]
    %v1588 = vld [vmem:[#allocation2 + $0xbc0] sm:$0xff]
    %v1589 = vld [vmem:[#allocation2 + $0xbc8] sm:$0xff]
    %v1590 = vld [vmem:[#allocation2 + $0xbd0] sm:$0xff]
    %v1591 = vld [vmem:[#allocation2 + $0xbd8] sm:$0xff]
    %v1592 = vld [vmem:[#allocation2 + $0xbe0] sm:$0xff]
    %v1593 = vld [vmem:[#allocation2 + $0xbe8] sm:$0xff]
    %v1594 = vld [vmem:[#allocation2 + $0xbf0] sm:$0xff]
    %v1595 = vld [vmem:[#allocation2 + $0xbf8] sm:$0xff]
    %v1596 = vld [vmem:[#allocation2 + $0xc00] sm:$0xff]
    %v1597 = vld [vmem:[#allocation2 + $0xc08] sm:$0xff]
    %v1598 = vld [vmem:[#allocation2 + $0xc10] sm:$0xff]
    %v1599 = vld [vmem:[#allocation2 + $0xc18] sm:$0xff]
    %v1600 = vld [vmem:[#allocation2 + $0xc20] sm:$0xff]
    %v1601 = vld [vmem:[#allocation2 + $0xc28] sm:$0xff]
    %v1602 = vld [vmem:[#allocation2 + $0xc30] sm:$0xff]
    %v1603 = vld [vmem:[#allocation2 + $0xc38] sm:$0xff]
    %v1604 = vld [vmem:[#allocation2 + $0xc40] sm:$0xff]
    %v1605 = vld [vmem:[#allocation2 + $0xc48] sm:$0xff]
    %v1606 = vld [vmem:[#allocation2 + $0xc50] sm:$0xff]
    %v1607 = vld [vmem:[#allocation2 + $0xc58] sm:$0xff]
    %v1608 = vld [vmem:[#allocation2 + $0xc60] sm:$0xff]
    %v1609 = vld [vmem:[#allocation2 + $0xc68] sm:$0xff]
    %v1610 = vld [vmem:[#allocation2 + $0xc70] sm:$0xff]
    %v1611 = vld [vmem:[#allocation2 + $0xc78] sm:$0xff]
    %v1612 = vld [vmem:[#allocation2 + $0xc80] sm:$0xff]
    %v1613 = vld [vmem:[#allocation2 + $0xc88] sm:$0xff]
    %v1614 = vld [vmem:[#allocation2 + $0xc90] sm:$0xff]
    %v1615 = vld [vmem:[#allocation2 + $0xc98] sm:$0xff]
    %v1616 = vld [vmem:[#allocation2 + $0xca0] sm:$0xff]
    %v1617 = vld [vmem:[#allocation2 + $0xca8] sm:$0xff]
    %v1618 = vld [vmem:[#allocation2 + $0xcb0] sm:$0xff]
    %v1619 = vld [vmem:[#allocation2 + $0xcb8] sm:$0xff]
    %v1620 = vld [vmem:[#allocation2 + $0xcc0] sm:$0xff]
    %v1621 = vld [vmem:[#allocation2 + $0xcc8] sm:$0xff]
    %v1622 = vld [vmem:[#allocation2 + $0xcd0] sm:$0xff]
    %v1623 = vld [vmem:[#allocation2 + $0xcd8] sm:$0xff]
    %v1624 = vld [vmem:[#allocation2 + $0xce0] sm:$0xff]
    %v1625 = vld [vmem:[#allocation2 + $0xce8] sm:$0xff]
    %v1626 = vld [vmem:[#allocation2 + $0xcf0] sm:$0xff]
    %v1627 = vld [vmem:[#allocation2 + $0xcf8] sm:$0xff]
    %v1628 = vld [vmem:[#allocation2 + $0xd00] sm:$0xff]
    %v1629 = vld [vmem:[#allocation2 + $0xd08] sm:$0xff]
    %v1630 = vld [vmem:[#allocation2 + $0xd10] sm:$0xff]
    %v1631 = vld [vmem:[#allocation2 + $0xd18] sm:$0xff]
    %v1632 = vld [vmem:[#allocation2 + $0xd20] sm:$0xff]
    %v1633 = vld [vmem:[#allocation2 + $0xd28] sm:$0xff]
    %v1634 = vld [vmem:[#allocation2 + $0xd30] sm:$0xff]
    %v1635 = vld [vmem:[#allocation2 + $0xd38] sm:$0xff]
    %v1636 = vld [vmem:[#allocation2 + $0xd40] sm:$0xff]
    %v1637 = vld [vmem:[#allocation2 + $0xd48] sm:$0xff]
    %v1638 = vld [vmem:[#allocation2 + $0xd50] sm:$0xff]
    %v1639 = vld [vmem:[#allocation2 + $0xd58] sm:$0xff]
    %v1640 = vld [vmem:[#allocation2 + $0xd60] sm:$0xff]
    %v1641 = vld [vmem:[#allocation2 + $0xd68] sm:$0xff]
    %v1642 = vld [vmem:[#allocation2 + $0xd70] sm:$0xff]
    %v1643 = vld [vmem:[#allocation2 + $0xd78] sm:$0xff]
    %v1644 = vld [vmem:[#allocation2 + $0xd80] sm:$0xff]
    %v1645 = vld [vmem:[#allocation2 + $0xd88] sm:$0xff]
    %v1646 = vld [vmem:[#allocation2 + $0xd90] sm:$0xff]
    %v1647 = vld [vmem:[#allocation2 + $0xd98] sm:$0xff]
    %v1648 = vld [vmem:[#allocation2 + $0xda0] sm:$0xff]
    %v1649 = vld [vmem:[#allocation2 + $0xda8] sm:$0xff]
    %v1650 = vld [vmem:[#allocation2 + $0xdb0] sm:$0xff]
    %v1651 = vld [vmem:[#allocation2 + $0xdb8] sm:$0xff]
    %v1652 = vld [vmem:[#allocation2 + $0xdc0] sm:$0xff]
    %v1653 = vld [vmem:[#allocation2 + $0xdc8] sm:$0xff]
    %v1654 = vld [vmem:[#allocation2 + $0xdd0] sm:$0xff]
    %v1655 = vld [vmem:[#allocation2 + $0xdd8] sm:$0xff]
    %v1656 = vld [vmem:[#allocation2 + $0xde0] sm:$0xff]
    %v1657 = vld [vmem:[#allocation2 + $0xde8] sm:$0xff]
    %v1658 = vld [vmem:[#allocation2 + $0xdf0] sm:$0xff]
    %v1659 = vld [vmem:[#allocation2 + $0xdf8] sm:$0xff]
    %v1660 = vld [vmem:[#allocation2 + $0xe00] sm:$0xff]
    %v1661 = vld [vmem:[#allocation2 + $0xe08] sm:$0xff]
    %v1662 = vld [vmem:[#allocation2 + $0xe10] sm:$0xff]
    %v1663 = vld [vmem:[#allocation2 + $0xe18] sm:$0xff]
    %v1664 = vld [vmem:[#allocation2 + $0xe20] sm:$0xff]
    %v1665 = vld [vmem:[#allocation2 + $0xe28] sm:$0xff]
    %v1666 = vld [vmem:[#allocation2 + $0xe30] sm:$0xff]
    %v1667 = vld [vmem:[#allocation2 + $0xe38] sm:$0xff]
    %v1668 = vld [vmem:[#allocation2 + $0xe40] sm:$0xff]
    %v1669 = vld [vmem:[#allocation2 + $0xe48] sm:$0xff]
    %v1670 = vld [vmem:[#allocation2 + $0xe50] sm:$0xff]
    %v1671 = vld [vmem:[#allocation2 + $0xe58] sm:$0xff]
    %v1672 = vld [vmem:[#allocation2 + $0xe60] sm:$0xff]
    %v1673 = vld [vmem:[#allocation2 + $0xe68] sm:$0xff]
    %v1674 = vld [vmem:[#allocation2 + $0xe70] sm:$0xff]
    %v1675 = vld [vmem:[#allocation2 + $0xe78] sm:$0xff]
    %v1676 = vld [vmem:[#allocation2 + $0xe80] sm:$0xff]
    %v1677 = vld [vmem:[#allocation2 + $0xe88] sm:$0xff]
    %v1678 = vld [vmem:[#allocation2 + $0xe90] sm:$0xff]
    %v1679 = vld [vmem:[#allocation2 + $0xe98] sm:$0xff]
    %v1680 = vld [vmem:[#allocation2 + $0xea0] sm:$0xff]
    %v1681 = vld [vmem:[#allocation2 + $0xea8] sm:$0xff]
    %v1682 = vld [vmem:[#allocation2 + $0xeb0] sm:$0xff]
    %v1683 = vld [vmem:[#allocation2 + $0xeb8] sm:$0xff]
    %v1684 = vld [vmem:[#allocation2 + $0xec0] sm:$0xff]
    %v1685 = vld [vmem:[#allocation2 + $0xec8] sm:$0xff]
    %v1686 = vld [vmem:[#allocation2 + $0xed0] sm:$0xff]
    %v1687 = vld [vmem:[#allocation2 + $0xed8] sm:$0xff]
    %v1688 = vld [vmem:[#allocation2 + $0xee0] sm:$0xff]
    %v1689 = vld [vmem:[#allocation2 + $0xee8] sm:$0xff]
    %v1690 = vld [vmem:[#allocation2 + $0xef0] sm:$0xff]
    %v1691 = vld [vmem:[#allocation2 + $0xef8] sm:$0xff]
    %v1692 = vld [vmem:[#allocation2 + $0xf00] sm:$0xff]
    %v1693 = vld [vmem:[#allocation2 + $0xf08] sm:$0xff]
    %v1694 = vld [vmem:[#allocation2 + $0xf10] sm:$0xff]
    %v1695 = vld [vmem:[#allocation2 + $0xf18] sm:$0xff]
    %v1696 = vld [vmem:[#allocation2 + $0xf20] sm:$0xff]
    %v1697 = vld [vmem:[#allocation2 + $0xf28] sm:$0xff]
    %v1698 = vld [vmem:[#allocation2 + $0xf30] sm:$0xff]
    %v1699 = vld [vmem:[#allocation2 + $0xf38] sm:$0xff]
    %v1700 = vld [vmem:[#allocation2 + $0xf40] sm:$0xff]
    %v1701 = vld [vmem:[#allocation2 + $0xf48] sm:$0xff]
    %v1702 = vld [vmem:[#allocation2 + $0xf50] sm:$0xff]
    %v1703 = vld [vmem:[#allocation2 + $0xf58] sm:$0xff]
    %v1704 = vld [vmem:[#allocation2 + $0xf60] sm:$0xff]
    %v1705 = vld [vmem:[#allocation2 + $0xf68] sm:$0xff]
    %v1706 = vld [vmem:[#allocation2 + $0xf70] sm:$0xff]
    %v1707 = vld [vmem:[#allocation2 + $0xf78] sm:$0xff]
    %v1708 = vld [vmem:[#allocation2 + $0xf80] sm:$0xff]
    %v1709 = vld [vmem:[#allocation2 + $0xf88] sm:$0xff]
    %v1710 = vld [vmem:[#allocation2 + $0xf90] sm:$0xff]
    %v1711 = vld [vmem:[#allocation2 + $0xf98] sm:$0xff]
    %v1712 = vld [vmem:[#allocation2 + $0xfa0] sm:$0xff]
    %v1713 = vld [vmem:[#allocation2 + $0xfa8] sm:$0xff]
    %v1714 = vld [vmem:[#allocation2 + $0xfb0] sm:$0xff]
    %v1715 = vld [vmem:[#allocation2 + $0xfb8] sm:$0xff]
    %v1716 = vld [vmem:[#allocation2 + $0xfc0] sm:$0xff]
    %v1717 = vld [vmem:[#allocation2 + $0xfc8] sm:$0xff]
    %v1718 = vld [vmem:[#allocation2 + $0xfd0] sm:$0xff]
    %v1719 = vld [vmem:[#allocation2 + $0xfd8] sm:$0xff]
    %v1720 = vld [vmem:[#allocation2 + $0xfe0] sm:$0xff]
    %v1721 = vld [vmem:[#allocation2 + $0xfe8] sm:$0xff]
    %v1722 = vld [vmem:[#allocation2 + $0xff0] sm:$0xff]
    %v1723 = vld [vmem:[#allocation2 + $0xff8] sm:$0xff]
    %v1724 = vld [vmem:[#allocation2 + $0x1000] sm:$0xff]
    %v1725 = vld [vmem:[#allocation2 + $0x1008] sm:$0xff]
    %v1726 = vld [vmem:[#allocation2 + $0x1010] sm:$0xff]
    %v1727 = vld [vmem:[#allocation2 + $0x1018] sm:$0xff]
    %v1728 = vld [vmem:[#allocation2 + $0x1020] sm:$0xff]
    %v1729 = vld [vmem:[#allocation2 + $0x1028] sm:$0xff]
    %v1730 = vld [vmem:[#allocation2 + $0x1030] sm:$0xff]
    %v1731 = vld [vmem:[#allocation2 + $0x1038] sm:$0xff]
    %v1732 = vld [vmem:[#allocation2 + $0x1040] sm:$0xff]
    %v1733 = vld [vmem:[#allocation2 + $0x1048] sm:$0xff]
    %v1734 = vld [vmem:[#allocation2 + $0x1050] sm:$0xff]
    %v1735 = vld [vmem:[#allocation2 + $0x1058] sm:$0xff]
    %v1736 = vld [vmem:[#allocation2 + $0x1060] sm:$0xff]
    %v1737 = vld [vmem:[#allocation2 + $0x1068] sm:$0xff]
    %v1738 = vld [vmem:[#allocation2 + $0x1070] sm:$0xff]
    %v1739 = vld [vmem:[#allocation2 + $0x1078] sm:$0xff]
    %v1740 = vld [vmem:[#allocation2 + $0x1080] sm:$0xff]
    %v1741 = vld [vmem:[#allocation2 + $0x1088] sm:$0xff]
    %v1742 = vld [vmem:[#allocation2 + $0x1090] sm:$0xff]
    %v1743 = vld [vmem:[#allocation2 + $0x1098] sm:$0xff]
    %v1744 = vld [vmem:[#allocation2 + $0x10a0] sm:$0xff]
    %v1745 = vld [vmem:[#allocation2 + $0x10a8] sm:$0xff]
    %v1746 = vld [vmem:[#allocation2 + $0x10b0] sm:$0xff]
    %v1747 = vld [vmem:[#allocation2 + $0x10b8] sm:$0xff]
    %v1748 = vld [vmem:[#allocation2 + $0x10c0] sm:$0xff]
    %v1749 = vld [vmem:[#allocation2 + $0x10c8] sm:$0xff]
    %v1750 = vld [vmem:[#allocation2 + $0x10d0] sm:$0xff]
    %v1751 = vld [vmem:[#allocation2 + $0x10d8] sm:$0xff]
    %v1752 = vld [vmem:[#allocation2 + $0x10e0] sm:$0xff]
    %v1753 = vld [vmem:[#allocation2 + $0x10e8] sm:$0xff]
    %v1754 = vld [vmem:[#allocation2 + $0x10f0] sm:$0xff]
    %v1755 = vld [vmem:[#allocation2 + $0x10f8] sm:$0xff]
    %v1756 = vld [vmem:[#allocation2 + $0x1100] sm:$0xff]
    %v1757 = vld [vmem:[#allocation2 + $0x1108] sm:$0xff]
    %v1758 = vld [vmem:[#allocation2 + $0x1110] sm:$0xff]
    %v1759 = vld [vmem:[#allocation2 + $0x1118] sm:$0xff]
    %v1760 = vld [vmem:[#allocation2 + $0x1120] sm:$0xff]
    %v1761 = vld [vmem:[#allocation2 + $0x1128] sm:$0xff]
    %v1762 = vld [vmem:[#allocation2 + $0x1130] sm:$0xff]
    %v1763 = vld [vmem:[#allocation2 + $0x1138] sm:$0xff]
    %v1764 = vld [vmem:[#allocation2 + $0x1140] sm:$0xff]
    %v1765 = vld [vmem:[#allocation2 + $0x1148] sm:$0xff]
    %v1766 = vld [vmem:[#allocation2 + $0x1150] sm:$0xff]
    %v1767 = vld [vmem:[#allocation2 + $0x1158] sm:$0xff]
    %v1768 = vld [vmem:[#allocation2 + $0x1160] sm:$0xff]
    %v1769 = vld [vmem:[#allocation2 + $0x1168] sm:$0xff]
    %v1770 = vld [vmem:[#allocation2 + $0x1170] sm:$0xff]
    %v1771 = vld [vmem:[#allocation2 + $0x1178] sm:$0xff]
    %v1772 = vld [vmem:[#allocation2 + $0x1180] sm:$0xff]
    %v1773 = vld [vmem:[#allocation2 + $0x1188] sm:$0xff]
    %v1774 = vld [vmem:[#allocation2 + $0x1190] sm:$0xff]
    %v1775 = vld [vmem:[#allocation2 + $0x1198] sm:$0xff]
    %v1776 = vld [vmem:[#allocation2 + $0x11a0] sm:$0xff]
    %v1777 = vld [vmem:[#allocation2 + $0x11a8] sm:$0xff]
    %v1778 = vld [vmem:[#allocation2 + $0x11b0] sm:$0xff]
    %v1779 = vld [vmem:[#allocation2 + $0x11b8] sm:$0xff]
    %v1780 = vld [vmem:[#allocation2 + $0x11c0] sm:$0xff]
    %v1781 = vld [vmem:[#allocation2 + $0x11c8] sm:$0xff]
    %v1782 = vld [vmem:[#allocation2 + $0x11d0] sm:$0xff]
    %v1783 = vld [vmem:[#allocation2 + $0x11d8] sm:$0xff]
    %v1784 = vld [vmem:[#allocation2 + $0x11e0] sm:$0xff]
    %v1785 = vld [vmem:[#allocation2 + $0x11e8] sm:$0xff]
    %v1786 = vld [vmem:[#allocation2 + $0x11f0] sm:$0xff]
    %v1787 = vld [vmem:[#allocation2 + $0x11f8] sm:$0xff]
    %v1788 = vld [vmem:[%s2] sm:$0xff]
    %v1789 = vld [vmem:[%s2 + $0x8] sm:$0xff]
    %v1790 = vld [vmem:[%s2 + $0x10] sm:$0xff]
    %v1791 = vld [vmem:[%s2 + $0x18] sm:$0xff]
    %v1792 = vld [vmem:[%s2 + $0x20] sm:$0xff]
    %v1793 = vld [vmem:[%s2 + $0x28] sm:$0xff]
    %v1794 = vld [vmem:[%s2 + $0x30] sm:$0xff]
    %v1795 = vld [vmem:[%s2 + $0x38] sm:$0xff]
    %v1796 = vld [vmem:[%s2 + $0x40] sm:$0xff]
    %v1797 = vld [vmem:[%s2 + $0x48] sm:$0xff]
    %v1798 = vld [vmem:[%s2 + $0x50] sm:$0xff]
    %v1799 = vld [vmem:[%s2 + $0x58] sm:$0xff]
    %v1800 = vld [vmem:[%s2 + $0x60] sm:$0xff]
    %v1801 = vld [vmem:[%s2 + $0x68] sm:$0xff]
    %v1802 = vld [vmem:[%s2 + $0x70] sm:$0xff]
    %v1803 = vld [vmem:[%s2 + $0x78] sm:$0xff]
    %v1804 = vld [vmem:[%s2 + $0x80] sm:$0xff]
    %v1805 = vld [vmem:[%s2 + $0x88] sm:$0xff]
    %v1806 = vld [vmem:[%s2 + $0x90] sm:$0xff]
    %v1807 = vld [vmem:[%s2 + $0x98] sm:$0xff]
    %v1808 = vld [vmem:[%s2 + $0xa0] sm:$0xff]
    %v1809 = vld [vmem:[%s2 + $0xa8] sm:$0xff]
    %v1810 = vld [vmem:[%s2 + $0xb0] sm:$0xff]
    %v1811 = vld [vmem:[%s2 + $0xb8] sm:$0xff]
    %v1812 = vld [vmem:[%s2 + $0xc0] sm:$0xff]
    %v1813 = vld [vmem:[%s2 + $0xc8] sm:$0xff]
    %v1814 = vld [vmem:[%s2 + $0xd0] sm:$0xff]
    %v1815 = vld [vmem:[%s2 + $0xd8] sm:$0xff]
    %v1816 = vld [vmem:[%s2 + $0xe0] sm:$0xff]
    %v1817 = vld [vmem:[%s2 + $0xe8] sm:$0xff]
    %v1818 = vld [vmem:[%s2 + $0xf0] sm:$0xff]
    %v1819 = vld [vmem:[%s2 + $0xf8] sm:$0xff]
    %v1820 = vld [vmem:[%s2 + $0x100] sm:$0xff]
    %v1821 = vld [vmem:[%s2 + $0x108] sm:$0xff]
    %v1822 = vld [vmem:[%s2 + $0x110] sm:$0xff]
    %v1823 = vld [vmem:[%s2 + $0x118] sm:$0xff]
    %v1824 = vld [vmem:[%s2 + $0x120] sm:$0xff]
    %v1825 = vld [vmem:[%s2 + $0x128] sm:$0xff]
    %v1826 = vld [vmem:[%s2 + $0x130] sm:$0xff]
    %v1827 = vld [vmem:[%s2 + $0x138] sm:$0xff]
    %v1828 = vld [vmem:[%s2 + $0x140] sm:$0xff]
    %v1829 = vld [vmem:[%s2 + $0x148] sm:$0xff]
    %v1830 = vld [vmem:[%s2 + $0x150] sm:$0xff]
    %v1831 = vld [vmem:[%s2 + $0x158] sm:$0xff]
    %v1832 = vld [vmem:[%s2 + $0x160] sm:$0xff]
    %v1833 = vld [vmem:[%s2 + $0x168] sm:$0xff]
    %v1834 = vld [vmem:[%s2 + $0x170] sm:$0xff]
    %v1835 = vld [vmem:[%s2 + $0x178] sm:$0xff]
    %v1836 = vld [vmem:[%s2 + $0x180] sm:$0xff]
    %v1837 = vld [vmem:[%s2 + $0x188] sm:$0xff]
    %v1838 = vld [vmem:[%s2 + $0x190] sm:$0xff]
    %v1839 = vld [vmem:[%s2 + $0x198] sm:$0xff]
    %v1840 = vld [vmem:[%s2 + $0x1a0] sm:$0xff]
    %v1841 = vld [vmem:[%s2 + $0x1a8] sm:$0xff]
    %v1842 = vld [vmem:[%s2 + $0x1b0] sm:$0xff]
    %v1843 = vld [vmem:[%s2 + $0x1b8] sm:$0xff]
    %v1844 = vld [vmem:[%s2 + $0x1c0] sm:$0xff]
    %v1845 = vld [vmem:[%s2 + $0x1c8] sm:$0xff]
    %v1846 = vld [vmem:[%s2 + $0x1d0] sm:$0xff]
    %v1847 = vld [vmem:[%s2 + $0x1d8] sm:$0xff]
    %v1848 = vld [vmem:[%s2 + $0x1e0] sm:$0xff]
    %v1849 = vld [vmem:[%s2 + $0x1e8] sm:$0xff]
    %v1850 = vld [vmem:[%s2 + $0x1f0] sm:$0xff]
    %v1851 = vld [vmem:[%s2 + $0x1f8] sm:$0xff]
    %v1852 = vld [vmem:[%s2 + $0x200] sm:$0xff]
    %v1853 = vld [vmem:[%s2 + $0x208] sm:$0xff]
    %v1854 = vld [vmem:[%s2 + $0x210] sm:$0xff]
    %v1855 = vld [vmem:[%s2 + $0x218] sm:$0xff]
    %v1856 = vld [vmem:[%s2 + $0x220] sm:$0xff]
    %v1857 = vld [vmem:[%s2 + $0x228] sm:$0xff]
    %v1858 = vld [vmem:[%s2 + $0x230] sm:$0xff]
    %v1859 = vld [vmem:[%s2 + $0x238] sm:$0xff]
    %v1860 = vld [vmem:[%s2 + $0x240] sm:$0xff]
    %v1861 = vld [vmem:[%s2 + $0x248] sm:$0xff]
    %v1862 = vld [vmem:[%s2 + $0x250] sm:$0xff]
    %v1863 = vld [vmem:[%s2 + $0x258] sm:$0xff]
    %v1864 = vld [vmem:[%s2 + $0x260] sm:$0xff]
    %v1865 = vld [vmem:[%s2 + $0x268] sm:$0xff]
    %v1866 = vld [vmem:[%s2 + $0x270] sm:$0xff]
    %v1867 = vld [vmem:[%s2 + $0x278] sm:$0xff]
    %v1868 = vld [vmem:[%s2 + $0x280] sm:$0xff]
    %v1869 = vld [vmem:[%s2 + $0x288] sm:$0xff]
    %v1870 = vld [vmem:[%s2 + $0x290] sm:$0xff]
    %v1871 = vld [vmem:[%s2 + $0x298] sm:$0xff]
    %v1872 = vld [vmem:[%s2 + $0x2a0] sm:$0xff]
    %v1873 = vld [vmem:[%s2 + $0x2a8] sm:$0xff]
    %v1874 = vld [vmem:[%s2 + $0x2b0] sm:$0xff]
    %v1875 = vld [vmem:[%s2 + $0x2b8] sm:$0xff]
    %v1876 = vld [vmem:[%s2 + $0x2c0] sm:$0xff]
    %v1877 = vld [vmem:[%s2 + $0x2c8] sm:$0xff]
    %v1878 = vld [vmem:[%s2 + $0x2d0] sm:$0xff]
    %v1879 = vld [vmem:[%s2 + $0x2d8] sm:$0xff]
    %v1880 = vld [vmem:[%s2 + $0x2e0] sm:$0xff]
    %v1881 = vld [vmem:[%s2 + $0x2e8] sm:$0xff]
    %v1882 = vld [vmem:[%s2 + $0x2f0] sm:$0xff]
    %v1883 = vld [vmem:[%s2 + $0x2f8] sm:$0xff]
    %v1884 = vld [vmem:[%s2 + $0x300] sm:$0xff]
    %v1885 = vld [vmem:[%s2 + $0x308] sm:$0xff]
    %v1886 = vld [vmem:[%s2 + $0x310] sm:$0xff]
    %v1887 = vld [vmem:[%s2 + $0x318] sm:$0xff]
    %v1888 = vld [vmem:[%s2 + $0x320] sm:$0xff]
    %v1889 = vld [vmem:[%s2 + $0x328] sm:$0xff]
    %v1890 = vld [vmem:[%s2 + $0x330] sm:$0xff]
    %v1891 = vld [vmem:[%s2 + $0x338] sm:$0xff]
    %v1892 = vld [vmem:[%s2 + $0x340] sm:$0xff]
    %v1893 = vld [vmem:[%s2 + $0x348] sm:$0xff]
    %v1894 = vld [vmem:[%s2 + $0x350] sm:$0xff]
    %v1895 = vld [vmem:[%s2 + $0x358] sm:$0xff]
    %v1896 = vld [vmem:[%s2 + $0x360] sm:$0xff]
    %v1897 = vld [vmem:[%s2 + $0x368] sm:$0xff]
    %v1898 = vld [vmem:[%s2 + $0x370] sm:$0xff]
    %v1899 = vld [vmem:[%s2 + $0x378] sm:$0xff]
    %v1900 = vld [vmem:[%s2 + $0x380] sm:$0xff]
    %v1901 = vld [vmem:[%s2 + $0x388] sm:$0xff]
    %v1902 = vld [vmem:[%s2 + $0x390] sm:$0xff]
    %v1903 = vld [vmem:[%s2 + $0x398] sm:$0xff]
    %v1904 = vld [vmem:[%s2 + $0x3a0] sm:$0xff]
    %v1905 = vld [vmem:[%s2 + $0x3a8] sm:$0xff]
    %v1906 = vld [vmem:[%s2 + $0x3b0] sm:$0xff]
    %v1907 = vld [vmem:[%s2 + $0x3b8] sm:$0xff]
    %v1908 = vld [vmem:[%s2 + $0x3c0] sm:$0xff]
    %v1909 = vld [vmem:[%s2 + $0x3c8] sm:$0xff]
    %v1910 = vld [vmem:[%s2 + $0x3d0] sm:$0xff]
    %v1911 = vld [vmem:[%s2 + $0x3d8] sm:$0xff]
    %v1912 = vld [vmem:[%s2 + $0x3e0] sm:$0xff]
    %v1913 = vld [vmem:[%s2 + $0x3e8] sm:$0xff]
    %v1914 = vld [vmem:[%s2 + $0x3f0] sm:$0xff]
    %v1915 = vld [vmem:[%s2 + $0x3f8] sm:$0xff]
    %v1916 = vld [vmem:[%s2 + $0x400] sm:$0xff]
    %v1917 = vld [vmem:[%s2 + $0x408] sm:$0xff]
    %v1918 = vld [vmem:[%s2 + $0x410] sm:$0xff]
    %v1919 = vld [vmem:[%s2 + $0x418] sm:$0xff]
    %v1920 = vld [vmem:[%s2 + $0x420] sm:$0xff]
    %v1921 = vld [vmem:[%s2 + $0x428] sm:$0xff]
    %v1922 = vld [vmem:[%s2 + $0x430] sm:$0xff]
    %v1923 = vld [vmem:[%s2 + $0x438] sm:$0xff]
    %v1924 = vld [vmem:[%s2 + $0x440] sm:$0xff]
    %v1925 = vld [vmem:[%s2 + $0x448] sm:$0xff]
    %v1926 = vld [vmem:[%s2 + $0x450] sm:$0xff]
    %v1927 = vld [vmem:[%s2 + $0x458] sm:$0xff]
    %v1928 = vld [vmem:[%s2 + $0x460] sm:$0xff]
    %v1929 = vld [vmem:[%s2 + $0x468] sm:$0xff]
    %v1930 = vld [vmem:[%s2 + $0x470] sm:$0xff]
    %v1931 = vld [vmem:[%s2 + $0x478] sm:$0xff]
    %1932 = vmatprep.subr.mxu0 0.0
    %1933 = vmatpush1.msra.mxu0 %v1788
    %1934 = vmatprep.subr.mxu0 0.0
    %1935 = vmatpush1.msra.mxu0 %v1789
    %1936 = vmatprep.subr.mxu0 0.0
    %1937 = vmatpush1.msra.mxu0 %v1790
    %1938 = vmatprep.subr.mxu0 0.0
    %1939 = vmatpush1.msra.mxu0 %v1791
    %1940 = vmatprep.subr.mxu0 0.0
    %1941 = vmatpush1.msra.mxu0 %v1792
    %1942 = vmatprep.subr.mxu0 0.0
    %1943 = vmatpush1.msra.mxu0 %v1793
    %1944 = vmatprep.subr.mxu0 0.0
    %1945 = vmatpush1.msra.mxu0 %v1794
    %1946 = vmatprep.subr.mxu0 0.0
    %1947 = vmatpush1.msra.mxu0 %v1795
    %1948 = vmatprep.subr.mxu0 0.0
    %1949 = vmatpush1.msra.mxu0 %v1796
    %1950 = vmatprep.subr.mxu0 0.0
    %1951 = vmatpush1.msra.mxu0 %v1797
    %1952 = vmatprep.subr.mxu0 0.0
    %1953 = vmatpush1.msra.mxu0 %v1798
    %1954 = vmatprep.subr.mxu0 0.0
    %1955 = vmatpush1.msra.mxu0 %v1799
    %1956 = vmatprep.subr.mxu0 0.0
    %1957 = vmatpush1.msra.mxu0 %v1800
    %1958 = vmatprep.subr.mxu0 0.0
    %1959 = vmatpush1.msra.mxu0 %v1801
    %1960 = vmatprep.subr.mxu0 0.0
    %1961 = vmatpush1.msra.mxu0 %v1802
    %1962 = vmatprep.subr.mxu0 0.0
    %1963 = vmatpush1.msra.mxu0 %v1803
    %1964 = vmatprep.subr.mxu0 0.0
    %1965 = vmatpush1.msra.mxu0 %v1804
    %1966 = vmatprep.subr.mxu0 0.0
    %1967 = vmatpush1.msra.mxu0 %v1805
    %1968 = vmatprep.subr.mxu0 0.0
    %1969 = vmatpush1.msra.mxu0 %v1806
    %1970 = vmatprep.subr.mxu0 0.0
    %1971 = vmatpush1.msra.mxu0 %v1807
    %1972 = vmatprep.subr.mxu0 0.0
    %1973 = vmatpush1.msra.mxu0 %v1808
    %1974 = vmatprep.subr.mxu0 0.0
    %1975 = vmatpush1.msra.mxu0 %v1809
    %1976 = vmatprep.subr.mxu0 0.0
    %1977 = vmatpush1.msra.mxu0 %v1810
    %1978 = vmatprep.subr.mxu0 0.0
    %1979 = vmatpush1.msra.mxu0 %v1811
    %1980 = vmatprep.subr.mxu0 0.0
    %1981 = vmatpush1.msra.mxu0 %v1812
    %1982 = vmatprep.subr.mxu0 0.0
    %1983 = vmatpush1.msra.mxu0 %v1813
    %1984 = vmatprep.subr.mxu0 0.0
    %1985 = vmatpush1.msra.mxu0 %v1814
    %1986 = vmatprep.subr.mxu0 0.0
    %1987 = vmatpush1.msra.mxu0 %v1815
    %1988 = vmatprep.subr.mxu0 0.0
    %1989 = vmatpush1.msra.mxu0 %v1816
    %1990 = vmatprep.subr.mxu0 0.0
    %1991 = vmatpush1.msra.mxu0 %v1817
    %1992 = vmatprep.subr.mxu0 0.0
    %1993 = vmatpush1.msra.mxu0 %v1818
    %1994 = vmatprep.subr.mxu0 0.0
    %1995 = vmatpush1.msra.mxu0 %v1819
    %1996 = vmatprep.mubr.f32.mxu0 %v1213
    %1997 = vmatmul.mubr.f32.gmra.mrb[0].mxu0 %v1212
    %v1998 = vpop.f32.mrb[0].mxu0
    %v1999 = vadd.f32 0.0, %v1998
    %v2000 = vpop.f32.mrb[0].mxu0
    %2001 = vmatprep.mubr.f32.mxu0 %v1222
    %2002 = vmatmul.mubr.f32.gmra.mrb[0].mxu0 %v1221
    %v2003 = vpop.f32.mrb[0].mxu0
    %v2004 = vadd.f32 0.0, %v2003
    %v2005 = vpop.f32.mrb[0].mxu0
    %2006 = vmatprep.mubr.f32.mxu0 %v1231
    %2007 = vmatmul.mubr.f32.gmra.mrb[0].mxu0 %v1230
    %v2008 = vpop.f32.mrb[0].mxu0
    %v2009 = vadd.f32 0.0, %v2008
    %v2010 = vpop.f32.mrb[0].mxu0
    %2011 = vmatprep.mubr.f32.mxu0 %v1240
    %2012 = vmatmul.mubr.f32.gmra.mrb[0].mxu0 %v1239
    %v2013 = vpop.f32.mrb[0].mxu0
    %v2014 = vadd.f32 0.0, %v2013
    %v2015 = vpop.f32.mrb[0].mxu0
    %2016 = vmatprep.mubr.f32.mxu0 %v1249
    %2017 = vmatmul.mubr.f32.gmra.mrb[0].mxu0 %v1248
    %v2018 = vpop.f32.mrb[0].mxu0
    %v2019 = vadd.f32 0.0, %v2018
    %v2020 = vpop.f32.mrb[0].mxu0
    %2021 = vmatprep.mubr.f32.mxu0 %v1258
    %2022 = vmatmul.mubr.f32.gmra.mrb[0].mxu0 %v1257
    %v2023 = vpop.f32.mrb[0].mxu0
    %v2024 = vadd.f32 0.0, %v2023
    %v2025 = vpop.f32.mrb[0].mxu0
    %2026 = vmatprep.mubr.f32.mxu0 %v1267
    %2027 = vmatmul.mubr.f32.gmra.mrb[0].mxu0 %v1266
    %v2028 = vpop.f32.mrb[0].mxu0
    %v2029 = vadd.f32 0.0, %v2028
    %v2030 = vpop.f32.mrb[0].mxu0
    %2031 = vmatprep.mubr.f32.mxu0 %v1276
    %2032 = vmatmul.mubr.f32.gmra.mrb[0].mxu0 %v1275
    %v2033 = vpop.f32.mrb[0].mxu0
    %v2034 = vadd.f32 0.0, %v2033
    %v2035 = vpop.f32.mrb[0].mxu0
    %2036 = vmatprep.mubr.f32.mxu0 %v1285
    %2037 = vmatmul.mubr.f32.gmra.mrb[0].mxu0 %v1284
    %v2038 = vpop.f32.mrb[0].mxu0
    %v2039 = vadd.f32 0.0, %v2038
    %v2040 = vpop.f32.mrb[0].mxu0
    %2041 = vmatprep.mubr.f32.mxu0 %v1294
    %2042 = vmatmul.mubr.f32.gmra.mrb[0].mxu0 %v1293
    %v2043 = vpop.f32.mrb[0].mxu0
    %v2044 = vadd.f32 0.0, %v2043
    %v2045 = vpop.f32.mrb[0].mxu0
    %2046 = vmatprep.mubr.f32.mxu0 %v1303
    %2047 = vmatmul.mubr.f32.gmra.mrb[0].mxu0 %v1302
    %v2048 = vpop.f32.mrb[0].mxu0
    %v2049 = vadd.f32 0.0, %v2048
    %v2050 = vpop.f32.mrb[0].mxu0
    %2051 = vmatprep.mubr.f32.mxu0 %v1312
    %2052 = vmatmul.mubr.f32.gmra.mrb[0].mxu0 %v1311
    %v2053 = vpop.f32.mrb[0].mxu0
    %v2054 = vadd.f32 0.0, %v2053
    %v2055 = vpop.f32.mrb[0].mxu0
    %2056 = vmatprep.mubr.f32.mxu0 %v1321
    %2057 = vmatmul.mubr.f32.gmra.mrb[0].mxu0 %v1320
    %v2058 = vpop.f32.mrb[0].mxu0
    %v2059 = vadd.f32 0.0, %v2058
    %v2060 = vpop.f32.mrb[0].mxu0
    %2061 = vmatprep.mubr.f32.mxu0 %v1330
    %2062 = vmatmul.mubr.f32.gmra.mrb[0].mxu0 %v1329
    %v2063 = vpop.f32.mrb[0].mxu0
    %v2064 = vadd.f32 0.0, %v2063
    %v2065 = vpop.f32.mrb[0].mxu0
    %2066 = vmatprep.mubr.f32.mxu0 %v1339
    %2067 = vmatmul.mubr.f32.gmra.mrb[0].mxu0 %v1338
    %v2068 = vpop.f32.mrb[0].mxu0
    %v2069 = vadd.f32 0.0, %v2068
    %v2070 = vpop.f32.mrb[0].mxu0
    %2071 = vmatprep.mubr.f32.mxu0 %v1348
    %2072 = vmatmul.mubr.f32.gmra.mrb[0].mxu0 %v1347
    %v2073 = vpop.f32.mrb[0].mxu0
    %v2074 = vadd.f32 0.0, %v2073
    %v2075 = vpop.f32.mrb[0].mxu0
    %2076 = vmatprep.mubr.f32.mxu0 %v1357
    %2077 = vmatmul.mubr.f32.gmra.mrb[0].mxu0 %v1356
    %v2078 = vpop.f32.mrb[0].mxu0
    %v2079 = vadd.f32 0.0, %v2078
    %v2080 = vpop.f32.mrb[0].mxu0
    %2081 = vmatprep.mubr.f32.mxu0 %v1366
    %2082 = vmatmul.mubr.f32.gmra.mrb[0].mxu0 %v1365
    %v2083 = vpop.f32.mrb[0].mxu0
    %v2084 = vadd.f32 0.0, %v2083
    %v2085 = vpop.f32.mrb[0].mxu0
    %2086 = vmatprep.mubr.f32.mxu0 %v1375
    %2087 = vmatmul.mubr.f32.gmra.mrb[0].mxu0 %v1374
    %v2088 = vpop.f32.mrb[0].mxu0
    %v2089 = vadd.f32 0.0, %v2088
    %v2090 = vpop.f32.mrb[0].mxu0
    %2091 = vmatprep.mubr.f32.mxu0 %v1384
    %2092 = vmatmul.mubr.f32.gmra.mrb[0].mxu0 %v1383
    %v2093 = vpop.f32.mrb[0].mxu0
    %v2094 = vadd.f32 0.0, %v2093
    %v2095 = vpop.f32.mrb[0].mxu0
    %2096 = vmatprep.mubr.f32.mxu0 %v1393
    %2097 = vmatmul.mubr.f32.gmra.mrb[0].mxu0 %v1392
    %v2098 = vpop.f32.mrb[0].mxu0
    %v2099 = vadd.f32 0.0, %v2098
    %v2100 = vpop.f32.mrb[0].mxu0
    %2101 = vmatprep.mubr.f32.mxu0 %v1402
    %2102 = vmatmul.mubr.f32.gmra.mrb[0].mxu0 %v1401
    %v2103 = vpop.f32.mrb[0].mxu0
    %v2104 = vadd.f32 0.0, %v2103
    %v2105 = vpop.f32.mrb[0].mxu0
    %2106 = vmatprep.mubr.f32.mxu0 %v1411
    %2107 = vmatmul.mubr.f32.gmra.mrb[0].mxu0 %v1410
    %v2108 = vpop.f32.mrb[0].mxu0
    %v2109 = vadd.f32 0.0, %v2108
    %v2110 = vpop.f32.mrb[0].mxu0
    %2111 = vmatprep.mubr.f32.mxu0 %v1420
    %2112 = vmatmul.mubr.f32.gmra.mrb[0].mxu0 %v1419
    %v2113 = vpop.f32.mrb[0].mxu0
    %v2114 = vadd.f32 0.0, %v2113
    %v2115 = vpop.f32.mrb[0].mxu0
    %2116 = vmatprep.mubr.f32.mxu0 %v1429
    %2117 = vmatmul.mubr.f32.gmra.mrb[0].mxu0 %v1428
    %v2118 = vpop.f32.mrb[0].mxu0
    %v2119 = vadd.f32 0.0, %v2118
    %v2120 = vpop.f32.mrb[0].mxu0
    %2121 = vmatprep.mubr.f32.mxu0 %v1438
    %2122 = vmatmul.mubr.f32.gmra.mrb[0].mxu0 %v1437
    %v2123 = vpop.f32.mrb[0].mxu0
    %v2124 = vadd.f32 0.0, %v2123
    %v2125 = vpop.f32.mrb[0].mxu0
    %2126 = vmatprep.mubr.f32.mxu0 %v1447
    %2127 = vmatmul.mubr.f32.gmra.mrb[0].mxu0 %v1446
    %v2128 = vpop.f32.mrb[0].mxu0
    %v2129 = vadd.f32 0.0, %v2128
    %v2130 = vpop.f32.mrb[0].mxu0
    %2131 = vmatprep.mubr.f32.mxu0 %v1456
    %2132 = vmatmul.mubr.f32.gmra.mrb[0].mxu0 %v1455
    %v2133 = vpop.f32.mrb[0].mxu0
    %v2134 = vadd.f32 0.0, %v2133
    %v2135 = vpop.f32.mrb[0].mxu0
    %2136 = vmatprep.mubr.f32.mxu0 %v1465
    %2137 = vmatmul.mubr.f32.gmra.mrb[0].mxu0 %v1464
    %v2138 = vpop.f32.mrb[0].mxu0
    %v2139 = vadd.f32 0.0, %v2138
    %v2140 = vpop.f32.mrb[0].mxu0
    %2141 = vmatprep.mubr.f32.mxu0 %v1474
    %2142 = vmatmul.mubr.f32.gmra.mrb[0].mxu0 %v1473
    %v2143 = vpop.f32.mrb[0].mxu0
    %v2144 = vadd.f32 0.0, %v2143
    %v2145 = vpop.f32.mrb[0].mxu0
    %2146 = vmatprep.mubr.f32.mxu0 %v1483
    %2147 = vmatmul.mubr.f32.gmra.mrb[0].mxu0 %v1482
    %v2148 = vpop.f32.mrb[0].mxu0
    %v2149 = vadd.f32 0.0, %v2148
    %v2150 = vpop.f32.mrb[0].mxu0
    %2151 = vmatprep.mubr.f32.mxu0 %v1492
    %2152 = vmatmul.mubr.f32.gmra.mrb[0].mxu0 %v1491
    %v2153 = vpop.f32.mrb[0].mxu0
    %v2154 = vadd.f32 0.0, %v2153
    %v2155 = vpop.f32.mrb[0].mxu0
    %2156 = vmatprep.mubr.f32.mxu0 %v1501
    %2157 = vmatmul.mubr.f32.gmra.mrb[0].mxu0 %v1500
    %v2158 = vpop.f32.mrb[0].mxu0
    %v2159 = vadd.f32 0.0, %v2158
    %v2160 = vpop.f32.mrb[0].mxu0
    %2161 = vmatprep.mubr.f32.mxu0 %v1510
    %2162 = vmatmul.mubr.f32.gmra.mrb[0].mxu0 %v1509
    %v2163 = vpop.f32.mrb[0].mxu0
    %v2164 = vadd.f32 0.0, %v2163
    %v2165 = vpop.f32.mrb[0].mxu0
    %2166 = vmatprep.mubr.f32.mxu0 %v1519
    %2167 = vmatmul.mubr.f32.gmra.mrb[0].mxu0 %v1518
    %v2168 = vpop.f32.mrb[0].mxu0
    %v2169 = vadd.f32 0.0, %v2168
    %v2170 = vpop.f32.mrb[0].mxu0
    %2171 = vmatprep.mubr.f32.mxu0 %v1528
    %2172 = vmatmul.mubr.f32.gmra.mrb[0].mxu0 %v1527
    %v2173 = vpop.f32.mrb[0].mxu0
    %v2174 = vadd.f32 0.0, %v2173
    %v2175 = vpop.f32.mrb[0].mxu0
    %2176 = vmatprep.mubr.f32.mxu0 %v1537
    %2177 = vmatmul.mubr.f32.gmra.mrb[0].mxu0 %v1536
    %v2178 = vpop.f32.mrb[0].mxu0
    %v2179 = vadd.f32 0.0, %v2178
    %v2180 = vpop.f32.mrb[0].mxu0
    %2181 = vmatprep.mubr.f32.mxu0 %v1546
    %2182 = vmatmul.mubr.f32.gmra.mrb[0].mxu0 %v1545
    %v2183 = vpop.f32.mrb[0].mxu0
    %v2184 = vadd.f32 0.0, %v2183
    %v2185 = vpop.f32.mrb[0].mxu0
    %2186 = vmatprep.mubr.f32.mxu0 %v1555
    %2187 = vmatmul.mubr.f32.gmra.mrb[0].mxu0 %v1554
    %v2188 = vpop.f32.mrb[0].mxu0
    %v2189 = vadd.f32 0.0, %v2188
    %v2190 = vpop.f32.mrb[0].mxu0
    %2191 = vmatprep.mubr.f32.mxu0 %v1564
    %2192 = vmatmul.mubr.f32.gmra.mrb[0].mxu0 %v1563
    %v2193 = vpop.f32.mrb[0].mxu0
    %v2194 = vadd.f32 0.0, %v2193
    %v2195 = vpop.f32.mrb[0].mxu0
    %2196 = vmatprep.mubr.f32.mxu0 %v1573
    %2197 = vmatmul.mubr.f32.gmra.mrb[0].mxu0 %v1572
    %v2198 = vpop.f32.mrb[0].mxu0
    %v2199 = vadd.f32 0.0, %v2198
    %v2200 = vpop.f32.mrb[0].mxu0
    %2201 = vmatprep.mubr.f32.mxu0 %v1582
    %2202 = vmatmul.mubr.f32.gmra.mrb[0].mxu0 %v1581
    %v2203 = vpop.f32.mrb[0].mxu0
    %v2204 = vadd.f32 0.0, %v2203
    %v2205 = vpop.f32.mrb[0].mxu0
    %2206 = vmatprep.mubr.f32.mxu0 %v1591
    %2207 = vmatmul.mubr.f32.gmra.mrb[0].mxu0 %v1590
    %v2208 = vpop.f32.mrb[0].mxu0
    %v2209 = vadd.f32 0.0, %v2208
    %v2210 = vpop.f32.mrb[0].mxu0
    %2211 = vmatprep.mubr.f32.mxu0 %v1600
    %2212 = vmatmul.mubr.f32.gmra.mrb[0].mxu0 %v1599
    %v2213 = vpop.f32.mrb[0].mxu0
    %v2214 = vadd.f32 0.0, %v2213
    %v2215 = vpop.f32.mrb[0].mxu0
    %2216 = vmatprep.mubr.f32.mxu0 %v1609
    %2217 = vmatmul.mubr.f32.gmra.mrb[0].mxu0 %v1608
    %v2218 = vpop.f32.mrb[0].mxu0
    %v2219 = vadd.f32 0.0, %v2218
    %v2220 = vpop.f32.mrb[0].mxu0
    %2221 = vmatprep.mubr.f32.mxu0 %v1618
    %2222 = vmatmul.mubr.f32.gmra.mrb[0].mxu0 %v1617
    %v2223 = vpop.f32.mrb[0].mxu0
    %v2224 = vadd.f32 0.0, %v2223
    %v2225 = vpop.f32.mrb[0].mxu0
    %2226 = vmatprep.mubr.f32.mxu0 %v1627
    %2227 = vmatmul.mubr.f32.gmra.mrb[0].mxu0 %v1626
    %v2228 = vpop.f32.mrb[0].mxu0
    %v2229 = vadd.f32 0.0, %v2228
    %v2230 = vpop.f32.mrb[0].mxu0
    %2231 = vmatprep.mubr.f32.mxu0 %v1636
    %2232 = vmatmul.mubr.f32.gmra.mrb[0].mxu0 %v1635
    %v2233 = vpop.f32.mrb[0].mxu0
    %v2234 = vadd.f32 0.0, %v2233
    %v2235 = vpop.f32.mrb[0].mxu0
    %2236 = vmatprep.mubr.f32.mxu0 %v1645
    %2237 = vmatmul.mubr.f32.gmra.mrb[0].mxu0 %v1644
    %v2238 = vpop.f32.mrb[0].mxu0
    %v2239 = vadd.f32 0.0, %v2238
    %v2240 = vpop.f32.mrb[0].mxu0
    %2241 = vmatprep.mubr.f32.mxu0 %v1654
    %2242 = vmatmul.mubr.f32.gmra.mrb[0].mxu0 %v1653
    %v2243 = vpop.f32.mrb[0].mxu0
    %v2244 = vadd.f32 0.0, %v2243
    %v2245 = vpop.f32.mrb[0].mxu0
    %2246 = vmatprep.mubr.f32.mxu0 %v1663
    %2247 = vmatmul.mubr.f32.gmra.mrb[0].mxu0 %v1662
    %v2248 = vpop.f32.mrb[0].mxu0
    %v2249 = vadd.f32 0.0, %v2248
    %v2250 = vpop.f32.mrb[0].mxu0
    %2251 = vmatprep.mubr.f32.mxu0 %v1672
    %2252 = vmatmul.mubr.f32.gmra.mrb[0].mxu0 %v1671
    %v2253 = vpop.f32.mrb[0].mxu0
    %v2254 = vadd.f32 0.0, %v2253
    %v2255 = vpop.f32.mrb[0].mxu0
    %2256 = vmatprep.mubr.f32.mxu0 %v1681
    %2257 = vmatmul.mubr.f32.gmra.mrb[0].mxu0 %v1680
    %v2258 = vpop.f32.mrb[0].mxu0
    %v2259 = vadd.f32 0.0, %v2258
    %v2260 = vpop.f32.mrb[0].mxu0
    %2261 = vmatprep.mubr.f32.mxu0 %v1690
    %2262 = vmatmul.mubr.f32.gmra.mrb[0].mxu0 %v1689
    %v2263 = vpop.f32.mrb[0].mxu0
    %v2264 = vadd.f32 0.0, %v2263
    %v2265 = vpop.f32.mrb[0].mxu0
    %2266 = vmatprep.mubr.f32.mxu0 %v1699
    %2267 = vmatmul.mubr.f32.gmra.mrb[0].mxu0 %v1698
    %v2268 = vpop.f32.mrb[0].mxu0
    %v2269 = vadd.f32 0.0, %v2268
    %v2270 = vpop.f32.mrb[0].mxu0
    %2271 = vmatprep.mubr.f32.mxu0 %v1708
    %2272 = vmatmul.mubr.f32.gmra.mrb[0].mxu0 %v1707
    %v2273 = vpop.f32.mrb[0].mxu0
    %v2274 = vadd.f32 0.0, %v2273
    %v2275 = vpop.f32.mrb[0].mxu0
    %2276 = vmatprep.mubr.f32.mxu0 %v1717
    %2277 = vmatmul.mubr.f32.gmra.mrb[0].mxu0 %v1716
    %v2278 = vpop.f32.mrb[0].mxu0
    %v2279 = vadd.f32 0.0, %v2278
    %v2280 = vpop.f32.mrb[0].mxu0
    %2281 = vmatprep.mubr.f32.mxu0 %v1726
    %2282 = vmatmul.mubr.f32.gmra.mrb[0].mxu0 %v1725
    %v2283 = vpop.f32.mrb[0].mxu0
    %v2284 = vadd.f32 0.0, %v2283
    %v2285 = vpop.f32.mrb[0].mxu0
    %2286 = vmatprep.mubr.f32.mxu0 %v1735
    %2287 = vmatmul.mubr.f32.gmra.mrb[0].mxu0 %v1734
    %v2288 = vpop.f32.mrb[0].mxu0
    %v2289 = vadd.f32 0.0, %v2288
    %v2290 = vpop.f32.mrb[0].mxu0
    %2291 = vmatprep.mubr.f32.mxu0 %v1744
    %2292 = vmatmul.mubr.f32.gmra.mrb[0].mxu0 %v1743
    %v2293 = vpop.f32.mrb[0].mxu0
    %v2294 = vadd.f32 0.0, %v2293
    %v2295 = vpop.f32.mrb[0].mxu0
    %2296 = vmatprep.mubr.f32.mxu0 %v1753
    %2297 = vmatmul.mubr.f32.gmra.mrb[0].mxu0 %v1752
    %v2298 = vpop.f32.mrb[0].mxu0
    %v2299 = vadd.f32 0.0, %v2298
    %v2300 = vpop.f32.mrb[0].mxu0
    %2301 = vmatprep.mubr.f32.mxu0 %v1762
    %2302 = vmatmul.mubr.f32.gmra.mrb[0].mxu0 %v1761
    %v2303 = vpop.f32.mrb[0].mxu0
    %v2304 = vadd.f32 0.0, %v2303
    %v2305 = vpop.f32.mrb[0].mxu0
    %2306 = vmatprep.mubr.f32.mxu0 %v1771
    %2307 = vmatmul.mubr.f32.gmra.mrb[0].mxu0 %v1770
    %v2308 = vpop.f32.mrb[0].mxu0
    %v2309 = vadd.f32 0.0, %v2308
    %v2310 = vpop.f32.mrb[0].mxu0
    %2311 = vmatprep.mubr.f32.mxu0 %v1780
    %2312 = vmatmul.mubr.f32.gmra.mrb[0].mxu0 %v1779
    %v2313 = vpop.f32.mrb[0].mxu0
    %v2314 = vadd.f32 0.0, %v2313
    %v2315 = vpop.f32.mrb[0].mxu0
    %2316 = vdwg.mxu0
    %2317 = vmatprep.subr.mxu0 0.0
    %2318 = vmatpush1.msra.mxu0 %v1820
    %2319 = vmatprep.subr.mxu0 0.0
    %2320 = vmatpush1.msra.mxu0 %v1821
    %2321 = vmatprep.subr.mxu0 0.0
    %2322 = vmatpush1.msra.mxu0 %v1822
    %2323 = vmatprep.subr.mxu0 0.0
    %2324 = vmatpush1.msra.mxu0 %v1823
    %2325 = vmatprep.subr.mxu0 0.0
    %2326 = vmatpush1.msra.mxu0 %v1824
    %2327 = vmatprep.subr.mxu0 0.0
    %2328 = vmatpush1.msra.mxu0 %v1825
    %2329 = vmatprep.subr.mxu0 0.0
    %2330 = vmatpush1.msra.mxu0 %v1826
    %2331 = vmatprep.subr.mxu0 0.0
    %2332 = vmatpush1.msra.mxu0 %v1827
    %2333 = vmatprep.subr.mxu0 0.0
    %2334 = vmatpush1.msra.mxu0 %v1828
    %2335 = vmatprep.subr.mxu0 0.0
    %2336 = vmatpush1.msra.mxu0 %v1829
    %2337 = vmatprep.subr.mxu0 0.0
    %2338 = vmatpush1.msra.mxu0 %v1830
    %2339 = vmatprep.subr.mxu0 0.0
    %2340 = vmatpush1.msra.mxu0 %v1831
    %2341 = vmatprep.subr.mxu0 0.0
    %2342 = vmatpush1.msra.mxu0 %v1832
    %2343 = vmatprep.subr.mxu0 0.0
    %2344 = vmatpush1.msra.mxu0 %v1833
    %2345 = vmatprep.subr.mxu0 0.0
    %2346 = vmatpush1.msra.mxu0 %v1834
    %2347 = vmatprep.subr.mxu0 0.0
    %2348 = vmatpush1.msra.mxu0 %v1835
    %2349 = vmatprep.subr.mxu0 0.0
    %2350 = vmatpush1.msra.mxu0 %v1836
    %2351 = vmatprep.subr.mxu0 0.0
    %2352 = vmatpush1.msra.mxu0 %v1837
    %2353 = vmatprep.subr.mxu0 0.0
    %2354 = vmatpush1.msra.mxu0 %v1838
    %2355 = vmatprep.subr.mxu0 0.0
    %2356 = vmatpush1.msra.mxu0 %v1839
    %2357 = vmatprep.subr.mxu0 0.0
    %2358 = vmatpush1.msra.mxu0 %v1840
    %2359 = vmatprep.subr.mxu0 0.0
    %2360 = vmatpush1.msra.mxu0 %v1841
    %2361 = vmatprep.subr.mxu0 0.0
    %2362 = vmatpush1.msra.mxu0 %v1842
    %2363 = vmatprep.subr.mxu0 0.0
    %2364 = vmatpush1.msra.mxu0 %v1843
    %2365 = vmatprep.subr.mxu0 0.0
    %2366 = vmatpush1.msra.mxu0 %v1844
    %2367 = vmatprep.subr.mxu0 0.0
    %2368 = vmatpush1.msra.mxu0 %v1845
    %2369 = vmatprep.subr.mxu0 0.0
    %2370 = vmatpush1.msra.mxu0 %v1846
    %2371 = vmatprep.subr.mxu0 0.0
    %2372 = vmatpush1.msra.mxu0 %v1847
    %2373 = vmatprep.subr.mxu0 0.0
    %2374 = vmatpush1.msra.mxu0 %v1848
    %2375 = vmatprep.subr.mxu0 0.0
    %2376 = vmatpush1.msra.mxu0 %v1849
    %2377 = vmatprep.subr.mxu0 0.0
    %2378 = vmatpush1.msra.mxu0 %v1850
    %2379 = vmatprep.subr.mxu0 0.0
    %2380 = vmatpush1.msra.mxu0 %v1851
    %2381 = vmatprep.mubr.f32.mxu0 %v1215
    %2382 = vmatmul.mubr.f32.gmra.mrb[0].mxu0 %v1214
    %v2383 = vpop.f32.mrb[0].mxu0
    %v2384 = vadd.f32 %v1999, %v2383
    %v2385 = vpop.f32.mrb[0].mxu0
    %2386 = vmatprep.mubr.f32.mxu0 %v1224
    %2387 = vmatmul.mubr.f32.gmra.mrb[0].mxu0 %v1223
    %v2388 = vpop.f32.mrb[0].mxu0
    %v2389 = vadd.f32 %v2004, %v2388
    %v2390 = vpop.f32.mrb[0].mxu0
    %2391 = vmatprep.mubr.f32.mxu0 %v1233
    %2392 = vmatmul.mubr.f32.gmra.mrb[0].mxu0 %v1232
    %v2393 = vpop.f32.mrb[0].mxu0
    %v2394 = vadd.f32 %v2009, %v2393
    %v2395 = vpop.f32.mrb[0].mxu0
    %2396 = vmatprep.mubr.f32.mxu0 %v1242
    %2397 = vmatmul.mubr.f32.gmra.mrb[0].mxu0 %v1241
    %v2398 = vpop.f32.mrb[0].mxu0
    %v2399 = vadd.f32 %v2014, %v2398
    %v2400 = vpop.f32.mrb[0].mxu0
    %2401 = vmatprep.mubr.f32.mxu0 %v1251
    %2402 = vmatmul.mubr.f32.gmra.mrb[0].mxu0 %v1250
    %v2403 = vpop.f32.mrb[0].mxu0
    %v2404 = vadd.f32 %v2019, %v2403
    %v2405 = vpop.f32.mrb[0].mxu0
    %2406 = vmatprep.mubr.f32.mxu0 %v1260
    %2407 = vmatmul.mubr.f32.gmra.mrb[0].mxu0 %v1259
    %v2408 = vpop.f32.mrb[0].mxu0
    %v2409 = vadd.f32 %v2024, %v2408
    %v2410 = vpop.f32.mrb[0].mxu0
    %2411 = vmatprep.mubr.f32.mxu0 %v1269
    %2412 = vmatmul.mubr.f32.gmra.mrb[0].mxu0 %v1268
    %v2413 = vpop.f32.mrb[0].mxu0
    %v2414 = vadd.f32 %v2029, %v2413
    %v2415 = vpop.f32.mrb[0].mxu0
    %2416 = vmatprep.mubr.f32.mxu0 %v1278
    %2417 = vmatmul.mubr.f32.gmra.mrb[0].mxu0 %v1277
    %v2418 = vpop.f32.mrb[0].mxu0
    %v2419 = vadd.f32 %v2034, %v2418
    %v2420 = vpop.f32.mrb[0].mxu0
    %2421 = vmatprep.mubr.f32.mxu0 %v1287
    %2422 = vmatmul.mubr.f32.gmra.mrb[0].mxu0 %v1286
    %v2423 = vpop.f32.mrb[0].mxu0
    %v2424 = vadd.f32 %v2039, %v2423
    %v2425 = vpop.f32.mrb[0].mxu0
    %2426 = vmatprep.mubr.f32.mxu0 %v1296
    %2427 = vmatmul.mubr.f32.gmra.mrb[0].mxu0 %v1295
    %v2428 = vpop.f32.mrb[0].mxu0
    %v2429 = vadd.f32 %v2044, %v2428
    %v2430 = vpop.f32.mrb[0].mxu0
    %2431 = vmatprep.mubr.f32.mxu0 %v1305
    %2432 = vmatmul.mubr.f32.gmra.mrb[0].mxu0 %v1304
    %v2433 = vpop.f32.mrb[0].mxu0
    %v2434 = vadd.f32 %v2049, %v2433
    %v2435 = vpop.f32.mrb[0].mxu0
    %2436 = vmatprep.mubr.f32.mxu0 %v1314
    %2437 = vmatmul.mubr.f32.gmra.mrb[0].mxu0 %v1313
    %v2438 = vpop.f32.mrb[0].mxu0
    %v2439 = vadd.f32 %v2054, %v2438
    %v2440 = vpop.f32.mrb[0].mxu0
    %2441 = vmatprep.mubr.f32.mxu0 %v1323
    %2442 = vmatmul.mubr.f32.gmra.mrb[0].mxu0 %v1322
    %v2443 = vpop.f32.mrb[0].mxu0
    %v2444 = vadd.f32 %v2059, %v2443
    %v2445 = vpop.f32.mrb[0].mxu0
    %2446 = vmatprep.mubr.f32.mxu0 %v1332
    %2447 = vmatmul.mubr.f32.gmra.mrb[0].mxu0 %v1331
    %v2448 = vpop.f32.mrb[0].mxu0
    %v2449 = vadd.f32 %v2064, %v2448
    %v2450 = vpop.f32.mrb[0].mxu0
    %2451 = vmatprep.mubr.f32.mxu0 %v1341
    %2452 = vmatmul.mubr.f32.gmra.mrb[0].mxu0 %v1340
    %v2453 = vpop.f32.mrb[0].mxu0
    %v2454 = vadd.f32 %v2069, %v2453
    %v2455 = vpop.f32.mrb[0].mxu0
    %2456 = vmatprep.mubr.f32.mxu0 %v1350
    %2457 = vmatmul.mubr.f32.gmra.mrb[0].mxu0 %v1349
    %v2458 = vpop.f32.mrb[0].mxu0
    %v2459 = vadd.f32 %v2074, %v2458
    %v2460 = vpop.f32.mrb[0].mxu0
    %2461 = vmatprep.mubr.f32.mxu0 %v1359
    %2462 = vmatmul.mubr.f32.gmra.mrb[0].mxu0 %v1358
    %v2463 = vpop.f32.mrb[0].mxu0
    %v2464 = vadd.f32 %v2079, %v2463
    %v2465 = vpop.f32.mrb[0].mxu0
    %2466 = vmatprep.mubr.f32.mxu0 %v1368
    %2467 = vmatmul.mubr.f32.gmra.mrb[0].mxu0 %v1367
    %v2468 = vpop.f32.mrb[0].mxu0
    %v2469 = vadd.f32 %v2084, %v2468
    %v2470 = vpop.f32.mrb[0].mxu0
    %2471 = vmatprep.mubr.f32.mxu0 %v1377
    %2472 = vmatmul.mubr.f32.gmra.mrb[0].mxu0 %v1376
    %v2473 = vpop.f32.mrb[0].mxu0
    %v2474 = vadd.f32 %v2089, %v2473
    %v2475 = vpop.f32.mrb[0].mxu0
    %2476 = vmatprep.mubr.f32.mxu0 %v1386
    %2477 = vmatmul.mubr.f32.gmra.mrb[0].mxu0 %v1385
    %v2478 = vpop.f32.mrb[0].mxu0
    %v2479 = vadd.f32 %v2094, %v2478
    %v2480 = vpop.f32.mrb[0].mxu0
    %2481 = vmatprep.mubr.f32.mxu0 %v1395
    %2482 = vmatmul.mubr.f32.gmra.mrb[0].mxu0 %v1394
    %v2483 = vpop.f32.mrb[0].mxu0
    %v2484 = vadd.f32 %v2099, %v2483
    %v2485 = vpop.f32.mrb[0].mxu0
    %2486 = vmatprep.mubr.f32.mxu0 %v1404
    %2487 = vmatmul.mubr.f32.gmra.mrb[0].mxu0 %v1403
    %v2488 = vpop.f32.mrb[0].mxu0
    %v2489 = vadd.f32 %v2104, %v2488
    %v2490 = vpop.f32.mrb[0].mxu0
    %2491 = vmatprep.mubr.f32.mxu0 %v1413
    %2492 = vmatmul.mubr.f32.gmra.mrb[0].mxu0 %v1412
    %v2493 = vpop.f32.mrb[0].mxu0
    %v2494 = vadd.f32 %v2109, %v2493
    %v2495 = vpop.f32.mrb[0].mxu0
    %2496 = vmatprep.mubr.f32.mxu0 %v1422
    %2497 = vmatmul.mubr.f32.gmra.mrb[0].mxu0 %v1421
    %v2498 = vpop.f32.mrb[0].mxu0
    %v2499 = vadd.f32 %v2114, %v2498
    %v2500 = vpop.f32.mrb[0].mxu0
    %2501 = vmatprep.mubr.f32.mxu0 %v1431
    %2502 = vmatmul.mubr.f32.gmra.mrb[0].mxu0 %v1430
    %v2503 = vpop.f32.mrb[0].mxu0
    %v2504 = vadd.f32 %v2119, %v2503
    %v2505 = vpop.f32.mrb[0].mxu0
    %2506 = vmatprep.mubr.f32.mxu0 %v1440
    %2507 = vmatmul.mubr.f32.gmra.mrb[0].mxu0 %v1439
    %v2508 = vpop.f32.mrb[0].mxu0
    %v2509 = vadd.f32 %v2124, %v2508
    %v2510 = vpop.f32.mrb[0].mxu0
    %2511 = vmatprep.mubr.f32.mxu0 %v1449
    %2512 = vmatmul.mubr.f32.gmra.mrb[0].mxu0 %v1448
    %v2513 = vpop.f32.mrb[0].mxu0
    %v2514 = vadd.f32 %v2129, %v2513
    %v2515 = vpop.f32.mrb[0].mxu0
    %2516 = vmatprep.mubr.f32.mxu0 %v1458
    %2517 = vmatmul.mubr.f32.gmra.mrb[0].mxu0 %v1457
    %v2518 = vpop.f32.mrb[0].mxu0
    %v2519 = vadd.f32 %v2134, %v2518
    %v2520 = vpop.f32.mrb[0].mxu0
    %2521 = vmatprep.mubr.f32.mxu0 %v1467
    %2522 = vmatmul.mubr.f32.gmra.mrb[0].mxu0 %v1466
    %v2523 = vpop.f32.mrb[0].mxu0
    %v2524 = vadd.f32 %v2139, %v2523
    %v2525 = vpop.f32.mrb[0].mxu0
    %2526 = vmatprep.mubr.f32.mxu0 %v1476
    %2527 = vmatmul.mubr.f32.gmra.mrb[0].mxu0 %v1475
    %v2528 = vpop.f32.mrb[0].mxu0
    %v2529 = vadd.f32 %v2144, %v2528
    %v2530 = vpop.f32.mrb[0].mxu0
    %2531 = vmatprep.mubr.f32.mxu0 %v1485
    %2532 = vmatmul.mubr.f32.gmra.mrb[0].mxu0 %v1484
    %v2533 = vpop.f32.mrb[0].mxu0
    %v2534 = vadd.f32 %v2149, %v2533
    %v2535 = vpop.f32.mrb[0].mxu0
    %2536 = vmatprep.mubr.f32.mxu0 %v1494
    %2537 = vmatmul.mubr.f32.gmra.mrb[0].mxu0 %v1493
    %v2538 = vpop.f32.mrb[0].mxu0
    %v2539 = vadd.f32 %v2154, %v2538
    %v2540 = vpop.f32.mrb[0].mxu0
    %2541 = vmatprep.mubr.f32.mxu0 %v1503
    %2542 = vmatmul.mubr.f32.gmra.mrb[0].mxu0 %v1502
    %v2543 = vpop.f32.mrb[0].mxu0
    %v2544 = vadd.f32 %v2159, %v2543
    %v2545 = vpop.f32.mrb[0].mxu0
    %2546 = vmatprep.mubr.f32.mxu0 %v1512
    %2547 = vmatmul.mubr.f32.gmra.mrb[0].mxu0 %v1511
    %v2548 = vpop.f32.mrb[0].mxu0
    %v2549 = vadd.f32 %v2164, %v2548
    %v2550 = vpop.f32.mrb[0].mxu0
    %2551 = vmatprep.mubr.f32.mxu0 %v1521
    %2552 = vmatmul.mubr.f32.gmra.mrb[0].mxu0 %v1520
    %v2553 = vpop.f32.mrb[0].mxu0
    %v2554 = vadd.f32 %v2169, %v2553
    %v2555 = vpop.f32.mrb[0].mxu0
    %2556 = vmatprep.mubr.f32.mxu0 %v1530
    %2557 = vmatmul.mubr.f32.gmra.mrb[0].mxu0 %v1529
    %v2558 = vpop.f32.mrb[0].mxu0
    %v2559 = vadd.f32 %v2174, %v2558
    %v2560 = vpop.f32.mrb[0].mxu0
    %2561 = vmatprep.mubr.f32.mxu0 %v1539
    %2562 = vmatmul.mubr.f32.gmra.mrb[0].mxu0 %v1538
    %v2563 = vpop.f32.mrb[0].mxu0
    %v2564 = vadd.f32 %v2179, %v2563
    %v2565 = vpop.f32.mrb[0].mxu0
    %2566 = vmatprep.mubr.f32.mxu0 %v1548
    %2567 = vmatmul.mubr.f32.gmra.mrb[0].mxu0 %v1547
    %v2568 = vpop.f32.mrb[0].mxu0
    %v2569 = vadd.f32 %v2184, %v2568
    %v2570 = vpop.f32.mrb[0].mxu0
    %2571 = vmatprep.mubr.f32.mxu0 %v1557
    %2572 = vmatmul.mubr.f32.gmra.mrb[0].mxu0 %v1556
    %v2573 = vpop.f32.mrb[0].mxu0
    %v2574 = vadd.f32 %v2189, %v2573
    %v2575 = vpop.f32.mrb[0].mxu0
    %2576 = vmatprep.mubr.f32.mxu0 %v1566
    %2577 = vmatmul.mubr.f32.gmra.mrb[0].mxu0 %v1565
    %v2578 = vpop.f32.mrb[0].mxu0
    %v2579 = vadd.f32 %v2194, %v2578
    %v2580 = vpop.f32.mrb[0].mxu0
    %2581 = vmatprep.mubr.f32.mxu0 %v1575
    %2582 = vmatmul.mubr.f32.gmra.mrb[0].mxu0 %v1574
    %v2583 = vpop.f32.mrb[0].mxu0
    %v2584 = vadd.f32 %v2199, %v2583
    %v2585 = vpop.f32.mrb[0].mxu0
    %2586 = vmatprep.mubr.f32.mxu0 %v1584
    %2587 = vmatmul.mubr.f32.gmra.mrb[0].mxu0 %v1583
    %v2588 = vpop.f32.mrb[0].mxu0
    %v2589 = vadd.f32 %v2204, %v2588
    %v2590 = vpop.f32.mrb[0].mxu0
    %2591 = vmatprep.mubr.f32.mxu0 %v1593
    %2592 = vmatmul.mubr.f32.gmra.mrb[0].mxu0 %v1592
    %v2593 = vpop.f32.mrb[0].mxu0
    %v2594 = vadd.f32 %v2209, %v2593
    %v2595 = vpop.f32.mrb[0].mxu0
    %2596 = vmatprep.mubr.f32.mxu0 %v1602
    %2597 = vmatmul.mubr.f32.gmra.mrb[0].mxu0 %v1601
    %v2598 = vpop.f32.mrb[0].mxu0
    %v2599 = vadd.f32 %v2214, %v2598
    %v2600 = vpop.f32.mrb[0].mxu0
    %2601 = vmatprep.mubr.f32.mxu0 %v1611
    %2602 = vmatmul.mubr.f32.gmra.mrb[0].mxu0 %v1610
    %v2603 = vpop.f32.mrb[0].mxu0
    %v2604 = vadd.f32 %v2219, %v2603
    %v2605 = vpop.f32.mrb[0].mxu0
    %2606 = vmatprep.mubr.f32.mxu0 %v1620
    %2607 = vmatmul.mubr.f32.gmra.mrb[0].mxu0 %v1619
    %v2608 = vpop.f32.mrb[0].mxu0
    %v2609 = vadd.f32 %v2224, %v2608
    %v2610 = vpop.f32.mrb[0].mxu0
    %2611 = vmatprep.mubr.f32.mxu0 %v1629
    %2612 = vmatmul.mubr.f32.gmra.mrb[0].mxu0 %v1628
    %v2613 = vpop.f32.mrb[0].mxu0
    %v2614 = vadd.f32 %v2229, %v2613
    %v2615 = vpop.f32.mrb[0].mxu0
    %2616 = vmatprep.mubr.f32.mxu0 %v1638
    %2617 = vmatmul.mubr.f32.gmra.mrb[0].mxu0 %v1637
    %v2618 = vpop.f32.mrb[0].mxu0
    %v2619 = vadd.f32 %v2234, %v2618
    %v2620 = vpop.f32.mrb[0].mxu0
    %2621 = vmatprep.mubr.f32.mxu0 %v1647
    %2622 = vmatmul.mubr.f32.gmra.mrb[0].mxu0 %v1646
    %v2623 = vpop.f32.mrb[0].mxu0
    %v2624 = vadd.f32 %v2239, %v2623
    %v2625 = vpop.f32.mrb[0].mxu0
    %2626 = vmatprep.mubr.f32.mxu0 %v1656
    %2627 = vmatmul.mubr.f32.gmra.mrb[0].mxu0 %v1655
    %v2628 = vpop.f32.mrb[0].mxu0
    %v2629 = vadd.f32 %v2244, %v2628
    %v2630 = vpop.f32.mrb[0].mxu0
    %2631 = vmatprep.mubr.f32.mxu0 %v1665
    %2632 = vmatmul.mubr.f32.gmra.mrb[0].mxu0 %v1664
    %v2633 = vpop.f32.mrb[0].mxu0
    %v2634 = vadd.f32 %v2249, %v2633
    %v2635 = vpop.f32.mrb[0].mxu0
    %2636 = vmatprep.mubr.f32.mxu0 %v1674
    %2637 = vmatmul.mubr.f32.gmra.mrb[0].mxu0 %v1673
    %v2638 = vpop.f32.mrb[0].mxu0
    %v2639 = vadd.f32 %v2254, %v2638
    %v2640 = vpop.f32.mrb[0].mxu0
    %2641 = vmatprep.mubr.f32.mxu0 %v1683
    %2642 = vmatmul.mubr.f32.gmra.mrb[0].mxu0 %v1682
    %v2643 = vpop.f32.mrb[0].mxu0
    %v2644 = vadd.f32 %v2259, %v2643
    %v2645 = vpop.f32.mrb[0].mxu0
    %2646 = vmatprep.mubr.f32.mxu0 %v1692
    %2647 = vmatmul.mubr.f32.gmra.mrb[0].mxu0 %v1691
    %v2648 = vpop.f32.mrb[0].mxu0
    %v2649 = vadd.f32 %v2264, %v2648
    %v2650 = vpop.f32.mrb[0].mxu0
    %2651 = vmatprep.mubr.f32.mxu0 %v1701
    %2652 = vmatmul.mubr.f32.gmra.mrb[0].mxu0 %v1700
    %v2653 = vpop.f32.mrb[0].mxu0
    %v2654 = vadd.f32 %v2269, %v2653
    %v2655 = vpop.f32.mrb[0].mxu0
    %2656 = vmatprep.mubr.f32.mxu0 %v1710
    %2657 = vmatmul.mubr.f32.gmra.mrb[0].mxu0 %v1709
    %v2658 = vpop.f32.mrb[0].mxu0
    %v2659 = vadd.f32 %v2274, %v2658
    %v2660 = vpop.f32.mrb[0].mxu0
    %2661 = vmatprep.mubr.f32.mxu0 %v1719
    %2662 = vmatmul.mubr.f32.gmra.mrb[0].mxu0 %v1718
    %v2663 = vpop.f32.mrb[0].mxu0
    %v2664 = vadd.f32 %v2279, %v2663
    %v2665 = vpop.f32.mrb[0].mxu0
    %2666 = vmatprep.mubr.f32.mxu0 %v1728
    %2667 = vmatmul.mubr.f32.gmra.mrb[0].mxu0 %v1727
    %v2668 = vpop.f32.mrb[0].mxu0
    %v2669 = vadd.f32 %v2284, %v2668
    %v2670 = vpop.f32.mrb[0].mxu0
    %2671 = vmatprep.mubr.f32.mxu0 %v1737
    %2672 = vmatmul.mubr.f32.gmra.mrb[0].mxu0 %v1736
    %v2673 = vpop.f32.mrb[0].mxu0
    %v2674 = vadd.f32 %v2289, %v2673
    %v2675 = vpop.f32.mrb[0].mxu0
    %2676 = vmatprep.mubr.f32.mxu0 %v1746
    %2677 = vmatmul.mubr.f32.gmra.mrb[0].mxu0 %v1745
    %v2678 = vpop.f32.mrb[0].mxu0
    %v2679 = vadd.f32 %v2294, %v2678
    %v2680 = vpop.f32.mrb[0].mxu0
    %2681 = vmatprep.mubr.f32.mxu0 %v1755
    %2682 = vmatmul.mubr.f32.gmra.mrb[0].mxu0 %v1754
    %v2683 = vpop.f32.mrb[0].mxu0
    %v2684 = vadd.f32 %v2299, %v2683
    %v2685 = vpop.f32.mrb[0].mxu0
    %2686 = vmatprep.mubr.f32.mxu0 %v1764
    %2687 = vmatmul.mubr.f32.gmra.mrb[0].mxu0 %v1763
    %v2688 = vpop.f32.mrb[0].mxu0
    %v2689 = vadd.f32 %v2304, %v2688
    %v2690 = vpop.f32.mrb[0].mxu0
    %2691 = vmatprep.mubr.f32.mxu0 %v1773
    %2692 = vmatmul.mubr.f32.gmra.mrb[0].mxu0 %v1772
    %v2693 = vpop.f32.mrb[0].mxu0
    %v2694 = vadd.f32 %v2309, %v2693
    %v2695 = vpop.f32.mrb[0].mxu0
    %2696 = vmatprep.mubr.f32.mxu0 %v1782
    %2697 = vmatmul.mubr.f32.gmra.mrb[0].mxu0 %v1781
    %v2698 = vpop.f32.mrb[0].mxu0
    %v2699 = vadd.f32 %v2314, %v2698
    %v2700 = vpop.f32.mrb[0].mxu0
    %2701 = vdwg.mxu0
    %2702 = vmatprep.subr.mxu0 0.0
    %2703 = vmatpush1.msra.mxu0 %v1852
    %2704 = vmatprep.subr.mxu0 0.0
    %2705 = vmatpush1.msra.mxu0 %v1853
    %2706 = vmatprep.subr.mxu0 0.0
    %2707 = vmatpush1.msra.mxu0 %v1854
    %2708 = vmatprep.subr.mxu0 0.0
    %2709 = vmatpush1.msra.mxu0 %v1855
    %2710 = vmatprep.subr.mxu0 0.0
    %2711 = vmatpush1.msra.mxu0 %v1856
    %2712 = vmatprep.subr.mxu0 0.0
    %2713 = vmatpush1.msra.mxu0 %v1857
    %2714 = vmatprep.subr.mxu0 0.0
    %2715 = vmatpush1.msra.mxu0 %v1858
    %2716 = vmatprep.subr.mxu0 0.0
    %2717 = vmatpush1.msra.mxu0 %v1859
    %2718 = vmatprep.subr.mxu0 0.0
    %2719 = vmatpush1.msra.mxu0 %v1860
    %2720 = vmatprep.subr.mxu0 0.0
    %2721 = vmatpush1.msra.mxu0 %v1861
    %2722 = vmatprep.subr.mxu0 0.0
    %2723 = vmatpush1.msra.mxu0 %v1862
    %2724 = vmatprep.subr.mxu0 0.0
    %2725 = vmatpush1.msra.mxu0 %v1863
    %2726 = vmatprep.subr.mxu0 0.0
    %2727 = vmatpush1.msra.mxu0 %v1864
    %2728 = vmatprep.subr.mxu0 0.0
    %2729 = vmatpush1.msra.mxu0 %v1865
    %2730 = vmatprep.subr.mxu0 0.0
    %2731 = vmatpush1.msra.mxu0 %v1866
    %2732 = vmatprep.subr.mxu0 0.0
    %2733 = vmatpush1.msra.mxu0 %v1867
    %2734 = vmatprep.subr.mxu0 0.0
    %2735 = vmatpush1.msra.mxu0 %v1868
    %2736 = vmatprep.subr.mxu0 0.0
    %2737 = vmatpush1.msra.mxu0 %v1869
    %2738 = vmatprep.subr.mxu0 0.0
    %2739 = vmatpush1.msra.mxu0 %v1870
    %2740 = vmatprep.subr.mxu0 0.0
    %2741 = vmatpush1.msra.mxu0 %v1871
    %2742 = vmatprep.subr.mxu0 0.0
    %2743 = vmatpush1.msra.mxu0 %v1872
    %2744 = vmatprep.subr.mxu0 0.0
    %2745 = vmatpush1.msra.mxu0 %v1873
    %2746 = vmatprep.subr.mxu0 0.0
    %2747 = vmatpush1.msra.mxu0 %v1874
    %2748 = vmatprep.subr.mxu0 0.0
    %2749 = vmatpush1.msra.mxu0 %v1875
    %2750 = vmatprep.subr.mxu0 0.0
    %2751 = vmatpush1.msra.mxu0 %v1876
    %2752 = vmatprep.subr.mxu0 0.0
    %2753 = vmatpush1.msra.mxu0 %v1877
    %2754 = vmatprep.subr.mxu0 0.0
    %2755 = vmatpush1.msra.mxu0 %v1878
    %2756 = vmatprep.subr.mxu0 0.0
    %2757 = vmatpush1.msra.mxu0 %v1879
    %2758 = vmatprep.subr.mxu0 0.0
    %2759 = vmatpush1.msra.mxu0 %v1880
    %2760 = vmatprep.subr.mxu0 0.0
    %2761 = vmatpush1.msra.mxu0 %v1881
    %2762 = vmatprep.subr.mxu0 0.0
    %2763 = vmatpush1.msra.mxu0 %v1882
    %2764 = vmatprep.subr.mxu0 0.0
    %2765 = vmatpush1.msra.mxu0 %v1883
    %2766 = vmatprep.mubr.f32.mxu0 %v1217
    %2767 = vmatmul.mubr.f32.gmra.mrb[0].mxu0 %v1216
    %v2768 = vpop.f32.mrb[0].mxu0
    %v2769 = vadd.f32 %v2384, %v2768
    %v2770 = vpop.f32.mrb[0].mxu0
    %2771 = vmatprep.mubr.f32.mxu0 %v1226
    %2772 = vmatmul.mubr.f32.gmra.mrb[0].mxu0 %v1225
    %v2773 = vpop.f32.mrb[0].mxu0
    %v2774 = vadd.f32 %v2389, %v2773
    %v2775 = vpop.f32.mrb[0].mxu0
    %2776 = vmatprep.mubr.f32.mxu0 %v1235
    %2777 = vmatmul.mubr.f32.gmra.mrb[0].mxu0 %v1234
    %v2778 = vpop.f32.mrb[0].mxu0
    %v2779 = vadd.f32 %v2394, %v2778
    %v2780 = vpop.f32.mrb[0].mxu0
    %2781 = vmatprep.mubr.f32.mxu0 %v1244
    %2782 = vmatmul.mubr.f32.gmra.mrb[0].mxu0 %v1243
    %v2783 = vpop.f32.mrb[0].mxu0
    %v2784 = vadd.f32 %v2399, %v2783
    %v2785 = vpop.f32.mrb[0].mxu0
    %2786 = vmatprep.mubr.f32.mxu0 %v1253
    %2787 = vmatmul.mubr.f32.gmra.mrb[0].mxu0 %v1252
    %v2788 = vpop.f32.mrb[0].mxu0
    %v2789 = vadd.f32 %v2404, %v2788
    %v2790 = vpop.f32.mrb[0].mxu0
    %2791 = vmatprep.mubr.f32.mxu0 %v1262
    %2792 = vmatmul.mubr.f32.gmra.mrb[0].mxu0 %v1261
    %v2793 = vpop.f32.mrb[0].mxu0
    %v2794 = vadd.f32 %v2409, %v2793
    %v2795 = vpop.f32.mrb[0].mxu0
    %2796 = vmatprep.mubr.f32.mxu0 %v1271
    %2797 = vmatmul.mubr.f32.gmra.mrb[0].mxu0 %v1270
    %v2798 = vpop.f32.mrb[0].mxu0
    %v2799 = vadd.f32 %v2414, %v2798
    %v2800 = vpop.f32.mrb[0].mxu0
    %2801 = vmatprep.mubr.f32.mxu0 %v1280
    %2802 = vmatmul.mubr.f32.gmra.mrb[0].mxu0 %v1279
    %v2803 = vpop.f32.mrb[0].mxu0
    %v2804 = vadd.f32 %v2419, %v2803
    %v2805 = vpop.f32.mrb[0].mxu0
    %2806 = vmatprep.mubr.f32.mxu0 %v1289
    %2807 = vmatmul.mubr.f32.gmra.mrb[0].mxu0 %v1288
    %v2808 = vpop.f32.mrb[0].mxu0
    %v2809 = vadd.f32 %v2424, %v2808
    %v2810 = vpop.f32.mrb[0].mxu0
    %2811 = vmatprep.mubr.f32.mxu0 %v1298
    %2812 = vmatmul.mubr.f32.gmra.mrb[0].mxu0 %v1297
    %v2813 = vpop.f32.mrb[0].mxu0
    %v2814 = vadd.f32 %v2429, %v2813
    %v2815 = vpop.f32.mrb[0].mxu0
    %2816 = vmatprep.mubr.f32.mxu0 %v1307
    %2817 = vmatmul.mubr.f32.gmra.mrb[0].mxu0 %v1306
    %v2818 = vpop.f32.mrb[0].mxu0
    %v2819 = vadd.f32 %v2434, %v2818
    %v2820 = vpop.f32.mrb[0].mxu0
    %2821 = vmatprep.mubr.f32.mxu0 %v1316
    %2822 = vmatmul.mubr.f32.gmra.mrb[0].mxu0 %v1315
    %v2823 = vpop.f32.mrb[0].mxu0
    %v2824 = vadd.f32 %v2439, %v2823
    %v2825 = vpop.f32.mrb[0].mxu0
    %2826 = vmatprep.mubr.f32.mxu0 %v1325
    %2827 = vmatmul.mubr.f32.gmra.mrb[0].mxu0 %v1324
    %v2828 = vpop.f32.mrb[0].mxu0
    %v2829 = vadd.f32 %v2444, %v2828
    %v2830 = vpop.f32.mrb[0].mxu0
    %2831 = vmatprep.mubr.f32.mxu0 %v1334
    %2832 = vmatmul.mubr.f32.gmra.mrb[0].mxu0 %v1333
    %v2833 = vpop.f32.mrb[0].mxu0
    %v2834 = vadd.f32 %v2449, %v2833
    %v2835 = vpop.f32.mrb[0].mxu0
    %2836 = vmatprep.mubr.f32.mxu0 %v1343
    %2837 = vmatmul.mubr.f32.gmra.mrb[0].mxu0 %v1342
    %v2838 = vpop.f32.mrb[0].mxu0
    %v2839 = vadd.f32 %v2454, %v2838
    %v2840 = vpop.f32.mrb[0].mxu0
    %2841 = vmatprep.mubr.f32.mxu0 %v1352
    %2842 = vmatmul.mubr.f32.gmra.mrb[0].mxu0 %v1351
    %v2843 = vpop.f32.mrb[0].mxu0
    %v2844 = vadd.f32 %v2459, %v2843
    %v2845 = vpop.f32.mrb[0].mxu0
    %2846 = vmatprep.mubr.f32.mxu0 %v1361
    %2847 = vmatmul.mubr.f32.gmra.mrb[0].mxu0 %v1360
    %v2848 = vpop.f32.mrb[0].mxu0
    %v2849 = vadd.f32 %v2464, %v2848
    %v2850 = vpop.f32.mrb[0].mxu0
    %2851 = vmatprep.mubr.f32.mxu0 %v1370
    %2852 = vmatmul.mubr.f32.gmra.mrb[0].mxu0 %v1369
    %v2853 = vpop.f32.mrb[0].mxu0
    %v2854 = vadd.f32 %v2469, %v2853
    %v2855 = vpop.f32.mrb[0].mxu0
    %2856 = vmatprep.mubr.f32.mxu0 %v1379
    %2857 = vmatmul.mubr.f32.gmra.mrb[0].mxu0 %v1378
    %v2858 = vpop.f32.mrb[0].mxu0
    %v2859 = vadd.f32 %v2474, %v2858
    %v2860 = vpop.f32.mrb[0].mxu0
    %2861 = vmatprep.mubr.f32.mxu0 %v1388
    %2862 = vmatmul.mubr.f32.gmra.mrb[0].mxu0 %v1387
    %v2863 = vpop.f32.mrb[0].mxu0
    %v2864 = vadd.f32 %v2479, %v2863
    %v2865 = vpop.f32.mrb[0].mxu0
    %2866 = vmatprep.mubr.f32.mxu0 %v1397
    %2867 = vmatmul.mubr.f32.gmra.mrb[0].mxu0 %v1396
    %v2868 = vpop.f32.mrb[0].mxu0
    %v2869 = vadd.f32 %v2484, %v2868
    %v2870 = vpop.f32.mrb[0].mxu0
    %2871 = vmatprep.mubr.f32.mxu0 %v1406
    %2872 = vmatmul.mubr.f32.gmra.mrb[0].mxu0 %v1405
    %v2873 = vpop.f32.mrb[0].mxu0
    %v2874 = vadd.f32 %v2489, %v2873
    %v2875 = vpop.f32.mrb[0].mxu0
    %2876 = vmatprep.mubr.f32.mxu0 %v1415
    %2877 = vmatmul.mubr.f32.gmra.mrb[0].mxu0 %v1414
    %v2878 = vpop.f32.mrb[0].mxu0
    %v2879 = vadd.f32 %v2494, %v2878
    %v2880 = vpop.f32.mrb[0].mxu0
    %2881 = vmatprep.mubr.f32.mxu0 %v1424
    %2882 = vmatmul.mubr.f32.gmra.mrb[0].mxu0 %v1423
    %v2883 = vpop.f32.mrb[0].mxu0
    %v2884 = vadd.f32 %v2499, %v2883
    %v2885 = vpop.f32.mrb[0].mxu0
    %2886 = vmatprep.mubr.f32.mxu0 %v1433
    %2887 = vmatmul.mubr.f32.gmra.mrb[0].mxu0 %v1432
    %v2888 = vpop.f32.mrb[0].mxu0
    %v2889 = vadd.f32 %v2504, %v2888
    %v2890 = vpop.f32.mrb[0].mxu0
    %2891 = vmatprep.mubr.f32.mxu0 %v1442
    %2892 = vmatmul.mubr.f32.gmra.mrb[0].mxu0 %v1441
    %v2893 = vpop.f32.mrb[0].mxu0
    %v2894 = vadd.f32 %v2509, %v2893
    %v2895 = vpop.f32.mrb[0].mxu0
    %2896 = vmatprep.mubr.f32.mxu0 %v1451
    %2897 = vmatmul.mubr.f32.gmra.mrb[0].mxu0 %v1450
    %v2898 = vpop.f32.mrb[0].mxu0
    %v2899 = vadd.f32 %v2514, %v2898
    %v2900 = vpop.f32.mrb[0].mxu0
    %2901 = vmatprep.mubr.f32.mxu0 %v1460
    %2902 = vmatmul.mubr.f32.gmra.mrb[0].mxu0 %v1459
    %v2903 = vpop.f32.mrb[0].mxu0
    %v2904 = vadd.f32 %v2519, %v2903
    %v2905 = vpop.f32.mrb[0].mxu0
    %2906 = vmatprep.mubr.f32.mxu0 %v1469
    %2907 = vmatmul.mubr.f32.gmra.mrb[0].mxu0 %v1468
    %v2908 = vpop.f32.mrb[0].mxu0
    %v2909 = vadd.f32 %v2524, %v2908
    %v2910 = vpop.f32.mrb[0].mxu0
    %2911 = vmatprep.mubr.f32.mxu0 %v1478
    %2912 = vmatmul.mubr.f32.gmra.mrb[0].mxu0 %v1477
    %v2913 = vpop.f32.mrb[0].mxu0
    %v2914 = vadd.f32 %v2529, %v2913
    %v2915 = vpop.f32.mrb[0].mxu0
    %2916 = vmatprep.mubr.f32.mxu0 %v1487
    %2917 = vmatmul.mubr.f32.gmra.mrb[0].mxu0 %v1486
    %v2918 = vpop.f32.mrb[0].mxu0
    %v2919 = vadd.f32 %v2534, %v2918
    %v2920 = vpop.f32.mrb[0].mxu0
    %2921 = vmatprep.mubr.f32.mxu0 %v1496
    %2922 = vmatmul.mubr.f32.gmra.mrb[0].mxu0 %v1495
    %v2923 = vpop.f32.mrb[0].mxu0
    %v2924 = vadd.f32 %v2539, %v2923
    %v2925 = vpop.f32.mrb[0].mxu0
    %2926 = vmatprep.mubr.f32.mxu0 %v1505
    %2927 = vmatmul.mubr.f32.gmra.mrb[0].mxu0 %v1504
    %v2928 = vpop.f32.mrb[0].mxu0
    %v2929 = vadd.f32 %v2544, %v2928
    %v2930 = vpop.f32.mrb[0].mxu0
    %2931 = vmatprep.mubr.f32.mxu0 %v1514
    %2932 = vmatmul.mubr.f32.gmra.mrb[0].mxu0 %v1513
    %v2933 = vpop.f32.mrb[0].mxu0
    %v2934 = vadd.f32 %v2549, %v2933
    %v2935 = vpop.f32.mrb[0].mxu0
    %2936 = vmatprep.mubr.f32.mxu0 %v1523
    %2937 = vmatmul.mubr.f32.gmra.mrb[0].mxu0 %v1522
    %v2938 = vpop.f32.mrb[0].mxu0
    %v2939 = vadd.f32 %v2554, %v2938
    %v2940 = vpop.f32.mrb[0].mxu0
    %2941 = vmatprep.mubr.f32.mxu0 %v1532
    %2942 = vmatmul.mubr.f32.gmra.mrb[0].mxu0 %v1531
    %v2943 = vpop.f32.mrb[0].mxu0
    %v2944 = vadd.f32 %v2559, %v2943
    %v2945 = vpop.f32.mrb[0].mxu0
    %2946 = vmatprep.mubr.f32.mxu0 %v1541
    %2947 = vmatmul.mubr.f32.gmra.mrb[0].mxu0 %v1540
    %v2948 = vpop.f32.mrb[0].mxu0
    %v2949 = vadd.f32 %v2564, %v2948
    %v2950 = vpop.f32.mrb[0].mxu0
    %2951 = vmatprep.mubr.f32.mxu0 %v1550
    %2952 = vmatmul.mubr.f32.gmra.mrb[0].mxu0 %v1549
    %v2953 = vpop.f32.mrb[0].mxu0
    %v2954 = vadd.f32 %v2569, %v2953
    %v2955 = vpop.f32.mrb[0].mxu0
    %2956 = vmatprep.mubr.f32.mxu0 %v1559
    %2957 = vmatmul.mubr.f32.gmra.mrb[0].mxu0 %v1558
    %v2958 = vpop.f32.mrb[0].mxu0
    %v2959 = vadd.f32 %v2574, %v2958
    %v2960 = vpop.f32.mrb[0].mxu0
    %2961 = vmatprep.mubr.f32.mxu0 %v1568
    %2962 = vmatmul.mubr.f32.gmra.mrb[0].mxu0 %v1567
    %v2963 = vpop.f32.mrb[0].mxu0
    %v2964 = vadd.f32 %v2579, %v2963
    %v2965 = vpop.f32.mrb[0].mxu0
    %2966 = vmatprep.mubr.f32.mxu0 %v1577
    %2967 = vmatmul.mubr.f32.gmra.mrb[0].mxu0 %v1576
    %v2968 = vpop.f32.mrb[0].mxu0
    %v2969 = vadd.f32 %v2584, %v2968
    %v2970 = vpop.f32.mrb[0].mxu0
    %2971 = vmatprep.mubr.f32.mxu0 %v1586
    %2972 = vmatmul.mubr.f32.gmra.mrb[0].mxu0 %v1585
    %v2973 = vpop.f32.mrb[0].mxu0
    %v2974 = vadd.f32 %v2589, %v2973
    %v2975 = vpop.f32.mrb[0].mxu0
    %2976 = vmatprep.mubr.f32.mxu0 %v1595
    %2977 = vmatmul.mubr.f32.gmra.mrb[0].mxu0 %v1594
    %v2978 = vpop.f32.mrb[0].mxu0
    %v2979 = vadd.f32 %v2594, %v2978
    %v2980 = vpop.f32.mrb[0].mxu0
    %2981 = vmatprep.mubr.f32.mxu0 %v1604
    %2982 = vmatmul.mubr.f32.gmra.mrb[0].mxu0 %v1603
    %v2983 = vpop.f32.mrb[0].mxu0
    %v2984 = vadd.f32 %v2599, %v2983
    %v2985 = vpop.f32.mrb[0].mxu0
    %2986 = vmatprep.mubr.f32.mxu0 %v1613
    %2987 = vmatmul.mubr.f32.gmra.mrb[0].mxu0 %v1612
    %v2988 = vpop.f32.mrb[0].mxu0
    %v2989 = vadd.f32 %v2604, %v2988
    %v2990 = vpop.f32.mrb[0].mxu0
    %2991 = vmatprep.mubr.f32.mxu0 %v1622
    %2992 = vmatmul.mubr.f32.gmra.mrb[0].mxu0 %v1621
    %v2993 = vpop.f32.mrb[0].mxu0
    %v2994 = vadd.f32 %v2609, %v2993
    %v2995 = vpop.f32.mrb[0].mxu0
    %2996 = vmatprep.mubr.f32.mxu0 %v1631
    %2997 = vmatmul.mubr.f32.gmra.mrb[0].mxu0 %v1630
    %v2998 = vpop.f32.mrb[0].mxu0
    %v2999 = vadd.f32 %v2614, %v2998
    %v3000 = vpop.f32.mrb[0].mxu0
    %3001 = vmatprep.mubr.f32.mxu0 %v1640
    %3002 = vmatmul.mubr.f32.gmra.mrb[0].mxu0 %v1639
    %v3003 = vpop.f32.mrb[0].mxu0
    %v3004 = vadd.f32 %v2619, %v3003
    %v3005 = vpop.f32.mrb[0].mxu0
    %3006 = vmatprep.mubr.f32.mxu0 %v1649
    %3007 = vmatmul.mubr.f32.gmra.mrb[0].mxu0 %v1648
    %v3008 = vpop.f32.mrb[0].mxu0
    %v3009 = vadd.f32 %v2624, %v3008
    %v3010 = vpop.f32.mrb[0].mxu0
    %3011 = vmatprep.mubr.f32.mxu0 %v1658
    %3012 = vmatmul.mubr.f32.gmra.mrb[0].mxu0 %v1657
    %v3013 = vpop.f32.mrb[0].mxu0
    %v3014 = vadd.f32 %v2629, %v3013
    %v3015 = vpop.f32.mrb[0].mxu0
    %3016 = vmatprep.mubr.f32.mxu0 %v1667
    %3017 = vmatmul.mubr.f32.gmra.mrb[0].mxu0 %v1666
    %v3018 = vpop.f32.mrb[0].mxu0
    %v3019 = vadd.f32 %v2634, %v3018
    %v3020 = vpop.f32.mrb[0].mxu0
    %3021 = vmatprep.mubr.f32.mxu0 %v1676
    %3022 = vmatmul.mubr.f32.gmra.mrb[0].mxu0 %v1675
    %v3023 = vpop.f32.mrb[0].mxu0
    %v3024 = vadd.f32 %v2639, %v3023
    %v3025 = vpop.f32.mrb[0].mxu0
    %3026 = vmatprep.mubr.f32.mxu0 %v1685
    %3027 = vmatmul.mubr.f32.gmra.mrb[0].mxu0 %v1684
    %v3028 = vpop.f32.mrb[0].mxu0
    %v3029 = vadd.f32 %v2644, %v3028
    %v3030 = vpop.f32.mrb[0].mxu0
    %3031 = vmatprep.mubr.f32.mxu0 %v1694
    %3032 = vmatmul.mubr.f32.gmra.mrb[0].mxu0 %v1693
    %v3033 = vpop.f32.mrb[0].mxu0
    %v3034 = vadd.f32 %v2649, %v3033
    %v3035 = vpop.f32.mrb[0].mxu0
    %3036 = vmatprep.mubr.f32.mxu0 %v1703
    %3037 = vmatmul.mubr.f32.gmra.mrb[0].mxu0 %v1702
    %v3038 = vpop.f32.mrb[0].mxu0
    %v3039 = vadd.f32 %v2654, %v3038
    %v3040 = vpop.f32.mrb[0].mxu0
    %3041 = vmatprep.mubr.f32.mxu0 %v1712
    %3042 = vmatmul.mubr.f32.gmra.mrb[0].mxu0 %v1711
    %v3043 = vpop.f32.mrb[0].mxu0
    %v3044 = vadd.f32 %v2659, %v3043
    %v3045 = vpop.f32.mrb[0].mxu0
    %3046 = vmatprep.mubr.f32.mxu0 %v1721
    %3047 = vmatmul.mubr.f32.gmra.mrb[0].mxu0 %v1720
    %v3048 = vpop.f32.mrb[0].mxu0
    %v3049 = vadd.f32 %v2664, %v3048
    %v3050 = vpop.f32.mrb[0].mxu0
    %3051 = vmatprep.mubr.f32.mxu0 %v1730
    %3052 = vmatmul.mubr.f32.gmra.mrb[0].mxu0 %v1729
    %v3053 = vpop.f32.mrb[0].mxu0
    %v3054 = vadd.f32 %v2669, %v3053
    %v3055 = vpop.f32.mrb[0].mxu0
    %3056 = vmatprep.mubr.f32.mxu0 %v1739
    %3057 = vmatmul.mubr.f32.gmra.mrb[0].mxu0 %v1738
    %v3058 = vpop.f32.mrb[0].mxu0
    %v3059 = vadd.f32 %v2674, %v3058
    %v3060 = vpop.f32.mrb[0].mxu0
    %3061 = vmatprep.mubr.f32.mxu0 %v1748
    %3062 = vmatmul.mubr.f32.gmra.mrb[0].mxu0 %v1747
    %v3063 = vpop.f32.mrb[0].mxu0
    %v3064 = vadd.f32 %v2679, %v3063
    %v3065 = vpop.f32.mrb[0].mxu0
    %3066 = vmatprep.mubr.f32.mxu0 %v1757
    %3067 = vmatmul.mubr.f32.gmra.mrb[0].mxu0 %v1756
    %v3068 = vpop.f32.mrb[0].mxu0
    %v3069 = vadd.f32 %v2684, %v3068
    %v3070 = vpop.f32.mrb[0].mxu0
    %3071 = vmatprep.mubr.f32.mxu0 %v1766
    %3072 = vmatmul.mubr.f32.gmra.mrb[0].mxu0 %v1765
    %v3073 = vpop.f32.mrb[0].mxu0
    %v3074 = vadd.f32 %v2689, %v3073
    %v3075 = vpop.f32.mrb[0].mxu0
    %3076 = vmatprep.mubr.f32.mxu0 %v1775
    %3077 = vmatmul.mubr.f32.gmra.mrb[0].mxu0 %v1774
    %v3078 = vpop.f32.mrb[0].mxu0
    %v3079 = vadd.f32 %v2694, %v3078
    %v3080 = vpop.f32.mrb[0].mxu0
    %3081 = vmatprep.mubr.f32.mxu0 %v1784
    %3082 = vmatmul.mubr.f32.gmra.mrb[0].mxu0 %v1783
    %v3083 = vpop.f32.mrb[0].mxu0
    %v3084 = vadd.f32 %v2699, %v3083
    %v3085 = vpop.f32.mrb[0].mxu0
    %3086 = vdwg.mxu0
    %3087 = vmatprep.subr.mxu0 0.0
    %3088 = vmatpush1.msra.mxu0 %v1884
    %3089 = vmatprep.subr.mxu0 0.0
    %3090 = vmatpush1.msra.mxu0 %v1885
    %3091 = vmatprep.subr.mxu0 0.0
    %3092 = vmatpush1.msra.mxu0 %v1886
    %3093 = vmatprep.subr.mxu0 0.0
    %3094 = vmatpush1.msra.mxu0 %v1887
    %3095 = vmatprep.subr.mxu0 0.0
    %3096 = vmatpush1.msra.mxu0 %v1888
    %3097 = vmatprep.subr.mxu0 0.0
    %3098 = vmatpush1.msra.mxu0 %v1889
    %3099 = vmatprep.subr.mxu0 0.0
    %3100 = vmatpush1.msra.mxu0 %v1890
    %3101 = vmatprep.subr.mxu0 0.0
    %3102 = vmatpush1.msra.mxu0 %v1891
    %3103 = vmatprep.subr.mxu0 0.0
    %3104 = vmatpush1.msra.mxu0 %v1892
    %3105 = vmatprep.subr.mxu0 0.0
    %3106 = vmatpush1.msra.mxu0 %v1893
    %3107 = vmatprep.subr.mxu0 0.0
    %3108 = vmatpush1.msra.mxu0 %v1894
    %3109 = vmatprep.subr.mxu0 0.0
    %3110 = vmatpush1.msra.mxu0 %v1895
    %3111 = vmatprep.subr.mxu0 0.0
    %3112 = vmatpush1.msra.mxu0 %v1896
    %3113 = vmatprep.subr.mxu0 0.0
    %3114 = vmatpush1.msra.mxu0 %v1897
    %3115 = vmatprep.subr.mxu0 0.0
    %3116 = vmatpush1.msra.mxu0 %v1898
    %3117 = vmatprep.subr.mxu0 0.0
    %3118 = vmatpush1.msra.mxu0 %v1899
    %3119 = vmatprep.subr.mxu0 0.0
    %3120 = vmatpush1.msra.mxu0 %v1900
    %3121 = vmatprep.subr.mxu0 0.0
    %3122 = vmatpush1.msra.mxu0 %v1901
    %3123 = vmatprep.subr.mxu0 0.0
    %3124 = vmatpush1.msra.mxu0 %v1902
    %3125 = vmatprep.subr.mxu0 0.0
    %3126 = vmatpush1.msra.mxu0 %v1903
    %3127 = vmatprep.subr.mxu0 0.0
    %3128 = vmatpush1.msra.mxu0 %v1904
    %3129 = vmatprep.subr.mxu0 0.0
    %3130 = vmatpush1.msra.mxu0 %v1905
    %3131 = vmatprep.subr.mxu0 0.0
    %3132 = vmatpush1.msra.mxu0 %v1906
    %3133 = vmatprep.subr.mxu0 0.0
    %3134 = vmatpush1.msra.mxu0 %v1907
    %3135 = vmatprep.subr.mxu0 0.0
    %3136 = vmatpush1.msra.mxu0 %v1908
    %3137 = vmatprep.subr.mxu0 0.0
    %3138 = vmatpush1.msra.mxu0 %v1909
    %3139 = vmatprep.subr.mxu0 0.0
    %3140 = vmatpush1.msra.mxu0 %v1910
    %3141 = vmatprep.subr.mxu0 0.0
    %3142 = vmatpush1.msra.mxu0 %v1911
    %3143 = vmatprep.subr.mxu0 0.0
    %3144 = vmatpush1.msra.mxu0 %v1912
    %3145 = vmatprep.subr.mxu0 0.0
    %3146 = vmatpush1.msra.mxu0 %v1913
    %3147 = vmatprep.subr.mxu0 0.0
    %3148 = vmatpush1.msra.mxu0 %v1914
    %3149 = vmatprep.subr.mxu0 0.0
    %3150 = vmatpush1.msra.mxu0 %v1915
    %3151 = vmatprep.mubr.f32.mxu0 %v1219
    %3152 = vmatmul.mubr.f32.gmra.mrb[0].mxu0 %v1218
    %v3153 = vpop.f32.mrb[0].mxu0
    %v3154 = vadd.f32 %v2769, %v3153
    %v3155 = vpop.f32.mrb[0].mxu0
    %3156 = vmatprep.mubr.f32.mxu0 %v1228
    %3157 = vmatmul.mubr.f32.gmra.mrb[0].mxu0 %v1227
    %v3158 = vpop.f32.mrb[0].mxu0
    %v3159 = vadd.f32 %v2774, %v3158
    %v3160 = vpop.f32.mrb[0].mxu0
    %3161 = vmatprep.mubr.f32.mxu0 %v1237
    %3162 = vmatmul.mubr.f32.gmra.mrb[0].mxu0 %v1236
    %v3163 = vpop.f32.mrb[0].mxu0
    %v3164 = vadd.f32 %v2779, %v3163
    %v3165 = vpop.f32.mrb[0].mxu0
    %3166 = vmatprep.mubr.f32.mxu0 %v1246
    %3167 = vmatmul.mubr.f32.gmra.mrb[0].mxu0 %v1245
    %v3168 = vpop.f32.mrb[0].mxu0
    %v3169 = vadd.f32 %v2784, %v3168
    %v3170 = vpop.f32.mrb[0].mxu0
    %3171 = vmatprep.mubr.f32.mxu0 %v1255
    %3172 = vmatmul.mubr.f32.gmra.mrb[0].mxu0 %v1254
    %v3173 = vpop.f32.mrb[0].mxu0
    %v3174 = vadd.f32 %v2789, %v3173
    %v3175 = vpop.f32.mrb[0].mxu0
    %3176 = vmatprep.mubr.f32.mxu0 %v1264
    %3177 = vmatmul.mubr.f32.gmra.mrb[0].mxu0 %v1263
    %v3178 = vpop.f32.mrb[0].mxu0
    %v3179 = vadd.f32 %v2794, %v3178
    %v3180 = vpop.f32.mrb[0].mxu0
    %3181 = vmatprep.mubr.f32.mxu0 %v1273
    %3182 = vmatmul.mubr.f32.gmra.mrb[0].mxu0 %v1272
    %v3183 = vpop.f32.mrb[0].mxu0
    %v3184 = vadd.f32 %v2799, %v3183
    %v3185 = vpop.f32.mrb[0].mxu0
    %3186 = vmatprep.mubr.f32.mxu0 %v1282
    %3187 = vmatmul.mubr.f32.gmra.mrb[0].mxu0 %v1281
    %v3188 = vpop.f32.mrb[0].mxu0
    %v3189 = vadd.f32 %v2804, %v3188
    %v3190 = vpop.f32.mrb[0].mxu0
    %3191 = vmatprep.mubr.f32.mxu0 %v1291
    %3192 = vmatmul.mubr.f32.gmra.mrb[0].mxu0 %v1290
    %v3193 = vpop.f32.mrb[0].mxu0
    %v3194 = vadd.f32 %v2809, %v3193
    %v3195 = vpop.f32.mrb[0].mxu0
    %3196 = vmatprep.mubr.f32.mxu0 %v1300
    %3197 = vmatmul.mubr.f32.gmra.mrb[0].mxu0 %v1299
    %v3198 = vpop.f32.mrb[0].mxu0
    %v3199 = vadd.f32 %v2814, %v3198
    %v3200 = vpop.f32.mrb[0].mxu0
    %3201 = vmatprep.mubr.f32.mxu0 %v1309
    %3202 = vmatmul.mubr.f32.gmra.mrb[0].mxu0 %v1308
    %v3203 = vpop.f32.mrb[0].mxu0
    %v3204 = vadd.f32 %v2819, %v3203
    %v3205 = vpop.f32.mrb[0].mxu0
    %3206 = vmatprep.mubr.f32.mxu0 %v1318
    %3207 = vmatmul.mubr.f32.gmra.mrb[0].mxu0 %v1317
    %v3208 = vpop.f32.mrb[0].mxu0
    %v3209 = vadd.f32 %v2824, %v3208
    %v3210 = vpop.f32.mrb[0].mxu0
    %3211 = vmatprep.mubr.f32.mxu0 %v1327
    %3212 = vmatmul.mubr.f32.gmra.mrb[0].mxu0 %v1326
    %v3213 = vpop.f32.mrb[0].mxu0
    %v3214 = vadd.f32 %v2829, %v3213
    %v3215 = vpop.f32.mrb[0].mxu0
    %3216 = vmatprep.mubr.f32.mxu0 %v1336
    %3217 = vmatmul.mubr.f32.gmra.mrb[0].mxu0 %v1335
    %v3218 = vpop.f32.mrb[0].mxu0
    %v3219 = vadd.f32 %v2834, %v3218
    %v3220 = vpop.f32.mrb[0].mxu0
    %3221 = vmatprep.mubr.f32.mxu0 %v1345
    %3222 = vmatmul.mubr.f32.gmra.mrb[0].mxu0 %v1344
    %v3223 = vpop.f32.mrb[0].mxu0
    %v3224 = vadd.f32 %v2839, %v3223
    %v3225 = vpop.f32.mrb[0].mxu0
    %3226 = vmatprep.mubr.f32.mxu0 %v1354
    %3227 = vmatmul.mubr.f32.gmra.mrb[0].mxu0 %v1353
    %v3228 = vpop.f32.mrb[0].mxu0
    %v3229 = vadd.f32 %v2844, %v3228
    %v3230 = vpop.f32.mrb[0].mxu0
    %3231 = vmatprep.mubr.f32.mxu0 %v1363
    %3232 = vmatmul.mubr.f32.gmra.mrb[0].mxu0 %v1362
    %v3233 = vpop.f32.mrb[0].mxu0
    %v3234 = vadd.f32 %v2849, %v3233
    %v3235 = vpop.f32.mrb[0].mxu0
    %3236 = vmatprep.mubr.f32.mxu0 %v1372
    %3237 = vmatmul.mubr.f32.gmra.mrb[0].mxu0 %v1371
    %v3238 = vpop.f32.mrb[0].mxu0
    %v3239 = vadd.f32 %v2854, %v3238
    %v3240 = vpop.f32.mrb[0].mxu0
    %3241 = vmatprep.mubr.f32.mxu0 %v1381
    %3242 = vmatmul.mubr.f32.gmra.mrb[0].mxu0 %v1380
    %v3243 = vpop.f32.mrb[0].mxu0
    %v3244 = vadd.f32 %v2859, %v3243
    %v3245 = vpop.f32.mrb[0].mxu0
    %3246 = vmatprep.mubr.f32.mxu0 %v1390
    %3247 = vmatmul.mubr.f32.gmra.mrb[0].mxu0 %v1389
    %v3248 = vpop.f32.mrb[0].mxu0
    %v3249 = vadd.f32 %v2864, %v3248
    %v3250 = vpop.f32.mrb[0].mxu0
    %3251 = vmatprep.mubr.f32.mxu0 %v1399
    %3252 = vmatmul.mubr.f32.gmra.mrb[0].mxu0 %v1398
    %v3253 = vpop.f32.mrb[0].mxu0
    %v3254 = vadd.f32 %v2869, %v3253
    %v3255 = vpop.f32.mrb[0].mxu0
    %3256 = vmatprep.mubr.f32.mxu0 %v1408
    %3257 = vmatmul.mubr.f32.gmra.mrb[0].mxu0 %v1407
    %v3258 = vpop.f32.mrb[0].mxu0
    %v3259 = vadd.f32 %v2874, %v3258
    %v3260 = vpop.f32.mrb[0].mxu0
    %3261 = vmatprep.mubr.f32.mxu0 %v1417
    %3262 = vmatmul.mubr.f32.gmra.mrb[0].mxu0 %v1416
    %v3263 = vpop.f32.mrb[0].mxu0
    %v3264 = vadd.f32 %v2879, %v3263
    %v3265 = vpop.f32.mrb[0].mxu0
    %3266 = vmatprep.mubr.f32.mxu0 %v1426
    %3267 = vmatmul.mubr.f32.gmra.mrb[0].mxu0 %v1425
    %v3268 = vpop.f32.mrb[0].mxu0
    %v3269 = vadd.f32 %v2884, %v3268
    %v3270 = vpop.f32.mrb[0].mxu0
    %3271 = vmatprep.mubr.f32.mxu0 %v1435
    %3272 = vmatmul.mubr.f32.gmra.mrb[0].mxu0 %v1434
    %v3273 = vpop.f32.mrb[0].mxu0
    %v3274 = vadd.f32 %v2889, %v3273
    %v3275 = vpop.f32.mrb[0].mxu0
    %3276 = vmatprep.mubr.f32.mxu0 %v1444
    %3277 = vmatmul.mubr.f32.gmra.mrb[0].mxu0 %v1443
    %v3278 = vpop.f32.mrb[0].mxu0
    %v3279 = vadd.f32 %v2894, %v3278
    %v3280 = vpop.f32.mrb[0].mxu0
    %3281 = vmatprep.mubr.f32.mxu0 %v1453
    %3282 = vmatmul.mubr.f32.gmra.mrb[0].mxu0 %v1452
    %v3283 = vpop.f32.mrb[0].mxu0
    %v3284 = vadd.f32 %v2899, %v3283
    %v3285 = vpop.f32.mrb[0].mxu0
    %3286 = vmatprep.mubr.f32.mxu0 %v1462
    %3287 = vmatmul.mubr.f32.gmra.mrb[0].mxu0 %v1461
    %v3288 = vpop.f32.mrb[0].mxu0
    %v3289 = vadd.f32 %v2904, %v3288
    %v3290 = vpop.f32.mrb[0].mxu0
    %3291 = vmatprep.mubr.f32.mxu0 %v1471
    %3292 = vmatmul.mubr.f32.gmra.mrb[0].mxu0 %v1470
    %v3293 = vpop.f32.mrb[0].mxu0
    %v3294 = vadd.f32 %v2909, %v3293
    %v3295 = vpop.f32.mrb[0].mxu0
    %3296 = vmatprep.mubr.f32.mxu0 %v1480
    %3297 = vmatmul.mubr.f32.gmra.mrb[0].mxu0 %v1479
    %v3298 = vpop.f32.mrb[0].mxu0
    %v3299 = vadd.f32 %v2914, %v3298
    %v3300 = vpop.f32.mrb[0].mxu0
    %3301 = vmatprep.mubr.f32.mxu0 %v1489
    %3302 = vmatmul.mubr.f32.gmra.mrb[0].mxu0 %v1488
    %v3303 = vpop.f32.mrb[0].mxu0
    %v3304 = vadd.f32 %v2919, %v3303
    %v3305 = vpop.f32.mrb[0].mxu0
    %3306 = vmatprep.mubr.f32.mxu0 %v1498
    %3307 = vmatmul.mubr.f32.gmra.mrb[0].mxu0 %v1497
    %v3308 = vpop.f32.mrb[0].mxu0
    %v3309 = vadd.f32 %v2924, %v3308
    %v3310 = vpop.f32.mrb[0].mxu0
    %3311 = vmatprep.mubr.f32.mxu0 %v1507
    %3312 = vmatmul.mubr.f32.gmra.mrb[0].mxu0 %v1506
    %v3313 = vpop.f32.mrb[0].mxu0
    %v3314 = vadd.f32 %v2929, %v3313
    %v3315 = vpop.f32.mrb[0].mxu0
    %3316 = vmatprep.mubr.f32.mxu0 %v1516
    %3317 = vmatmul.mubr.f32.gmra.mrb[0].mxu0 %v1515
    %v3318 = vpop.f32.mrb[0].mxu0
    %v3319 = vadd.f32 %v2934, %v3318
    %v3320 = vpop.f32.mrb[0].mxu0
    %3321 = vmatprep.mubr.f32.mxu0 %v1525
    %3322 = vmatmul.mubr.f32.gmra.mrb[0].mxu0 %v1524
    %v3323 = vpop.f32.mrb[0].mxu0
    %v3324 = vadd.f32 %v2939, %v3323
    %v3325 = vpop.f32.mrb[0].mxu0
    %3326 = vmatprep.mubr.f32.mxu0 %v1534
    %3327 = vmatmul.mubr.f32.gmra.mrb[0].mxu0 %v1533
    %v3328 = vpop.f32.mrb[0].mxu0
    %v3329 = vadd.f32 %v2944, %v3328
    %v3330 = vpop.f32.mrb[0].mxu0
    %3331 = vmatprep.mubr.f32.mxu0 %v1543
    %3332 = vmatmul.mubr.f32.gmra.mrb[0].mxu0 %v1542
    %v3333 = vpop.f32.mrb[0].mxu0
    %v3334 = vadd.f32 %v2949, %v3333
    %v3335 = vpop.f32.mrb[0].mxu0
    %3336 = vmatprep.mubr.f32.mxu0 %v1552
    %3337 = vmatmul.mubr.f32.gmra.mrb[0].mxu0 %v1551
    %v3338 = vpop.f32.mrb[0].mxu0
    %v3339 = vadd.f32 %v2954, %v3338
    %v3340 = vpop.f32.mrb[0].mxu0
    %3341 = vmatprep.mubr.f32.mxu0 %v1561
    %3342 = vmatmul.mubr.f32.gmra.mrb[0].mxu0 %v1560
    %v3343 = vpop.f32.mrb[0].mxu0
    %v3344 = vadd.f32 %v2959, %v3343
    %v3345 = vpop.f32.mrb[0].mxu0
    %3346 = vmatprep.mubr.f32.mxu0 %v1570
    %3347 = vmatmul.mubr.f32.gmra.mrb[0].mxu0 %v1569
    %v3348 = vpop.f32.mrb[0].mxu0
    %v3349 = vadd.f32 %v2964, %v3348
    %v3350 = vpop.f32.mrb[0].mxu0
    %3351 = vmatprep.mubr.f32.mxu0 %v1579
    %3352 = vmatmul.mubr.f32.gmra.mrb[0].mxu0 %v1578
    %v3353 = vpop.f32.mrb[0].mxu0
    %v3354 = vadd.f32 %v2969, %v3353
    %v3355 = vpop.f32.mrb[0].mxu0
    %3356 = vmatprep.mubr.f32.mxu0 %v1588
    %3357 = vmatmul.mubr.f32.gmra.mrb[0].mxu0 %v1587
    %v3358 = vpop.f32.mrb[0].mxu0
    %v3359 = vadd.f32 %v2974, %v3358
    %v3360 = vpop.f32.mrb[0].mxu0
    %3361 = vmatprep.mubr.f32.mxu0 %v1597
    %3362 = vmatmul.mubr.f32.gmra.mrb[0].mxu0 %v1596
    %v3363 = vpop.f32.mrb[0].mxu0
    %v3364 = vadd.f32 %v2979, %v3363
    %v3365 = vpop.f32.mrb[0].mxu0
    %3366 = vmatprep.mubr.f32.mxu0 %v1606
    %3367 = vmatmul.mubr.f32.gmra.mrb[0].mxu0 %v1605
    %v3368 = vpop.f32.mrb[0].mxu0
    %v3369 = vadd.f32 %v2984, %v3368
    %v3370 = vpop.f32.mrb[0].mxu0
    %3371 = vmatprep.mubr.f32.mxu0 %v1615
    %3372 = vmatmul.mubr.f32.gmra.mrb[0].mxu0 %v1614
    %v3373 = vpop.f32.mrb[0].mxu0
    %v3374 = vadd.f32 %v2989, %v3373
    %v3375 = vpop.f32.mrb[0].mxu0
    %3376 = vmatprep.mubr.f32.mxu0 %v1624
    %3377 = vmatmul.mubr.f32.gmra.mrb[0].mxu0 %v1623
    %v3378 = vpop.f32.mrb[0].mxu0
    %v3379 = vadd.f32 %v2994, %v3378
    %v3380 = vpop.f32.mrb[0].mxu0
    %3381 = vmatprep.mubr.f32.mxu0 %v1633
    %3382 = vmatmul.mubr.f32.gmra.mrb[0].mxu0 %v1632
    %v3383 = vpop.f32.mrb[0].mxu0
    %v3384 = vadd.f32 %v2999, %v3383
    %v3385 = vpop.f32.mrb[0].mxu0
    %3386 = vmatprep.mubr.f32.mxu0 %v1642
    %3387 = vmatmul.mubr.f32.gmra.mrb[0].mxu0 %v1641
    %v3388 = vpop.f32.mrb[0].mxu0
    %v3389 = vadd.f32 %v3004, %v3388
    %v3390 = vpop.f32.mrb[0].mxu0
    %3391 = vmatprep.mubr.f32.mxu0 %v1651
    %3392 = vmatmul.mubr.f32.gmra.mrb[0].mxu0 %v1650
    %v3393 = vpop.f32.mrb[0].mxu0
    %v3394 = vadd.f32 %v3009, %v3393
    %v3395 = vpop.f32.mrb[0].mxu0
    %3396 = vmatprep.mubr.f32.mxu0 %v1660
    %3397 = vmatmul.mubr.f32.gmra.mrb[0].mxu0 %v1659
    %v3398 = vpop.f32.mrb[0].mxu0
    %v3399 = vadd.f32 %v3014, %v3398
    %v3400 = vpop.f32.mrb[0].mxu0
    %3401 = vmatprep.mubr.f32.mxu0 %v1669
    %3402 = vmatmul.mubr.f32.gmra.mrb[0].mxu0 %v1668
    %v3403 = vpop.f32.mrb[0].mxu0
    %v3404 = vadd.f32 %v3019, %v3403
    %v3405 = vpop.f32.mrb[0].mxu0
    %3406 = vmatprep.mubr.f32.mxu0 %v1678
    %3407 = vmatmul.mubr.f32.gmra.mrb[0].mxu0 %v1677
    %v3408 = vpop.f32.mrb[0].mxu0
    %v3409 = vadd.f32 %v3024, %v3408
    %v3410 = vpop.f32.mrb[0].mxu0
    %3411 = vmatprep.mubr.f32.mxu0 %v1687
    %3412 = vmatmul.mubr.f32.gmra.mrb[0].mxu0 %v1686
    %v3413 = vpop.f32.mrb[0].mxu0
    %v3414 = vadd.f32 %v3029, %v3413
    %v3415 = vpop.f32.mrb[0].mxu0
    %3416 = vmatprep.mubr.f32.mxu0 %v1696
    %3417 = vmatmul.mubr.f32.gmra.mrb[0].mxu0 %v1695
    %v3418 = vpop.f32.mrb[0].mxu0
    %v3419 = vadd.f32 %v3034, %v3418
    %v3420 = vpop.f32.mrb[0].mxu0
    %3421 = vmatprep.mubr.f32.mxu0 %v1705
    %3422 = vmatmul.mubr.f32.gmra.mrb[0].mxu0 %v1704
    %v3423 = vpop.f32.mrb[0].mxu0
    %v3424 = vadd.f32 %v3039, %v3423
    %v3425 = vpop.f32.mrb[0].mxu0
    %3426 = vmatprep.mubr.f32.mxu0 %v1714
    %3427 = vmatmul.mubr.f32.gmra.mrb[0].mxu0 %v1713
    %v3428 = vpop.f32.mrb[0].mxu0
    %v3429 = vadd.f32 %v3044, %v3428
    %v3430 = vpop.f32.mrb[0].mxu0
    %3431 = vmatprep.mubr.f32.mxu0 %v1723
    %3432 = vmatmul.mubr.f32.gmra.mrb[0].mxu0 %v1722
    %v3433 = vpop.f32.mrb[0].mxu0
    %v3434 = vadd.f32 %v3049, %v3433
    %v3435 = vpop.f32.mrb[0].mxu0
    %3436 = vmatprep.mubr.f32.mxu0 %v1732
    %3437 = vmatmul.mubr.f32.gmra.mrb[0].mxu0 %v1731
    %v3438 = vpop.f32.mrb[0].mxu0
    %v3439 = vadd.f32 %v3054, %v3438
    %v3440 = vpop.f32.mrb[0].mxu0
    %3441 = vmatprep.mubr.f32.mxu0 %v1741
    %3442 = vmatmul.mubr.f32.gmra.mrb[0].mxu0 %v1740
    %v3443 = vpop.f32.mrb[0].mxu0
    %v3444 = vadd.f32 %v3059, %v3443
    %v3445 = vpop.f32.mrb[0].mxu0
    %3446 = vmatprep.mubr.f32.mxu0 %v1750
    %3447 = vmatmul.mubr.f32.gmra.mrb[0].mxu0 %v1749
    %v3448 = vpop.f32.mrb[0].mxu0
    %v3449 = vadd.f32 %v3064, %v3448
    %v3450 = vpop.f32.mrb[0].mxu0
    %3451 = vmatprep.mubr.f32.mxu0 %v1759
    %3452 = vmatmul.mubr.f32.gmra.mrb[0].mxu0 %v1758
    %v3453 = vpop.f32.mrb[0].mxu0
    %v3454 = vadd.f32 %v3069, %v3453
    %v3455 = vpop.f32.mrb[0].mxu0
    %3456 = vmatprep.mubr.f32.mxu0 %v1768
    %3457 = vmatmul.mubr.f32.gmra.mrb[0].mxu0 %v1767
    %v3458 = vpop.f32.mrb[0].mxu0
    %v3459 = vadd.f32 %v3074, %v3458
    %v3460 = vpop.f32.mrb[0].mxu0
    %3461 = vmatprep.mubr.f32.mxu0 %v1777
    %3462 = vmatmul.mubr.f32.gmra.mrb[0].mxu0 %v1776
    %v3463 = vpop.f32.mrb[0].mxu0
    %v3464 = vadd.f32 %v3079, %v3463
    %v3465 = vpop.f32.mrb[0].mxu0
    %3466 = vmatprep.mubr.f32.mxu0 %v1786
    %3467 = vmatmul.mubr.f32.gmra.mrb[0].mxu0 %v1785
    %v3468 = vpop.f32.mrb[0].mxu0
    %v3469 = vadd.f32 %v3084, %v3468
    %v3470 = vpop.f32.mrb[0].mxu0
    %3471 = vdwg.mxu0
    %3472 = vmatprep.subr.mxu0 0.0
    %3473 = vmatpush1.msra.mxu0 %v1916
    %3474 = vmatprep.subr.mxu0 0.0
    %3475 = vmatpush1.msra.mxu0 %v1917
    %3476 = vmatprep.subr.mxu0 0.0
    %3477 = vmatpush1.msra.mxu0 %v1918
    %3478 = vmatprep.subr.mxu0 0.0
    %3479 = vmatpush1.msra.mxu0 %v1919
    %3480 = vmatprep.subr.mxu0 0.0
    %3481 = vmatpush1.msra.mxu0 %v1920
    %3482 = vmatprep.subr.mxu0 0.0
    %3483 = vmatpush1.msra.mxu0 %v1921
    %3484 = vmatprep.subr.mxu0 0.0
    %3485 = vmatpush1.msra.mxu0 %v1922
    %3486 = vmatprep.subr.mxu0 0.0
    %3487 = vmatpush1.msra.mxu0 %v1923
    %3488 = vmatprep.subr.mxu0 0.0
    %3489 = vmatpush1.msra.mxu0 %v1924
    %3490 = vmatprep.subr.mxu0 0.0
    %3491 = vmatpush1.msra.mxu0 %v1925
    %3492 = vmatprep.subr.mxu0 0.0
    %3493 = vmatpush1.msra.mxu0 %v1926
    %3494 = vmatprep.subr.mxu0 0.0
    %3495 = vmatpush1.msra.mxu0 %v1927
    %3496 = vmatprep.subr.mxu0 0.0
    %3497 = vmatpush1.msra.mxu0 %v1928
    %3498 = vmatprep.subr.mxu0 0.0
    %3499 = vmatpush1.msra.mxu0 %v1929
    %3500 = vmatprep.subr.mxu0 0.0
    %3501 = vmatpush1.msra.mxu0 %v1930
    %3502 = vmatprep.subr.mxu0 0.0
    %3503 = vmatpush1.msra.mxu0 %v1931
    %3504 = vmatprep.subr.mxu0 0.0
    %3505 = vmatpush1.msra.mxu0 0.0
    %3506 = vmatprep.subr.mxu0 0.0
    %3507 = vmatpush1.msra.mxu0 0.0
    %3508 = vmatprep.subr.mxu0 0.0
    %3509 = vmatpush1.msra.mxu0 0.0
    %3510 = vmatprep.subr.mxu0 0.0
    %3511 = vmatpush1.msra.mxu0 0.0
    %3512 = vmatprep.subr.mxu0 0.0
    %3513 = vmatpush1.msra.mxu0 0.0
    %3514 = vmatprep.subr.mxu0 0.0
    %3515 = vmatpush1.msra.mxu0 0.0
    %3516 = vmatprep.subr.mxu0 0.0
    %3517 = vmatpush1.msra.mxu0 0.0
    %3518 = vmatprep.subr.mxu0 0.0
    %3519 = vmatpush1.msra.mxu0 0.0
    %3520 = vmatprep.subr.mxu0 0.0
    %3521 = vmatpush1.msra.mxu0 0.0
    %3522 = vmatprep.subr.mxu0 0.0
    %3523 = vmatpush1.msra.mxu0 0.0
    %3524 = vmatprep.subr.mxu0 0.0
    %3525 = vmatpush1.msra.mxu0 0.0
    %3526 = vmatprep.subr.mxu0 0.0
    %3527 = vmatpush1.msra.mxu0 0.0
    %3528 = vmatprep.subr.mxu0 0.0
    %3529 = vmatpush1.msra.mxu0 0.0
    %3530 = vmatprep.subr.mxu0 0.0
    %3531 = vmatpush1.msra.mxu0 0.0
    %3532 = vmatprep.subr.mxu0 0.0
    %3533 = vmatpush1.msra.mxu0 0.0
    %3534 = vmatprep.subr.mxu0 0.0
    %3535 = vmatpush1.msra.mxu0 0.0
    %3536 = vmatprep.mubr.f32.mxu0 0.0
    %3537 = vmatmul.mubr.f32.gmra.mrb[0].mxu0 %v1220
    %v3538 = vpop.f32.mrb[0].mxu0
    %v3539 = vadd.f32 %v3154, %v3538
    %v3540 = vpop.f32.mrb[0].mxu0
    %3541 = vmatprep.mubr.f32.mxu0 0.0
    %3542 = vmatmul.mubr.f32.gmra.mrb[0].mxu0 %v1229
    %v3543 = vpop.f32.mrb[0].mxu0
    %v3544 = vadd.f32 %v3159, %v3543
    %v3545 = vpop.f32.mrb[0].mxu0
    %3546 = vmatprep.mubr.f32.mxu0 0.0
    %3547 = vmatmul.mubr.f32.gmra.mrb[0].mxu0 %v1238
    %v3548 = vpop.f32.mrb[0].mxu0
    %v3549 = vadd.f32 %v3164, %v3548
    %v3550 = vpop.f32.mrb[0].mxu0
    %3551 = vmatprep.mubr.f32.mxu0 0.0
    %3552 = vmatmul.mubr.f32.gmra.mrb[0].mxu0 %v1247
    %v3553 = vpop.f32.mrb[0].mxu0
    %v3554 = vadd.f32 %v3169, %v3553
    %v3555 = vpop.f32.mrb[0].mxu0
    %3556 = vmatprep.mubr.f32.mxu0 0.0
    %3557 = vmatmul.mubr.f32.gmra.mrb[0].mxu0 %v1256
    %v3558 = vpop.f32.mrb[0].mxu0
    %v3559 = vadd.f32 %v3174, %v3558
    %v3560 = vpop.f32.mrb[0].mxu0
    %3561 = vmatprep.mubr.f32.mxu0 0.0
    %3562 = vmatmul.mubr.f32.gmra.mrb[0].mxu0 %v1265
    %v3563 = vpop.f32.mrb[0].mxu0
    %v3564 = vadd.f32 %v3179, %v3563
    %v3565 = vpop.f32.mrb[0].mxu0
    %3566 = vmatprep.mubr.f32.mxu0 0.0
    %3567 = vmatmul.mubr.f32.gmra.mrb[0].mxu0 %v1274
    %v3568 = vpop.f32.mrb[0].mxu0
    %v3569 = vadd.f32 %v3184, %v3568
    %v3570 = vpop.f32.mrb[0].mxu0
    %3571 = vmatprep.mubr.f32.mxu0 0.0
    %3572 = vmatmul.mubr.f32.gmra.mrb[0].mxu0 %v1283
    %v3573 = vpop.f32.mrb[0].mxu0
    %v3574 = vadd.f32 %v3189, %v3573
    %v3575 = vpop.f32.mrb[0].mxu0
    %3576 = vmatprep.mubr.f32.mxu0 0.0
    %3577 = vmatmul.mubr.f32.gmra.mrb[0].mxu0 %v1292
    %v3578 = vpop.f32.mrb[0].mxu0
    %v3579 = vadd.f32 %v3194, %v3578
    %v3580 = vpop.f32.mrb[0].mxu0
    %3581 = vmatprep.mubr.f32.mxu0 0.0
    %3582 = vmatmul.mubr.f32.gmra.mrb[0].mxu0 %v1301
    %v3583 = vpop.f32.mrb[0].mxu0
    %v3584 = vadd.f32 %v3199, %v3583
    %v3585 = vpop.f32.mrb[0].mxu0
    %3586 = vmatprep.mubr.f32.mxu0 0.0
    %3587 = vmatmul.mubr.f32.gmra.mrb[0].mxu0 %v1310
    %v3588 = vpop.f32.mrb[0].mxu0
    %v3589 = vadd.f32 %v3204, %v3588
    %v3590 = vpop.f32.mrb[0].mxu0
    %3591 = vmatprep.mubr.f32.mxu0 0.0
    %3592 = vmatmul.mubr.f32.gmra.mrb[0].mxu0 %v1319
    %v3593 = vpop.f32.mrb[0].mxu0
    %v3594 = vadd.f32 %v3209, %v3593
    %v3595 = vpop.f32.mrb[0].mxu0
    %3596 = vmatprep.mubr.f32.mxu0 0.0
    %3597 = vmatmul.mubr.f32.gmra.mrb[0].mxu0 %v1328
    %v3598 = vpop.f32.mrb[0].mxu0
    %v3599 = vadd.f32 %v3214, %v3598
    %v3600 = vpop.f32.mrb[0].mxu0
    %3601 = vmatprep.mubr.f32.mxu0 0.0
    %3602 = vmatmul.mubr.f32.gmra.mrb[0].mxu0 %v1337
    %v3603 = vpop.f32.mrb[0].mxu0
    %v3604 = vadd.f32 %v3219, %v3603
    %v3605 = vpop.f32.mrb[0].mxu0
    %3606 = vmatprep.mubr.f32.mxu0 0.0
    %3607 = vmatmul.mubr.f32.gmra.mrb[0].mxu0 %v1346
    %v3608 = vpop.f32.mrb[0].mxu0
    %v3609 = vadd.f32 %v3224, %v3608
    %v3610 = vpop.f32.mrb[0].mxu0
    %3611 = vmatprep.mubr.f32.mxu0 0.0
    %3612 = vmatmul.mubr.f32.gmra.mrb[0].mxu0 %v1355
    %v3613 = vpop.f32.mrb[0].mxu0
    %v3614 = vadd.f32 %v3229, %v3613
    %v3615 = vpop.f32.mrb[0].mxu0
    %3616 = vmatprep.mubr.f32.mxu0 0.0
    %3617 = vmatmul.mubr.f32.gmra.mrb[0].mxu0 %v1364
    %v3618 = vpop.f32.mrb[0].mxu0
    %v3619 = vadd.f32 %v3234, %v3618
    %v3620 = vpop.f32.mrb[0].mxu0
    %3621 = vmatprep.mubr.f32.mxu0 0.0
    %3622 = vmatmul.mubr.f32.gmra.mrb[0].mxu0 %v1373
    %v3623 = vpop.f32.mrb[0].mxu0
    %v3624 = vadd.f32 %v3239, %v3623
    %v3625 = vpop.f32.mrb[0].mxu0
    %3626 = vmatprep.mubr.f32.mxu0 0.0
    %3627 = vmatmul.mubr.f32.gmra.mrb[0].mxu0 %v1382
    %v3628 = vpop.f32.mrb[0].mxu0
    %v3629 = vadd.f32 %v3244, %v3628
    %v3630 = vpop.f32.mrb[0].mxu0
    %3631 = vmatprep.mubr.f32.mxu0 0.0
    %3632 = vmatmul.mubr.f32.gmra.mrb[0].mxu0 %v1391
    %v3633 = vpop.f32.mrb[0].mxu0
    %v3634 = vadd.f32 %v3249, %v3633
    %v3635 = vpop.f32.mrb[0].mxu0
    %3636 = vmatprep.mubr.f32.mxu0 0.0
    %3637 = vmatmul.mubr.f32.gmra.mrb[0].mxu0 %v1400
    %v3638 = vpop.f32.mrb[0].mxu0
    %v3639 = vadd.f32 %v3254, %v3638
    %v3640 = vpop.f32.mrb[0].mxu0
    %3641 = vmatprep.mubr.f32.mxu0 0.0
    %3642 = vmatmul.mubr.f32.gmra.mrb[0].mxu0 %v1409
    %v3643 = vpop.f32.mrb[0].mxu0
    %v3644 = vadd.f32 %v3259, %v3643
    %v3645 = vpop.f32.mrb[0].mxu0
    %3646 = vmatprep.mubr.f32.mxu0 0.0
    %3647 = vmatmul.mubr.f32.gmra.mrb[0].mxu0 %v1418
    %v3648 = vpop.f32.mrb[0].mxu0
    %v3649 = vadd.f32 %v3264, %v3648
    %v3650 = vpop.f32.mrb[0].mxu0
    %3651 = vmatprep.mubr.f32.mxu0 0.0
    %3652 = vmatmul.mubr.f32.gmra.mrb[0].mxu0 %v1427
    %v3653 = vpop.f32.mrb[0].mxu0
    %v3654 = vadd.f32 %v3269, %v3653
    %v3655 = vpop.f32.mrb[0].mxu0
    %3656 = vmatprep.mubr.f32.mxu0 0.0
    %3657 = vmatmul.mubr.f32.gmra.mrb[0].mxu0 %v1436
    %v3658 = vpop.f32.mrb[0].mxu0
    %v3659 = vadd.f32 %v3274, %v3658
    %v3660 = vpop.f32.mrb[0].mxu0
    %3661 = vmatprep.mubr.f32.mxu0 0.0
    %3662 = vmatmul.mubr.f32.gmra.mrb[0].mxu0 %v1445
    %v3663 = vpop.f32.mrb[0].mxu0
    %v3664 = vadd.f32 %v3279, %v3663
    %v3665 = vpop.f32.mrb[0].mxu0
    %3666 = vmatprep.mubr.f32.mxu0 0.0
    %3667 = vmatmul.mubr.f32.gmra.mrb[0].mxu0 %v1454
    %v3668 = vpop.f32.mrb[0].mxu0
    %v3669 = vadd.f32 %v3284, %v3668
    %v3670 = vpop.f32.mrb[0].mxu0
    %3671 = vmatprep.mubr.f32.mxu0 0.0
    %3672 = vmatmul.mubr.f32.gmra.mrb[0].mxu0 %v1463
    %v3673 = vpop.f32.mrb[0].mxu0
    %v3674 = vadd.f32 %v3289, %v3673
    %v3675 = vpop.f32.mrb[0].mxu0
    %3676 = vmatprep.mubr.f32.mxu0 0.0
    %3677 = vmatmul.mubr.f32.gmra.mrb[0].mxu0 %v1472
    %v3678 = vpop.f32.mrb[0].mxu0
    %v3679 = vadd.f32 %v3294, %v3678
    %v3680 = vpop.f32.mrb[0].mxu0
    %3681 = vmatprep.mubr.f32.mxu0 0.0
    %3682 = vmatmul.mubr.f32.gmra.mrb[0].mxu0 %v1481
    %v3683 = vpop.f32.mrb[0].mxu0
    %v3684 = vadd.f32 %v3299, %v3683
    %v3685 = vpop.f32.mrb[0].mxu0
    %3686 = vmatprep.mubr.f32.mxu0 0.0
    %3687 = vmatmul.mubr.f32.gmra.mrb[0].mxu0 %v1490
    %v3688 = vpop.f32.mrb[0].mxu0
    %v3689 = vadd.f32 %v3304, %v3688
    %v3690 = vpop.f32.mrb[0].mxu0
    %3691 = vmatprep.mubr.f32.mxu0 0.0
    %3692 = vmatmul.mubr.f32.gmra.mrb[0].mxu0 %v1499
    %v3693 = vpop.f32.mrb[0].mxu0
    %v3694 = vadd.f32 %v3309, %v3693
    %v3695 = vpop.f32.mrb[0].mxu0
    %3696 = vmatprep.mubr.f32.mxu0 0.0
    %3697 = vmatmul.mubr.f32.gmra.mrb[0].mxu0 %v1508
    %v3698 = vpop.f32.mrb[0].mxu0
    %v3699 = vadd.f32 %v3314, %v3698
    %v3700 = vpop.f32.mrb[0].mxu0
    %3701 = vmatprep.mubr.f32.mxu0 0.0
    %3702 = vmatmul.mubr.f32.gmra.mrb[0].mxu0 %v1517
    %v3703 = vpop.f32.mrb[0].mxu0
    %v3704 = vadd.f32 %v3319, %v3703
    %v3705 = vpop.f32.mrb[0].mxu0
    %3706 = vmatprep.mubr.f32.mxu0 0.0
    %3707 = vmatmul.mubr.f32.gmra.mrb[0].mxu0 %v1526
    %v3708 = vpop.f32.mrb[0].mxu0
    %v3709 = vadd.f32 %v3324, %v3708
    %v3710 = vpop.f32.mrb[0].mxu0
    %3711 = vmatprep.mubr.f32.mxu0 0.0
    %3712 = vmatmul.mubr.f32.gmra.mrb[0].mxu0 %v1535
    %v3713 = vpop.f32.mrb[0].mxu0
    %v3714 = vadd.f32 %v3329, %v3713
    %v3715 = vpop.f32.mrb[0].mxu0
    %3716 = vmatprep.mubr.f32.mxu0 0.0
    %3717 = vmatmul.mubr.f32.gmra.mrb[0].mxu0 %v1544
    %v3718 = vpop.f32.mrb[0].mxu0
    %v3719 = vadd.f32 %v3334, %v3718
    %v3720 = vpop.f32.mrb[0].mxu0
    %3721 = vmatprep.mubr.f32.mxu0 0.0
    %3722 = vmatmul.mubr.f32.gmra.mrb[0].mxu0 %v1553
    %v3723 = vpop.f32.mrb[0].mxu0
    %v3724 = vadd.f32 %v3339, %v3723
    %v3725 = vpop.f32.mrb[0].mxu0
    %3726 = vmatprep.mubr.f32.mxu0 0.0
    %3727 = vmatmul.mubr.f32.gmra.mrb[0].mxu0 %v1562
    %v3728 = vpop.f32.mrb[0].mxu0
    %v3729 = vadd.f32 %v3344, %v3728
    %v3730 = vpop.f32.mrb[0].mxu0
    %3731 = vmatprep.mubr.f32.mxu0 0.0
    %3732 = vmatmul.mubr.f32.gmra.mrb[0].mxu0 %v1571
    %v3733 = vpop.f32.mrb[0].mxu0
    %v3734 = vadd.f32 %v3349, %v3733
    %v3735 = vpop.f32.mrb[0].mxu0
    %3736 = vmatprep.mubr.f32.mxu0 0.0
    %3737 = vmatmul.mubr.f32.gmra.mrb[0].mxu0 %v1580
    %v3738 = vpop.f32.mrb[0].mxu0
    %v3739 = vadd.f32 %v3354, %v3738
    %v3740 = vpop.f32.mrb[0].mxu0
    %3741 = vmatprep.mubr.f32.mxu0 0.0
    %3742 = vmatmul.mubr.f32.gmra.mrb[0].mxu0 %v1589
    %v3743 = vpop.f32.mrb[0].mxu0
    %v3744 = vadd.f32 %v3359, %v3743
    %v3745 = vpop.f32.mrb[0].mxu0
    %3746 = vmatprep.mubr.f32.mxu0 0.0
    %3747 = vmatmul.mubr.f32.gmra.mrb[0].mxu0 %v1598
    %v3748 = vpop.f32.mrb[0].mxu0
    %v3749 = vadd.f32 %v3364, %v3748
    %v3750 = vpop.f32.mrb[0].mxu0
    %3751 = vmatprep.mubr.f32.mxu0 0.0
    %3752 = vmatmul.mubr.f32.gmra.mrb[0].mxu0 %v1607
    %v3753 = vpop.f32.mrb[0].mxu0
    %v3754 = vadd.f32 %v3369, %v3753
    %v3755 = vpop.f32.mrb[0].mxu0
    %3756 = vmatprep.mubr.f32.mxu0 0.0
    %3757 = vmatmul.mubr.f32.gmra.mrb[0].mxu0 %v1616
    %v3758 = vpop.f32.mrb[0].mxu0
    %v3759 = vadd.f32 %v3374, %v3758
    %v3760 = vpop.f32.mrb[0].mxu0
    %3761 = vmatprep.mubr.f32.mxu0 0.0
    %3762 = vmatmul.mubr.f32.gmra.mrb[0].mxu0 %v1625
    %v3763 = vpop.f32.mrb[0].mxu0
    %v3764 = vadd.f32 %v3379, %v3763
    %v3765 = vpop.f32.mrb[0].mxu0
    %3766 = vmatprep.mubr.f32.mxu0 0.0
    %3767 = vmatmul.mubr.f32.gmra.mrb[0].mxu0 %v1634
    %v3768 = vpop.f32.mrb[0].mxu0
    %v3769 = vadd.f32 %v3384, %v3768
    %v3770 = vpop.f32.mrb[0].mxu0
    %3771 = vmatprep.mubr.f32.mxu0 0.0
    %3772 = vmatmul.mubr.f32.gmra.mrb[0].mxu0 %v1643
    %v3773 = vpop.f32.mrb[0].mxu0
    %v3774 = vadd.f32 %v3389, %v3773
    %v3775 = vpop.f32.mrb[0].mxu0
    %3776 = vmatprep.mubr.f32.mxu0 0.0
    %3777 = vmatmul.mubr.f32.gmra.mrb[0].mxu0 %v1652
    %v3778 = vpop.f32.mrb[0].mxu0
    %v3779 = vadd.f32 %v3394, %v3778
    %v3780 = vpop.f32.mrb[0].mxu0
    %3781 = vmatprep.mubr.f32.mxu0 0.0
    %3782 = vmatmul.mubr.f32.gmra.mrb[0].mxu0 %v1661
    %v3783 = vpop.f32.mrb[0].mxu0
    %v3784 = vadd.f32 %v3399, %v3783
    %v3785 = vpop.f32.mrb[0].mxu0
    %3786 = vmatprep.mubr.f32.mxu0 0.0
    %3787 = vmatmul.mubr.f32.gmra.mrb[0].mxu0 %v1670
    %v3788 = vpop.f32.mrb[0].mxu0
    %v3789 = vadd.f32 %v3404, %v3788
    %v3790 = vpop.f32.mrb[0].mxu0
    %3791 = vmatprep.mubr.f32.mxu0 0.0
    %3792 = vmatmul.mubr.f32.gmra.mrb[0].mxu0 %v1679
    %v3793 = vpop.f32.mrb[0].mxu0
    %v3794 = vadd.f32 %v3409, %v3793
    %v3795 = vpop.f32.mrb[0].mxu0
    %3796 = vmatprep.mubr.f32.mxu0 0.0
    %3797 = vmatmul.mubr.f32.gmra.mrb[0].mxu0 %v1688
    %v3798 = vpop.f32.mrb[0].mxu0
    %v3799 = vadd.f32 %v3414, %v3798
    %v3800 = vpop.f32.mrb[0].mxu0
    %3801 = vmatprep.mubr.f32.mxu0 0.0
    %3802 = vmatmul.mubr.f32.gmra.mrb[0].mxu0 %v1697
    %v3803 = vpop.f32.mrb[0].mxu0
    %v3804 = vadd.f32 %v3419, %v3803
    %v3805 = vpop.f32.mrb[0].mxu0
    %3806 = vmatprep.mubr.f32.mxu0 0.0
    %3807 = vmatmul.mubr.f32.gmra.mrb[0].mxu0 %v1706
    %v3808 = vpop.f32.mrb[0].mxu0
    %v3809 = vadd.f32 %v3424, %v3808
    %v3810 = vpop.f32.mrb[0].mxu0
    %3811 = vmatprep.mubr.f32.mxu0 0.0
    %3812 = vmatmul.mubr.f32.gmra.mrb[0].mxu0 %v1715
    %v3813 = vpop.f32.mrb[0].mxu0
    %v3814 = vadd.f32 %v3429, %v3813
    %v3815 = vpop.f32.mrb[0].mxu0
    %3816 = vmatprep.mubr.f32.mxu0 0.0
    %3817 = vmatmul.mubr.f32.gmra.mrb[0].mxu0 %v1724
    %v3818 = vpop.f32.mrb[0].mxu0
    %v3819 = vadd.f32 %v3434, %v3818
    %v3820 = vpop.f32.mrb[0].mxu0
    %3821 = vmatprep.mubr.f32.mxu0 0.0
    %3822 = vmatmul.mubr.f32.gmra.mrb[0].mxu0 %v1733
    %v3823 = vpop.f32.mrb[0].mxu0
    %v3824 = vadd.f32 %v3439, %v3823
    %v3825 = vpop.f32.mrb[0].mxu0
    %3826 = vmatprep.mubr.f32.mxu0 0.0
    %3827 = vmatmul.mubr.f32.gmra.mrb[0].mxu0 %v1742
    %v3828 = vpop.f32.mrb[0].mxu0
    %v3829 = vadd.f32 %v3444, %v3828
    %v3830 = vpop.f32.mrb[0].mxu0
    %3831 = vmatprep.mubr.f32.mxu0 0.0
    %3832 = vmatmul.mubr.f32.gmra.mrb[0].mxu0 %v1751
    %v3833 = vpop.f32.mrb[0].mxu0
    %v3834 = vadd.f32 %v3449, %v3833
    %v3835 = vpop.f32.mrb[0].mxu0
    %3836 = vmatprep.mubr.f32.mxu0 0.0
    %3837 = vmatmul.mubr.f32.gmra.mrb[0].mxu0 %v1760
    %v3838 = vpop.f32.mrb[0].mxu0
    %v3839 = vadd.f32 %v3454, %v3838
    %v3840 = vpop.f32.mrb[0].mxu0
    %3841 = vmatprep.mubr.f32.mxu0 0.0
    %3842 = vmatmul.mubr.f32.gmra.mrb[0].mxu0 %v1769
    %v3843 = vpop.f32.mrb[0].mxu0
    %v3844 = vadd.f32 %v3459, %v3843
    %v3845 = vpop.f32.mrb[0].mxu0
    %3846 = vmatprep.mubr.f32.mxu0 0.0
    %3847 = vmatmul.mubr.f32.gmra.mrb[0].mxu0 %v1778
    %v3848 = vpop.f32.mrb[0].mxu0
    %v3849 = vadd.f32 %v3464, %v3848
    %v3850 = vpop.f32.mrb[0].mxu0
    %3851 = vmatprep.mubr.f32.mxu0 0.0
    %3852 = vmatmul.mubr.f32.gmra.mrb[0].mxu0 %v1787
    %v3853 = vpop.f32.mrb[0].mxu0
    %v3854 = vadd.f32 %v3469, %v3853
    %v3855 = vpop.f32.mrb[0].mxu0
    %3856 = vdwg.mxu0
    %v3857 = vadd.f32 %v3539, %v3544
    %v3858 = vadd.f32 %v3857, %v3549
    %v3859 = vadd.f32 %v3858, %v3554
    %v3860 = vadd.f32 %v3859, %v3559
    %v3861 = vadd.f32 %v3860, %v3564
    %v3862 = vadd.f32 %v3861, %v3569
    %v3863 = vadd.f32 %v3862, %v3574
    %v3864 = vadd.f32 %v3863, %v3579
    %v3865 = vadd.f32 %v3864, %v3584
    %v3866 = vadd.f32 %v3865, %v3589
    %v3867 = vadd.f32 %v3866, %v3594
    %v3868 = vadd.f32 %v3867, %v3599
    %v3869 = vadd.f32 %v3868, %v3604
    %v3870 = vadd.f32 %v3869, %v3609
    %v3871 = vadd.f32 %v3870, %v3614
    %v3872 = vadd.f32 %v3871, %v3619
    %v3873 = vadd.f32 %v3872, %v3624
    %v3874 = vadd.f32 %v3873, %v3629
    %v3875 = vadd.f32 %v3874, %v3634
    %v3876 = vadd.f32 %v3875, %v3639
    %v3877 = vadd.f32 %v3876, %v3644
    %v3878 = vadd.f32 %v3877, %v3649
    %v3879 = vadd.f32 %v3878, %v3654
    %v3880 = vadd.f32 %v3879, %v3659
    %v3881 = vadd.f32 %v3880, %v3664
    %v3882 = vadd.f32 %v3881, %v3669
    %v3883 = vadd.f32 %v3882, %v3674
    %v3884 = vadd.f32 %v3883, %v3679
    %v3885 = vadd.f32 %v3884, %v3684
    %v3886 = vadd.f32 %v3885, %v3689
    %v3887 = vadd.f32 %v3886, %v3694
    %v3888 = vadd.f32 %v3887, %v3699
    %v3889 = vadd.f32 %v3888, %v3704
    %v3890 = vadd.f32 %v3889, %v3709
    %v3891 = vadd.f32 %v3890, %v3714
    %v3892 = vadd.f32 %v3891, %v3719
    %v3893 = vadd.f32 %v3892, %v3724
    %v3894 = vadd.f32 %v3893, %v3729
    %v3895 = vadd.f32 %v3894, %v3734
    %v3896 = vadd.f32 %v3895, %v3739
    %v3897 = vadd.f32 %v3896, %v3744
    %v3898 = vadd.f32 %v3897, %v3749
    %v3899 = vadd.f32 %v3898, %v3754
    %v3900 = vadd.f32 %v3899, %v3759
    %v3901 = vadd.f32 %v3900, %v3764
    %v3902 = vadd.f32 %v3901, %v3769
    %v3903 = vadd.f32 %v3902, %v3774
    %v3904 = vadd.f32 %v3903, %v3779
    %v3905 = vadd.f32 %v3904, %v3784
    %v3906 = vadd.f32 %v3905, %v3789
    %v3907 = vadd.f32 %v3906, %v3794
    %v3908 = vadd.f32 %v3907, %v3799
    %v3909 = vadd.f32 %v3908, %v3804
    %v3910 = vadd.f32 %v3909, %v3809
    %v3911 = vadd.f32 %v3910, %v3814
    %v3912 = vadd.f32 %v3911, %v3819
    %v3913 = vadd.f32 %v3912, %v3824
    %v3914 = vadd.f32 %v3913, %v3829
    %v3915 = vadd.f32 %v3914, %v3834
    %v3916 = vadd.f32 %v3915, %v3839
    %v3917 = vadd.f32 %v3916, %v3844
    %v3918 = vadd.f32 %v3917, %v3849
    %v3919 = vadd.f32 %v3918, %v3854
    %v3920 = vrot.slane %v3919, 4
    %v3921 = vadd.f32 %v3919, %v3920
    %v3922 = vrot.slane %v3921, 2
    %v3923 = vadd.f32 %v3921, %v3922
    %v3924 = vrot.slane %v3923, 1
    %v3925 = vadd.f32 %v3923, %v3924
    %v3926 = vrcp.pop 512.0
    %v3927 = vmul.f32 %v3925, %v3926
    %v3928 = vsub.f32 %v3539, %v3927
    %v3929 = vsub.f32 %v3544, %v3927
    %v3930 = vsub.f32 %v3549, %v3927
    %v3931 = vsub.f32 %v3554, %v3927
    %v3932 = vsub.f32 %v3559, %v3927
    %v3933 = vsub.f32 %v3564, %v3927
    %v3934 = vsub.f32 %v3569, %v3927
    %v3935 = vsub.f32 %v3574, %v3927
    %v3936 = vsub.f32 %v3579, %v3927
    %v3937 = vsub.f32 %v3584, %v3927
    %v3938 = vsub.f32 %v3589, %v3927
    %v3939 = vsub.f32 %v3594, %v3927
    %v3940 = vsub.f32 %v3599, %v3927
    %v3941 = vsub.f32 %v3604, %v3927
    %v3942 = vsub.f32 %v3609, %v3927
    %v3943 = vsub.f32 %v3614, %v3927
    %v3944 = vsub.f32 %v3619, %v3927
    %v3945 = vsub.f32 %v3624, %v3927
    %v3946 = vsub.f32 %v3629, %v3927
    %v3947 = vsub.f32 %v3634, %v3927
    %v3948 = vsub.f32 %v3639, %v3927
    %v3949 = vsub.f32 %v3644, %v3927
    %v3950 = vsub.f32 %v3649, %v3927
    %v3951 = vsub.f32 %v3654, %v3927
    %v3952 = vsub.f32 %v3659, %v3927
    %v3953 = vsub.f32 %v3664, %v3927
    %v3954 = vsub.f32 %v3669, %v3927
    %v3955 = vsub.f32 %v3674, %v3927
    %v3956 = vsub.f32 %v3679, %v3927
    %v3957 = vsub.f32 %v3684, %v3927
    %v3958 = vsub.f32 %v3689, %v3927
    %v3959 = vsub.f32 %v3694, %v3927
    %v3960 = vsub.f32 %v3699, %v3927
    %v3961 = vsub.f32 %v3704, %v3927
    %v3962 = vsub.f32 %v3709, %v3927
    %v3963 = vsub.f32 %v3714, %v3927
    %v3964 = vsub.f32 %v3719, %v3927
    %v3965 = vsub.f32 %v3724, %v3927
    %v3966 = vsub.f32 %v3729, %v3927
    %v3967 = vsub.f32 %v3734, %v3927
    %v3968 = vsub.f32 %v3739, %v3927
    %v3969 = vsub.f32 %v3744, %v3927
    %v3970 = vsub.f32 %v3749, %v3927
    %v3971 = vsub.f32 %v3754, %v3927
    %v3972 = vsub.f32 %v3759, %v3927
    %v3973 = vsub.f32 %v3764, %v3927
    %v3974 = vsub.f32 %v3769, %v3927
    %v3975 = vsub.f32 %v3774, %v3927
    %v3976 = vsub.f32 %v3779, %v3927
    %v3977 = vsub.f32 %v3784, %v3927
    %v3978 = vsub.f32 %v3789, %v3927
    %v3979 = vsub.f32 %v3794, %v3927
    %v3980 = vsub.f32 %v3799, %v3927
    %v3981 = vsub.f32 %v3804, %v3927
    %v3982 = vsub.f32 %v3809, %v3927
    %v3983 = vsub.f32 %v3814, %v3927
    %v3984 = vsub.f32 %v3819, %v3927
    %v3985 = vsub.f32 %v3824, %v3927
    %v3986 = vsub.f32 %v3829, %v3927
    %v3987 = vsub.f32 %v3834, %v3927
    %v3988 = vsub.f32 %v3839, %v3927
    %v3989 = vsub.f32 %v3844, %v3927
    %v3990 = vsub.f32 %v3849, %v3927
    %v3991 = vsub.f32 %v3854, %v3927
    %v3992 = vmul.f32 %v3928, %v3928
    %v3993 = vmul.f32 %v3929, %v3929
    %v3994 = vmul.f32 %v3930, %v3930
    %v3995 = vmul.f32 %v3931, %v3931
    %v3996 = vmul.f32 %v3932, %v3932
    %v3997 = vmul.f32 %v3933, %v3933
    %v3998 = vmul.f32 %v3934, %v3934
    %v3999 = vmul.f32 %v3935, %v3935
    %v4000 = vmul.f32 %v3936, %v3936
    %v4001 = vmul.f32 %v3937, %v3937
    %v4002 = vmul.f32 %v3938, %v3938
    %v4003 = vmul.f32 %v3939, %v3939
    %v4004 = vmul.f32 %v3940, %v3940
    %v4005 = vmul.f32 %v3941, %v3941
    %v4006 = vmul.f32 %v3942, %v3942
    %v4007 = vmul.f32 %v3943, %v3943
    %v4008 = vmul.f32 %v3944, %v3944
    %v4009 = vmul.f32 %v3945, %v3945
    %v4010 = vmul.f32 %v3946, %v3946
    %v4011 = vmul.f32 %v3947, %v3947
    %v4012 = vmul.f32 %v3948, %v3948
    %v4013 = vmul.f32 %v3949, %v3949
    %v4014 = vmul.f32 %v3950, %v3950
    %v4015 = vmul.f32 %v3951, %v3951
    %v4016 = vmul.f32 %v3952, %v3952
    %v4017 = vmul.f32 %v3953, %v3953
    %v4018 = vmul.f32 %v3954, %v3954
    %v4019 = vmul.f32 %v3955, %v3955
    %v4020 = vmul.f32 %v3956, %v3956
    %v4021 = vmul.f32 %v3957, %v3957
    %v4022 = vmul.f32 %v3958, %v3958
    %v4023 = vmul.f32 %v3959, %v3959
    %v4024 = vmul.f32 %v3960, %v3960
    %v4025 = vmul.f32 %v3961, %v3961
    %v4026 = vmul.f32 %v3962, %v3962
    %v4027 = vmul.f32 %v3963, %v3963
    %v4028 = vmul.f32 %v3964, %v3964
    %v4029 = vmul.f32 %v3965, %v3965
    %v4030 = vmul.f32 %v3966, %v3966
    %v4031 = vmul.f32 %v3967, %v3967
    %v4032 = vmul.f32 %v3968, %v3968
    %v4033 = vmul.f32 %v3969, %v3969
    %v4034 = vmul.f32 %v3970, %v3970
    %v4035 = vmul.f32 %v3971, %v3971
    %v4036 = vmul.f32 %v3972, %v3972
    %v4037 = vmul.f32 %v3973, %v3973
    %v4038 = vmul.f32 %v3974, %v3974
    %v4039 = vmul.f32 %v3975, %v3975
    %v4040 = vmul.f32 %v3976, %v3976
    %v4041 = vmul.f32 %v3977, %v3977
    %v4042 = vmul.f32 %v3978, %v3978
    %v4043 = vmul.f32 %v3979, %v3979
    %v4044 = vmul.f32 %v3980, %v3980
    %v4045 = vmul.f32 %v3981, %v3981
    %v4046 = vmul.f32 %v3982, %v3982
    %v4047 = vmul.f32 %v3983, %v3983
    %v4048 = vmul.f32 %v3984, %v3984
    %v4049 = vmul.f32 %v3985, %v3985
    %v4050 = vmul.f32 %v3986, %v3986
    %v4051 = vmul.f32 %v3987, %v3987
    %v4052 = vmul.f32 %v3988, %v3988
    %v4053 = vmul.f32 %v3989, %v3989
    %v4054 = vmul.f32 %v3990, %v3990
    %v4055 = vmul.f32 %v3991, %v3991
    %v4056 = vadd.f32 %v3992, %v3993
    %v4057 = vadd.f32 %v4056, %v3994
    %v4058 = vadd.f32 %v4057, %v3995
    %v4059 = vadd.f32 %v4058, %v3996
    %v4060 = vadd.f32 %v4059, %v3997
    %v4061 = vadd.f32 %v4060, %v3998
    %v4062 = vadd.f32 %v4061, %v3999
    %v4063 = vadd.f32 %v4062, %v4000
    %v4064 = vadd.f32 %v4063, %v4001
    %v4065 = vadd.f32 %v4064, %v4002
    %v4066 = vadd.f32 %v4065, %v4003
    %v4067 = vadd.f32 %v4066, %v4004
    %v4068 = vadd.f32 %v4067, %v4005
    %v4069 = vadd.f32 %v4068, %v4006
    %v4070 = vadd.f32 %v4069, %v4007
    %v4071 = vadd.f32 %v4070, %v4008
    %v4072 = vadd.f32 %v4071, %v4009
    %v4073 = vadd.f32 %v4072, %v4010
    %v4074 = vadd.f32 %v4073, %v4011
    %v4075 = vadd.f32 %v4074, %v4012
    %v4076 = vadd.f32 %v4075, %v4013
    %v4077 = vadd.f32 %v4076, %v4014
    %v4078 = vadd.f32 %v4077, %v4015
    %v4079 = vadd.f32 %v4078, %v4016
    %v4080 = vadd.f32 %v4079, %v4017
    %v4081 = vadd.f32 %v4080, %v4018
    %v4082 = vadd.f32 %v4081, %v4019
    %v4083 = vadd.f32 %v4082, %v4020
    %v4084 = vadd.f32 %v4083, %v4021
    %v4085 = vadd.f32 %v4084, %v4022
    %v4086 = vadd.f32 %v4085, %v4023
    %v4087 = vadd.f32 %v4086, %v4024
    %v4088 = vadd.f32 %v4087, %v4025
    %v4089 = vadd.f32 %v4088, %v4026
    %v4090 = vadd.f32 %v4089, %v4027
    %v4091 = vadd.f32 %v4090, %v4028
    %v4092 = vadd.f32 %v4091, %v4029
    %v4093 = vadd.f32 %v4092, %v4030
    %v4094 = vadd.f32 %v4093, %v4031
    %v4095 = vadd.f32 %v4094, %v4032
    %v4096 = vadd.f32 %v4095, %v4033
    %v4097 = vadd.f32 %v4096, %v4034
    %v4098 = vadd.f32 %v4097, %v4035
    %v4099 = vadd.f32 %v4098, %v4036
    %v4100 = vadd.f32 %v4099, %v4037
    %v4101 = vadd.f32 %v4100, %v4038
    %v4102 = vadd.f32 %v4101, %v4039
    %v4103 = vadd.f32 %v4102, %v4040
    %v4104 = vadd.f32 %v4103, %v4041
    %v4105 = vadd.f32 %v4104, %v4042
    %v4106 = vadd.f32 %v4105, %v4043
    %v4107 = vadd.f32 %v4106, %v4044
    %v4108 = vadd.f32 %v4107, %v4045
    %v4109 = vadd.f32 %v4108, %v4046
    %v4110 = vadd.f32 %v4109, %v4047
    %v4111 = vadd.f32 %v4110, %v4048
    %v4112 = vadd.f32 %v4111, %v4049
    %v4113 = vadd.f32 %v4112, %v4050
    %v4114 = vadd.f32 %v4113, %v4051
    %v4115 = vadd.f32 %v4114, %v4052
    %v4116 = vadd.f32 %v4115, %v4053
    %v4117 = vadd.f32 %v4116, %v4054
    %v4118 = vadd.f32 %v4117, %v4055
    %v4119 = vrot.slane %v4118, 4
    %v4120 = vadd.f32 %v4118, %v4119
    %v4121 = vrot.slane %v4120, 2
    %v4122 = vadd.f32 %v4120, %v4121
    %v4123 = vrot.slane %v4122, 1
    %v4124 = vadd.f32 %v4122, %v4123
    %v4125 = vmul.f32 %v4124, %v3926
    %v4126 = vadd.f32 %v4125, 1e-05
    %v4127 = vrsqrt.pop %v4126
    %v4128 = vld [vmem:[%s4] sm:$0x1]
    %v4129 = vmul.f32 %v4127, %v4128
    %v4130 = vlaneseq
    %v4131 = vshrl.u32 %v4130, 7
    %v4132 = vsub.s32 0, %v4131
    %v4133 = vrot.slane %v4129, %v4132
    %v4134 = vmul.f32 %v3928, %v4133
    %v4135 = vmul.f32 %v3929, %v4133
    %v4136 = vmul.f32 %v3930, %v4133
    %v4137 = vmul.f32 %v3931, %v4133
    %v4138 = vmul.f32 %v3932, %v4133
    %v4139 = vmul.f32 %v3933, %v4133
    %v4140 = vmul.f32 %v3934, %v4133
    %v4141 = vmul.f32 %v3935, %v4133
    %v4142 = vmul.f32 %v3936, %v4133
    %v4143 = vmul.f32 %v3937, %v4133
    %v4144 = vmul.f32 %v3938, %v4133
    %v4145 = vmul.f32 %v3939, %v4133
    %v4146 = vmul.f32 %v3940, %v4133
    %v4147 = vmul.f32 %v3941, %v4133
    %v4148 = vmul.f32 %v3942, %v4133
    %v4149 = vmul.f32 %v3943, %v4133
    %v4150 = vmul.f32 %v3944, %v4133
    %v4151 = vmul.f32 %v3945, %v4133
    %v4152 = vmul.f32 %v3946, %v4133
    %v4153 = vmul.f32 %v3947, %v4133
    %v4154 = vmul.f32 %v3948, %v4133
    %v4155 = vmul.f32 %v3949, %v4133
    %v4156 = vmul.f32 %v3950, %v4133
    %v4157 = vmul.f32 %v3951, %v4133
    %v4158 = vmul.f32 %v3952, %v4133
    %v4159 = vmul.f32 %v3953, %v4133
    %v4160 = vmul.f32 %v3954, %v4133
    %v4161 = vmul.f32 %v3955, %v4133
    %v4162 = vmul.f32 %v3956, %v4133
    %v4163 = vmul.f32 %v3957, %v4133
    %v4164 = vmul.f32 %v3958, %v4133
    %v4165 = vmul.f32 %v3959, %v4133
    %v4166 = vmul.f32 %v3960, %v4133
    %v4167 = vmul.f32 %v3961, %v4133
    %v4168 = vmul.f32 %v3962, %v4133
    %v4169 = vmul.f32 %v3963, %v4133
    %v4170 = vmul.f32 %v3964, %v4133
    %v4171 = vmul.f32 %v3965, %v4133
    %v4172 = vmul.f32 %v3966, %v4133
    %v4173 = vmul.f32 %v3967, %v4133
    %v4174 = vmul.f32 %v3968, %v4133
    %v4175 = vmul.f32 %v3969, %v4133
    %v4176 = vmul.f32 %v3970, %v4133
    %v4177 = vmul.f32 %v3971, %v4133
    %v4178 = vmul.f32 %v3972, %v4133
    %v4179 = vmul.f32 %v3973, %v4133
    %v4180 = vmul.f32 %v3974, %v4133
    %v4181 = vmul.f32 %v3975, %v4133
    %v4182 = vmul.f32 %v3976, %v4133
    %v4183 = vmul.f32 %v3977, %v4133
    %v4184 = vmul.f32 %v3978, %v4133
    %v4185 = vmul.f32 %v3979, %v4133
    %v4186 = vmul.f32 %v3980, %v4133
    %v4187 = vmul.f32 %v3981, %v4133
    %v4188 = vmul.f32 %v3982, %v4133
    %v4189 = vmul.f32 %v3983, %v4133
    %v4190 = vmul.f32 %v3984, %v4133
    %v4191 = vmul.f32 %v3985, %v4133
    %v4192 = vmul.f32 %v3986, %v4133
    %v4193 = vmul.f32 %v3987, %v4133
    %v4194 = vmul.f32 %v3988, %v4133
    %v4195 = vmul.f32 %v3989, %v4133
    %v4196 = vmul.f32 %v3990, %v4133
    %v4197 = vmul.f32 %v3991, %v4133
    %v4198 = vld [vmem:[%s5] sm:$0x1]
    %v4200 = vlaneseq
    %v4201 = vshrl.u32 %v4200, 7
    %v4202 = vsub.s32 0, %v4201
    %v4203 = vrot.slane %v4198, %v4202
    %v4205 = vadd.f32 %v4134, %v4203
    %v4206 = vadd.f32 %v4135, %v4203
    %v4207 = vadd.f32 %v4136, %v4203
    %v4208 = vadd.f32 %v4137, %v4203
    %v4209 = vadd.f32 %v4138, %v4203
    %v4210 = vadd.f32 %v4139, %v4203
    %v4211 = vadd.f32 %v4140, %v4203
    %v4212 = vadd.f32 %v4141, %v4203
    %v4213 = vadd.f32 %v4142, %v4203
    %v4214 = vadd.f32 %v4143, %v4203
    %v4215 = vadd.f32 %v4144, %v4203
    %v4216 = vadd.f32 %v4145, %v4203
    %v4217 = vadd.f32 %v4146, %v4203
    %v4218 = vadd.f32 %v4147, %v4203
    %v4219 = vadd.f32 %v4148, %v4203
    %v4220 = vadd.f32 %v4149, %v4203
    %v4221 = vadd.f32 %v4150, %v4203
    %v4222 = vadd.f32 %v4151, %v4203
    %v4223 = vadd.f32 %v4152, %v4203
    %v4224 = vadd.f32 %v4153, %v4203
    %v4225 = vadd.f32 %v4154, %v4203
    %v4226 = vadd.f32 %v4155, %v4203
    %v4227 = vadd.f32 %v4156, %v4203
    %v4228 = vadd.f32 %v4157, %v4203
    %v4229 = vadd.f32 %v4158, %v4203
    %v4230 = vadd.f32 %v4159, %v4203
    %v4231 = vadd.f32 %v4160, %v4203
    %v4232 = vadd.f32 %v4161, %v4203
    %v4233 = vadd.f32 %v4162, %v4203
    %v4234 = vadd.f32 %v4163, %v4203
    %v4235 = vadd.f32 %v4164, %v4203
    %v4236 = vadd.f32 %v4165, %v4203
    %v4237 = vadd.f32 %v4166, %v4203
    %v4238 = vadd.f32 %v4167, %v4203
    %v4239 = vadd.f32 %v4168, %v4203
    %v4240 = vadd.f32 %v4169, %v4203
    %v4241 = vadd.f32 %v4170, %v4203
    %v4242 = vadd.f32 %v4171, %v4203
    %v4243 = vadd.f32 %v4172, %v4203
    %v4244 = vadd.f32 %v4173, %v4203
    %v4245 = vadd.f32 %v4174, %v4203
    %v4246 = vadd.f32 %v4175, %v4203
    %v4247 = vadd.f32 %v4176, %v4203
    %v4248 = vadd.f32 %v4177, %v4203
    %v4249 = vadd.f32 %v4178, %v4203
    %v4250 = vadd.f32 %v4179, %v4203
    %v4251 = vadd.f32 %v4180, %v4203
    %v4252 = vadd.f32 %v4181, %v4203
    %v4253 = vadd.f32 %v4182, %v4203
    %v4254 = vadd.f32 %v4183, %v4203
    %v4255 = vadd.f32 %v4184, %v4203
    %v4256 = vadd.f32 %v4185, %v4203
    %v4257 = vadd.f32 %v4186, %v4203
    %v4258 = vadd.f32 %v4187, %v4203
    %v4259 = vadd.f32 %v4188, %v4203
    %v4260 = vadd.f32 %v4189, %v4203
    %v4261 = vadd.f32 %v4190, %v4203
    %v4262 = vadd.f32 %v4191, %v4203
    %v4263 = vadd.f32 %v4192, %v4203
    %v4264 = vadd.f32 %v4193, %v4203
    %v4265 = vadd.f32 %v4194, %v4203
    %v4266 = vadd.f32 %v4195, %v4203
    %v4267 = vadd.f32 %v4196, %v4203
    %v4268 = vadd.f32 %v4197, %v4203
    %v4269 = vmax.f32 %v4205, 0.0
    %v4270 = vmax.f32 %v4206, 0.0
    %v4271 = vmax.f32 %v4207, 0.0
    %v4272 = vmax.f32 %v4208, 0.0
    %v4273 = vmax.f32 %v4209, 0.0
    %v4274 = vmax.f32 %v4210, 0.0
    %v4275 = vmax.f32 %v4211, 0.0
    %v4276 = vmax.f32 %v4212, 0.0
    %v4277 = vmax.f32 %v4213, 0.0
    %v4278 = vmax.f32 %v4214, 0.0
    %v4279 = vmax.f32 %v4215, 0.0
    %v4280 = vmax.f32 %v4216, 0.0
    %v4281 = vmax.f32 %v4217, 0.0
    %v4282 = vmax.f32 %v4218, 0.0
    %v4283 = vmax.f32 %v4219, 0.0
    %v4284 = vmax.f32 %v4220, 0.0
    %v4285 = vmax.f32 %v4221, 0.0
    %v4286 = vmax.f32 %v4222, 0.0
    %v4287 = vmax.f32 %v4223, 0.0
    %v4288 = vmax.f32 %v4224, 0.0
    %v4289 = vmax.f32 %v4225, 0.0
    %v4290 = vmax.f32 %v4226, 0.0
    %v4291 = vmax.f32 %v4227, 0.0
    %v4292 = vmax.f32 %v4228, 0.0
    %v4293 = vmax.f32 %v4229, 0.0
    %v4294 = vmax.f32 %v4230, 0.0
    %v4295 = vmax.f32 %v4231, 0.0
    %v4296 = vmax.f32 %v4232, 0.0
    %v4297 = vmax.f32 %v4233, 0.0
    %v4298 = vmax.f32 %v4234, 0.0
    %v4299 = vmax.f32 %v4235, 0.0
    %v4300 = vmax.f32 %v4236, 0.0
    %v4301 = vmax.f32 %v4237, 0.0
    %v4302 = vmax.f32 %v4238, 0.0
    %v4303 = vmax.f32 %v4239, 0.0
    %v4304 = vmax.f32 %v4240, 0.0
    %v4305 = vmax.f32 %v4241, 0.0
    %v4306 = vmax.f32 %v4242, 0.0
    %v4307 = vmax.f32 %v4243, 0.0
    %v4308 = vmax.f32 %v4244, 0.0
    %v4309 = vmax.f32 %v4245, 0.0
    %v4310 = vmax.f32 %v4246, 0.0
    %v4311 = vmax.f32 %v4247, 0.0
    %v4312 = vmax.f32 %v4248, 0.0
    %v4313 = vmax.f32 %v4249, 0.0
    %v4314 = vmax.f32 %v4250, 0.0
    %v4315 = vmax.f32 %v4251, 0.0
    %v4316 = vmax.f32 %v4252, 0.0
    %v4317 = vmax.f32 %v4253, 0.0
    %v4318 = vmax.f32 %v4254, 0.0
    %v4319 = vmax.f32 %v4255, 0.0
    %v4320 = vmax.f32 %v4256, 0.0
    %v4321 = vmax.f32 %v4257, 0.0
    %v4322 = vmax.f32 %v4258, 0.0
    %v4323 = vmax.f32 %v4259, 0.0
    %v4324 = vmax.f32 %v4260, 0.0
    %v4325 = vmax.f32 %v4261, 0.0
    %v4326 = vmax.f32 %v4262, 0.0
    %v4327 = vmax.f32 %v4263, 0.0
    %v4328 = vmax.f32 %v4264, 0.0
    %v4329 = vmax.f32 %v4265, 0.0
    %v4330 = vmax.f32 %v4266, 0.0
    %v4331 = vmax.f32 %v4267, 0.0
    %v4332 = vmax.f32 %v4268, 0.0
    %4333 = vst [vmem:[#allocation3] sm:$0xff] 0.0
    %4334 = vst [vmem:[#allocation3 + $0x8] sm:$0xff] 0.0
    %4335 = vst [vmem:[#allocation3 + $0x10] sm:$0x3] 0.0
    %4336 = vst [vmem:[#allocation3 + $0x1b0] sm:$0xff] 0.0
    %4337 = vst [vmem:[#allocation3 + $0x1b8] sm:$0xff] 0.0
    %4338 = vst [vmem:[#allocation3 + $0x1c0] sm:$0x3] 0.0
    %s4339 = scalar_lea.vmem [#allocation3], 408
    %4340 = vst [vmem:[%s4339] sm:$0xff] 0.0
    %4341 = vst [vmem:[%s4339 + $0x8] sm:$0xff] 0.0
    %4342 = vst [vmem:[%s4339 + $0x10] sm:$0x3] 0.0
    %4343 = vst [vmem:[%s4339 + $0x1b0] sm:$0xff] 0.0
    %4344 = vst [vmem:[%s4339 + $0x1b8] sm:$0xff] 0.0
    %4345 = vst [vmem:[%s4339 + $0x1c0] sm:$0x3] 0.0
    %4346 = vst [vmem:[#allocation3] sm:$0x1] 0.0
    %4347 = vst [vmem:[#allocation3 + $0x18] sm:$0x1] 0.0
    %4348 = vst [vmem:[#allocation3 + $0x30] sm:$0x1] 0.0
    %4349 = vst [vmem:[#allocation3 + $0x48] sm:$0x1] 0.0
    %4350 = vst [vmem:[#allocation3 + $0x60] sm:$0x1] 0.0
    %4351 = vst [vmem:[#allocation3 + $0x78] sm:$0x1] 0.0
    %4352 = vst [vmem:[#allocation3 + $0x90] sm:$0x1] 0.0
    %4353 = vst [vmem:[#allocation3 + $0xa8] sm:$0x1] 0.0
    %4354 = vst [vmem:[#allocation3 + $0xc0] sm:$0x1] 0.0
    %4355 = vst [vmem:[#allocation3 + $0xd8] sm:$0x1] 0.0
    %4356 = vst [vmem:[#allocation3 + $0xf0] sm:$0x1] 0.0
    %4357 = vst [vmem:[#allocation3 + $0x108] sm:$0x1] 0.0
    %4358 = vst [vmem:[#allocation3 + $0x120] sm:$0x1] 0.0
    %4359 = vst [vmem:[#allocation3 + $0x138] sm:$0x1] 0.0
    %4360 = vst [vmem:[#allocation3 + $0x150] sm:$0x1] 0.0
    %4361 = vst [vmem:[#allocation3 + $0x168] sm:$0x1] 0.0
    %4362 = vst [vmem:[#allocation3 + $0x180] sm:$0x1] 0.0
    %4363 = vst [vmem:[#allocation3 + $0x198] sm:$0x1] 0.0
    %4364 = vst [vmem:[#allocation3 + $0x1b0] sm:$0x1] 0.0
    %4365 = vst [vmem:[#allocation3 + $0x1c8] sm:$0x1] 0.0
    %4366 = vst [vmem:[#allocation3 + $0x1e0] sm:$0x1] 0.0
    %4367 = vst [vmem:[#allocation3 + $0x1f8] sm:$0x1] 0.0
    %4368 = vst [vmem:[#allocation3 + $0x210] sm:$0x1] 0.0
    %4369 = vst [vmem:[#allocation3 + $0x228] sm:$0x1] 0.0
    %4370 = vst [vmem:[#allocation3 + $0x240] sm:$0x1] 0.0
    %4371 = vst [vmem:[#allocation3 + $0x258] sm:$0x1] 0.0
    %4372 = vst [vmem:[#allocation3 + $0x270] sm:$0x1] 0.0
    %4373 = vst [vmem:[#allocation3 + $0x288] sm:$0x1] 0.0
    %4374 = vst [vmem:[#allocation3 + $0x2a0] sm:$0x1] 0.0
    %4375 = vst [vmem:[#allocation3 + $0x2b8] sm:$0x1] 0.0
    %4376 = vst [vmem:[#allocation3 + $0x2d0] sm:$0x1] 0.0
    %4377 = vst [vmem:[#allocation3 + $0x2e8] sm:$0x1] 0.0
    %4378 = vst [vmem:[#allocation3 + $0x300] sm:$0x1] 0.0
    %4379 = vst [vmem:[#allocation3 + $0x318] sm:$0x1] 0.0
    %4380 = vst [vmem:[#allocation3 + $0x330] sm:$0x1] 0.0
    %4381 = vst [vmem:[#allocation3 + $0x348] sm:$0x1] 0.0
    %4382 = vst [vmem:[#allocation3 + $0x11] sm:$0x1] 0.0
    %4383 = vst [vmem:[#allocation3 + $0x29] sm:$0x1] 0.0
    %4384 = vst [vmem:[#allocation3 + $0x41] sm:$0x1] 0.0
    %4385 = vst [vmem:[#allocation3 + $0x59] sm:$0x1] 0.0
    %4386 = vst [vmem:[#allocation3 + $0x71] sm:$0x1] 0.0
    %4387 = vst [vmem:[#allocation3 + $0x89] sm:$0x1] 0.0
    %4388 = vst [vmem:[#allocation3 + $0xa1] sm:$0x1] 0.0
    %4389 = vst [vmem:[#allocation3 + $0xb9] sm:$0x1] 0.0
    %4390 = vst [vmem:[#allocation3 + $0xd1] sm:$0x1] 0.0
    %4391 = vst [vmem:[#allocation3 + $0xe9] sm:$0x1] 0.0
    %4392 = vst [vmem:[#allocation3 + $0x101] sm:$0x1] 0.0
    %4393 = vst [vmem:[#allocation3 + $0x119] sm:$0x1] 0.0
    %4394 = vst [vmem:[#allocation3 + $0x131] sm:$0x1] 0.0
    %4395 = vst [vmem:[#allocation3 + $0x149] sm:$0x1] 0.0
    %4396 = vst [vmem:[#allocation3 + $0x161] sm:$0x1] 0.0
    %4397 = vst [vmem:[#allocation3 + $0x179] sm:$0x1] 0.0
    %4398 = vst [vmem:[#allocation3 + $0x191] sm:$0x1] 0.0
    %4399 = vst [vmem:[#allocation3 + $0x1a9] sm:$0x1] 0.0
    %4400 = vst [vmem:[#allocation3 + $0x1c1] sm:$0x1] 0.0
    %4401 = vst [vmem:[#allocation3 + $0x1d9] sm:$0x1] 0.0
    %4402 = vst [vmem:[#allocation3 + $0x1f1] sm:$0x1] 0.0
    %4403 = vst [vmem:[#allocation3 + $0x209] sm:$0x1] 0.0
    %4404 = vst [vmem:[#allocation3 + $0x221] sm:$0x1] 0.0
    %4405 = vst [vmem:[#allocation3 + $0x239] sm:$0x1] 0.0
    %4406 = vst [vmem:[#allocation3 + $0x251] sm:$0x1] 0.0
    %4407 = vst [vmem:[#allocation3 + $0x269] sm:$0x1] 0.0
    %4408 = vst [vmem:[#allocation3 + $0x281] sm:$0x1] 0.0
    %4409 = vst [vmem:[#allocation3 + $0x299] sm:$0x1] 0.0
    %4410 = vst [vmem:[#allocation3 + $0x2b1] sm:$0x1] 0.0
    %4411 = vst [vmem:[#allocation3 + $0x2c9] sm:$0x1] 0.0
    %4412 = vst [vmem:[#allocation3 + $0x2e1] sm:$0x1] 0.0
    %4413 = vst [vmem:[#allocation3 + $0x2f9] sm:$0x1] 0.0
    %4414 = vst [vmem:[#allocation3 + $0x311] sm:$0x1] 0.0
    %4415 = vst [vmem:[#allocation3 + $0x329] sm:$0x1] 0.0
    %4416 = vst [vmem:[#allocation3 + $0x341] sm:$0x1] 0.0
    %4417 = vst [vmem:[#allocation3 + $0x359] sm:$0x1] 0.0
    %s4418 = scalar_lea.vmem [#allocation3], 24
    %4419 = vst [vmem:[%s4418 + $0x1] sm:$0xff] %v4269
    %4420 = vst [vmem:[%s4418 + $0x9] sm:$0xff] %v4270
    %4421 = vst [vmem:[%s4418 + $0x19] sm:$0xff] %v4271
    %4422 = vst [vmem:[%s4418 + $0x21] sm:$0xff] %v4272
    %4423 = vst [vmem:[%s4418 + $0x31] sm:$0xff] %v4273
    %4424 = vst [vmem:[%s4418 + $0x39] sm:$0xff] %v4274
    %4425 = vst [vmem:[%s4418 + $0x49] sm:$0xff] %v4275
    %4426 = vst [vmem:[%s4418 + $0x51] sm:$0xff] %v4276
    %4427 = vst [vmem:[%s4418 + $0x61] sm:$0xff] %v4277
    %4428 = vst [vmem:[%s4418 + $0x69] sm:$0xff] %v4278
    %4429 = vst [vmem:[%s4418 + $0x79] sm:$0xff] %v4279
    %4430 = vst [vmem:[%s4418 + $0x81] sm:$0xff] %v4280
    %4431 = vst [vmem:[%s4418 + $0x91] sm:$0xff] %v4281
    %4432 = vst [vmem:[%s4418 + $0x99] sm:$0xff] %v4282
    %4433 = vst [vmem:[%s4418 + $0xa9] sm:$0xff] %v4283
    %4434 = vst [vmem:[%s4418 + $0xb1] sm:$0xff] %v4284
    %4435 = vst [vmem:[%s4418 + $0xc1] sm:$0xff] %v4285
    %4436 = vst [vmem:[%s4418 + $0xc9] sm:$0xff] %v4286
    %4437 = vst [vmem:[%s4418 + $0xd9] sm:$0xff] %v4287
    %4438 = vst [vmem:[%s4418 + $0xe1] sm:$0xff] %v4288
    %4439 = vst [vmem:[%s4418 + $0xf1] sm:$0xff] %v4289
    %4440 = vst [vmem:[%s4418 + $0xf9] sm:$0xff] %v4290
    %4441 = vst [vmem:[%s4418 + $0x109] sm:$0xff] %v4291
    %4442 = vst [vmem:[%s4418 + $0x111] sm:$0xff] %v4292
    %4443 = vst [vmem:[%s4418 + $0x121] sm:$0xff] %v4293
    %4444 = vst [vmem:[%s4418 + $0x129] sm:$0xff] %v4294
    %4445 = vst [vmem:[%s4418 + $0x139] sm:$0xff] %v4295
    %4446 = vst [vmem:[%s4418 + $0x141] sm:$0xff] %v4296
    %4447 = vst [vmem:[%s4418 + $0x151] sm:$0xff] %v4297
    %4448 = vst [vmem:[%s4418 + $0x159] sm:$0xff] %v4298
    %4449 = vst [vmem:[%s4418 + $0x169] sm:$0xff] %v4299
    %4450 = vst [vmem:[%s4418 + $0x171] sm:$0xff] %v4300
    %4451 = vst [vmem:[%s4418 + $0x1b1] sm:$0xff] %v4301
    %4452 = vst [vmem:[%s4418 + $0x1b9] sm:$0xff] %v4302
    %4453 = vst [vmem:[%s4418 + $0x1c9] sm:$0xff] %v4303
    %4454 = vst [vmem:[%s4418 + $0x1d1] sm:$0xff] %v4304
    %4455 = vst [vmem:[%s4418 + $0x1e1] sm:$0xff] %v4305
    %4456 = vst [vmem:[%s4418 + $0x1e9] sm:$0xff] %v4306
    %4457 = vst [vmem:[%s4418 + $0x1f9] sm:$0xff] %v4307
    %4458 = vst [vmem:[%s4418 + $0x201] sm:$0xff] %v4308
    %4459 = vst [vmem:[%s4418 + $0x211] sm:$0xff] %v4309
    %4460 = vst [vmem:[%s4418 + $0x219] sm:$0xff] %v4310
    %4461 = vst [vmem:[%s4418 + $0x229] sm:$0xff] %v4311
    %4462 = vst [vmem:[%s4418 + $0x231] sm:$0xff] %v4312
    %4463 = vst [vmem:[%s4418 + $0x241] sm:$0xff] %v4313
    %4464 = vst [vmem:[%s4418 + $0x249] sm:$0xff] %v4314
    %4465 = vst [vmem:[%s4418 + $0x259] sm:$0xff] %v4315
    %4466 = vst [vmem:[%s4418 + $0x261] sm:$0xff] %v4316
    %4467 = vst [vmem:[%s4418 + $0x271] sm:$0xff] %v4317
    %4468 = vst [vmem:[%s4418 + $0x279] sm:$0xff] %v4318
    %4469 = vst [vmem:[%s4418 + $0x289] sm:$0xff] %v4319
    %4470 = vst [vmem:[%s4418 + $0x291] sm:$0xff] %v4320
    %4471 = vst [vmem:[%s4418 + $0x2a1] sm:$0xff] %v4321
    %4472 = vst [vmem:[%s4418 + $0x2a9] sm:$0xff] %v4322
    %4473 = vst [vmem:[%s4418 + $0x2b9] sm:$0xff] %v4323
    %4474 = vst [vmem:[%s4418 + $0x2c1] sm:$0xff] %v4324
    %4475 = vst [vmem:[%s4418 + $0x2d1] sm:$0xff] %v4325
    %4476 = vst [vmem:[%s4418 + $0x2d9] sm:$0xff] %v4326
    %4477 = vst [vmem:[%s4418 + $0x2e9] sm:$0xff] %v4327
    %4478 = vst [vmem:[%s4418 + $0x2f1] sm:$0xff] %v4328
    %4479 = vst [vmem:[%s4418 + $0x301] sm:$0xff] %v4329
    %4480 = vst [vmem:[%s4418 + $0x309] sm:$0xff] %v4330
    %4481 = vst [vmem:[%s4418 + $0x319] sm:$0xff] %v4331
    %4482 = vst [vmem:[%s4418 + $0x321] sm:$0xff] %v4332
    %v4483 = vld [vmem:[#allocation3] sm:$0xff]
    %v4484 = vld [vmem:[#allocation3 + $0x8] sm:$0xff]
    %v4485 = vld [vmem:[#allocation3 + $0x18] sm:$0xff]
    %v4486 = vld [vmem:[#allocation3 + $0x20] sm:$0xff]
    %v4487 = vld [vmem:[#allocation3 + $0x30] sm:$0xff]
    %v4488 = vld [vmem:[#allocation3 + $0x38] sm:$0xff]
    %v4489 = vld [vmem:[#allocation3 + $0x48] sm:$0xff]
    %v4490 = vld [vmem:[#allocation3 + $0x50] sm:$0xff]
    %v4491 = vld [vmem:[#allocation3 + $0x60] sm:$0xff]
    %v4492 = vld [vmem:[#allocation3 + $0x68] sm:$0xff]
    %v4493 = vld [vmem:[#allocation3 + $0x78] sm:$0xff]
    %v4494 = vld [vmem:[#allocation3 + $0x80] sm:$0xff]
    %v4495 = vld [vmem:[#allocation3 + $0x90] sm:$0xff]
    %v4496 = vld [vmem:[#allocation3 + $0x98] sm:$0xff]
    %v4497 = vld [vmem:[#allocation3 + $0xa8] sm:$0xff]
    %v4498 = vld [vmem:[#allocation3 + $0xb0] sm:$0xff]
    %v4499 = vld [vmem:[#allocation3 + $0xc0] sm:$0xff]
    %v4500 = vld [vmem:[#allocation3 + $0xc8] sm:$0xff]
    %v4501 = vld [vmem:[#allocation3 + $0xd8] sm:$0xff]
    %v4502 = vld [vmem:[#allocation3 + $0xe0] sm:$0xff]
    %v4503 = vld [vmem:[#allocation3 + $0xf0] sm:$0xff]
    %v4504 = vld [vmem:[#allocation3 + $0xf8] sm:$0xff]
    %v4505 = vld [vmem:[#allocation3 + $0x108] sm:$0xff]
    %v4506 = vld [vmem:[#allocation3 + $0x110] sm:$0xff]
    %v4507 = vld [vmem:[#allocation3 + $0x120] sm:$0xff]
    %v4508 = vld [vmem:[#allocation3 + $0x128] sm:$0xff]
    %v4509 = vld [vmem:[#allocation3 + $0x138] sm:$0xff]
    %v4510 = vld [vmem:[#allocation3 + $0x140] sm:$0xff]
    %v4511 = vld [vmem:[#allocation3 + $0x150] sm:$0xff]
    %v4512 = vld [vmem:[#allocation3 + $0x158] sm:$0xff]
    %v4513 = vld [vmem:[#allocation3 + $0x168] sm:$0xff]
    %v4514 = vld [vmem:[#allocation3 + $0x170] sm:$0xff]
    %v4515 = vld [vmem:[#allocation3 + $0x1b0] sm:$0xff]
    %v4516 = vld [vmem:[#allocation3 + $0x1b8] sm:$0xff]
    %v4517 = vld [vmem:[#allocation3 + $0x1c8] sm:$0xff]
    %v4518 = vld [vmem:[#allocation3 + $0x1d0] sm:$0xff]
    %v4519 = vld [vmem:[#allocation3 + $0x1e0] sm:$0xff]
    %v4520 = vld [vmem:[#allocation3 + $0x1e8] sm:$0xff]
    %v4521 = vld [vmem:[#allocation3 + $0x1f8] sm:$0xff]
    %v4522 = vld [vmem:[#allocation3 + $0x200] sm:$0xff]
    %v4523 = vld [vmem:[#allocation3 + $0x210] sm:$0xff]
    %v4524 = vld [vmem:[#allocation3 + $0x218] sm:$0xff]
    %v4525 = vld [vmem:[#allocation3 + $0x228] sm:$0xff]
    %v4526 = vld [vmem:[#allocation3 + $0x230] sm:$0xff]
    %v4527 = vld [vmem:[#allocation3 + $0x240] sm:$0xff]
    %v4528 = vld [vmem:[#allocation3 + $0x248] sm:$0xff]
    %v4529 = vld [vmem:[#allocation3 + $0x258] sm:$0xff]
    %v4530 = vld [vmem:[#allocation3 + $0x260] sm:$0xff]
    %v4531 = vld [vmem:[#allocation3 + $0x270] sm:$0xff]
    %v4532 = vld [vmem:[#allocation3 + $0x278] sm:$0xff]
    %v4533 = vld [vmem:[#allocation3 + $0x288] sm:$0xff]
    %v4534 = vld [vmem:[#allocation3 + $0x290] sm:$0xff]
    %v4535 = vld [vmem:[#allocation3 + $0x2a0] sm:$0xff]
    %v4536 = vld [vmem:[#allocation3 + $0x2a8] sm:$0xff]
    %v4537 = vld [vmem:[#allocation3 + $0x2b8] sm:$0xff]
    %v4538 = vld [vmem:[#allocation3 + $0x2c0] sm:$0xff]
    %v4539 = vld [vmem:[#allocation3 + $0x2d0] sm:$0xff]
    %v4540 = vld [vmem:[#allocation3 + $0x2d8] sm:$0xff]
    %v4541 = vld [vmem:[#allocation3 + $0x2e8] sm:$0xff]
    %v4542 = vld [vmem:[#allocation3 + $0x2f0] sm:$0xff]
    %v4543 = vld [vmem:[#allocation3 + $0x300] sm:$0xff]
    %v4544 = vld [vmem:[#allocation3 + $0x308] sm:$0xff]
    %v4545 = vld [vmem:[#allocation3 + $0x318] sm:$0xff]
    %v4546 = vld [vmem:[#allocation3 + $0x320] sm:$0xff]
    %4547 = vst [vmem:[#allocation2] sm:$0xff] %v4483
    %4548 = vst [vmem:[#allocation2 + $0x48] sm:$0xff] %v4484
    %4549 = vst [vmem:[#allocation2 + $0x90] sm:$0xff] %v4485
    %4550 = vst [vmem:[#allocation2 + $0xd8] sm:$0xff] %v4486
    %4551 = vst [vmem:[#allocation2 + $0x120] sm:$0xff] %v4487
    %4552 = vst [vmem:[#allocation2 + $0x168] sm:$0xff] %v4488
    %4553 = vst [vmem:[#allocation2 + $0x1b0] sm:$0xff] %v4489
    %4554 = vst [vmem:[#allocation2 + $0x1f8] sm:$0xff] %v4490
    %4555 = vst [vmem:[#allocation2 + $0x240] sm:$0xff] %v4491
    %4556 = vst [vmem:[#allocation2 + $0x288] sm:$0xff] %v4492
    %4557 = vst [vmem:[#allocation2 + $0x2d0] sm:$0xff] %v4493
    %4558 = vst [vmem:[#allocation2 + $0x318] sm:$0xff] %v4494
    %4559 = vst [vmem:[#allocation2 + $0x360] sm:$0xff] %v4495
    %4560 = vst [vmem:[#allocation2 + $0x3a8] sm:$0xff] %v4496
    %4561 = vst [vmem:[#allocation2 + $0x3f0] sm:$0xff] %v4497
    %4562 = vst [vmem:[#allocation2 + $0x438] sm:$0xff] %v4498
    %4563 = vst [vmem:[#allocation2 + $0x480] sm:$0xff] %v4499
    %4564 = vst [vmem:[#allocation2 + $0x4c8] sm:$0xff] %v4500
    %4565 = vst [vmem:[#allocation2 + $0x510] sm:$0xff] %v4501
    %4566 = vst [vmem:[#allocation2 + $0x558] sm:$0xff] %v4502
    %4567 = vst [vmem:[#allocation2 + $0x5a0] sm:$0xff] %v4503
    %4568 = vst [vmem:[#allocation2 + $0x5e8] sm:$0xff] %v4504
    %4569 = vst [vmem:[#allocation2 + $0x630] sm:$0xff] %v4505
    %4570 = vst [vmem:[#allocation2 + $0x678] sm:$0xff] %v4506
    %4571 = vst [vmem:[#allocation2 + $0x6c0] sm:$0xff] %v4507
    %4572 = vst [vmem:[#allocation2 + $0x708] sm:$0xff] %v4508
    %4573 = vst [vmem:[#allocation2 + $0x750] sm:$0xff] %v4509
    %4574 = vst [vmem:[#allocation2 + $0x798] sm:$0xff] %v4510
    %4575 = vst [vmem:[#allocation2 + $0x7e0] sm:$0xff] %v4511
    %4576 = vst [vmem:[#allocation2 + $0x828] sm:$0xff] %v4512
    %4577 = vst [vmem:[#allocation2 + $0x870] sm:$0xff] %v4513
    %4578 = vst [vmem:[#allocation2 + $0x8b8] sm:$0xff] %v4514
    %4579 = vst [vmem:[#allocation2 + $0x900] sm:$0xff] %v4515
    %4580 = vst [vmem:[#allocation2 + $0x948] sm:$0xff] %v4516
    %4581 = vst [vmem:[#allocation2 + $0x990] sm:$0xff] %v4517
    %4582 = vst [vmem:[#allocation2 + $0x9d8] sm:$0xff] %v4518
    %4583 = vst [vmem:[#allocation2 + $0xa20] sm:$0xff] %v4519
    %4584 = vst [vmem:[#allocation2 + $0xa68] sm:$0xff] %v4520
    %4585 = vst [vmem:[#allocation2 + $0xab0] sm:$0xff] %v4521
    %4586 = vst [vmem:[#allocation2 + $0xaf8] sm:$0xff] %v4522
    %4587 = vst [vmem:[#allocation2 + $0xb40] sm:$0xff] %v4523
    %4588 = vst [vmem:[#allocation2 + $0xb88] sm:$0xff] %v4524
    %4589 = vst [vmem:[#allocation2 + $0xbd0] sm:$0xff] %v4525
    %4590 = vst [vmem:[#allocation2 + $0xc18] sm:$0xff] %v4526
    %4591 = vst [vmem:[#allocation2 + $0xc60] sm:$0xff] %v4527
    %4592 = vst [vmem:[#allocation2 + $0xca8] sm:$0xff] %v4528
    %4593 = vst [vmem:[#allocation2 + $0xcf0] sm:$0xff] %v4529
    %4594 = vst [vmem:[#allocation2 + $0xd38] sm:$0xff] %v4530
    %4595 = vst [vmem:[#allocation2 + $0xd80] sm:$0xff] %v4531
    %4596 = vst [vmem:[#allocation2 + $0xdc8] sm:$0xff] %v4532
    %4597 = vst [vmem:[#allocation2 + $0xe10] sm:$0xff] %v4533
    %4598 = vst [vmem:[#allocation2 + $0xe58] sm:$0xff] %v4534
    %4599 = vst [vmem:[#allocation2 + $0xea0] sm:$0xff] %v4535
    %4600 = vst [vmem:[#allocation2 + $0xee8] sm:$0xff] %v4536
    %4601 = vst [vmem:[#allocation2 + $0xf30] sm:$0xff] %v4537
    %4602 = vst [vmem:[#allocation2 + $0xf78] sm:$0xff] %v4538
    %4603 = vst [vmem:[#allocation2 + $0xfc0] sm:$0xff] %v4539
    %4604 = vst [vmem:[#allocation2 + $0x1008] sm:$0xff] %v4540
    %4605 = vst [vmem:[#allocation2 + $0x1050] sm:$0xff] %v4541
    %4606 = vst [vmem:[#allocation2 + $0x1098] sm:$0xff] %v4542
    %4607 = vst [vmem:[#allocation2 + $0x10e0] sm:$0xff] %v4543
    %4608 = vst [vmem:[#allocation2 + $0x1128] sm:$0xff] %v4544
    %4609 = vst [vmem:[#allocation2 + $0x1170] sm:$0xff] %v4545
    %4610 = vst [vmem:[#allocation2 + $0x11b8] sm:$0xff] %v4546
    %v4611 = vld [vmem:[#allocation3 + $0x1] sm:$0xff]
    %v4612 = vld [vmem:[#allocation3 + $0x9] sm:$0xff]
    %v4613 = vld [vmem:[#allocation3 + $0x19] sm:$0xff]
    %v4614 = vld [vmem:[#allocation3 + $0x21] sm:$0xff]
    %v4615 = vld [vmem:[#allocation3 + $0x31] sm:$0xff]
    %v4616 = vld [vmem:[#allocation3 + $0x39] sm:$0xff]
    %v4617 = vld [vmem:[#allocation3 + $0x49] sm:$0xff]
    %v4618 = vld [vmem:[#allocation3 + $0x51] sm:$0xff]
    %v4619 = vld [vmem:[#allocation3 + $0x61] sm:$0xff]
    %v4620 = vld [vmem:[#allocation3 + $0x69] sm:$0xff]
    %v4621 = vld [vmem:[#allocation3 + $0x79] sm:$0xff]
    %v4622 = vld [vmem:[#allocation3 + $0x81] sm:$0xff]
    %v4623 = vld [vmem:[#allocation3 + $0x91] sm:$0xff]
    %v4624 = vld [vmem:[#allocation3 + $0x99] sm:$0xff]
    %v4625 = vld [vmem:[#allocation3 + $0xa9] sm:$0xff]
    %v4626 = vld [vmem:[#allocation3 + $0xb1] sm:$0xff]
    %v4627 = vld [vmem:[#allocation3 + $0xc1] sm:$0xff]
    %v4628 = vld [vmem:[#allocation3 + $0xc9] sm:$0xff]
    %v4629 = vld [vmem:[#allocation3 + $0xd9] sm:$0xff]
    %v4630 = vld [vmem:[#allocation3 + $0xe1] sm:$0xff]
    %v4631 = vld [vmem:[#allocation3 + $0xf1] sm:$0xff]
    %v4632 = vld [vmem:[#allocation3 + $0xf9] sm:$0xff]
    %v4633 = vld [vmem:[#allocation3 + $0x109] sm:$0xff]
    %v4634 = vld [vmem:[#allocation3 + $0x111] sm:$0xff]
    %v4635 = vld [vmem:[#allocation3 + $0x121] sm:$0xff]
    %v4636 = vld [vmem:[#allocation3 + $0x129] sm:$0xff]
    %v4637 = vld [vmem:[#allocation3 + $0x139] sm:$0xff]
    %v4638 = vld [vmem:[#allocation3 + $0x141] sm:$0xff]
    %v4639 = vld [vmem:[#allocation3 + $0x151] sm:$0xff]
    %v4640 = vld [vmem:[#allocation3 + $0x159] sm:$0xff]
    %v4641 = vld [vmem:[#allocation3 + $0x169] sm:$0xff]
    %v4642 = vld [vmem:[#allocation3 + $0x171] sm:$0xff]
    %v4643 = vld [vmem:[#allocation3 + $0x1b1] sm:$0xff]
    %v4644 = vld [vmem:[#allocation3 + $0x1b9] sm:$0xff]
    %v4645 = vld [vmem:[#allocation3 + $0x1c9] sm:$0xff]
    %v4646 = vld [vmem:[#allocation3 + $0x1d1] sm:$0xff]
    %v4647 = vld [vmem:[#allocation3 + $0x1e1] sm:$0xff]
    %v4648 = vld [vmem:[#allocation3 + $0x1e9] sm:$0xff]
    %v4649 = vld [vmem:[#allocation3 + $0x1f9] sm:$0xff]
    %v4650 = vld [vmem:[#allocation3 + $0x201] sm:$0xff]
    %v4651 = vld [vmem:[#allocation3 + $0x211] sm:$0xff]
    %v4652 = vld [vmem:[#allocation3 + $0x219] sm:$0xff]
    %v4653 = vld [vmem:[#allocation3 + $0x229] sm:$0xff]
    %v4654 = vld [vmem:[#allocation3 + $0x231] sm:$0xff]
    %v4655 = vld [vmem:[#allocation3 + $0x241] sm:$0xff]
    %v4656 = vld [vmem:[#allocation3 + $0x249] sm:$0xff]
    %v4657 = vld [vmem:[#allocation3 + $0x259] sm:$0xff]
    %v4658 = vld [vmem:[#allocation3 + $0x261] sm:$0xff]
    %v4659 = vld [vmem:[#allocation3 + $0x271] sm:$0xff]
    %v4660 = vld [vmem:[#allocation3 + $0x279] sm:$0xff]
    %v4661 = vld [vmem:[#allocation3 + $0x289] sm:$0xff]
    %v4662 = vld [vmem:[#allocation3 + $0x291] sm:$0xff]
    %v4663 = vld [vmem:[#allocation3 + $0x2a1] sm:$0xff]
    %v4664 = vld [vmem:[#allocation3 + $0x2a9] sm:$0xff]
    %v4665 = vld [vmem:[#allocation3 + $0x2b9] sm:$0xff]
    %v4666 = vld [vmem:[#allocation3 + $0x2c1] sm:$0xff]
    %v4667 = vld [vmem:[#allocation3 + $0x2d1] sm:$0xff]
    %v4668 = vld [vmem:[#allocation3 + $0x2d9] sm:$0xff]
    %v4669 = vld [vmem:[#allocation3 + $0x2e9] sm:$0xff]
    %v4670 = vld [vmem:[#allocation3 + $0x2f1] sm:$0xff]
    %v4671 = vld [vmem:[#allocation3 + $0x301] sm:$0xff]
    %v4672 = vld [vmem:[#allocation3 + $0x309] sm:$0xff]
    %v4673 = vld [vmem:[#allocation3 + $0x319] sm:$0xff]
    %v4674 = vld [vmem:[#allocation3 + $0x321] sm:$0xff]
    %4675 = vst [vmem:[#allocation2 + $0x8] sm:$0xff] %v4611
    %4676 = vst [vmem:[#allocation2 + $0x50] sm:$0xff] %v4612
    %4677 = vst [vmem:[#allocation2 + $0x98] sm:$0xff] %v4613
    %4678 = vst [vmem:[#allocation2 + $0xe0] sm:$0xff] %v4614
    %4679 = vst [vmem:[#allocation2 + $0x128] sm:$0xff] %v4615
    %4680 = vst [vmem:[#allocation2 + $0x170] sm:$0xff] %v4616
    %4681 = vst [vmem:[#allocation2 + $0x1b8] sm:$0xff] %v4617
    %4682 = vst [vmem:[#allocation2 + $0x200] sm:$0xff] %v4618
    %4683 = vst [vmem:[#allocation2 + $0x248] sm:$0xff] %v4619
    %4684 = vst [vmem:[#allocation2 + $0x290] sm:$0xff] %v4620
    %4685 = vst [vmem:[#allocation2 + $0x2d8] sm:$0xff] %v4621
    %4686 = vst [vmem:[#allocation2 + $0x320] sm:$0xff] %v4622
    %4687 = vst [vmem:[#allocation2 + $0x368] sm:$0xff] %v4623
    %4688 = vst [vmem:[#allocation2 + $0x3b0] sm:$0xff] %v4624
    %4689 = vst [vmem:[#allocation2 + $0x3f8] sm:$0xff] %v4625
    %4690 = vst [vmem:[#allocation2 + $0x440] sm:$0xff] %v4626
    %4691 = vst [vmem:[#allocation2 + $0x488] sm:$0xff] %v4627
    %4692 = vst [vmem:[#allocation2 + $0x4d0] sm:$0xff] %v4628
    %4693 = vst [vmem:[#allocation2 + $0x518] sm:$0xff] %v4629
    %4694 = vst [vmem:[#allocation2 + $0x560] sm:$0xff] %v4630
    %4695 = vst [vmem:[#allocation2 + $0x5a8] sm:$0xff] %v4631
    %4696 = vst [vmem:[#allocation2 + $0x5f0] sm:$0xff] %v4632
    %4697 = vst [vmem:[#allocation2 + $0x638] sm:$0xff] %v4633
    %4698 = vst [vmem:[#allocation2 + $0x680] sm:$0xff] %v4634
    %4699 = vst [vmem:[#allocation2 + $0x6c8] sm:$0xff] %v4635
    %4700 = vst [vmem:[#allocation2 + $0x710] sm:$0xff] %v4636
    %4701 = vst [vmem:[#allocation2 + $0x758] sm:$0xff] %v4637
    %4702 = vst [vmem:[#allocation2 + $0x7a0] sm:$0xff] %v4638
    %4703 = vst [vmem:[#allocation2 + $0x7e8] sm:$0xff] %v4639
    %4704 = vst [vmem:[#allocation2 + $0x830] sm:$0xff] %v4640
    %4705 = vst [vmem:[#allocation2 + $0x878] sm:$0xff] %v4641
    %4706 = vst [vmem:[#allocation2 + $0x8c0] sm:$0xff] %v4642
    %4707 = vst [vmem:[#allocation2 + $0x908] sm:$0xff] %v4643
    %4708 = vst [vmem:[#allocation2 + $0x950] sm:$0xff] %v4644
    %4709 = vst [vmem:[#allocation2 + $0x998] sm:$0xff] %v4645
    %4710 = vst [vmem:[#allocation2 + $0x9e0] sm:$0xff] %v4646
    %4711 = vst [vmem:[#allocation2 + $0xa28] sm:$0xff] %v4647
    %4712 = vst [vmem:[#allocation2 + $0xa70] sm:$0xff] %v4648
    %4713 = vst [vmem:[#allocation2 + $0xab8] sm:$0xff] %v4649
    %4714 = vst [vmem:[#allocation2 + $0xb00] sm:$0xff] %v4650
    %4715 = vst [vmem:[#allocation2 + $0xb48] sm:$0xff] %v4651
    %4716 = vst [vmem:[#allocation2 + $0xb90] sm:$0xff] %v4652
    %4717 = vst [vmem:[#allocation2 + $0xbd8] sm:$0xff] %v4653
    %4718 = vst [vmem:[#allocation2 + $0xc20] sm:$0xff] %v4654
    %4719 = vst [vmem:[#allocation2 + $0xc68] sm:$0xff] %v4655
    %4720 = vst [vmem:[#allocation2 + $0xcb0] sm:$0xff] %v4656
    %4721 = vst [vmem:[#allocation2 + $0xcf8] sm:$0xff] %v4657
    %4722 = vst [vmem:[#allocation2 + $0xd40] sm:$0xff] %v4658
    %4723 = vst [vmem:[#allocation2 + $0xd88] sm:$0xff] %v4659
    %4724 = vst [vmem:[#allocation2 + $0xdd0] sm:$0xff] %v4660
    %4725 = vst [vmem:[#allocation2 + $0xe18] sm:$0xff] %v4661
    %4726 = vst [vmem:[#allocation2 + $0xe60] sm:$0xff] %v4662
    %4727 = vst [vmem:[#allocation2 + $0xea8] sm:$0xff] %v4663
    %4728 = vst [vmem:[#allocation2 + $0xef0] sm:$0xff] %v4664
    %4729 = vst [vmem:[#allocation2 + $0xf38] sm:$0xff] %v4665
    %4730 = vst [vmem:[#allocation2 + $0xf80] sm:$0xff] %v4666
    %4731 = vst [vmem:[#allocation2 + $0xfc8] sm:$0xff] %v4667
    %4732 = vst [vmem:[#allocation2 + $0x1010] sm:$0xff] %v4668
    %4733 = vst [vmem:[#allocation2 + $0x1058] sm:$0xff] %v4669
    %4734 = vst [vmem:[#allocation2 + $0x10a0] sm:$0xff] %v4670
    %4735 = vst [vmem:[#allocation2 + $0x10e8] sm:$0xff] %v4671
    %4736 = vst [vmem:[#allocation2 + $0x1130] sm:$0xff] %v4672
    %4737 = vst [vmem:[#allocation2 + $0x1178] sm:$0xff] %v4673
    %4738 = vst [vmem:[#allocation2 + $0x11c0] sm:$0xff] %v4674
    %v4739 = vld [vmem:[#allocation3 + $0x2] sm:$0xff]
    %v4740 = vld [vmem:[#allocation3 + $0xa] sm:$0xff]
    %v4741 = vld [vmem:[#allocation3 + $0x1a] sm:$0xff]
    %v4742 = vld [vmem:[#allocation3 + $0x22] sm:$0xff]
    %v4743 = vld [vmem:[#allocation3 + $0x32] sm:$0xff]
    %v4744 = vld [vmem:[#allocation3 + $0x3a] sm:$0xff]
    %v4745 = vld [vmem:[#allocation3 + $0x4a] sm:$0xff]
    %v4746 = vld [vmem:[#allocation3 + $0x52] sm:$0xff]
    %v4747 = vld [vmem:[#allocation3 + $0x62] sm:$0xff]
    %v4748 = vld [vmem:[#allocation3 + $0x6a] sm:$0xff]
    %v4749 = vld [vmem:[#allocation3 + $0x7a] sm:$0xff]
    %v4750 = vld [vmem:[#allocation3 + $0x82] sm:$0xff]
    %v4751 = vld [vmem:[#allocation3 + $0x92] sm:$0xff]
    %v4752 = vld [vmem:[#allocation3 + $0x9a] sm:$0xff]
    %v4753 = vld [vmem:[#allocation3 + $0xaa] sm:$0xff]
    %v4754 = vld [vmem:[#allocation3 + $0xb2] sm:$0xff]
    %v4755 = vld [vmem:[#allocation3 + $0xc2] sm:$0xff]
    %v4756 = vld [vmem:[#allocation3 + $0xca] sm:$0xff]
    %v4757 = vld [vmem:[#allocation3 + $0xda] sm:$0xff]
    %v4758 = vld [vmem:[#allocation3 + $0xe2] sm:$0xff]
    %v4759 = vld [vmem:[#allocation3 + $0xf2] sm:$0xff]
    %v4760 = vld [vmem:[#allocation3 + $0xfa] sm:$0xff]
    %v4761 = vld [vmem:[#allocation3 + $0x10a] sm:$0xff]
    %v4762 = vld [vmem:[#allocation3 + $0x112] sm:$0xff]
    %v4763 = vld [vmem:[#allocation3 + $0x122] sm:$0xff]
    %v4764 = vld [vmem:[#allocation3 + $0x12a] sm:$0xff]
    %v4765 = vld [vmem:[#allocation3 + $0x13a] sm:$0xff]
    %v4766 = vld [vmem:[#allocation3 + $0x142] sm:$0xff]
    %v4767 = vld [vmem:[#allocation3 + $0x152] sm:$0xff]
    %v4768 = vld [vmem:[#allocation3 + $0x15a] sm:$0xff]
    %v4769 = vld [vmem:[#allocation3 + $0x16a] sm:$0xff]
    %v4770 = vld [vmem:[#allocation3 + $0x172] sm:$0xff]
    %v4771 = vld [vmem:[#allocation3 + $0x1b2] sm:$0xff]
    %v4772 = vld [vmem:[#allocation3 + $0x1ba] sm:$0xff]
    %v4773 = vld [vmem:[#allocation3 + $0x1ca] sm:$0xff]
    %v4774 = vld [vmem:[#allocation3 + $0x1d2] sm:$0xff]
    %v4775 = vld [vmem:[#allocation3 + $0x1e2] sm:$0xff]
    %v4776 = vld [vmem:[#allocation3 + $0x1ea] sm:$0xff]
    %v4777 = vld [vmem:[#allocation3 + $0x1fa] sm:$0xff]
    %v4778 = vld [vmem:[#allocation3 + $0x202] sm:$0xff]
    %v4779 = vld [vmem:[#allocation3 + $0x212] sm:$0xff]
    %v4780 = vld [vmem:[#allocation3 + $0x21a] sm:$0xff]
    %v4781 = vld [vmem:[#allocation3 + $0x22a] sm:$0xff]
    %v4782 = vld [vmem:[#allocation3 + $0x232] sm:$0xff]
    %v4783 = vld [vmem:[#allocation3 + $0x242] sm:$0xff]
    %v4784 = vld [vmem:[#allocation3 + $0x24a] sm:$0xff]
    %v4785 = vld [vmem:[#allocation3 + $0x25a] sm:$0xff]
    %v4786 = vld [vmem:[#allocation3 + $0x262] sm:$0xff]
    %v4787 = vld [vmem:[#allocation3 + $0x272] sm:$0xff]
    %v4788 = vld [vmem:[#allocation3 + $0x27a] sm:$0xff]
    %v4789 = vld [vmem:[#allocation3 + $0x28a] sm:$0xff]
    %v4790 = vld [vmem:[#allocation3 + $0x292] sm:$0xff]
    %v4791 = vld [vmem:[#allocation3 + $0x2a2] sm:$0xff]
    %v4792 = vld [vmem:[#allocation3 + $0x2aa] sm:$0xff]
    %v4793 = vld [vmem:[#allocation3 + $0x2ba] sm:$0xff]
    %v4794 = vld [vmem:[#allocation3 + $0x2c2] sm:$0xff]
    %v4795 = vld [vmem:[#allocation3 + $0x2d2] sm:$0xff]
    %v4796 = vld [vmem:[#allocation3 + $0x2da] sm:$0xff]
    %v4797 = vld [vmem:[#allocation3 + $0x2ea] sm:$0xff]
    %v4798 = vld [vmem:[#allocation3 + $0x2f2] sm:$0xff]
    %v4799 = vld [vmem:[#allocation3 + $0x302] sm:$0xff]
    %v4800 = vld [vmem:[#allocation3 + $0x30a] sm:$0xff]
    %v4801 = vld [vmem:[#allocation3 + $0x31a] sm:$0xff]
    %v4802 = vld [vmem:[#allocation3 + $0x322] sm:$0xff]
    %4803 = vst [vmem:[#allocation2 + $0x10] sm:$0xff] %v4739
    %4804 = vst [vmem:[#allocation2 + $0x58] sm:$0xff] %v4740
    %4805 = vst [vmem:[#allocation2 + $0xa0] sm:$0xff] %v4741
    %4806 = vst [vmem:[#allocation2 + $0xe8] sm:$0xff] %v4742
    %4807 = vst [vmem:[#allocation2 + $0x130] sm:$0xff] %v4743
    %4808 = vst [vmem:[#allocation2 + $0x178] sm:$0xff] %v4744
    %4809 = vst [vmem:[#allocation2 + $0x1c0] sm:$0xff] %v4745
    %4810 = vst [vmem:[#allocation2 + $0x208] sm:$0xff] %v4746
    %4811 = vst [vmem:[#allocation2 + $0x250] sm:$0xff] %v4747
    %4812 = vst [vmem:[#allocation2 + $0x298] sm:$0xff] %v4748
    %4813 = vst [vmem:[#allocation2 + $0x2e0] sm:$0xff] %v4749
    %4814 = vst [vmem:[#allocation2 + $0x328] sm:$0xff] %v4750
    %4815 = vst [vmem:[#allocation2 + $0x370] sm:$0xff] %v4751
    %4816 = vst [vmem:[#allocation2 + $0x3b8] sm:$0xff] %v4752
    %4817 = vst [vmem:[#allocation2 + $0x400] sm:$0xff] %v4753
    %4818 = vst [vmem:[#allocation2 + $0x448] sm:$0xff] %v4754
    %4819 = vst [vmem:[#allocation2 + $0x490] sm:$0xff] %v4755
    %4820 = vst [vmem:[#allocation2 + $0x4d8] sm:$0xff] %v4756
    %4821 = vst [vmem:[#allocation2 + $0x520] sm:$0xff] %v4757
    %4822 = vst [vmem:[#allocation2 + $0x568] sm:$0xff] %v4758
    %4823 = vst [vmem:[#allocation2 + $0x5b0] sm:$0xff] %v4759
    %4824 = vst [vmem:[#allocation2 + $0x5f8] sm:$0xff] %v4760
    %4825 = vst [vmem:[#allocation2 + $0x640] sm:$0xff] %v4761
    %4826 = vst [vmem:[#allocation2 + $0x688] sm:$0xff] %v4762
    %4827 = vst [vmem:[#allocation2 + $0x6d0] sm:$0xff] %v4763
    %4828 = vst [vmem:[#allocation2 + $0x718] sm:$0xff] %v4764
    %4829 = vst [vmem:[#allocation2 + $0x760] sm:$0xff] %v4765
    %4830 = vst [vmem:[#allocation2 + $0x7a8] sm:$0xff] %v4766
    %4831 = vst [vmem:[#allocation2 + $0x7f0] sm:$0xff] %v4767
    %4832 = vst [vmem:[#allocation2 + $0x838] sm:$0xff] %v4768
    %4833 = vst [vmem:[#allocation2 + $0x880] sm:$0xff] %v4769
    %4834 = vst [vmem:[#allocation2 + $0x8c8] sm:$0xff] %v4770
    %4835 = vst [vmem:[#allocation2 + $0x910] sm:$0xff] %v4771
    %4836 = vst [vmem:[#allocation2 + $0x958] sm:$0xff] %v4772
    %4837 = vst [vmem:[#allocation2 + $0x9a0] sm:$0xff] %v4773
    %4838 = vst [vmem:[#allocation2 + $0x9e8] sm:$0xff] %v4774
    %4839 = vst [vmem:[#allocation2 + $0xa30] sm:$0xff] %v4775
    %4840 = vst [vmem:[#allocation2 + $0xa78] sm:$0xff] %v4776
    %4841 = vst [vmem:[#allocation2 + $0xac0] sm:$0xff] %v4777
    %4842 = vst [vmem:[#allocation2 + $0xb08] sm:$0xff] %v4778
    %4843 = vst [vmem:[#allocation2 + $0xb50] sm:$0xff] %v4779
    %4844 = vst [vmem:[#allocation2 + $0xb98] sm:$0xff] %v4780
    %4845 = vst [vmem:[#allocation2 + $0xbe0] sm:$0xff] %v4781
    %4846 = vst [vmem:[#allocation2 + $0xc28] sm:$0xff] %v4782
    %4847 = vst [vmem:[#allocation2 + $0xc70] sm:$0xff] %v4783
    %4848 = vst [vmem:[#allocation2 + $0xcb8] sm:$0xff] %v4784
    %4849 = vst [vmem:[#allocation2 + $0xd00] sm:$0xff] %v4785
    %4850 = vst [vmem:[#allocation2 + $0xd48] sm:$0xff] %v4786
    %4851 = vst [vmem:[#allocation2 + $0xd90] sm:$0xff] %v4787
    %4852 = vst [vmem:[#allocation2 + $0xdd8] sm:$0xff] %v4788
    %4853 = vst [vmem:[#allocation2 + $0xe20] sm:$0xff] %v4789
    %4854 = vst [vmem:[#allocation2 + $0xe68] sm:$0xff] %v4790
    %4855 = vst [vmem:[#allocation2 + $0xeb0] sm:$0xff] %v4791
    %4856 = vst [vmem:[#allocation2 + $0xef8] sm:$0xff] %v4792
    %4857 = vst [vmem:[#allocation2 + $0xf40] sm:$0xff] %v4793
    %4858 = vst [vmem:[#allocation2 + $0xf88] sm:$0xff] %v4794
    %4859 = vst [vmem:[#allocation2 + $0xfd0] sm:$0xff] %v4795
    %4860 = vst [vmem:[#allocation2 + $0x1018] sm:$0xff] %v4796
    %4861 = vst [vmem:[#allocation2 + $0x1060] sm:$0xff] %v4797
    %4862 = vst [vmem:[#allocation2 + $0x10a8] sm:$0xff] %v4798
    %4863 = vst [vmem:[#allocation2 + $0x10f0] sm:$0xff] %v4799
    %4864 = vst [vmem:[#allocation2 + $0x1138] sm:$0xff] %v4800
    %4865 = vst [vmem:[#allocation2 + $0x1180] sm:$0xff] %v4801
    %4866 = vst [vmem:[#allocation2 + $0x11c8] sm:$0xff] %v4802
    %v4867 = vld [vmem:[%s4418] sm:$0xff]
    %v4868 = vld [vmem:[%s4418 + $0x8] sm:$0xff]
    %v4869 = vld [vmem:[%s4418 + $0x18] sm:$0xff]
    %v4870 = vld [vmem:[%s4418 + $0x20] sm:$0xff]
    %v4871 = vld [vmem:[%s4418 + $0x30] sm:$0xff]
    %v4872 = vld [vmem:[%s4418 + $0x38] sm:$0xff]
    %v4873 = vld [vmem:[%s4418 + $0x48] sm:$0xff]
    %v4874 = vld [vmem:[%s4418 + $0x50] sm:$0xff]
    %v4875 = vld [vmem:[%s4418 + $0x60] sm:$0xff]
    %v4876 = vld [vmem:[%s4418 + $0x68] sm:$0xff]
    %v4877 = vld [vmem:[%s4418 + $0x78] sm:$0xff]
    %v4878 = vld [vmem:[%s4418 + $0x80] sm:$0xff]
    %v4879 = vld [vmem:[%s4418 + $0x90] sm:$0xff]
    %v4880 = vld [vmem:[%s4418 + $0x98] sm:$0xff]
    %v4881 = vld [vmem:[%s4418 + $0xa8] sm:$0xff]
    %v4882 = vld [vmem:[%s4418 + $0xb0] sm:$0xff]
    %v4883 = vld [vmem:[%s4418 + $0xc0] sm:$0xff]
    %v4884 = vld [vmem:[%s4418 + $0xc8] sm:$0xff]
    %v4885 = vld [vmem:[%s4418 + $0xd8] sm:$0xff]
    %v4886 = vld [vmem:[%s4418 + $0xe0] sm:$0xff]
    %v4887 = vld [vmem:[%s4418 + $0xf0] sm:$0xff]
    %v4888 = vld [vmem:[%s4418 + $0xf8] sm:$0xff]
    %v4889 = vld [vmem:[%s4418 + $0x108] sm:$0xff]
    %v4890 = vld [vmem:[%s4418 + $0x110] sm:$0xff]
    %v4891 = vld [vmem:[%s4418 + $0x120] sm:$0xff]
    %v4892 = vld [vmem:[%s4418 + $0x128] sm:$0xff]
    %v4893 = vld [vmem:[%s4418 + $0x138] sm:$0xff]
    %v4894 = vld [vmem:[%s4418 + $0x140] sm:$0xff]
    %v4895 = vld [vmem:[%s4418 + $0x150] sm:$0xff]
    %v4896 = vld [vmem:[%s4418 + $0x158] sm:$0xff]
    %v4897 = vld [vmem:[%s4418 + $0x168] sm:$0xff]
    %v4898 = vld [vmem:[%s4418 + $0x170] sm:$0xff]
    %v4899 = vld [vmem:[%s4418 + $0x1b0] sm:$0xff]
    %v4900 = vld [vmem:[%s4418 + $0x1b8] sm:$0xff]
    %v4901 = vld [vmem:[%s4418 + $0x1c8] sm:$0xff]
    %v4902 = vld [vmem:[%s4418 + $0x1d0] sm:$0xff]
    %v4903 = vld [vmem:[%s4418 + $0x1e0] sm:$0xff]
    %v4904 = vld [vmem:[%s4418 + $0x1e8] sm:$0xff]
    %v4905 = vld [vmem:[%s4418 + $0x1f8] sm:$0xff]
    %v4906 = vld [vmem:[%s4418 + $0x200] sm:$0xff]
    %v4907 = vld [vmem:[%s4418 + $0x210] sm:$0xff]
    %v4908 = vld [vmem:[%s4418 + $0x218] sm:$0xff]
    %v4909 = vld [vmem:[%s4418 + $0x228] sm:$0xff]
    %v4910 = vld [vmem:[%s4418 + $0x230] sm:$0xff]
    %v4911 = vld [vmem:[%s4418 + $0x240] sm:$0xff]
    %v4912 = vld [vmem:[%s4418 + $0x248] sm:$0xff]
    %v4913 = vld [vmem:[%s4418 + $0x258] sm:$0xff]
    %v4914 = vld [vmem:[%s4418 + $0x260] sm:$0xff]
    %v4915 = vld [vmem:[%s4418 + $0x270] sm:$0xff]
    %v4916 = vld [vmem:[%s4418 + $0x278] sm:$0xff]
    %v4917 = vld [vmem:[%s4418 + $0x288] sm:$0xff]
    %v4918 = vld [vmem:[%s4418 + $0x290] sm:$0xff]
    %v4919 = vld [vmem:[%s4418 + $0x2a0] sm:$0xff]
    %v4920 = vld [vmem:[%s4418 + $0x2a8] sm:$0xff]
    %v4921 = vld [vmem:[%s4418 + $0x2b8] sm:$0xff]
    %v4922 = vld [vmem:[%s4418 + $0x2c0] sm:$0xff]
    %v4923 = vld [vmem:[%s4418 + $0x2d0] sm:$0xff]
    %v4924 = vld [vmem:[%s4418 + $0x2d8] sm:$0xff]
    %v4925 = vld [vmem:[%s4418 + $0x2e8] sm:$0xff]
    %v4926 = vld [vmem:[%s4418 + $0x2f0] sm:$0xff]
    %v4927 = vld [vmem:[%s4418 + $0x300] sm:$0xff]
    %v4928 = vld [vmem:[%s4418 + $0x308] sm:$0xff]
    %v4929 = vld [vmem:[%s4418 + $0x318] sm:$0xff]
    %v4930 = vld [vmem:[%s4418 + $0x320] sm:$0xff]
    %4931 = vst [vmem:[#allocation2 + $0x18] sm:$0xff] %v4867
    %4932 = vst [vmem:[#allocation2 + $0x60] sm:$0xff] %v4868
    %4933 = vst [vmem:[#allocation2 + $0xa8] sm:$0xff] %v4869
    %4934 = vst [vmem:[#allocation2 + $0xf0] sm:$0xff] %v4870
    %4935 = vst [vmem:[#allocation2 + $0x138] sm:$0xff] %v4871
    %4936 = vst [vmem:[#allocation2 + $0x180] sm:$0xff] %v4872
    %4937 = vst [vmem:[#allocation2 + $0x1c8] sm:$0xff] %v4873
    %4938 = vst [vmem:[#allocation2 + $0x210] sm:$0xff] %v4874
    %4939 = vst [vmem:[#allocation2 + $0x258] sm:$0xff] %v4875
    %4940 = vst [vmem:[#allocation2 + $0x2a0] sm:$0xff] %v4876
    %4941 = vst [vmem:[#allocation2 + $0x2e8] sm:$0xff] %v4877
    %4942 = vst [vmem:[#allocation2 + $0x330] sm:$0xff] %v4878
    %4943 = vst [vmem:[#allocation2 + $0x378] sm:$0xff] %v4879
    %4944 = vst [vmem:[#allocation2 + $0x3c0] sm:$0xff] %v4880
    %4945 = vst [vmem:[#allocation2 + $0x408] sm:$0xff] %v4881
    %4946 = vst [vmem:[#allocation2 + $0x450] sm:$0xff] %v4882
    %4947 = vst [vmem:[#allocation2 + $0x498] sm:$0xff] %v4883
    %4948 = vst [vmem:[#allocation2 + $0x4e0] sm:$0xff] %v4884
    %4949 = vst [vmem:[#allocation2 + $0x528] sm:$0xff] %v4885
    %4950 = vst [vmem:[#allocation2 + $0x570] sm:$0xff] %v4886
    %4951 = vst [vmem:[#allocation2 + $0x5b8] sm:$0xff] %v4887
    %4952 = vst [vmem:[#allocation2 + $0x600] sm:$0xff] %v4888
    %4953 = vst [vmem:[#allocation2 + $0x648] sm:$0xff] %v4889
    %4954 = vst [vmem:[#allocation2 + $0x690] sm:$0xff] %v4890
    %4955 = vst [vmem:[#allocation2 + $0x6d8] sm:$0xff] %v4891
    %4956 = vst [vmem:[#allocation2 + $0x720] sm:$0xff] %v4892
    %4957 = vst [vmem:[#allocation2 + $0x768] sm:$0xff] %v4893
    %4958 = vst [vmem:[#allocation2 + $0x7b0] sm:$0xff] %v4894
    %4959 = vst [vmem:[#allocation2 + $0x7f8] sm:$0xff] %v4895
    %4960 = vst [vmem:[#allocation2 + $0x840] sm:$0xff] %v4896
    %4961 = vst [vmem:[#allocation2 + $0x888] sm:$0xff] %v4897
    %4962 = vst [vmem:[#allocation2 + $0x8d0] sm:$0xff] %v4898
    %4963 = vst [vmem:[#allocation2 + $0x918] sm:$0xff] %v4899
    %4964 = vst [vmem:[#allocation2 + $0x960] sm:$0xff] %v4900
    %4965 = vst [vmem:[#allocation2 + $0x9a8] sm:$0xff] %v4901
    %4966 = vst [vmem:[#allocation2 + $0x9f0] sm:$0xff] %v4902
    %4967 = vst [vmem:[#allocation2 + $0xa38] sm:$0xff] %v4903
    %4968 = vst [vmem:[#allocation2 + $0xa80] sm:$0xff] %v4904
    %4969 = vst [vmem:[#allocation2 + $0xac8] sm:$0xff] %v4905
    %4970 = vst [vmem:[#allocation2 + $0xb10] sm:$0xff] %v4906
    %4971 = vst [vmem:[#allocation2 + $0xb58] sm:$0xff] %v4907
    %4972 = vst [vmem:[#allocation2 + $0xba0] sm:$0xff] %v4908
    %4973 = vst [vmem:[#allocation2 + $0xbe8] sm:$0xff] %v4909
    %4974 = vst [vmem:[#allocation2 + $0xc30] sm:$0xff] %v4910
    %4975 = vst [vmem:[#allocation2 + $0xc78] sm:$0xff] %v4911
    %4976 = vst [vmem:[#allocation2 + $0xcc0] sm:$0xff] %v4912
    %4977 = vst [vmem:[#allocation2 + $0xd08] sm:$0xff] %v4913
    %4978 = vst [vmem:[#allocation2 + $0xd50] sm:$0xff] %v4914
    %4979 = vst [vmem:[#allocation2 + $0xd98] sm:$0xff] %v4915
    %4980 = vst [vmem:[#allocation2 + $0xde0] sm:$0xff] %v4916
    %4981 = vst [vmem:[#allocation2 + $0xe28] sm:$0xff] %v4917
    %4982 = vst [vmem:[#allocation2 + $0xe70] sm:$0xff] %v4918
    %4983 = vst [vmem:[#allocation2 + $0xeb8] sm:$0xff] %v4919
    %4984 = vst [vmem:[#allocation2 + $0xf00] sm:$0xff] %v4920
    %4985 = vst [vmem:[#allocation2 + $0xf48] sm:$0xff] %v4921
    %4986 = vst [vmem:[#allocation2 + $0xf90] sm:$0xff] %v4922
    %4987 = vst [vmem:[#allocation2 + $0xfd8] sm:$0xff] %v4923
    %4988 = vst [vmem:[#allocation2 + $0x1020] sm:$0xff] %v4924
    %4989 = vst [vmem:[#allocation2 + $0x1068] sm:$0xff] %v4925
    %4990 = vst [vmem:[#allocation2 + $0x10b0] sm:$0xff] %v4926
    %4991 = vst [vmem:[#allocation2 + $0x10f8] sm:$0xff] %v4927
    %4992 = vst [vmem:[#allocation2 + $0x1140] sm:$0xff] %v4928
    %4993 = vst [vmem:[#allocation2 + $0x1188] sm:$0xff] %v4929
    %4994 = vst [vmem:[#allocation2 + $0x11d0] sm:$0xff] %v4930
    %v4995 = vld [vmem:[%s4418 + $0x1] sm:$0xff]
    %v4996 = vld [vmem:[%s4418 + $0x9] sm:$0xff]
    %v4997 = vld [vmem:[%s4418 + $0x19] sm:$0xff]
    %v4998 = vld [vmem:[%s4418 + $0x21] sm:$0xff]
    %v4999 = vld [vmem:[%s4418 + $0x31] sm:$0xff]
    %v5000 = vld [vmem:[%s4418 + $0x39] sm:$0xff]
    %v5001 = vld [vmem:[%s4418 + $0x49] sm:$0xff]
    %v5002 = vld [vmem:[%s4418 + $0x51] sm:$0xff]
    %v5003 = vld [vmem:[%s4418 + $0x61] sm:$0xff]
    %v5004 = vld [vmem:[%s4418 + $0x69] sm:$0xff]
    %v5005 = vld [vmem:[%s4418 + $0x79] sm:$0xff]
    %v5006 = vld [vmem:[%s4418 + $0x81] sm:$0xff]
    %v5007 = vld [vmem:[%s4418 + $0x91] sm:$0xff]
    %v5008 = vld [vmem:[%s4418 + $0x99] sm:$0xff]
    %v5009 = vld [vmem:[%s4418 + $0xa9] sm:$0xff]
    %v5010 = vld [vmem:[%s4418 + $0xb1] sm:$0xff]
    %v5011 = vld [vmem:[%s4418 + $0xc1] sm:$0xff]
    %v5012 = vld [vmem:[%s4418 + $0xc9] sm:$0xff]
    %v5013 = vld [vmem:[%s4418 + $0xd9] sm:$0xff]
    %v5014 = vld [vmem:[%s4418 + $0xe1] sm:$0xff]
    %v5015 = vld [vmem:[%s4418 + $0xf1] sm:$0xff]
    %v5016 = vld [vmem:[%s4418 + $0xf9] sm:$0xff]
    %v5017 = vld [vmem:[%s4418 + $0x109] sm:$0xff]
    %v5018 = vld [vmem:[%s4418 + $0x111] sm:$0xff]
    %v5019 = vld [vmem:[%s4418 + $0x121] sm:$0xff]
    %v5020 = vld [vmem:[%s4418 + $0x129] sm:$0xff]
    %v5021 = vld [vmem:[%s4418 + $0x139] sm:$0xff]
    %v5022 = vld [vmem:[%s4418 + $0x141] sm:$0xff]
    %v5023 = vld [vmem:[%s4418 + $0x151] sm:$0xff]
    %v5024 = vld [vmem:[%s4418 + $0x159] sm:$0xff]
    %v5025 = vld [vmem:[%s4418 + $0x169] sm:$0xff]
    %v5026 = vld [vmem:[%s4418 + $0x171] sm:$0xff]
    %v5027 = vld [vmem:[%s4418 + $0x1b1] sm:$0xff]
    %v5028 = vld [vmem:[%s4418 + $0x1b9] sm:$0xff]
    %v5029 = vld [vmem:[%s4418 + $0x1c9] sm:$0xff]
    %v5030 = vld [vmem:[%s4418 + $0x1d1] sm:$0xff]
    %v5031 = vld [vmem:[%s4418 + $0x1e1] sm:$0xff]
    %v5032 = vld [vmem:[%s4418 + $0x1e9] sm:$0xff]
    %v5033 = vld [vmem:[%s4418 + $0x1f9] sm:$0xff]
    %v5034 = vld [vmem:[%s4418 + $0x201] sm:$0xff]
    %v5035 = vld [vmem:[%s4418 + $0x211] sm:$0xff]
    %v5036 = vld [vmem:[%s4418 + $0x219] sm:$0xff]
    %v5037 = vld [vmem:[%s4418 + $0x229] sm:$0xff]
    %v5038 = vld [vmem:[%s4418 + $0x231] sm:$0xff]
    %v5039 = vld [vmem:[%s4418 + $0x241] sm:$0xff]
    %v5040 = vld [vmem:[%s4418 + $0x249] sm:$0xff]
    %v5041 = vld [vmem:[%s4418 + $0x259] sm:$0xff]
    %v5042 = vld [vmem:[%s4418 + $0x261] sm:$0xff]
    %v5043 = vld [vmem:[%s4418 + $0x271] sm:$0xff]
    %v5044 = vld [vmem:[%s4418 + $0x279] sm:$0xff]
    %v5045 = vld [vmem:[%s4418 + $0x289] sm:$0xff]
    %v5046 = vld [vmem:[%s4418 + $0x291] sm:$0xff]
    %v5047 = vld [vmem:[%s4418 + $0x2a1] sm:$0xff]
    %v5048 = vld [vmem:[%s4418 + $0x2a9] sm:$0xff]
    %v5049 = vld [vmem:[%s4418 + $0x2b9] sm:$0xff]
    %v5050 = vld [vmem:[%s4418 + $0x2c1] sm:$0xff]
    %v5051 = vld [vmem:[%s4418 + $0x2d1] sm:$0xff]
    %v5052 = vld [vmem:[%s4418 + $0x2d9] sm:$0xff]
    %v5053 = vld [vmem:[%s4418 + $0x2e9] sm:$0xff]
    %v5054 = vld [vmem:[%s4418 + $0x2f1] sm:$0xff]
    %v5055 = vld [vmem:[%s4418 + $0x301] sm:$0xff]
    %v5056 = vld [vmem:[%s4418 + $0x309] sm:$0xff]
    %v5057 = vld [vmem:[%s4418 + $0x319] sm:$0xff]
    %v5058 = vld [vmem:[%s4418 + $0x321] sm:$0xff]
    %5059 = vst [vmem:[#allocation2 + $0x20] sm:$0xff] %v4995
    %5060 = vst [vmem:[#allocation2 + $0x68] sm:$0xff] %v4996
    %5061 = vst [vmem:[#allocation2 + $0xb0] sm:$0xff] %v4997
    %5062 = vst [vmem:[#allocation2 + $0xf8] sm:$0xff] %v4998
    %5063 = vst [vmem:[#allocation2 + $0x140] sm:$0xff] %v4999
    %5064 = vst [vmem:[#allocation2 + $0x188] sm:$0xff] %v5000
    %5065 = vst [vmem:[#allocation2 + $0x1d0] sm:$0xff] %v5001
    %5066 = vst [vmem:[#allocation2 + $0x218] sm:$0xff] %v5002
    %5067 = vst [vmem:[#allocation2 + $0x260] sm:$0xff] %v5003
    %5068 = vst [vmem:[#allocation2 + $0x2a8] sm:$0xff] %v5004
    %5069 = vst [vmem:[#allocation2 + $0x2f0] sm:$0xff] %v5005
    %5070 = vst [vmem:[#allocation2 + $0x338] sm:$0xff] %v5006
    %5071 = vst [vmem:[#allocation2 + $0x380] sm:$0xff] %v5007
    %5072 = vst [vmem:[#allocation2 + $0x3c8] sm:$0xff] %v5008
    %5073 = vst [vmem:[#allocation2 + $0x410] sm:$0xff] %v5009
    %5074 = vst [vmem:[#allocation2 + $0x458] sm:$0xff] %v5010
    %5075 = vst [vmem:[#allocation2 + $0x4a0] sm:$0xff] %v5011
    %5076 = vst [vmem:[#allocation2 + $0x4e8] sm:$0xff] %v5012
    %5077 = vst [vmem:[#allocation2 + $0x530] sm:$0xff] %v5013
    %5078 = vst [vmem:[#allocation2 + $0x578] sm:$0xff] %v5014
    %5079 = vst [vmem:[#allocation2 + $0x5c0] sm:$0xff] %v5015
    %5080 = vst [vmem:[#allocation2 + $0x608] sm:$0xff] %v5016
    %5081 = vst [vmem:[#allocation2 + $0x650] sm:$0xff] %v5017
    %5082 = vst [vmem:[#allocation2 + $0x698] sm:$0xff] %v5018
    %5083 = vst [vmem:[#allocation2 + $0x6e0] sm:$0xff] %v5019
    %5084 = vst [vmem:[#allocation2 + $0x728] sm:$0xff] %v5020
    %5085 = vst [vmem:[#allocation2 + $0x770] sm:$0xff] %v5021
    %5086 = vst [vmem:[#allocation2 + $0x7b8] sm:$0xff] %v5022
    %5087 = vst [vmem:[#allocation2 + $0x800] sm:$0xff] %v5023
    %5088 = vst [vmem:[#allocation2 + $0x848] sm:$0xff] %v5024
    %5089 = vst [vmem:[#allocation2 + $0x890] sm:$0xff] %v5025
    %5090 = vst [vmem:[#allocation2 + $0x8d8] sm:$0xff] %v5026
    %5091 = vst [vmem:[#allocation2 + $0x920] sm:$0xff] %v5027
    %5092 = vst [vmem:[#allocation2 + $0x968] sm:$0xff] %v5028
    %5093 = vst [vmem:[#allocation2 + $0x9b0] sm:$0xff] %v5029
    %5094 = vst [vmem:[#allocation2 + $0x9f8] sm:$0xff] %v5030
    %5095 = vst [vmem:[#allocation2 + $0xa40] sm:$0xff] %v5031
    %5096 = vst [vmem:[#allocation2 + $0xa88] sm:$0xff] %v5032
    %5097 = vst [vmem:[#allocation2 + $0xad0] sm:$0xff] %v5033
    %5098 = vst [vmem:[#allocation2 + $0xb18] sm:$0xff] %v5034
    %5099 = vst [vmem:[#allocation2 + $0xb60] sm:$0xff] %v5035
    %5100 = vst [vmem:[#allocation2 + $0xba8] sm:$0xff] %v5036
    %5101 = vst [vmem:[#allocation2 + $0xbf0] sm:$0xff] %v5037
    %5102 = vst [vmem:[#allocation2 + $0xc38] sm:$0xff] %v5038
    %5103 = vst [vmem:[#allocation2 + $0xc80] sm:$0xff] %v5039
    %5104 = vst [vmem:[#allocation2 + $0xcc8] sm:$0xff] %v5040
    %5105 = vst [vmem:[#allocation2 + $0xd10] sm:$0xff] %v5041
    %5106 = vst [vmem:[#allocation2 + $0xd58] sm:$0xff] %v5042
    %5107 = vst [vmem:[#allocation2 + $0xda0] sm:$0xff] %v5043
    %5108 = vst [vmem:[#allocation2 + $0xde8] sm:$0xff] %v5044
    %5109 = vst [vmem:[#allocation2 + $0xe30] sm:$0xff] %v5045
    %5110 = vst [vmem:[#allocation2 + $0xe78] sm:$0xff] %v5046
    %5111 = vst [vmem:[#allocation2 + $0xec0] sm:$0xff] %v5047
    %5112 = vst [vmem:[#allocation2 + $0xf08] sm:$0xff] %v5048
    %5113 = vst [vmem:[#allocation2 + $0xf50] sm:$0xff] %v5049
    %5114 = vst [vmem:[#allocation2 + $0xf98] sm:$0xff] %v5050
    %5115 = vst [vmem:[#allocation2 + $0xfe0] sm:$0xff] %v5051
    %5116 = vst [vmem:[#allocation2 + $0x1028] sm:$0xff] %v5052
    %5117 = vst [vmem:[#allocation2 + $0x1070] sm:$0xff] %v5053
    %5118 = vst [vmem:[#allocation2 + $0x10b8] sm:$0xff] %v5054
    %5119 = vst [vmem:[#allocation2 + $0x1100] sm:$0xff] %v5055
    %5120 = vst [vmem:[#allocation2 + $0x1148] sm:$0xff] %v5056
    %5121 = vst [vmem:[#allocation2 + $0x1190] sm:$0xff] %v5057
    %5122 = vst [vmem:[#allocation2 + $0x11d8] sm:$0xff] %v5058
    %v5123 = vld [vmem:[%s4418 + $0x2] sm:$0xff]
    %v5124 = vld [vmem:[%s4418 + $0xa] sm:$0xff]
    %v5125 = vld [vmem:[%s4418 + $0x1a] sm:$0xff]
    %v5126 = vld [vmem:[%s4418 + $0x22] sm:$0xff]
    %v5127 = vld [vmem:[%s4418 + $0x32] sm:$0xff]
    %v5128 = vld [vmem:[%s4418 + $0x3a] sm:$0xff]
    %v5129 = vld [vmem:[%s4418 + $0x4a] sm:$0xff]
    %v5130 = vld [vmem:[%s4418 + $0x52] sm:$0xff]
    %v5131 = vld [vmem:[%s4418 + $0x62] sm:$0xff]
    %v5132 = vld [vmem:[%s4418 + $0x6a] sm:$0xff]
    %v5133 = vld [vmem:[%s4418 + $0x7a] sm:$0xff]
    %v5134 = vld [vmem:[%s4418 + $0x82] sm:$0xff]
    %v5135 = vld [vmem:[%s4418 + $0x92] sm:$0xff]
    %v5136 = vld [vmem:[%s4418 + $0x9a] sm:$0xff]
    %v5137 = vld [vmem:[%s4418 + $0xaa] sm:$0xff]
    %v5138 = vld [vmem:[%s4418 + $0xb2] sm:$0xff]
    %v5139 = vld [vmem:[%s4418 + $0xc2] sm:$0xff]
    %v5140 = vld [vmem:[%s4418 + $0xca] sm:$0xff]
    %v5141 = vld [vmem:[%s4418 + $0xda] sm:$0xff]
    %v5142 = vld [vmem:[%s4418 + $0xe2] sm:$0xff]
    %v5143 = vld [vmem:[%s4418 + $0xf2] sm:$0xff]
    %v5144 = vld [vmem:[%s4418 + $0xfa] sm:$0xff]
    %v5145 = vld [vmem:[%s4418 + $0x10a] sm:$0xff]
    %v5146 = vld [vmem:[%s4418 + $0x112] sm:$0xff]
    %v5147 = vld [vmem:[%s4418 + $0x122] sm:$0xff]
    %v5148 = vld [vmem:[%s4418 + $0x12a] sm:$0xff]
    %v5149 = vld [vmem:[%s4418 + $0x13a] sm:$0xff]
    %v5150 = vld [vmem:[%s4418 + $0x142] sm:$0xff]
    %v5151 = vld [vmem:[%s4418 + $0x152] sm:$0xff]
    %v5152 = vld [vmem:[%s4418 + $0x15a] sm:$0xff]
    %v5153 = vld [vmem:[%s4418 + $0x16a] sm:$0xff]
    %v5154 = vld [vmem:[%s4418 + $0x172] sm:$0xff]
    %v5155 = vld [vmem:[%s4418 + $0x1b2] sm:$0xff]
    %v5156 = vld [vmem:[%s4418 + $0x1ba] sm:$0xff]
    %v5157 = vld [vmem:[%s4418 + $0x1ca] sm:$0xff]
    %v5158 = vld [vmem:[%s4418 + $0x1d2] sm:$0xff]
    %v5159 = vld [vmem:[%s4418 + $0x1e2] sm:$0xff]
    %v5160 = vld [vmem:[%s4418 + $0x1ea] sm:$0xff]
    %v5161 = vld [vmem:[%s4418 + $0x1fa] sm:$0xff]
    %v5162 = vld [vmem:[%s4418 + $0x202] sm:$0xff]
    %v5163 = vld [vmem:[%s4418 + $0x212] sm:$0xff]
    %v5164 = vld [vmem:[%s4418 + $0x21a] sm:$0xff]
    %v5165 = vld [vmem:[%s4418 + $0x22a] sm:$0xff]
    %v5166 = vld [vmem:[%s4418 + $0x232] sm:$0xff]
    %v5167 = vld [vmem:[%s4418 + $0x242] sm:$0xff]
    %v5168 = vld [vmem:[%s4418 + $0x24a] sm:$0xff]
    %v5169 = vld [vmem:[%s4418 + $0x25a] sm:$0xff]
    %v5170 = vld [vmem:[%s4418 + $0x262] sm:$0xff]
    %v5171 = vld [vmem:[%s4418 + $0x272] sm:$0xff]
    %v5172 = vld [vmem:[%s4418 + $0x27a] sm:$0xff]
    %v5173 = vld [vmem:[%s4418 + $0x28a] sm:$0xff]
    %v5174 = vld [vmem:[%s4418 + $0x292] sm:$0xff]
    %v5175 = vld [vmem:[%s4418 + $0x2a2] sm:$0xff]
    %v5176 = vld [vmem:[%s4418 + $0x2aa] sm:$0xff]
    %v5177 = vld [vmem:[%s4418 + $0x2ba] sm:$0xff]
    %v5178 = vld [vmem:[%s4418 + $0x2c2] sm:$0xff]
    %v5179 = vld [vmem:[%s4418 + $0x2d2] sm:$0xff]
    %v5180 = vld [vmem:[%s4418 + $0x2da] sm:$0xff]
    %v5181 = vld [vmem:[%s4418 + $0x2ea] sm:$0xff]
    %v5182 = vld [vmem:[%s4418 + $0x2f2] sm:$0xff]
    %v5183 = vld [vmem:[%s4418 + $0x302] sm:$0xff]
    %v5184 = vld [vmem:[%s4418 + $0x30a] sm:$0xff]
    %v5185 = vld [vmem:[%s4418 + $0x31a] sm:$0xff]
    %v5186 = vld [vmem:[%s4418 + $0x322] sm:$0xff]
    %5187 = vst [vmem:[#allocation2 + $0x28] sm:$0xff] %v5123
    %5188 = vst [vmem:[#allocation2 + $0x70] sm:$0xff] %v5124
    %5189 = vst [vmem:[#allocation2 + $0xb8] sm:$0xff] %v5125
    %5190 = vst [vmem:[#allocation2 + $0x100] sm:$0xff] %v5126
    %5191 = vst [vmem:[#allocation2 + $0x148] sm:$0xff] %v5127
    %5192 = vst [vmem:[#allocation2 + $0x190] sm:$0xff] %v5128
    %5193 = vst [vmem:[#allocation2 + $0x1d8] sm:$0xff] %v5129
    %5194 = vst [vmem:[#allocation2 + $0x220] sm:$0xff] %v5130
    %5195 = vst [vmem:[#allocation2 + $0x268] sm:$0xff] %v5131
    %5196 = vst [vmem:[#allocation2 + $0x2b0] sm:$0xff] %v5132
    %5197 = vst [vmem:[#allocation2 + $0x2f8] sm:$0xff] %v5133
    %5198 = vst [vmem:[#allocation2 + $0x340] sm:$0xff] %v5134
    %5199 = vst [vmem:[#allocation2 + $0x388] sm:$0xff] %v5135
    %5200 = vst [vmem:[#allocation2 + $0x3d0] sm:$0xff] %v5136
    %5201 = vst [vmem:[#allocation2 + $0x418] sm:$0xff] %v5137
    %5202 = vst [vmem:[#allocation2 + $0x460] sm:$0xff] %v5138
    %5203 = vst [vmem:[#allocation2 + $0x4a8] sm:$0xff] %v5139
    %5204 = vst [vmem:[#allocation2 + $0x4f0] sm:$0xff] %v5140
    %5205 = vst [vmem:[#allocation2 + $0x538] sm:$0xff] %v5141
    %5206 = vst [vmem:[#allocation2 + $0x580] sm:$0xff] %v5142
    %5207 = vst [vmem:[#allocation2 + $0x5c8] sm:$0xff] %v5143
    %5208 = vst [vmem:[#allocation2 + $0x610] sm:$0xff] %v5144
    %5209 = vst [vmem:[#allocation2 + $0x658] sm:$0xff] %v5145
    %5210 = vst [vmem:[#allocation2 + $0x6a0] sm:$0xff] %v5146
    %5211 = vst [vmem:[#allocation2 + $0x6e8] sm:$0xff] %v5147
    %5212 = vst [vmem:[#allocation2 + $0x730] sm:$0xff] %v5148
    %5213 = vst [vmem:[#allocation2 + $0x778] sm:$0xff] %v5149
    %5214 = vst [vmem:[#allocation2 + $0x7c0] sm:$0xff] %v5150
    %5215 = vst [vmem:[#allocation2 + $0x808] sm:$0xff] %v5151
    %5216 = vst [vmem:[#allocation2 + $0x850] sm:$0xff] %v5152
    %5217 = vst [vmem:[#allocation2 + $0x898] sm:$0xff] %v5153
    %5218 = vst [vmem:[#allocation2 + $0x8e0] sm:$0xff] %v5154
    %5219 = vst [vmem:[#allocation2 + $0x928] sm:$0xff] %v5155
    %5220 = vst [vmem:[#allocation2 + $0x970] sm:$0xff] %v5156
    %5221 = vst [vmem:[#allocation2 + $0x9b8] sm:$0xff] %v5157
    %5222 = vst [vmem:[#allocation2 + $0xa00] sm:$0xff] %v5158
    %5223 = vst [vmem:[#allocation2 + $0xa48] sm:$0xff] %v5159
    %5224 = vst [vmem:[#allocation2 + $0xa90] sm:$0xff] %v5160
    %5225 = vst [vmem:[#allocation2 + $0xad8] sm:$0xff] %v5161
    %5226 = vst [vmem:[#allocation2 + $0xb20] sm:$0xff] %v5162
    %5227 = vst [vmem:[#allocation2 + $0xb68] sm:$0xff] %v5163
    %5228 = vst [vmem:[#allocation2 + $0xbb0] sm:$0xff] %v5164
    %5229 = vst [vmem:[#allocation2 + $0xbf8] sm:$0xff] %v5165
    %5230 = vst [vmem:[#allocation2 + $0xc40] sm:$0xff] %v5166
    %5231 = vst [vmem:[#allocation2 + $0xc88] sm:$0xff] %v5167
    %5232 = vst [vmem:[#allocation2 + $0xcd0] sm:$0xff] %v5168
    %5233 = vst [vmem:[#allocation2 + $0xd18] sm:$0xff] %v5169
    %5234 = vst [vmem:[#allocation2 + $0xd60] sm:$0xff] %v5170
    %5235 = vst [vmem:[#allocation2 + $0xda8] sm:$0xff] %v5171
    %5236 = vst [vmem:[#allocation2 + $0xdf0] sm:$0xff] %v5172
    %5237 = vst [vmem:[#allocation2 + $0xe38] sm:$0xff] %v5173
    %5238 = vst [vmem:[#allocation2 + $0xe80] sm:$0xff] %v5174
    %5239 = vst [vmem:[#allocation2 + $0xec8] sm:$0xff] %v5175
    %5240 = vst [vmem:[#allocation2 + $0xf10] sm:$0xff] %v5176
    %5241 = vst [vmem:[#allocation2 + $0xf58] sm:$0xff] %v5177
    %5242 = vst [vmem:[#allocation2 + $0xfa0] sm:$0xff] %v5178
    %5243 = vst [vmem:[#allocation2 + $0xfe8] sm:$0xff] %v5179
    %5244 = vst [vmem:[#allocation2 + $0x1030] sm:$0xff] %v5180
    %5245 = vst [vmem:[#allocation2 + $0x1078] sm:$0xff] %v5181
    %5246 = vst [vmem:[#allocation2 + $0x10c0] sm:$0xff] %v5182
    %5247 = vst [vmem:[#allocation2 + $0x1108] sm:$0xff] %v5183
    %5248 = vst [vmem:[#allocation2 + $0x1150] sm:$0xff] %v5184
    %5249 = vst [vmem:[#allocation2 + $0x1198] sm:$0xff] %v5185
    %5250 = vst [vmem:[#allocation2 + $0x11e0] sm:$0xff] %v5186
    %s5251 = scalar_lea.vmem [#allocation3], 48
    %v5252 = vld [vmem:[%s5251] sm:$0xff]
    %v5253 = vld [vmem:[%s5251 + $0x8] sm:$0xff]
    %v5254 = vld [vmem:[%s5251 + $0x18] sm:$0xff]
    %v5255 = vld [vmem:[%s5251 + $0x20] sm:$0xff]
    %v5256 = vld [vmem:[%s5251 + $0x30] sm:$0xff]
    %v5257 = vld [vmem:[%s5251 + $0x38] sm:$0xff]
    %v5258 = vld [vmem:[%s5251 + $0x48] sm:$0xff]
    %v5259 = vld [vmem:[%s5251 + $0x50] sm:$0xff]
    %v5260 = vld [vmem:[%s5251 + $0x60] sm:$0xff]
    %v5261 = vld [vmem:[%s5251 + $0x68] sm:$0xff]
    %v5262 = vld [vmem:[%s5251 + $0x78] sm:$0xff]
    %v5263 = vld [vmem:[%s5251 + $0x80] sm:$0xff]
    %v5264 = vld [vmem:[%s5251 + $0x90] sm:$0xff]
    %v5265 = vld [vmem:[%s5251 + $0x98] sm:$0xff]
    %v5266 = vld [vmem:[%s5251 + $0xa8] sm:$0xff]
    %v5267 = vld [vmem:[%s5251 + $0xb0] sm:$0xff]
    %v5268 = vld [vmem:[%s5251 + $0xc0] sm:$0xff]
    %v5269 = vld [vmem:[%s5251 + $0xc8] sm:$0xff]
    %v5270 = vld [vmem:[%s5251 + $0xd8] sm:$0xff]
    %v5271 = vld [vmem:[%s5251 + $0xe0] sm:$0xff]
    %v5272 = vld [vmem:[%s5251 + $0xf0] sm:$0xff]
    %v5273 = vld [vmem:[%s5251 + $0xf8] sm:$0xff]
    %v5274 = vld [vmem:[%s5251 + $0x108] sm:$0xff]
    %v5275 = vld [vmem:[%s5251 + $0x110] sm:$0xff]
    %v5276 = vld [vmem:[%s5251 + $0x120] sm:$0xff]
    %v5277 = vld [vmem:[%s5251 + $0x128] sm:$0xff]
    %v5278 = vld [vmem:[%s5251 + $0x138] sm:$0xff]
    %v5279 = vld [vmem:[%s5251 + $0x140] sm:$0xff]
    %v5280 = vld [vmem:[%s5251 + $0x150] sm:$0xff]
    %v5281 = vld [vmem:[%s5251 + $0x158] sm:$0xff]
    %v5282 = vld [vmem:[%s5251 + $0x168] sm:$0xff]
    %v5283 = vld [vmem:[%s5251 + $0x170] sm:$0xff]
    %v5284 = vld [vmem:[%s5251 + $0x1b0] sm:$0xff]
    %v5285 = vld [vmem:[%s5251 + $0x1b8] sm:$0xff]
    %v5286 = vld [vmem:[%s5251 + $0x1c8] sm:$0xff]
    %v5287 = vld [vmem:[%s5251 + $0x1d0] sm:$0xff]
    %v5288 = vld [vmem:[%s5251 + $0x1e0] sm:$0xff]
    %v5289 = vld [vmem:[%s5251 + $0x1e8] sm:$0xff]
    %v5290 = vld [vmem:[%s5251 + $0x1f8] sm:$0xff]
    %v5291 = vld [vmem:[%s5251 + $0x200] sm:$0xff]
    %v5292 = vld [vmem:[%s5251 + $0x210] sm:$0xff]
    %v5293 = vld [vmem:[%s5251 + $0x218] sm:$0xff]
    %v5294 = vld [vmem:[%s5251 + $0x228] sm:$0xff]
    %v5295 = vld [vmem:[%s5251 + $0x230] sm:$0xff]
    %v5296 = vld [vmem:[%s5251 + $0x240] sm:$0xff]
    %v5297 = vld [vmem:[%s5251 + $0x248] sm:$0xff]
    %v5298 = vld [vmem:[%s5251 + $0x258] sm:$0xff]
    %v5299 = vld [vmem:[%s5251 + $0x260] sm:$0xff]
    %v5300 = vld [vmem:[%s5251 + $0x270] sm:$0xff]
    %v5301 = vld [vmem:[%s5251 + $0x278] sm:$0xff]
    %v5302 = vld [vmem:[%s5251 + $0x288] sm:$0xff]
    %v5303 = vld [vmem:[%s5251 + $0x290] sm:$0xff]
    %v5304 = vld [vmem:[%s5251 + $0x2a0] sm:$0xff]
    %v5305 = vld [vmem:[%s5251 + $0x2a8] sm:$0xff]
    %v5306 = vld [vmem:[%s5251 + $0x2b8] sm:$0xff]
    %v5307 = vld [vmem:[%s5251 + $0x2c0] sm:$0xff]
    %v5308 = vld [vmem:[%s5251 + $0x2d0] sm:$0xff]
    %v5309 = vld [vmem:[%s5251 + $0x2d8] sm:$0xff]
    %v5310 = vld [vmem:[%s5251 + $0x2e8] sm:$0xff]
    %v5311 = vld [vmem:[%s5251 + $0x2f0] sm:$0xff]
    %v5312 = vld [vmem:[%s5251 + $0x300] sm:$0xff]
    %v5313 = vld [vmem:[%s5251 + $0x308] sm:$0xff]
    %v5314 = vld [vmem:[%s5251 + $0x318] sm:$0xff]
    %v5315 = vld [vmem:[%s5251 + $0x320] sm:$0xff]
    %5316 = vst [vmem:[#allocation2 + $0x30] sm:$0xff] %v5252
    %5317 = vst [vmem:[#allocation2 + $0x78] sm:$0xff] %v5253
    %5318 = vst [vmem:[#allocation2 + $0xc0] sm:$0xff] %v5254
    %5319 = vst [vmem:[#allocation2 + $0x108] sm:$0xff] %v5255
    %5320 = vst [vmem:[#allocation2 + $0x150] sm:$0xff] %v5256
    %5321 = vst [vmem:[#allocation2 + $0x198] sm:$0xff] %v5257
    %5322 = vst [vmem:[#allocation2 + $0x1e0] sm:$0xff] %v5258
    %5323 = vst [vmem:[#allocation2 + $0x228] sm:$0xff] %v5259
    %5324 = vst [vmem:[#allocation2 + $0x270] sm:$0xff] %v5260
    %5325 = vst [vmem:[#allocation2 + $0x2b8] sm:$0xff] %v5261
    %5326 = vst [vmem:[#allocation2 + $0x300] sm:$0xff] %v5262
    %5327 = vst [vmem:[#allocation2 + $0x348] sm:$0xff] %v5263
    %5328 = vst [vmem:[#allocation2 + $0x390] sm:$0xff] %v5264
    %5329 = vst [vmem:[#allocation2 + $0x3d8] sm:$0xff] %v5265
    %5330 = vst [vmem:[#allocation2 + $0x420] sm:$0xff] %v5266
    %5331 = vst [vmem:[#allocation2 + $0x468] sm:$0xff] %v5267
    %5332 = vst [vmem:[#allocation2 + $0x4b0] sm:$0xff] %v5268
    %5333 = vst [vmem:[#allocation2 + $0x4f8] sm:$0xff] %v5269
    %5334 = vst [vmem:[#allocation2 + $0x540] sm:$0xff] %v5270
    %5335 = vst [vmem:[#allocation2 + $0x588] sm:$0xff] %v5271
    %5336 = vst [vmem:[#allocation2 + $0x5d0] sm:$0xff] %v5272
    %5337 = vst [vmem:[#allocation2 + $0x618] sm:$0xff] %v5273
    %5338 = vst [vmem:[#allocation2 + $0x660] sm:$0xff] %v5274
    %5339 = vst [vmem:[#allocation2 + $0x6a8] sm:$0xff] %v5275
    %5340 = vst [vmem:[#allocation2 + $0x6f0] sm:$0xff] %v5276
    %5341 = vst [vmem:[#allocation2 + $0x738] sm:$0xff] %v5277
    %5342 = vst [vmem:[#allocation2 + $0x780] sm:$0xff] %v5278
    %5343 = vst [vmem:[#allocation2 + $0x7c8] sm:$0xff] %v5279
    %5344 = vst [vmem:[#allocation2 + $0x810] sm:$0xff] %v5280
    %5345 = vst [vmem:[#allocation2 + $0x858] sm:$0xff] %v5281
    %5346 = vst [vmem:[#allocation2 + $0x8a0] sm:$0xff] %v5282
    %5347 = vst [vmem:[#allocation2 + $0x8e8] sm:$0xff] %v5283
    %5348 = vst [vmem:[#allocation2 + $0x930] sm:$0xff] %v5284
    %5349 = vst [vmem:[#allocation2 + $0x978] sm:$0xff] %v5285
    %5350 = vst [vmem:[#allocation2 + $0x9c0] sm:$0xff] %v5286
    %5351 = vst [vmem:[#allocation2 + $0xa08] sm:$0xff] %v5287
    %5352 = vst [vmem:[#allocation2 + $0xa50] sm:$0xff] %v5288
    %5353 = vst [vmem:[#allocation2 + $0xa98] sm:$0xff] %v5289
    %5354 = vst [vmem:[#allocation2 + $0xae0] sm:$0xff] %v5290
    %5355 = vst [vmem:[#allocation2 + $0xb28] sm:$0xff] %v5291
    %5356 = vst [vmem:[#allocation2 + $0xb70] sm:$0xff] %v5292
    %5357 = vst [vmem:[#allocation2 + $0xbb8] sm:$0xff] %v5293
    %5358 = vst [vmem:[#allocation2 + $0xc00] sm:$0xff] %v5294
    %5359 = vst [vmem:[#allocation2 + $0xc48] sm:$0xff] %v5295
    %5360 = vst [vmem:[#allocation2 + $0xc90] sm:$0xff] %v5296
    %5361 = vst [vmem:[#allocation2 + $0xcd8] sm:$0xff] %v5297
    %5362 = vst [vmem:[#allocation2 + $0xd20] sm:$0xff] %v5298
    %5363 = vst [vmem:[#allocation2 + $0xd68] sm:$0xff] %v5299
    %5364 = vst [vmem:[#allocation2 + $0xdb0] sm:$0xff] %v5300
    %5365 = vst [vmem:[#allocation2 + $0xdf8] sm:$0xff] %v5301
    %5366 = vst [vmem:[#allocation2 + $0xe40] sm:$0xff] %v5302
    %5367 = vst [vmem:[#allocation2 + $0xe88] sm:$0xff] %v5303
    %5368 = vst [vmem:[#allocation2 + $0xed0] sm:$0xff] %v5304
    %5369 = vst [vmem:[#allocation2 + $0xf18] sm:$0xff] %v5305
    %5370 = vst [vmem:[#allocation2 + $0xf60] sm:$0xff] %v5306
    %5371 = vst [vmem:[#allocation2 + $0xfa8] sm:$0xff] %v5307
    %5372 = vst [vmem:[#allocation2 + $0xff0] sm:$0xff] %v5308
    %5373 = vst [vmem:[#allocation2 + $0x1038] sm:$0xff] %v5309
    %5374 = vst [vmem:[#allocation2 + $0x1080] sm:$0xff] %v5310
    %5375 = vst [vmem:[#allocation2 + $0x10c8] sm:$0xff] %v5311
    %5376 = vst [vmem:[#allocation2 + $0x1110] sm:$0xff] %v5312
    %5377 = vst [vmem:[#allocation2 + $0x1158] sm:$0xff] %v5313
    %5378 = vst [vmem:[#allocation2 + $0x11a0] sm:$0xff] %v5314
    %5379 = vst [vmem:[#allocation2 + $0x11e8] sm:$0xff] %v5315
    %v5380 = vld [vmem:[%s5251 + $0x1] sm:$0xff]
    %v5381 = vld [vmem:[%s5251 + $0x9] sm:$0xff]
    %v5382 = vld [vmem:[%s5251 + $0x19] sm:$0xff]
    %v5383 = vld [vmem:[%s5251 + $0x21] sm:$0xff]
    %v5384 = vld [vmem:[%s5251 + $0x31] sm:$0xff]
    %v5385 = vld [vmem:[%s5251 + $0x39] sm:$0xff]
    %v5386 = vld [vmem:[%s5251 + $0x49] sm:$0xff]
    %v5387 = vld [vmem:[%s5251 + $0x51] sm:$0xff]
    %v5388 = vld [vmem:[%s5251 + $0x61] sm:$0xff]
    %v5389 = vld [vmem:[%s5251 + $0x69] sm:$0xff]
    %v5390 = vld [vmem:[%s5251 + $0x79] sm:$0xff]
    %v5391 = vld [vmem:[%s5251 + $0x81] sm:$0xff]
    %v5392 = vld [vmem:[%s5251 + $0x91] sm:$0xff]
    %v5393 = vld [vmem:[%s5251 + $0x99] sm:$0xff]
    %v5394 = vld [vmem:[%s5251 + $0xa9] sm:$0xff]
    %v5395 = vld [vmem:[%s5251 + $0xb1] sm:$0xff]
    %v5396 = vld [vmem:[%s5251 + $0xc1] sm:$0xff]
    %v5397 = vld [vmem:[%s5251 + $0xc9] sm:$0xff]
    %v5398 = vld [vmem:[%s5251 + $0xd9] sm:$0xff]
    %v5399 = vld [vmem:[%s5251 + $0xe1] sm:$0xff]
    %v5400 = vld [vmem:[%s5251 + $0xf1] sm:$0xff]
    %v5401 = vld [vmem:[%s5251 + $0xf9] sm:$0xff]
    %v5402 = vld [vmem:[%s5251 + $0x109] sm:$0xff]
    %v5403 = vld [vmem:[%s5251 + $0x111] sm:$0xff]
    %v5404 = vld [vmem:[%s5251 + $0x121] sm:$0xff]
    %v5405 = vld [vmem:[%s5251 + $0x129] sm:$0xff]
    %v5406 = vld [vmem:[%s5251 + $0x139] sm:$0xff]
    %v5407 = vld [vmem:[%s5251 + $0x141] sm:$0xff]
    %v5408 = vld [vmem:[%s5251 + $0x151] sm:$0xff]
    %v5409 = vld [vmem:[%s5251 + $0x159] sm:$0xff]
    %v5410 = vld [vmem:[%s5251 + $0x169] sm:$0xff]
    %v5411 = vld [vmem:[%s5251 + $0x171] sm:$0xff]
    %v5412 = vld [vmem:[%s5251 + $0x1b1] sm:$0xff]
    %v5413 = vld [vmem:[%s5251 + $0x1b9] sm:$0xff]
    %v5414 = vld [vmem:[%s5251 + $0x1c9] sm:$0xff]
    %v5415 = vld [vmem:[%s5251 + $0x1d1] sm:$0xff]
    %v5416 = vld [vmem:[%s5251 + $0x1e1] sm:$0xff]
    %v5417 = vld [vmem:[%s5251 + $0x1e9] sm:$0xff]
    %v5418 = vld [vmem:[%s5251 + $0x1f9] sm:$0xff]
    %v5419 = vld [vmem:[%s5251 + $0x201] sm:$0xff]
    %v5420 = vld [vmem:[%s5251 + $0x211] sm:$0xff]
    %v5421 = vld [vmem:[%s5251 + $0x219] sm:$0xff]
    %v5422 = vld [vmem:[%s5251 + $0x229] sm:$0xff]
    %v5423 = vld [vmem:[%s5251 + $0x231] sm:$0xff]
    %v5424 = vld [vmem:[%s5251 + $0x241] sm:$0xff]
    %v5425 = vld [vmem:[%s5251 + $0x249] sm:$0xff]
    %v5426 = vld [vmem:[%s5251 + $0x259] sm:$0xff]
    %v5427 = vld [vmem:[%s5251 + $0x261] sm:$0xff]
    %v5428 = vld [vmem:[%s5251 + $0x271] sm:$0xff]
    %v5429 = vld [vmem:[%s5251 + $0x279] sm:$0xff]
    %v5430 = vld [vmem:[%s5251 + $0x289] sm:$0xff]
    %v5431 = vld [vmem:[%s5251 + $0x291] sm:$0xff]
    %v5432 = vld [vmem:[%s5251 + $0x2a1] sm:$0xff]
    %v5433 = vld [vmem:[%s5251 + $0x2a9] sm:$0xff]
    %v5434 = vld [vmem:[%s5251 + $0x2b9] sm:$0xff]
    %v5435 = vld [vmem:[%s5251 + $0x2c1] sm:$0xff]
    %v5436 = vld [vmem:[%s5251 + $0x2d1] sm:$0xff]
    %v5437 = vld [vmem:[%s5251 + $0x2d9] sm:$0xff]
    %v5438 = vld [vmem:[%s5251 + $0x2e9] sm:$0xff]
    %v5439 = vld [vmem:[%s5251 + $0x2f1] sm:$0xff]
    %v5440 = vld [vmem:[%s5251 + $0x301] sm:$0xff]
    %v5441 = vld [vmem:[%s5251 + $0x309] sm:$0xff]
    %v5442 = vld [vmem:[%s5251 + $0x319] sm:$0xff]
    %v5443 = vld [vmem:[%s5251 + $0x321] sm:$0xff]
    %5444 = vst [vmem:[#allocation2 + $0x38] sm:$0xff] %v5380
    %5445 = vst [vmem:[#allocation2 + $0x80] sm:$0xff] %v5381
    %5446 = vst [vmem:[#allocation2 + $0xc8] sm:$0xff] %v5382
    %5447 = vst [vmem:[#allocation2 + $0x110] sm:$0xff] %v5383
    %5448 = vst [vmem:[#allocation2 + $0x158] sm:$0xff] %v5384
    %5449 = vst [vmem:[#allocation2 + $0x1a0] sm:$0xff] %v5385
    %5450 = vst [vmem:[#allocation2 + $0x1e8] sm:$0xff] %v5386
    %5451 = vst [vmem:[#allocation2 + $0x230] sm:$0xff] %v5387
    %5452 = vst [vmem:[#allocation2 + $0x278] sm:$0xff] %v5388
    %5453 = vst [vmem:[#allocation2 + $0x2c0] sm:$0xff] %v5389
    %5454 = vst [vmem:[#allocation2 + $0x308] sm:$0xff] %v5390
    %5455 = vst [vmem:[#allocation2 + $0x350] sm:$0xff] %v5391
    %5456 = vst [vmem:[#allocation2 + $0x398] sm:$0xff] %v5392
    %5457 = vst [vmem:[#allocation2 + $0x3e0] sm:$0xff] %v5393
    %5458 = vst [vmem:[#allocation2 + $0x428] sm:$0xff] %v5394
    %5459 = vst [vmem:[#allocation2 + $0x470] sm:$0xff] %v5395
    %5460 = vst [vmem:[#allocation2 + $0x4b8] sm:$0xff] %v5396
    %5461 = vst [vmem:[#allocation2 + $0x500] sm:$0xff] %v5397
    %5462 = vst [vmem:[#allocation2 + $0x548] sm:$0xff] %v5398
    %5463 = vst [vmem:[#allocation2 + $0x590] sm:$0xff] %v5399
    %5464 = vst [vmem:[#allocation2 + $0x5d8] sm:$0xff] %v5400
    %5465 = vst [vmem:[#allocation2 + $0x620] sm:$0xff] %v5401
    %5466 = vst [vmem:[#allocation2 + $0x668] sm:$0xff] %v5402
    %5467 = vst [vmem:[#allocation2 + $0x6b0] sm:$0xff] %v5403
    %5468 = vst [vmem:[#allocation2 + $0x6f8] sm:$0xff] %v5404
    %5469 = vst [vmem:[#allocation2 + $0x740] sm:$0xff] %v5405
    %5470 = vst [vmem:[#allocation2 + $0x788] sm:$0xff] %v5406
    %5471 = vst [vmem:[#allocation2 + $0x7d0] sm:$0xff] %v5407
    %5472 = vst [vmem:[#allocation2 + $0x818] sm:$0xff] %v5408
    %5473 = vst [vmem:[#allocation2 + $0x860] sm:$0xff] %v5409
    %5474 = vst [vmem:[#allocation2 + $0x8a8] sm:$0xff] %v5410
    %5475 = vst [vmem:[#allocation2 + $0x8f0] sm:$0xff] %v5411
    %5476 = vst [vmem:[#allocation2 + $0x938] sm:$0xff] %v5412
    %5477 = vst [vmem:[#allocation2 + $0x980] sm:$0xff] %v5413
    %5478 = vst [vmem:[#allocation2 + $0x9c8] sm:$0xff] %v5414
    %5479 = vst [vmem:[#allocation2 + $0xa10] sm:$0xff] %v5415
    %5480 = vst [vmem:[#allocation2 + $0xa58] sm:$0xff] %v5416
    %5481 = vst [vmem:[#allocation2 + $0xaa0] sm:$0xff] %v5417
    %5482 = vst [vmem:[#allocation2 + $0xae8] sm:$0xff] %v5418
    %5483 = vst [vmem:[#allocation2 + $0xb30] sm:$0xff] %v5419
    %5484 = vst [vmem:[#allocation2 + $0xb78] sm:$0xff] %v5420
    %5485 = vst [vmem:[#allocation2 + $0xbc0] sm:$0xff] %v5421
    %5486 = vst [vmem:[#allocation2 + $0xc08] sm:$0xff] %v5422
    %5487 = vst [vmem:[#allocation2 + $0xc50] sm:$0xff] %v5423
    %5488 = vst [vmem:[#allocation2 + $0xc98] sm:$0xff] %v5424
    %5489 = vst [vmem:[#allocation2 + $0xce0] sm:$0xff] %v5425
    %5490 = vst [vmem:[#allocation2 + $0xd28] sm:$0xff] %v5426
    %5491 = vst [vmem:[#allocation2 + $0xd70] sm:$0xff] %v5427
    %5492 = vst [vmem:[#allocation2 + $0xdb8] sm:$0xff] %v5428
    %5493 = vst [vmem:[#allocation2 + $0xe00] sm:$0xff] %v5429
    %5494 = vst [vmem:[#allocation2 + $0xe48] sm:$0xff] %v5430
    %5495 = vst [vmem:[#allocation2 + $0xe90] sm:$0xff] %v5431
    %5496 = vst [vmem:[#allocation2 + $0xed8] sm:$0xff] %v5432
    %5497 = vst [vmem:[#allocation2 + $0xf20] sm:$0xff] %v5433
    %5498 = vst [vmem:[#allocation2 + $0xf68] sm:$0xff] %v5434
    %5499 = vst [vmem:[#allocation2 + $0xfb0] sm:$0xff] %v5435
    %5500 = vst [vmem:[#allocation2 + $0xff8] sm:$0xff] %v5436
    %5501 = vst [vmem:[#allocation2 + $0x1040] sm:$0xff] %v5437
    %5502 = vst [vmem:[#allocation2 + $0x1088] sm:$0xff] %v5438
    %5503 = vst [vmem:[#allocation2 + $0x10d0] sm:$0xff] %v5439
    %5504 = vst [vmem:[#allocation2 + $0x1118] sm:$0xff] %v5440
    %5505 = vst [vmem:[#allocation2 + $0x1160] sm:$0xff] %v5441
    %5506 = vst [vmem:[#allocation2 + $0x11a8] sm:$0xff] %v5442
    %5507 = vst [vmem:[#allocation2 + $0x11f0] sm:$0xff] %v5443
    %v5508 = vld [vmem:[%s5251 + $0x2] sm:$0xff]
    %v5509 = vld [vmem:[%s5251 + $0xa] sm:$0xff]
    %v5510 = vld [vmem:[%s5251 + $0x1a] sm:$0xff]
    %v5511 = vld [vmem:[%s5251 + $0x22] sm:$0xff]
    %v5512 = vld [vmem:[%s5251 + $0x32] sm:$0xff]
    %v5513 = vld [vmem:[%s5251 + $0x3a] sm:$0xff]
    %v5514 = vld [vmem:[%s5251 + $0x4a] sm:$0xff]
    %v5515 = vld [vmem:[%s5251 + $0x52] sm:$0xff]
    %v5516 = vld [vmem:[%s5251 + $0x62] sm:$0xff]
    %v5517 = vld [vmem:[%s5251 + $0x6a] sm:$0xff]
    %v5518 = vld [vmem:[%s5251 + $0x7a] sm:$0xff]
    %v5519 = vld [vmem:[%s5251 + $0x82] sm:$0xff]
    %v5520 = vld [vmem:[%s5251 + $0x92] sm:$0xff]
    %v5521 = vld [vmem:[%s5251 + $0x9a] sm:$0xff]
    %v5522 = vld [vmem:[%s5251 + $0xaa] sm:$0xff]
    %v5523 = vld [vmem:[%s5251 + $0xb2] sm:$0xff]
    %v5524 = vld [vmem:[%s5251 + $0xc2] sm:$0xff]
    %v5525 = vld [vmem:[%s5251 + $0xca] sm:$0xff]
    %v5526 = vld [vmem:[%s5251 + $0xda] sm:$0xff]
    %v5527 = vld [vmem:[%s5251 + $0xe2] sm:$0xff]
    %v5528 = vld [vmem:[%s5251 + $0xf2] sm:$0xff]
    %v5529 = vld [vmem:[%s5251 + $0xfa] sm:$0xff]
    %v5530 = vld [vmem:[%s5251 + $0x10a] sm:$0xff]
    %v5531 = vld [vmem:[%s5251 + $0x112] sm:$0xff]
    %v5532 = vld [vmem:[%s5251 + $0x122] sm:$0xff]
    %v5533 = vld [vmem:[%s5251 + $0x12a] sm:$0xff]
    %v5534 = vld [vmem:[%s5251 + $0x13a] sm:$0xff]
    %v5535 = vld [vmem:[%s5251 + $0x142] sm:$0xff]
    %v5536 = vld [vmem:[%s5251 + $0x152] sm:$0xff]
    %v5537 = vld [vmem:[%s5251 + $0x15a] sm:$0xff]
    %v5538 = vld [vmem:[%s5251 + $0x16a] sm:$0xff]
    %v5539 = vld [vmem:[%s5251 + $0x172] sm:$0xff]
    %v5540 = vld [vmem:[%s5251 + $0x1b2] sm:$0xff]
    %v5541 = vld [vmem:[%s5251 + $0x1ba] sm:$0xff]
    %v5542 = vld [vmem:[%s5251 + $0x1ca] sm:$0xff]
    %v5543 = vld [vmem:[%s5251 + $0x1d2] sm:$0xff]
    %v5544 = vld [vmem:[%s5251 + $0x1e2] sm:$0xff]
    %v5545 = vld [vmem:[%s5251 + $0x1ea] sm:$0xff]
    %v5546 = vld [vmem:[%s5251 + $0x1fa] sm:$0xff]
    %v5547 = vld [vmem:[%s5251 + $0x202] sm:$0xff]
    %v5548 = vld [vmem:[%s5251 + $0x212] sm:$0xff]
    %v5549 = vld [vmem:[%s5251 + $0x21a] sm:$0xff]
    %v5550 = vld [vmem:[%s5251 + $0x22a] sm:$0xff]
    %v5551 = vld [vmem:[%s5251 + $0x232] sm:$0xff]
    %v5552 = vld [vmem:[%s5251 + $0x242] sm:$0xff]
    %v5553 = vld [vmem:[%s5251 + $0x24a] sm:$0xff]
    %v5554 = vld [vmem:[%s5251 + $0x25a] sm:$0xff]
    %v5555 = vld [vmem:[%s5251 + $0x262] sm:$0xff]
    %v5556 = vld [vmem:[%s5251 + $0x272] sm:$0xff]
    %v5557 = vld [vmem:[%s5251 + $0x27a] sm:$0xff]
    %v5558 = vld [vmem:[%s5251 + $0x28a] sm:$0xff]
    %v5559 = vld [vmem:[%s5251 + $0x292] sm:$0xff]
    %v5560 = vld [vmem:[%s5251 + $0x2a2] sm:$0xff]
    %v5561 = vld [vmem:[%s5251 + $0x2aa] sm:$0xff]
    %v5562 = vld [vmem:[%s5251 + $0x2ba] sm:$0xff]
    %v5563 = vld [vmem:[%s5251 + $0x2c2] sm:$0xff]
    %v5564 = vld [vmem:[%s5251 + $0x2d2] sm:$0xff]
    %v5565 = vld [vmem:[%s5251 + $0x2da] sm:$0xff]
    %v5566 = vld [vmem:[%s5251 + $0x2ea] sm:$0xff]
    %v5567 = vld [vmem:[%s5251 + $0x2f2] sm:$0xff]
    %v5568 = vld [vmem:[%s5251 + $0x302] sm:$0xff]
    %v5569 = vld [vmem:[%s5251 + $0x30a] sm:$0xff]
    %v5570 = vld [vmem:[%s5251 + $0x31a] sm:$0xff]
    %v5571 = vld [vmem:[%s5251 + $0x322] sm:$0xff]
    %5572 = vst [vmem:[#allocation2 + $0x40] sm:$0xff] %v5508
    %5573 = vst [vmem:[#allocation2 + $0x88] sm:$0xff] %v5509
    %5574 = vst [vmem:[#allocation2 + $0xd0] sm:$0xff] %v5510
    %5575 = vst [vmem:[#allocation2 + $0x118] sm:$0xff] %v5511
    %5576 = vst [vmem:[#allocation2 + $0x160] sm:$0xff] %v5512
    %5577 = vst [vmem:[#allocation2 + $0x1a8] sm:$0xff] %v5513
    %5578 = vst [vmem:[#allocation2 + $0x1f0] sm:$0xff] %v5514
    %5579 = vst [vmem:[#allocation2 + $0x238] sm:$0xff] %v5515
    %5580 = vst [vmem:[#allocation2 + $0x280] sm:$0xff] %v5516
    %5581 = vst [vmem:[#allocation2 + $0x2c8] sm:$0xff] %v5517
    %5582 = vst [vmem:[#allocation2 + $0x310] sm:$0xff] %v5518
    %5583 = vst [vmem:[#allocation2 + $0x358] sm:$0xff] %v5519
    %5584 = vst [vmem:[#allocation2 + $0x3a0] sm:$0xff] %v5520
    %5585 = vst [vmem:[#allocation2 + $0x3e8] sm:$0xff] %v5521
    %5586 = vst [vmem:[#allocation2 + $0x430] sm:$0xff] %v5522
    %5587 = vst [vmem:[#allocation2 + $0x478] sm:$0xff] %v5523
    %5588 = vst [vmem:[#allocation2 + $0x4c0] sm:$0xff] %v5524
    %5589 = vst [vmem:[#allocation2 + $0x508] sm:$0xff] %v5525
    %5590 = vst [vmem:[#allocation2 + $0x550] sm:$0xff] %v5526
    %5591 = vst [vmem:[#allocation2 + $0x598] sm:$0xff] %v5527
    %5592 = vst [vmem:[#allocation2 + $0x5e0] sm:$0xff] %v5528
    %5593 = vst [vmem:[#allocation2 + $0x628] sm:$0xff] %v5529
    %5594 = vst [vmem:[#allocation2 + $0x670] sm:$0xff] %v5530
    %5595 = vst [vmem:[#allocation2 + $0x6b8] sm:$0xff] %v5531
    %5596 = vst [vmem:[#allocation2 + $0x700] sm:$0xff] %v5532
    %5597 = vst [vmem:[#allocation2 + $0x748] sm:$0xff] %v5533
    %5598 = vst [vmem:[#allocation2 + $0x790] sm:$0xff] %v5534
    %5599 = vst [vmem:[#allocation2 + $0x7d8] sm:$0xff] %v5535
    %5600 = vst [vmem:[#allocation2 + $0x820] sm:$0xff] %v5536
    %5601 = vst [vmem:[#allocation2 + $0x868] sm:$0xff] %v5537
    %5602 = vst [vmem:[#allocation2 + $0x8b0] sm:$0xff] %v5538
    %5603 = vst [vmem:[#allocation2 + $0x8f8] sm:$0xff] %v5539
    %5604 = vst [vmem:[#allocation2 + $0x940] sm:$0xff] %v5540
    %5605 = vst [vmem:[#allocation2 + $0x988] sm:$0xff] %v5541
    %5606 = vst [vmem:[#allocation2 + $0x9d0] sm:$0xff] %v5542
    %5607 = vst [vmem:[#allocation2 + $0xa18] sm:$0xff] %v5543
    %5608 = vst [vmem:[#allocation2 + $0xa60] sm:$0xff] %v5544
    %5609 = vst [vmem:[#allocation2 + $0xaa8] sm:$0xff] %v5545
    %5610 = vst [vmem:[#allocation2 + $0xaf0] sm:$0xff] %v5546
    %5611 = vst [vmem:[#allocation2 + $0xb38] sm:$0xff] %v5547
    %5612 = vst [vmem:[#allocation2 + $0xb80] sm:$0xff] %v5548
    %5613 = vst [vmem:[#allocation2 + $0xbc8] sm:$0xff] %v5549
    %5614 = vst [vmem:[#allocation2 + $0xc10] sm:$0xff] %v5550
    %5615 = vst [vmem:[#allocation2 + $0xc58] sm:$0xff] %v5551
    %5616 = vst [vmem:[#allocation2 + $0xca0] sm:$0xff] %v5552
    %5617 = vst [vmem:[#allocation2 + $0xce8] sm:$0xff] %v5553
    %5618 = vst [vmem:[#allocation2 + $0xd30] sm:$0xff] %v5554
    %5619 = vst [vmem:[#allocation2 + $0xd78] sm:$0xff] %v5555
    %5620 = vst [vmem:[#allocation2 + $0xdc0] sm:$0xff] %v5556
    %5621 = vst [vmem:[#allocation2 + $0xe08] sm:$0xff] %v5557
    %5622 = vst [vmem:[#allocation2 + $0xe50] sm:$0xff] %v5558
    %5623 = vst [vmem:[#allocation2 + $0xe98] sm:$0xff] %v5559
    %5624 = vst [vmem:[#allocation2 + $0xee0] sm:$0xff] %v5560
    %5625 = vst [vmem:[#allocation2 + $0xf28] sm:$0xff] %v5561
    %5626 = vst [vmem:[#allocation2 + $0xf70] sm:$0xff] %v5562
    %5627 = vst [vmem:[#allocation2 + $0xfb8] sm:$0xff] %v5563
    %5628 = vst [vmem:[#allocation2 + $0x1000] sm:$0xff] %v5564
    %5629 = vst [vmem:[#allocation2 + $0x1048] sm:$0xff] %v5565
    %5630 = vst [vmem:[#allocation2 + $0x1090] sm:$0xff] %v5566
    %5631 = vst [vmem:[#allocation2 + $0x10d8] sm:$0xff] %v5567
    %5632 = vst [vmem:[#allocation2 + $0x1120] sm:$0xff] %v5568
    %5633 = vst [vmem:[#allocation2 + $0x1168] sm:$0xff] %v5569
    %5634 = vst [vmem:[#allocation2 + $0x11b0] sm:$0xff] %v5570
    %5635 = vst [vmem:[#allocation2 + $0x11f8] sm:$0xff] %v5571
    %v5636 = vld [vmem:[#allocation2] sm:$0xff]
    %v5637 = vld [vmem:[#allocation2 + $0x8] sm:$0xff]
    %v5638 = vld [vmem:[#allocation2 + $0x10] sm:$0xff]
    %v5639 = vld [vmem:[#allocation2 + $0x18] sm:$0xff]
    %v5640 = vld [vmem:[#allocation2 + $0x20] sm:$0xff]
    %v5641 = vld [vmem:[#allocation2 + $0x28] sm:$0xff]
    %v5642 = vld [vmem:[#allocation2 + $0x30] sm:$0xff]
    %v5643 = vld [vmem:[#allocation2 + $0x38] sm:$0xff]
    %v5644 = vld [vmem:[#allocation2 + $0x40] sm:$0xff]
    %v5645 = vld [vmem:[#allocation2 + $0x48] sm:$0xff]
    %v5646 = vld [vmem:[#allocation2 + $0x50] sm:$0xff]
    %v5647 = vld [vmem:[#allocation2 + $0x58] sm:$0xff]
    %v5648 = vld [vmem:[#allocation2 + $0x60] sm:$0xff]
    %v5649 = vld [vmem:[#allocation2 + $0x68] sm:$0xff]
    %v5650 = vld [vmem:[#allocation2 + $0x70] sm:$0xff]
    %v5651 = vld [vmem:[#allocation2 + $0x78] sm:$0xff]
    %v5652 = vld [vmem:[#allocation2 + $0x80] sm:$0xff]
    %v5653 = vld [vmem:[#allocation2 + $0x88] sm:$0xff]
    %v5654 = vld [vmem:[#allocation2 + $0x90] sm:$0xff]
    %v5655 = vld [vmem:[#allocation2 + $0x98] sm:$0xff]
    %v5656 = vld [vmem:[#allocation2 + $0xa0] sm:$0xff]
    %v5657 = vld [vmem:[#allocation2 + $0xa8] sm:$0xff]
    %v5658 = vld [vmem:[#allocation2 + $0xb0] sm:$0xff]
    %v5659 = vld [vmem:[#allocation2 + $0xb8] sm:$0xff]
    %v5660 = vld [vmem:[#allocation2 + $0xc0] sm:$0xff]
    %v5661 = vld [vmem:[#allocation2 + $0xc8] sm:$0xff]
    %v5662 = vld [vmem:[#allocation2 + $0xd0] sm:$0xff]
    %v5663 = vld [vmem:[#allocation2 + $0xd8] sm:$0xff]
    %v5664 = vld [vmem:[#allocation2 + $0xe0] sm:$0xff]
    %v5665 = vld [vmem:[#allocation2 + $0xe8] sm:$0xff]
    %v5666 = vld [vmem:[#allocation2 + $0xf0] sm:$0xff]
    %v5667 = vld [vmem:[#allocation2 + $0xf8] sm:$0xff]
    %v5668 = vld [vmem:[#allocation2 + $0x100] sm:$0xff]
    %v5669 = vld [vmem:[#allocation2 + $0x108] sm:$0xff]
    %v5670 = vld [vmem:[#allocation2 + $0x110] sm:$0xff]
    %v5671 = vld [vmem:[#allocation2 + $0x118] sm:$0xff]
    %v5672 = vld [vmem:[#allocation2 + $0x120] sm:$0xff]
    %v5673 = vld [vmem:[#allocation2 + $0x128] sm:$0xff]
    %v5674 = vld [vmem:[#allocation2 + $0x130] sm:$0xff]
    %v5675 = vld [vmem:[#allocation2 + $0x138] sm:$0xff]
    %v5676 = vld [vmem:[#allocation2 + $0x140] sm:$0xff]
    %v5677 = vld [vmem:[#allocation2 + $0x148] sm:$0xff]
    %v5678 = vld [vmem:[#allocation2 + $0x150] sm:$0xff]
    %v5679 = vld [vmem:[#allocation2 + $0x158] sm:$0xff]
    %v5680 = vld [vmem:[#allocation2 + $0x160] sm:$0xff]
    %v5681 = vld [vmem:[#allocation2 + $0x168] sm:$0xff]
    %v5682 = vld [vmem:[#allocation2 + $0x170] sm:$0xff]
    %v5683 = vld [vmem:[#allocation2 + $0x178] sm:$0xff]
    %v5684 = vld [vmem:[#allocation2 + $0x180] sm:$0xff]
    %v5685 = vld [vmem:[#allocation2 + $0x188] sm:$0xff]
    %v5686 = vld [vmem:[#allocation2 + $0x190] sm:$0xff]
    %v5687 = vld [vmem:[#allocation2 + $0x198] sm:$0xff]
    %v5688 = vld [vmem:[#allocation2 + $0x1a0] sm:$0xff]
    %v5689 = vld [vmem:[#allocation2 + $0x1a8] sm:$0xff]
    %v5690 = vld [vmem:[#allocation2 + $0x1b0] sm:$0xff]
    %v5691 = vld [vmem:[#allocation2 + $0x1b8] sm:$0xff]
    %v5692 = vld [vmem:[#allocation2 + $0x1c0] sm:$0xff]
    %v5693 = vld [vmem:[#allocation2 + $0x1c8] sm:$0xff]
    %v5694 = vld [vmem:[#allocation2 + $0x1d0] sm:$0xff]
    %v5695 = vld [vmem:[#allocation2 + $0x1d8] sm:$0xff]
    %v5696 = vld [vmem:[#allocation2 + $0x1e0] sm:$0xff]
    %v5697 = vld [vmem:[#allocation2 + $0x1e8] sm:$0xff]
    %v5698 = vld [vmem:[#allocation2 + $0x1f0] sm:$0xff]
    %v5699 = vld [vmem:[#allocation2 + $0x1f8] sm:$0xff]
    %v5700 = vld [vmem:[#allocation2 + $0x200] sm:$0xff]
    %v5701 = vld [vmem:[#allocation2 + $0x208] sm:$0xff]
    %v5702 = vld [vmem:[#allocation2 + $0x210] sm:$0xff]
    %v5703 = vld [vmem:[#allocation2 + $0x218] sm:$0xff]
    %v5704 = vld [vmem:[#allocation2 + $0x220] sm:$0xff]
    %v5705 = vld [vmem:[#allocation2 + $0x228] sm:$0xff]
    %v5706 = vld [vmem:[#allocation2 + $0x230] sm:$0xff]
    %v5707 = vld [vmem:[#allocation2 + $0x238] sm:$0xff]
    %v5708 = vld [vmem:[#allocation2 + $0x240] sm:$0xff]
    %v5709 = vld [vmem:[#allocation2 + $0x248] sm:$0xff]
    %v5710 = vld [vmem:[#allocation2 + $0x250] sm:$0xff]
    %v5711 = vld [vmem:[#allocation2 + $0x258] sm:$0xff]
    %v5712 = vld [vmem:[#allocation2 + $0x260] sm:$0xff]
    %v5713 = vld [vmem:[#allocation2 + $0x268] sm:$0xff]
    %v5714 = vld [vmem:[#allocation2 + $0x270] sm:$0xff]
    %v5715 = vld [vmem:[#allocation2 + $0x278] sm:$0xff]
    %v5716 = vld [vmem:[#allocation2 + $0x280] sm:$0xff]
    %v5717 = vld [vmem:[#allocation2 + $0x288] sm:$0xff]
    %v5718 = vld [vmem:[#allocation2 + $0x290] sm:$0xff]
    %v5719 = vld [vmem:[#allocation2 + $0x298] sm:$0xff]
    %v5720 = vld [vmem:[#allocation2 + $0x2a0] sm:$0xff]
    %v5721 = vld [vmem:[#allocation2 + $0x2a8] sm:$0xff]
    %v5722 = vld [vmem:[#allocation2 + $0x2b0] sm:$0xff]
    %v5723 = vld [vmem:[#allocation2 + $0x2b8] sm:$0xff]
    %v5724 = vld [vmem:[#allocation2 + $0x2c0] sm:$0xff]
    %v5725 = vld [vmem:[#allocation2 + $0x2c8] sm:$0xff]
    %v5726 = vld [vmem:[#allocation2 + $0x2d0] sm:$0xff]
    %v5727 = vld [vmem:[#allocation2 + $0x2d8] sm:$0xff]
    %v5728 = vld [vmem:[#allocation2 + $0x2e0] sm:$0xff]
    %v5729 = vld [vmem:[#allocation2 + $0x2e8] sm:$0xff]
    %v5730 = vld [vmem:[#allocation2 + $0x2f0] sm:$0xff]
    %v5731 = vld [vmem:[#allocation2 + $0x2f8] sm:$0xff]
    %v5732 = vld [vmem:[#allocation2 + $0x300] sm:$0xff]
    %v5733 = vld [vmem:[#allocation2 + $0x308] sm:$0xff]
    %v5734 = vld [vmem:[#allocation2 + $0x310] sm:$0xff]
    %v5735 = vld [vmem:[#allocation2 + $0x318] sm:$0xff]
    %v5736 = vld [vmem:[#allocation2 + $0x320] sm:$0xff]
    %v5737 = vld [vmem:[#allocation2 + $0x328] sm:$0xff]
    %v5738 = vld [vmem:[#allocation2 + $0x330] sm:$0xff]
    %v5739 = vld [vmem:[#allocation2 + $0x338] sm:$0xff]
    %v5740 = vld [vmem:[#allocation2 + $0x340] sm:$0xff]
    %v5741 = vld [vmem:[#allocation2 + $0x348] sm:$0xff]
    %v5742 = vld [vmem:[#allocation2 + $0x350] sm:$0xff]
    %v5743 = vld [vmem:[#allocation2 + $0x358] sm:$0xff]
    %v5744 = vld [vmem:[#allocation2 + $0x360] sm:$0xff]
    %v5745 = vld [vmem:[#allocation2 + $0x368] sm:$0xff]
    %v5746 = vld [vmem:[#allocation2 + $0x370] sm:$0xff]
    %v5747 = vld [vmem:[#allocation2 + $0x378] sm:$0xff]
    %v5748 = vld [vmem:[#allocation2 + $0x380] sm:$0xff]
    %v5749 = vld [vmem:[#allocation2 + $0x388] sm:$0xff]
    %v5750 = vld [vmem:[#allocation2 + $0x390] sm:$0xff]
    %v5751 = vld [vmem:[#allocation2 + $0x398] sm:$0xff]
    %v5752 = vld [vmem:[#allocation2 + $0x3a0] sm:$0xff]
    %v5753 = vld [vmem:[#allocation2 + $0x3a8] sm:$0xff]
    %v5754 = vld [vmem:[#allocation2 + $0x3b0] sm:$0xff]
    %v5755 = vld [vmem:[#allocation2 + $0x3b8] sm:$0xff]
    %v5756 = vld [vmem:[#allocation2 + $0x3c0] sm:$0xff]
    %v5757 = vld [vmem:[#allocation2 + $0x3c8] sm:$0xff]
    %v5758 = vld [vmem:[#allocation2 + $0x3d0] sm:$0xff]
    %v5759 = vld [vmem:[#allocation2 + $0x3d8] sm:$0xff]
    %v5760 = vld [vmem:[#allocation2 + $0x3e0] sm:$0xff]
    %v5761 = vld [vmem:[#allocation2 + $0x3e8] sm:$0xff]
    %v5762 = vld [vmem:[#allocation2 + $0x3f0] sm:$0xff]
    %v5763 = vld [vmem:[#allocation2 + $0x3f8] sm:$0xff]
    %v5764 = vld [vmem:[#allocation2 + $0x400] sm:$0xff]
    %v5765 = vld [vmem:[#allocation2 + $0x408] sm:$0xff]
    %v5766 = vld [vmem:[#allocation2 + $0x410] sm:$0xff]
    %v5767 = vld [vmem:[#allocation2 + $0x418] sm:$0xff]
    %v5768 = vld [vmem:[#allocation2 + $0x420] sm:$0xff]
    %v5769 = vld [vmem:[#allocation2 + $0x428] sm:$0xff]
    %v5770 = vld [vmem:[#allocation2 + $0x430] sm:$0xff]
    %v5771 = vld [vmem:[#allocation2 + $0x438] sm:$0xff]
    %v5772 = vld [vmem:[#allocation2 + $0x440] sm:$0xff]
    %v5773 = vld [vmem:[#allocation2 + $0x448] sm:$0xff]
    %v5774 = vld [vmem:[#allocation2 + $0x450] sm:$0xff]
    %v5775 = vld [vmem:[#allocation2 + $0x458] sm:$0xff]
    %v5776 = vld [vmem:[#allocation2 + $0x460] sm:$0xff]
    %v5777 = vld [vmem:[#allocation2 + $0x468] sm:$0xff]
    %v5778 = vld [vmem:[#allocation2 + $0x470] sm:$0xff]
    %v5779 = vld [vmem:[#allocation2 + $0x478] sm:$0xff]
    %v5780 = vld [vmem:[#allocation2 + $0x480] sm:$0xff]
    %v5781 = vld [vmem:[#allocation2 + $0x488] sm:$0xff]
    %v5782 = vld [vmem:[#allocation2 + $0x490] sm:$0xff]
    %v5783 = vld [vmem:[#allocation2 + $0x498] sm:$0xff]
    %v5784 = vld [vmem:[#allocation2 + $0x4a0] sm:$0xff]
    %v5785 = vld [vmem:[#allocation2 + $0x4a8] sm:$0xff]
    %v5786 = vld [vmem:[#allocation2 + $0x4b0] sm:$0xff]
    %v5787 = vld [vmem:[#allocation2 + $0x4b8] sm:$0xff]
    %v5788 = vld [vmem:[#allocation2 + $0x4c0] sm:$0xff]
    %v5789 = vld [vmem:[#allocation2 + $0x4c8] sm:$0xff]
    %v5790 = vld [vmem:[#allocation2 + $0x4d0] sm:$0xff]
    %v5791 = vld [vmem:[#allocation2 + $0x4d8] sm:$0xff]
    %v5792 = vld [vmem:[#allocation2 + $0x4e0] sm:$0xff]
    %v5793 = vld [vmem:[#allocation2 + $0x4e8] sm:$0xff]
    %v5794 = vld [vmem:[#allocation2 + $0x4f0] sm:$0xff]
    %v5795 = vld [vmem:[#allocation2 + $0x4f8] sm:$0xff]
    %v5796 = vld [vmem:[#allocation2 + $0x500] sm:$0xff]
    %v5797 = vld [vmem:[#allocation2 + $0x508] sm:$0xff]
    %v5798 = vld [vmem:[#allocation2 + $0x510] sm:$0xff]
    %v5799 = vld [vmem:[#allocation2 + $0x518] sm:$0xff]
    %v5800 = vld [vmem:[#allocation2 + $0x520] sm:$0xff]
    %v5801 = vld [vmem:[#allocation2 + $0x528] sm:$0xff]
    %v5802 = vld [vmem:[#allocation2 + $0x530] sm:$0xff]
    %v5803 = vld [vmem:[#allocation2 + $0x538] sm:$0xff]
    %v5804 = vld [vmem:[#allocation2 + $0x540] sm:$0xff]
    %v5805 = vld [vmem:[#allocation2 + $0x548] sm:$0xff]
    %v5806 = vld [vmem:[#allocation2 + $0x550] sm:$0xff]
    %v5807 = vld [vmem:[#allocation2 + $0x558] sm:$0xff]
    %v5808 = vld [vmem:[#allocation2 + $0x560] sm:$0xff]
    %v5809 = vld [vmem:[#allocation2 + $0x568] sm:$0xff]
    %v5810 = vld [vmem:[#allocation2 + $0x570] sm:$0xff]
    %v5811 = vld [vmem:[#allocation2 + $0x578] sm:$0xff]
    %v5812 = vld [vmem:[#allocation2 + $0x580] sm:$0xff]
    %v5813 = vld [vmem:[#allocation2 + $0x588] sm:$0xff]
    %v5814 = vld [vmem:[#allocation2 + $0x590] sm:$0xff]
    %v5815 = vld [vmem:[#allocation2 + $0x598] sm:$0xff]
    %v5816 = vld [vmem:[#allocation2 + $0x5a0] sm:$0xff]
    %v5817 = vld [vmem:[#allocation2 + $0x5a8] sm:$0xff]
    %v5818 = vld [vmem:[#allocation2 + $0x5b0] sm:$0xff]
    %v5819 = vld [vmem:[#allocation2 + $0x5b8] sm:$0xff]
    %v5820 = vld [vmem:[#allocation2 + $0x5c0] sm:$0xff]
    %v5821 = vld [vmem:[#allocation2 + $0x5c8] sm:$0xff]
    %v5822 = vld [vmem:[#allocation2 + $0x5d0] sm:$0xff]
    %v5823 = vld [vmem:[#allocation2 + $0x5d8] sm:$0xff]
    %v5824 = vld [vmem:[#allocation2 + $0x5e0] sm:$0xff]
    %v5825 = vld [vmem:[#allocation2 + $0x5e8] sm:$0xff]
    %v5826 = vld [vmem:[#allocation2 + $0x5f0] sm:$0xff]
    %v5827 = vld [vmem:[#allocation2 + $0x5f8] sm:$0xff]
    %v5828 = vld [vmem:[#allocation2 + $0x600] sm:$0xff]
    %v5829 = vld [vmem:[#allocation2 + $0x608] sm:$0xff]
    %v5830 = vld [vmem:[#allocation2 + $0x610] sm:$0xff]
    %v5831 = vld [vmem:[#allocation2 + $0x618] sm:$0xff]
    %v5832 = vld [vmem:[#allocation2 + $0x620] sm:$0xff]
    %v5833 = vld [vmem:[#allocation2 + $0x628] sm:$0xff]
    %v5834 = vld [vmem:[#allocation2 + $0x630] sm:$0xff]
    %v5835 = vld [vmem:[#allocation2 + $0x638] sm:$0xff]
    %v5836 = vld [vmem:[#allocation2 + $0x640] sm:$0xff]
    %v5837 = vld [vmem:[#allocation2 + $0x648] sm:$0xff]
    %v5838 = vld [vmem:[#allocation2 + $0x650] sm:$0xff]
    %v5839 = vld [vmem:[#allocation2 + $0x658] sm:$0xff]
    %v5840 = vld [vmem:[#allocation2 + $0x660] sm:$0xff]
    %v5841 = vld [vmem:[#allocation2 + $0x668] sm:$0xff]
    %v5842 = vld [vmem:[#allocation2 + $0x670] sm:$0xff]
    %v5843 = vld [vmem:[#allocation2 + $0x678] sm:$0xff]
    %v5844 = vld [vmem:[#allocation2 + $0x680] sm:$0xff]
    %v5845 = vld [vmem:[#allocation2 + $0x688] sm:$0xff]
    %v5846 = vld [vmem:[#allocation2 + $0x690] sm:$0xff]
    %v5847 = vld [vmem:[#allocation2 + $0x698] sm:$0xff]
    %v5848 = vld [vmem:[#allocation2 + $0x6a0] sm:$0xff]
    %v5849 = vld [vmem:[#allocation2 + $0x6a8] sm:$0xff]
    %v5850 = vld [vmem:[#allocation2 + $0x6b0] sm:$0xff]
    %v5851 = vld [vmem:[#allocation2 + $0x6b8] sm:$0xff]
    %v5852 = vld [vmem:[#allocation2 + $0x6c0] sm:$0xff]
    %v5853 = vld [vmem:[#allocation2 + $0x6c8] sm:$0xff]
    %v5854 = vld [vmem:[#allocation2 + $0x6d0] sm:$0xff]
    %v5855 = vld [vmem:[#allocation2 + $0x6d8] sm:$0xff]
    %v5856 = vld [vmem:[#allocation2 + $0x6e0] sm:$0xff]
    %v5857 = vld [vmem:[#allocation2 + $0x6e8] sm:$0xff]
    %v5858 = vld [vmem:[#allocation2 + $0x6f0] sm:$0xff]
    %v5859 = vld [vmem:[#allocation2 + $0x6f8] sm:$0xff]
    %v5860 = vld [vmem:[#allocation2 + $0x700] sm:$0xff]
    %v5861 = vld [vmem:[#allocation2 + $0x708] sm:$0xff]
    %v5862 = vld [vmem:[#allocation2 + $0x710] sm:$0xff]
    %v5863 = vld [vmem:[#allocation2 + $0x718] sm:$0xff]
    %v5864 = vld [vmem:[#allocation2 + $0x720] sm:$0xff]
    %v5865 = vld [vmem:[#allocation2 + $0x728] sm:$0xff]
    %v5866 = vld [vmem:[#allocation2 + $0x730] sm:$0xff]
    %v5867 = vld [vmem:[#allocation2 + $0x738] sm:$0xff]
    %v5868 = vld [vmem:[#allocation2 + $0x740] sm:$0xff]
    %v5869 = vld [vmem:[#allocation2 + $0x748] sm:$0xff]
    %v5870 = vld [vmem:[#allocation2 + $0x750] sm:$0xff]
    %v5871 = vld [vmem:[#allocation2 + $0x758] sm:$0xff]
    %v5872 = vld [vmem:[#allocation2 + $0x760] sm:$0xff]
    %v5873 = vld [vmem:[#allocation2 + $0x768] sm:$0xff]
    %v5874 = vld [vmem:[#allocation2 + $0x770] sm:$0xff]
    %v5875 = vld [vmem:[#allocation2 + $0x778] sm:$0xff]
    %v5876 = vld [vmem:[#allocation2 + $0x780] sm:$0xff]
    %v5877 = vld [vmem:[#allocation2 + $0x788] sm:$0xff]
    %v5878 = vld [vmem:[#allocation2 + $0x790] sm:$0xff]
    %v5879 = vld [vmem:[#allocation2 + $0x798] sm:$0xff]
    %v5880 = vld [vmem:[#allocation2 + $0x7a0] sm:$0xff]
    %v5881 = vld [vmem:[#allocation2 + $0x7a8] sm:$0xff]
    %v5882 = vld [vmem:[#allocation2 + $0x7b0] sm:$0xff]
    %v5883 = vld [vmem:[#allocation2 + $0x7b8] sm:$0xff]
    %v5884 = vld [vmem:[#allocation2 + $0x7c0] sm:$0xff]
    %v5885 = vld [vmem:[#allocation2 + $0x7c8] sm:$0xff]
    %v5886 = vld [vmem:[#allocation2 + $0x7d0] sm:$0xff]
    %v5887 = vld [vmem:[#allocation2 + $0x7d8] sm:$0xff]
    %v5888 = vld [vmem:[#allocation2 + $0x7e0] sm:$0xff]
    %v5889 = vld [vmem:[#allocation2 + $0x7e8] sm:$0xff]
    %v5890 = vld [vmem:[#allocation2 + $0x7f0] sm:$0xff]
    %v5891 = vld [vmem:[#allocation2 + $0x7f8] sm:$0xff]
    %v5892 = vld [vmem:[#allocation2 + $0x800] sm:$0xff]
    %v5893 = vld [vmem:[#allocation2 + $0x808] sm:$0xff]
    %v5894 = vld [vmem:[#allocation2 + $0x810] sm:$0xff]
    %v5895 = vld [vmem:[#allocation2 + $0x818] sm:$0xff]
    %v5896 = vld [vmem:[#allocation2 + $0x820] sm:$0xff]
    %v5897 = vld [vmem:[#allocation2 + $0x828] sm:$0xff]
    %v5898 = vld [vmem:[#allocation2 + $0x830] sm:$0xff]
    %v5899 = vld [vmem:[#allocation2 + $0x838] sm:$0xff]
    %v5900 = vld [vmem:[#allocation2 + $0x840] sm:$0xff]
    %v5901 = vld [vmem:[#allocation2 + $0x848] sm:$0xff]
    %v5902 = vld [vmem:[#allocation2 + $0x850] sm:$0xff]
    %v5903 = vld [vmem:[#allocation2 + $0x858] sm:$0xff]
    %v5904 = vld [vmem:[#allocation2 + $0x860] sm:$0xff]
    %v5905 = vld [vmem:[#allocation2 + $0x868] sm:$0xff]
    %v5906 = vld [vmem:[#allocation2 + $0x870] sm:$0xff]
    %v5907 = vld [vmem:[#allocation2 + $0x878] sm:$0xff]
    %v5908 = vld [vmem:[#allocation2 + $0x880] sm:$0xff]
    %v5909 = vld [vmem:[#allocation2 + $0x888] sm:$0xff]
    %v5910 = vld [vmem:[#allocation2 + $0x890] sm:$0xff]
    %v5911 = vld [vmem:[#allocation2 + $0x898] sm:$0xff]
    %v5912 = vld [vmem:[#allocation2 + $0x8a0] sm:$0xff]
    %v5913 = vld [vmem:[#allocation2 + $0x8a8] sm:$0xff]
    %v5914 = vld [vmem:[#allocation2 + $0x8b0] sm:$0xff]
    %v5915 = vld [vmem:[#allocation2 + $0x8b8] sm:$0xff]
    %v5916 = vld [vmem:[#allocation2 + $0x8c0] sm:$0xff]
    %v5917 = vld [vmem:[#allocation2 + $0x8c8] sm:$0xff]
    %v5918 = vld [vmem:[#allocation2 + $0x8d0] sm:$0xff]
    %v5919 = vld [vmem:[#allocation2 + $0x8d8] sm:$0xff]
    %v5920 = vld [vmem:[#allocation2 + $0x8e0] sm:$0xff]
    %v5921 = vld [vmem:[#allocation2 + $0x8e8] sm:$0xff]
    %v5922 = vld [vmem:[#allocation2 + $0x8f0] sm:$0xff]
    %v5923 = vld [vmem:[#allocation2 + $0x8f8] sm:$0xff]
    %v5924 = vld [vmem:[#allocation2 + $0x900] sm:$0xff]
    %v5925 = vld [vmem:[#allocation2 + $0x908] sm:$0xff]
    %v5926 = vld [vmem:[#allocation2 + $0x910] sm:$0xff]
    %v5927 = vld [vmem:[#allocation2 + $0x918] sm:$0xff]
    %v5928 = vld [vmem:[#allocation2 + $0x920] sm:$0xff]
    %v5929 = vld [vmem:[#allocation2 + $0x928] sm:$0xff]
    %v5930 = vld [vmem:[#allocation2 + $0x930] sm:$0xff]
    %v5931 = vld [vmem:[#allocation2 + $0x938] sm:$0xff]
    %v5932 = vld [vmem:[#allocation2 + $0x940] sm:$0xff]
    %v5933 = vld [vmem:[#allocation2 + $0x948] sm:$0xff]
    %v5934 = vld [vmem:[#allocation2 + $0x950] sm:$0xff]
    %v5935 = vld [vmem:[#allocation2 + $0x958] sm:$0xff]
    %v5936 = vld [vmem:[#allocation2 + $0x960] sm:$0xff]
    %v5937 = vld [vmem:[#allocation2 + $0x968] sm:$0xff]
    %v5938 = vld [vmem:[#allocation2 + $0x970] sm:$0xff]
    %v5939 = vld [vmem:[#allocation2 + $0x978] sm:$0xff]
    %v5940 = vld [vmem:[#allocation2 + $0x980] sm:$0xff]
    %v5941 = vld [vmem:[#allocation2 + $0x988] sm:$0xff]
    %v5942 = vld [vmem:[#allocation2 + $0x990] sm:$0xff]
    %v5943 = vld [vmem:[#allocation2 + $0x998] sm:$0xff]
    %v5944 = vld [vmem:[#allocation2 + $0x9a0] sm:$0xff]
    %v5945 = vld [vmem:[#allocation2 + $0x9a8] sm:$0xff]
    %v5946 = vld [vmem:[#allocation2 + $0x9b0] sm:$0xff]
    %v5947 = vld [vmem:[#allocation2 + $0x9b8] sm:$0xff]
    %v5948 = vld [vmem:[#allocation2 + $0x9c0] sm:$0xff]
    %v5949 = vld [vmem:[#allocation2 + $0x9c8] sm:$0xff]
    %v5950 = vld [vmem:[#allocation2 + $0x9d0] sm:$0xff]
    %v5951 = vld [vmem:[#allocation2 + $0x9d8] sm:$0xff]
    %v5952 = vld [vmem:[#allocation2 + $0x9e0] sm:$0xff]
    %v5953 = vld [vmem:[#allocation2 + $0x9e8] sm:$0xff]
    %v5954 = vld [vmem:[#allocation2 + $0x9f0] sm:$0xff]
    %v5955 = vld [vmem:[#allocation2 + $0x9f8] sm:$0xff]
    %v5956 = vld [vmem:[#allocation2 + $0xa00] sm:$0xff]
    %v5957 = vld [vmem:[#allocation2 + $0xa08] sm:$0xff]
    %v5958 = vld [vmem:[#allocation2 + $0xa10] sm:$0xff]
    %v5959 = vld [vmem:[#allocation2 + $0xa18] sm:$0xff]
    %v5960 = vld [vmem:[#allocation2 + $0xa20] sm:$0xff]
    %v5961 = vld [vmem:[#allocation2 + $0xa28] sm:$0xff]
    %v5962 = vld [vmem:[#allocation2 + $0xa30] sm:$0xff]
    %v5963 = vld [vmem:[#allocation2 + $0xa38] sm:$0xff]
    %v5964 = vld [vmem:[#allocation2 + $0xa40] sm:$0xff]
    %v5965 = vld [vmem:[#allocation2 + $0xa48] sm:$0xff]
    %v5966 = vld [vmem:[#allocation2 + $0xa50] sm:$0xff]
    %v5967 = vld [vmem:[#allocation2 + $0xa58] sm:$0xff]
    %v5968 = vld [vmem:[#allocation2 + $0xa60] sm:$0xff]
    %v5969 = vld [vmem:[#allocation2 + $0xa68] sm:$0xff]
    %v5970 = vld [vmem:[#allocation2 + $0xa70] sm:$0xff]
    %v5971 = vld [vmem:[#allocation2 + $0xa78] sm:$0xff]
    %v5972 = vld [vmem:[#allocation2 + $0xa80] sm:$0xff]
    %v5973 = vld [vmem:[#allocation2 + $0xa88] sm:$0xff]
    %v5974 = vld [vmem:[#allocation2 + $0xa90] sm:$0xff]
    %v5975 = vld [vmem:[#allocation2 + $0xa98] sm:$0xff]
    %v5976 = vld [vmem:[#allocation2 + $0xaa0] sm:$0xff]
    %v5977 = vld [vmem:[#allocation2 + $0xaa8] sm:$0xff]
    %v5978 = vld [vmem:[#allocation2 + $0xab0] sm:$0xff]
    %v5979 = vld [vmem:[#allocation2 + $0xab8] sm:$0xff]
    %v5980 = vld [vmem:[#allocation2 + $0xac0] sm:$0xff]
    %v5981 = vld [vmem:[#allocation2 + $0xac8] sm:$0xff]
    %v5982 = vld [vmem:[#allocation2 + $0xad0] sm:$0xff]
    %v5983 = vld [vmem:[#allocation2 + $0xad8] sm:$0xff]
    %v5984 = vld [vmem:[#allocation2 + $0xae0] sm:$0xff]
    %v5985 = vld [vmem:[#allocation2 + $0xae8] sm:$0xff]
    %v5986 = vld [vmem:[#allocation2 + $0xaf0] sm:$0xff]
    %v5987 = vld [vmem:[#allocation2 + $0xaf8] sm:$0xff]
    %v5988 = vld [vmem:[#allocation2 + $0xb00] sm:$0xff]
    %v5989 = vld [vmem:[#allocation2 + $0xb08] sm:$0xff]
    %v5990 = vld [vmem:[#allocation2 + $0xb10] sm:$0xff]
    %v5991 = vld [vmem:[#allocation2 + $0xb18] sm:$0xff]
    %v5992 = vld [vmem:[#allocation2 + $0xb20] sm:$0xff]
    %v5993 = vld [vmem:[#allocation2 + $0xb28] sm:$0xff]
    %v5994 = vld [vmem:[#allocation2 + $0xb30] sm:$0xff]
    %v5995 = vld [vmem:[#allocation2 + $0xb38] sm:$0xff]
    %v5996 = vld [vmem:[#allocation2 + $0xb40] sm:$0xff]
    %v5997 = vld [vmem:[#allocation2 + $0xb48] sm:$0xff]
    %v5998 = vld [vmem:[#allocation2 + $0xb50] sm:$0xff]
    %v5999 = vld [vmem:[#allocation2 + $0xb58] sm:$0xff]
    %v6000 = vld [vmem:[#allocation2 + $0xb60] sm:$0xff]
    %v6001 = vld [vmem:[#allocation2 + $0xb68] sm:$0xff]
    %v6002 = vld [vmem:[#allocation2 + $0xb70] sm:$0xff]
    %v6003 = vld [vmem:[#allocation2 + $0xb78] sm:$0xff]
    %v6004 = vld [vmem:[#allocation2 + $0xb80] sm:$0xff]
    %v6005 = vld [vmem:[#allocation2 + $0xb88] sm:$0xff]
    %v6006 = vld [vmem:[#allocation2 + $0xb90] sm:$0xff]
    %v6007 = vld [vmem:[#allocation2 + $0xb98] sm:$0xff]
    %v6008 = vld [vmem:[#allocation2 + $0xba0] sm:$0xff]
    %v6009 = vld [vmem:[#allocation2 + $0xba8] sm:$0xff]
    %v6010 = vld [vmem:[#allocation2 + $0xbb0] sm:$0xff]
    %v6011 = vld [vmem:[#allocation2 + $0xbb8] sm:$0xff]
    %v6012 = vld [vmem:[#allocation2 + $0xbc0] sm:$0xff]
    %v6013 = vld [vmem:[#allocation2 + $0xbc8] sm:$0xff]
    %v6014 = vld [vmem:[#allocation2 + $0xbd0] sm:$0xff]
    %v6015 = vld [vmem:[#allocation2 + $0xbd8] sm:$0xff]
    %v6016 = vld [vmem:[#allocation2 + $0xbe0] sm:$0xff]
    %v6017 = vld [vmem:[#allocation2 + $0xbe8] sm:$0xff]
    %v6018 = vld [vmem:[#allocation2 + $0xbf0] sm:$0xff]
    %v6019 = vld [vmem:[#allocation2 + $0xbf8] sm:$0xff]
    %v6020 = vld [vmem:[#allocation2 + $0xc00] sm:$0xff]
    %v6021 = vld [vmem:[#allocation2 + $0xc08] sm:$0xff]
    %v6022 = vld [vmem:[#allocation2 + $0xc10] sm:$0xff]
    %v6023 = vld [vmem:[#allocation2 + $0xc18] sm:$0xff]
    %v6024 = vld [vmem:[#allocation2 + $0xc20] sm:$0xff]
    %v6025 = vld [vmem:[#allocation2 + $0xc28] sm:$0xff]
    %v6026 = vld [vmem:[#allocation2 + $0xc30] sm:$0xff]
    %v6027 = vld [vmem:[#allocation2 + $0xc38] sm:$0xff]
    %v6028 = vld [vmem:[#allocation2 + $0xc40] sm:$0xff]
    %v6029 = vld [vmem:[#allocation2 + $0xc48] sm:$0xff]
    %v6030 = vld [vmem:[#allocation2 + $0xc50] sm:$0xff]
    %v6031 = vld [vmem:[#allocation2 + $0xc58] sm:$0xff]
    %v6032 = vld [vmem:[#allocation2 + $0xc60] sm:$0xff]
    %v6033 = vld [vmem:[#allocation2 + $0xc68] sm:$0xff]
    %v6034 = vld [vmem:[#allocation2 + $0xc70] sm:$0xff]
    %v6035 = vld [vmem:[#allocation2 + $0xc78] sm:$0xff]
    %v6036 = vld [vmem:[#allocation2 + $0xc80] sm:$0xff]
    %v6037 = vld [vmem:[#allocation2 + $0xc88] sm:$0xff]
    %v6038 = vld [vmem:[#allocation2 + $0xc90] sm:$0xff]
    %v6039 = vld [vmem:[#allocation2 + $0xc98] sm:$0xff]
    %v6040 = vld [vmem:[#allocation2 + $0xca0] sm:$0xff]
    %v6041 = vld [vmem:[#allocation2 + $0xca8] sm:$0xff]
    %v6042 = vld [vmem:[#allocation2 + $0xcb0] sm:$0xff]
    %v6043 = vld [vmem:[#allocation2 + $0xcb8] sm:$0xff]
    %v6044 = vld [vmem:[#allocation2 + $0xcc0] sm:$0xff]
    %v6045 = vld [vmem:[#allocation2 + $0xcc8] sm:$0xff]
    %v6046 = vld [vmem:[#allocation2 + $0xcd0] sm:$0xff]
    %v6047 = vld [vmem:[#allocation2 + $0xcd8] sm:$0xff]
    %v6048 = vld [vmem:[#allocation2 + $0xce0] sm:$0xff]
    %v6049 = vld [vmem:[#allocation2 + $0xce8] sm:$0xff]
    %v6050 = vld [vmem:[#allocation2 + $0xcf0] sm:$0xff]
    %v6051 = vld [vmem:[#allocation2 + $0xcf8] sm:$0xff]
    %v6052 = vld [vmem:[#allocation2 + $0xd00] sm:$0xff]
    %v6053 = vld [vmem:[#allocation2 + $0xd08] sm:$0xff]
    %v6054 = vld [vmem:[#allocation2 + $0xd10] sm:$0xff]
    %v6055 = vld [vmem:[#allocation2 + $0xd18] sm:$0xff]
    %v6056 = vld [vmem:[#allocation2 + $0xd20] sm:$0xff]
    %v6057 = vld [vmem:[#allocation2 + $0xd28] sm:$0xff]
    %v6058 = vld [vmem:[#allocation2 + $0xd30] sm:$0xff]
    %v6059 = vld [vmem:[#allocation2 + $0xd38] sm:$0xff]
    %v6060 = vld [vmem:[#allocation2 + $0xd40] sm:$0xff]
    %v6061 = vld [vmem:[#allocation2 + $0xd48] sm:$0xff]
    %v6062 = vld [vmem:[#allocation2 + $0xd50] sm:$0xff]
    %v6063 = vld [vmem:[#allocation2 + $0xd58] sm:$0xff]
    %v6064 = vld [vmem:[#allocation2 + $0xd60] sm:$0xff]
    %v6065 = vld [vmem:[#allocation2 + $0xd68] sm:$0xff]
    %v6066 = vld [vmem:[#allocation2 + $0xd70] sm:$0xff]
    %v6067 = vld [vmem:[#allocation2 + $0xd78] sm:$0xff]
    %v6068 = vld [vmem:[#allocation2 + $0xd80] sm:$0xff]
    %v6069 = vld [vmem:[#allocation2 + $0xd88] sm:$0xff]
    %v6070 = vld [vmem:[#allocation2 + $0xd90] sm:$0xff]
    %v6071 = vld [vmem:[#allocation2 + $0xd98] sm:$0xff]
    %v6072 = vld [vmem:[#allocation2 + $0xda0] sm:$0xff]
    %v6073 = vld [vmem:[#allocation2 + $0xda8] sm:$0xff]
    %v6074 = vld [vmem:[#allocation2 + $0xdb0] sm:$0xff]
    %v6075 = vld [vmem:[#allocation2 + $0xdb8] sm:$0xff]
    %v6076 = vld [vmem:[#allocation2 + $0xdc0] sm:$0xff]
    %v6077 = vld [vmem:[#allocation2 + $0xdc8] sm:$0xff]
    %v6078 = vld [vmem:[#allocation2 + $0xdd0] sm:$0xff]
    %v6079 = vld [vmem:[#allocation2 + $0xdd8] sm:$0xff]
    %v6080 = vld [vmem:[#allocation2 + $0xde0] sm:$0xff]
    %v6081 = vld [vmem:[#allocation2 + $0xde8] sm:$0xff]
    %v6082 = vld [vmem:[#allocation2 + $0xdf0] sm:$0xff]
    %v6083 = vld [vmem:[#allocation2 + $0xdf8] sm:$0xff]
    %v6084 = vld [vmem:[#allocation2 + $0xe00] sm:$0xff]
    %v6085 = vld [vmem:[#allocation2 + $0xe08] sm:$0xff]
    %v6086 = vld [vmem:[#allocation2 + $0xe10] sm:$0xff]
    %v6087 = vld [vmem:[#allocation2 + $0xe18] sm:$0xff]
    %v6088 = vld [vmem:[#allocation2 + $0xe20] sm:$0xff]
    %v6089 = vld [vmem:[#allocation2 + $0xe28] sm:$0xff]
    %v6090 = vld [vmem:[#allocation2 + $0xe30] sm:$0xff]
    %v6091 = vld [vmem:[#allocation2 + $0xe38] sm:$0xff]
    %v6092 = vld [vmem:[#allocation2 + $0xe40] sm:$0xff]
    %v6093 = vld [vmem:[#allocation2 + $0xe48] sm:$0xff]
    %v6094 = vld [vmem:[#allocation2 + $0xe50] sm:$0xff]
    %v6095 = vld [vmem:[#allocation2 + $0xe58] sm:$0xff]
    %v6096 = vld [vmem:[#allocation2 + $0xe60] sm:$0xff]
    %v6097 = vld [vmem:[#allocation2 + $0xe68] sm:$0xff]
    %v6098 = vld [vmem:[#allocation2 + $0xe70] sm:$0xff]
    %v6099 = vld [vmem:[#allocation2 + $0xe78] sm:$0xff]
    %v6100 = vld [vmem:[#allocation2 + $0xe80] sm:$0xff]
    %v6101 = vld [vmem:[#allocation2 + $0xe88] sm:$0xff]
    %v6102 = vld [vmem:[#allocation2 + $0xe90] sm:$0xff]
    %v6103 = vld [vmem:[#allocation2 + $0xe98] sm:$0xff]
    %v6104 = vld [vmem:[#allocation2 + $0xea0] sm:$0xff]
    %v6105 = vld [vmem:[#allocation2 + $0xea8] sm:$0xff]
    %v6106 = vld [vmem:[#allocation2 + $0xeb0] sm:$0xff]
    %v6107 = vld [vmem:[#allocation2 + $0xeb8] sm:$0xff]
    %v6108 = vld [vmem:[#allocation2 + $0xec0] sm:$0xff]
    %v6109 = vld [vmem:[#allocation2 + $0xec8] sm:$0xff]
    %v6110 = vld [vmem:[#allocation2 + $0xed0] sm:$0xff]
    %v6111 = vld [vmem:[#allocation2 + $0xed8] sm:$0xff]
    %v6112 = vld [vmem:[#allocation2 + $0xee0] sm:$0xff]
    %v6113 = vld [vmem:[#allocation2 + $0xee8] sm:$0xff]
    %v6114 = vld [vmem:[#allocation2 + $0xef0] sm:$0xff]
    %v6115 = vld [vmem:[#allocation2 + $0xef8] sm:$0xff]
    %v6116 = vld [vmem:[#allocation2 + $0xf00] sm:$0xff]
    %v6117 = vld [vmem:[#allocation2 + $0xf08] sm:$0xff]
    %v6118 = vld [vmem:[#allocation2 + $0xf10] sm:$0xff]
    %v6119 = vld [vmem:[#allocation2 + $0xf18] sm:$0xff]
    %v6120 = vld [vmem:[#allocation2 + $0xf20] sm:$0xff]
    %v6121 = vld [vmem:[#allocation2 + $0xf28] sm:$0xff]
    %v6122 = vld [vmem:[#allocation2 + $0xf30] sm:$0xff]
    %v6123 = vld [vmem:[#allocation2 + $0xf38] sm:$0xff]
    %v6124 = vld [vmem:[#allocation2 + $0xf40] sm:$0xff]
    %v6125 = vld [vmem:[#allocation2 + $0xf48] sm:$0xff]
    %v6126 = vld [vmem:[#allocation2 + $0xf50] sm:$0xff]
    %v6127 = vld [vmem:[#allocation2 + $0xf58] sm:$0xff]
    %v6128 = vld [vmem:[#allocation2 + $0xf60] sm:$0xff]
    %v6129 = vld [vmem:[#allocation2 + $0xf68] sm:$0xff]
    %v6130 = vld [vmem:[#allocation2 + $0xf70] sm:$0xff]
    %v6131 = vld [vmem:[#allocation2 + $0xf78] sm:$0xff]
    %v6132 = vld [vmem:[#allocation2 + $0xf80] sm:$0xff]
    %v6133 = vld [vmem:[#allocation2 + $0xf88] sm:$0xff]
    %v6134 = vld [vmem:[#allocation2 + $0xf90] sm:$0xff]
    %v6135 = vld [vmem:[#allocation2 + $0xf98] sm:$0xff]
    %v6136 = vld [vmem:[#allocation2 + $0xfa0] sm:$0xff]
    %v6137 = vld [vmem:[#allocation2 + $0xfa8] sm:$0xff]
    %v6138 = vld [vmem:[#allocation2 + $0xfb0] sm:$0xff]
    %v6139 = vld [vmem:[#allocation2 + $0xfb8] sm:$0xff]
    %v6140 = vld [vmem:[#allocation2 + $0xfc0] sm:$0xff]
    %v6141 = vld [vmem:[#allocation2 + $0xfc8] sm:$0xff]
    %v6142 = vld [vmem:[#allocation2 + $0xfd0] sm:$0xff]
    %v6143 = vld [vmem:[#allocation2 + $0xfd8] sm:$0xff]
    %v6144 = vld [vmem:[#allocation2 + $0xfe0] sm:$0xff]
    %v6145 = vld [vmem:[#allocation2 + $0xfe8] sm:$0xff]
    %v6146 = vld [vmem:[#allocation2 + $0xff0] sm:$0xff]
    %v6147 = vld [vmem:[#allocation2 + $0xff8] sm:$0xff]
    %v6148 = vld [vmem:[#allocation2 + $0x1000] sm:$0xff]
    %v6149 = vld [vmem:[#allocation2 + $0x1008] sm:$0xff]
    %v6150 = vld [vmem:[#allocation2 + $0x1010] sm:$0xff]
    %v6151 = vld [vmem:[#allocation2 + $0x1018] sm:$0xff]
    %v6152 = vld [vmem:[#allocation2 + $0x1020] sm:$0xff]
    %v6153 = vld [vmem:[#allocation2 + $0x1028] sm:$0xff]
    %v6154 = vld [vmem:[#allocation2 + $0x1030] sm:$0xff]
    %v6155 = vld [vmem:[#allocation2 + $0x1038] sm:$0xff]
    %v6156 = vld [vmem:[#allocation2 + $0x1040] sm:$0xff]
    %v6157 = vld [vmem:[#allocation2 + $0x1048] sm:$0xff]
    %v6158 = vld [vmem:[#allocation2 + $0x1050] sm:$0xff]
    %v6159 = vld [vmem:[#allocation2 + $0x1058] sm:$0xff]
    %v6160 = vld [vmem:[#allocation2 + $0x1060] sm:$0xff]
    %v6161 = vld [vmem:[#allocation2 + $0x1068] sm:$0xff]
    %v6162 = vld [vmem:[#allocation2 + $0x1070] sm:$0xff]
    %v6163 = vld [vmem:[#allocation2 + $0x1078] sm:$0xff]
    %v6164 = vld [vmem:[#allocation2 + $0x1080] sm:$0xff]
    %v6165 = vld [vmem:[#allocation2 + $0x1088] sm:$0xff]
    %v6166 = vld [vmem:[#allocation2 + $0x1090] sm:$0xff]
    %v6167 = vld [vmem:[#allocation2 + $0x1098] sm:$0xff]
    %v6168 = vld [vmem:[#allocation2 + $0x10a0] sm:$0xff]
    %v6169 = vld [vmem:[#allocation2 + $0x10a8] sm:$0xff]
    %v6170 = vld [vmem:[#allocation2 + $0x10b0] sm:$0xff]
    %v6171 = vld [vmem:[#allocation2 + $0x10b8] sm:$0xff]
    %v6172 = vld [vmem:[#allocation2 + $0x10c0] sm:$0xff]
    %v6173 = vld [vmem:[#allocation2 + $0x10c8] sm:$0xff]
    %v6174 = vld [vmem:[#allocation2 + $0x10d0] sm:$0xff]
    %v6175 = vld [vmem:[#allocation2 + $0x10d8] sm:$0xff]
    %v6176 = vld [vmem:[#allocation2 + $0x10e0] sm:$0xff]
    %v6177 = vld [vmem:[#allocation2 + $0x10e8] sm:$0xff]
    %v6178 = vld [vmem:[#allocation2 + $0x10f0] sm:$0xff]
    %v6179 = vld [vmem:[#allocation2 + $0x10f8] sm:$0xff]
    %v6180 = vld [vmem:[#allocation2 + $0x1100] sm:$0xff]
    %v6181 = vld [vmem:[#allocation2 + $0x1108] sm:$0xff]
    %v6182 = vld [vmem:[#allocation2 + $0x1110] sm:$0xff]
    %v6183 = vld [vmem:[#allocation2 + $0x1118] sm:$0xff]
    %v6184 = vld [vmem:[#allocation2 + $0x1120] sm:$0xff]
    %v6185 = vld [vmem:[#allocation2 + $0x1128] sm:$0xff]
    %v6186 = vld [vmem:[#allocation2 + $0x1130] sm:$0xff]
    %v6187 = vld [vmem:[#allocation2 + $0x1138] sm:$0xff]
    %v6188 = vld [vmem:[#allocation2 + $0x1140] sm:$0xff]
    %v6189 = vld [vmem:[#allocation2 + $0x1148] sm:$0xff]
    %v6190 = vld [vmem:[#allocation2 + $0x1150] sm:$0xff]
    %v6191 = vld [vmem:[#allocation2 + $0x1158] sm:$0xff]
    %v6192 = vld [vmem:[#allocation2 + $0x1160] sm:$0xff]
    %v6193 = vld [vmem:[#allocation2 + $0x1168] sm:$0xff]
    %v6194 = vld [vmem:[#allocation2 + $0x1170] sm:$0xff]
    %v6195 = vld [vmem:[#allocation2 + $0x1178] sm:$0xff]
    %v6196 = vld [vmem:[#allocation2 + $0x1180] sm:$0xff]
    %v6197 = vld [vmem:[#allocation2 + $0x1188] sm:$0xff]
    %v6198 = vld [vmem:[#allocation2 + $0x1190] sm:$0xff]
    %v6199 = vld [vmem:[#allocation2 + $0x1198] sm:$0xff]
    %v6200 = vld [vmem:[#allocation2 + $0x11a0] sm:$0xff]
    %v6201 = vld [vmem:[#allocation2 + $0x11a8] sm:$0xff]
    %v6202 = vld [vmem:[#allocation2 + $0x11b0] sm:$0xff]
    %v6203 = vld [vmem:[#allocation2 + $0x11b8] sm:$0xff]
    %v6204 = vld [vmem:[#allocation2 + $0x11c0] sm:$0xff]
    %v6205 = vld [vmem:[#allocation2 + $0x11c8] sm:$0xff]
    %v6206 = vld [vmem:[#allocation2 + $0x11d0] sm:$0xff]
    %v6207 = vld [vmem:[#allocation2 + $0x11d8] sm:$0xff]
    %v6208 = vld [vmem:[#allocation2 + $0x11e0] sm:$0xff]
    %v6209 = vld [vmem:[#allocation2 + $0x11e8] sm:$0xff]
    %v6210 = vld [vmem:[#allocation2 + $0x11f0] sm:$0xff]
    %v6211 = vld [vmem:[#allocation2 + $0x11f8] sm:$0xff]
    %v6212 = vld [vmem:[#allocation7] sm:$0xff]
    %v6213 = vld [vmem:[#allocation7 + $0x8] sm:$0xff]
    %v6214 = vld [vmem:[#allocation7 + $0x10] sm:$0xff]
    %v6215 = vld [vmem:[#allocation7 + $0x18] sm:$0xff]
    %v6216 = vld [vmem:[#allocation7 + $0x20] sm:$0xff]
    %v6217 = vld [vmem:[#allocation7 + $0x28] sm:$0xff]
    %v6218 = vld [vmem:[#allocation7 + $0x30] sm:$0xff]
    %v6219 = vld [vmem:[#allocation7 + $0x38] sm:$0xff]
    %v6220 = vld [vmem:[#allocation7 + $0x40] sm:$0xff]
    %v6221 = vld [vmem:[#allocation7 + $0x48] sm:$0xff]
    %v6222 = vld [vmem:[#allocation7 + $0x50] sm:$0xff]
    %v6223 = vld [vmem:[#allocation7 + $0x58] sm:$0xff]
    %v6224 = vld [vmem:[#allocation7 + $0x60] sm:$0xff]
    %v6225 = vld [vmem:[#allocation7 + $0x68] sm:$0xff]
    %v6226 = vld [vmem:[#allocation7 + $0x70] sm:$0xff]
    %v6227 = vld [vmem:[#allocation7 + $0x78] sm:$0xff]
    %v6228 = vld [vmem:[#allocation7 + $0x80] sm:$0xff]
    %v6229 = vld [vmem:[#allocation7 + $0x88] sm:$0xff]
    %v6230 = vld [vmem:[#allocation7 + $0x90] sm:$0xff]
    %v6231 = vld [vmem:[#allocation7 + $0x98] sm:$0xff]
    %v6232 = vld [vmem:[#allocation7 + $0xa0] sm:$0xff]
    %v6233 = vld [vmem:[#allocation7 + $0xa8] sm:$0xff]
    %v6234 = vld [vmem:[#allocation7 + $0xb0] sm:$0xff]
    %v6235 = vld [vmem:[#allocation7 + $0xb8] sm:$0xff]
    %v6236 = vld [vmem:[#allocation7 + $0xc0] sm:$0xff]
    %v6237 = vld [vmem:[#allocation7 + $0xc8] sm:$0xff]
    %v6238 = vld [vmem:[#allocation7 + $0xd0] sm:$0xff]
    %v6239 = vld [vmem:[#allocation7 + $0xd8] sm:$0xff]
    %v6240 = vld [vmem:[#allocation7 + $0xe0] sm:$0xff]
    %v6241 = vld [vmem:[#allocation7 + $0xe8] sm:$0xff]
    %v6242 = vld [vmem:[#allocation7 + $0xf0] sm:$0xff]
    %v6243 = vld [vmem:[#allocation7 + $0xf8] sm:$0xff]
    %v6244 = vld [vmem:[#allocation7 + $0x100] sm:$0xff]
    %v6245 = vld [vmem:[#allocation7 + $0x108] sm:$0xff]
    %v6246 = vld [vmem:[#allocation7 + $0x110] sm:$0xff]
    %v6247 = vld [vmem:[#allocation7 + $0x118] sm:$0xff]
    %v6248 = vld [vmem:[#allocation7 + $0x120] sm:$0xff]
    %v6249 = vld [vmem:[#allocation7 + $0x128] sm:$0xff]
    %v6250 = vld [vmem:[#allocation7 + $0x130] sm:$0xff]
    %v6251 = vld [vmem:[#allocation7 + $0x138] sm:$0xff]
    %v6252 = vld [vmem:[#allocation7 + $0x140] sm:$0xff]
    %v6253 = vld [vmem:[#allocation7 + $0x148] sm:$0xff]
    %v6254 = vld [vmem:[#allocation7 + $0x150] sm:$0xff]
    %v6255 = vld [vmem:[#allocation7 + $0x158] sm:$0xff]
    %v6256 = vld [vmem:[#allocation7 + $0x160] sm:$0xff]
    %v6257 = vld [vmem:[#allocation7 + $0x168] sm:$0xff]
    %v6258 = vld [vmem:[#allocation7 + $0x170] sm:$0xff]
    %v6259 = vld [vmem:[#allocation7 + $0x178] sm:$0xff]
    %v6260 = vld [vmem:[#allocation7 + $0x180] sm:$0xff]
    %v6261 = vld [vmem:[#allocation7 + $0x188] sm:$0xff]
    %v6262 = vld [vmem:[#allocation7 + $0x190] sm:$0xff]
    %v6263 = vld [vmem:[#allocation7 + $0x198] sm:$0xff]
    %v6264 = vld [vmem:[#allocation7 + $0x1a0] sm:$0xff]
    %v6265 = vld [vmem:[#allocation7 + $0x1a8] sm:$0xff]
    %v6266 = vld [vmem:[#allocation7 + $0x1b0] sm:$0xff]
    %v6267 = vld [vmem:[#allocation7 + $0x1b8] sm:$0xff]
    %v6268 = vld [vmem:[#allocation7 + $0x1c0] sm:$0xff]
    %v6269 = vld [vmem:[#allocation7 + $0x1c8] sm:$0xff]
    %v6270 = vld [vmem:[#allocation7 + $0x1d0] sm:$0xff]
    %v6271 = vld [vmem:[#allocation7 + $0x1d8] sm:$0xff]
    %v6272 = vld [vmem:[#allocation7 + $0x1e0] sm:$0xff]
    %v6273 = vld [vmem:[#allocation7 + $0x1e8] sm:$0xff]
    %v6274 = vld [vmem:[#allocation7 + $0x1f0] sm:$0xff]
    %v6275 = vld [vmem:[#allocation7 + $0x1f8] sm:$0xff]
    %v6276 = vld [vmem:[#allocation7 + $0x200] sm:$0xff]
    %v6277 = vld [vmem:[#allocation7 + $0x208] sm:$0xff]
    %v6278 = vld [vmem:[#allocation7 + $0x210] sm:$0xff]
    %v6279 = vld [vmem:[#allocation7 + $0x218] sm:$0xff]
    %v6280 = vld [vmem:[#allocation7 + $0x220] sm:$0xff]
    %v6281 = vld [vmem:[#allocation7 + $0x228] sm:$0xff]
    %v6282 = vld [vmem:[#allocation7 + $0x230] sm:$0xff]
    %v6283 = vld [vmem:[#allocation7 + $0x238] sm:$0xff]
    %v6284 = vld [vmem:[#allocation7 + $0x240] sm:$0xff]
    %v6285 = vld [vmem:[#allocation7 + $0x248] sm:$0xff]
    %v6286 = vld [vmem:[#allocation7 + $0x250] sm:$0xff]
    %v6287 = vld [vmem:[#allocation7 + $0x258] sm:$0xff]
    %v6288 = vld [vmem:[#allocation7 + $0x260] sm:$0xff]
    %v6289 = vld [vmem:[#allocation7 + $0x268] sm:$0xff]
    %v6290 = vld [vmem:[#allocation7 + $0x270] sm:$0xff]
    %v6291 = vld [vmem:[#allocation7 + $0x278] sm:$0xff]
    %v6292 = vld [vmem:[#allocation7 + $0x280] sm:$0xff]
    %v6293 = vld [vmem:[#allocation7 + $0x288] sm:$0xff]
    %v6294 = vld [vmem:[#allocation7 + $0x290] sm:$0xff]
    %v6295 = vld [vmem:[#allocation7 + $0x298] sm:$0xff]
    %v6296 = vld [vmem:[#allocation7 + $0x2a0] sm:$0xff]
    %v6297 = vld [vmem:[#allocation7 + $0x2a8] sm:$0xff]
    %v6298 = vld [vmem:[#allocation7 + $0x2b0] sm:$0xff]
    %v6299 = vld [vmem:[#allocation7 + $0x2b8] sm:$0xff]
    %v6300 = vld [vmem:[#allocation7 + $0x2c0] sm:$0xff]
    %v6301 = vld [vmem:[#allocation7 + $0x2c8] sm:$0xff]
    %v6302 = vld [vmem:[#allocation7 + $0x2d0] sm:$0xff]
    %v6303 = vld [vmem:[#allocation7 + $0x2d8] sm:$0xff]
    %v6304 = vld [vmem:[#allocation7 + $0x2e0] sm:$0xff]
    %v6305 = vld [vmem:[#allocation7 + $0x2e8] sm:$0xff]
    %v6306 = vld [vmem:[#allocation7 + $0x2f0] sm:$0xff]
    %v6307 = vld [vmem:[#allocation7 + $0x2f8] sm:$0xff]
    %v6308 = vld [vmem:[#allocation7 + $0x300] sm:$0xff]
    %v6309 = vld [vmem:[#allocation7 + $0x308] sm:$0xff]
    %v6310 = vld [vmem:[#allocation7 + $0x310] sm:$0xff]
    %v6311 = vld [vmem:[#allocation7 + $0x318] sm:$0xff]
    %v6312 = vld [vmem:[#allocation7 + $0x320] sm:$0xff]
    %v6313 = vld [vmem:[#allocation7 + $0x328] sm:$0xff]
    %v6314 = vld [vmem:[#allocation7 + $0x330] sm:$0xff]
    %v6315 = vld [vmem:[#allocation7 + $0x338] sm:$0xff]
    %v6316 = vld [vmem:[#allocation7 + $0x340] sm:$0xff]
    %v6317 = vld [vmem:[#allocation7 + $0x348] sm:$0xff]
    %v6318 = vld [vmem:[#allocation7 + $0x350] sm:$0xff]
    %v6319 = vld [vmem:[#allocation7 + $0x358] sm:$0xff]
    %v6320 = vld [vmem:[#allocation7 + $0x360] sm:$0xff]
    %v6321 = vld [vmem:[#allocation7 + $0x368] sm:$0xff]
    %v6322 = vld [vmem:[#allocation7 + $0x370] sm:$0xff]
    %v6323 = vld [vmem:[#allocation7 + $0x378] sm:$0xff]
    %v6324 = vld [vmem:[#allocation7 + $0x380] sm:$0xff]
    %v6325 = vld [vmem:[#allocation7 + $0x388] sm:$0xff]
    %v6326 = vld [vmem:[#allocation7 + $0x390] sm:$0xff]
    %v6327 = vld [vmem:[#allocation7 + $0x398] sm:$0xff]
    %v6328 = vld [vmem:[#allocation7 + $0x3a0] sm:$0xff]
    %v6329 = vld [vmem:[#allocation7 + $0x3a8] sm:$0xff]
    %v6330 = vld [vmem:[#allocation7 + $0x3b0] sm:$0xff]
    %v6331 = vld [vmem:[#allocation7 + $0x3b8] sm:$0xff]
    %v6332 = vld [vmem:[#allocation7 + $0x3c0] sm:$0xff]
    %v6333 = vld [vmem:[#allocation7 + $0x3c8] sm:$0xff]
    %v6334 = vld [vmem:[#allocation7 + $0x3d0] sm:$0xff]
    %v6335 = vld [vmem:[#allocation7 + $0x3d8] sm:$0xff]
    %v6336 = vld [vmem:[#allocation7 + $0x3e0] sm:$0xff]
    %v6337 = vld [vmem:[#allocation7 + $0x3e8] sm:$0xff]
    %v6338 = vld [vmem:[#allocation7 + $0x3f0] sm:$0xff]
    %v6339 = vld [vmem:[#allocation7 + $0x3f8] sm:$0xff]
    %v6340 = vld [vmem:[#allocation7 + $0x400] sm:$0xff]
    %v6341 = vld [vmem:[#allocation7 + $0x408] sm:$0xff]
    %v6342 = vld [vmem:[#allocation7 + $0x410] sm:$0xff]
    %v6343 = vld [vmem:[#allocation7 + $0x418] sm:$0xff]
    %v6344 = vld [vmem:[#allocation7 + $0x420] sm:$0xff]
    %v6345 = vld [vmem:[#allocation7 + $0x428] sm:$0xff]
    %v6346 = vld [vmem:[#allocation7 + $0x430] sm:$0xff]
    %v6347 = vld [vmem:[#allocation7 + $0x438] sm:$0xff]
    %v6348 = vld [vmem:[#allocation7 + $0x440] sm:$0xff]
    %v6349 = vld [vmem:[#allocation7 + $0x448] sm:$0xff]
    %v6350 = vld [vmem:[#allocation7 + $0x450] sm:$0xff]
    %v6351 = vld [vmem:[#allocation7 + $0x458] sm:$0xff]
    %v6352 = vld [vmem:[#allocation7 + $0x460] sm:$0xff]
    %v6353 = vld [vmem:[#allocation7 + $0x468] sm:$0xff]
    %v6354 = vld [vmem:[#allocation7 + $0x470] sm:$0xff]
    %v6355 = vld [vmem:[#allocation7 + $0x478] sm:$0xff]
    %6356 = vmatprep.subr.mxu0 0.0
    %6357 = vmatpush1.msra.mxu0 %v6212
    %6358 = vmatprep.subr.mxu0 0.0
    %6359 = vmatpush1.msra.mxu0 %v6213
    %6360 = vmatprep.subr.mxu0 0.0
    %6361 = vmatpush1.msra.mxu0 %v6214
    %6362 = vmatprep.subr.mxu0 0.0
    %6363 = vmatpush1.msra.mxu0 %v6215
    %6364 = vmatprep.subr.mxu0 0.0
    %6365 = vmatpush1.msra.mxu0 %v6216
    %6366 = vmatprep.subr.mxu0 0.0
    %6367 = vmatpush1.msra.mxu0 %v6217
    %6368 = vmatprep.subr.mxu0 0.0
    %6369 = vmatpush1.msra.mxu0 %v6218
    %6370 = vmatprep.subr.mxu0 0.0
    %6371 = vmatpush1.msra.mxu0 %v6219
    %6372 = vmatprep.subr.mxu0 0.0
    %6373 = vmatpush1.msra.mxu0 %v6220
    %6374 = vmatprep.subr.mxu0 0.0
    %6375 = vmatpush1.msra.mxu0 %v6221
    %6376 = vmatprep.subr.mxu0 0.0
    %6377 = vmatpush1.msra.mxu0 %v6222
    %6378 = vmatprep.subr.mxu0 0.0
    %6379 = vmatpush1.msra.mxu0 %v6223
    %6380 = vmatprep.subr.mxu0 0.0
    %6381 = vmatpush1.msra.mxu0 %v6224
    %6382 = vmatprep.subr.mxu0 0.0
    %6383 = vmatpush1.msra.mxu0 %v6225
    %6384 = vmatprep.subr.mxu0 0.0
    %6385 = vmatpush1.msra.mxu0 %v6226
    %6386 = vmatprep.subr.mxu0 0.0
    %6387 = vmatpush1.msra.mxu0 %v6227
    %6388 = vmatprep.subr.mxu0 0.0
    %6389 = vmatpush1.msra.mxu0 %v6228
    %6390 = vmatprep.subr.mxu0 0.0
    %6391 = vmatpush1.msra.mxu0 %v6229
    %6392 = vmatprep.subr.mxu0 0.0
    %6393 = vmatpush1.msra.mxu0 %v6230
    %6394 = vmatprep.subr.mxu0 0.0
    %6395 = vmatpush1.msra.mxu0 %v6231
    %6396 = vmatprep.subr.mxu0 0.0
    %6397 = vmatpush1.msra.mxu0 %v6232
    %6398 = vmatprep.subr.mxu0 0.0
    %6399 = vmatpush1.msra.mxu0 %v6233
    %6400 = vmatprep.subr.mxu0 0.0
    %6401 = vmatpush1.msra.mxu0 %v6234
    %6402 = vmatprep.subr.mxu0 0.0
    %6403 = vmatpush1.msra.mxu0 %v6235
    %6404 = vmatprep.subr.mxu0 0.0
    %6405 = vmatpush1.msra.mxu0 %v6236
    %6406 = vmatprep.subr.mxu0 0.0
    %6407 = vmatpush1.msra.mxu0 %v6237
    %6408 = vmatprep.subr.mxu0 0.0
    %6409 = vmatpush1.msra.mxu0 %v6238
    %6410 = vmatprep.subr.mxu0 0.0
    %6411 = vmatpush1.msra.mxu0 %v6239
    %6412 = vmatprep.subr.mxu0 0.0
    %6413 = vmatpush1.msra.mxu0 %v6240
    %6414 = vmatprep.subr.mxu0 0.0
    %6415 = vmatpush1.msra.mxu0 %v6241
    %6416 = vmatprep.subr.mxu0 0.0
    %6417 = vmatpush1.msra.mxu0 %v6242
    %6418 = vmatprep.subr.mxu0 0.0
    %6419 = vmatpush1.msra.mxu0 %v6243
    %6420 = vmatprep.mubr.f32.mxu0 %v5637
    %6421 = vmatmul.mubr.f32.gmra.mrb[0].mxu0 %v5636
    %v6422 = vpop.f32.mrb[0].mxu0
    %v6423 = vadd.f32 0.0, %v6422
    %v6424 = vpop.f32.mrb[0].mxu0
    %6425 = vmatprep.mubr.f32.mxu0 %v5646
    %6426 = vmatmul.mubr.f32.gmra.mrb[0].mxu0 %v5645
    %v6427 = vpop.f32.mrb[0].mxu0
    %v6428 = vadd.f32 0.0, %v6427
    %v6429 = vpop.f32.mrb[0].mxu0
    %6430 = vmatprep.mubr.f32.mxu0 %v5655
    %6431 = vmatmul.mubr.f32.gmra.mrb[0].mxu0 %v5654
    %v6432 = vpop.f32.mrb[0].mxu0
    %v6433 = vadd.f32 0.0, %v6432
    %v6434 = vpop.f32.mrb[0].mxu0
    %6435 = vmatprep.mubr.f32.mxu0 %v5664
    %6436 = vmatmul.mubr.f32.gmra.mrb[0].mxu0 %v5663
    %v6437 = vpop.f32.mrb[0].mxu0
    %v6438 = vadd.f32 0.0, %v6437
    %v6439 = vpop.f32.mrb[0].mxu0
    %6440 = vmatprep.mubr.f32.mxu0 %v5673
    %6441 = vmatmul.mubr.f32.gmra.mrb[0].mxu0 %v5672
    %v6442 = vpop.f32.mrb[0].mxu0
    %v6443 = vadd.f32 0.0, %v6442
    %v6444 = vpop.f32.mrb[0].mxu0
    %6445 = vmatprep.mubr.f32.mxu0 %v5682
    %6446 = vmatmul.mubr.f32.gmra.mrb[0].mxu0 %v5681
    %v6447 = vpop.f32.mrb[0].mxu0
    %v6448 = vadd.f32 0.0, %v6447
    %v6449 = vpop.f32.mrb[0].mxu0
    %6450 = vmatprep.mubr.f32.mxu0 %v5691
    %6451 = vmatmul.mubr.f32.gmra.mrb[0].mxu0 %v5690
    %v6452 = vpop.f32.mrb[0].mxu0
    %v6453 = vadd.f32 0.0, %v6452
    %v6454 = vpop.f32.mrb[0].mxu0
    %6455 = vmatprep.mubr.f32.mxu0 %v5700
    %6456 = vmatmul.mubr.f32.gmra.mrb[0].mxu0 %v5699
    %v6457 = vpop.f32.mrb[0].mxu0
    %v6458 = vadd.f32 0.0, %v6457
    %v6459 = vpop.f32.mrb[0].mxu0
    %6460 = vmatprep.mubr.f32.mxu0 %v5709
    %6461 = vmatmul.mubr.f32.gmra.mrb[0].mxu0 %v5708
    %v6462 = vpop.f32.mrb[0].mxu0
    %v6463 = vadd.f32 0.0, %v6462
    %v6464 = vpop.f32.mrb[0].mxu0
    %6465 = vmatprep.mubr.f32.mxu0 %v5718
    %6466 = vmatmul.mubr.f32.gmra.mrb[0].mxu0 %v5717
    %v6467 = vpop.f32.mrb[0].mxu0
    %v6468 = vadd.f32 0.0, %v6467
    %v6469 = vpop.f32.mrb[0].mxu0
    %6470 = vmatprep.mubr.f32.mxu0 %v5727
    %6471 = vmatmul.mubr.f32.gmra.mrb[0].mxu0 %v5726
    %v6472 = vpop.f32.mrb[0].mxu0
    %v6473 = vadd.f32 0.0, %v6472
    %v6474 = vpop.f32.mrb[0].mxu0
    %6475 = vmatprep.mubr.f32.mxu0 %v5736
    %6476 = vmatmul.mubr.f32.gmra.mrb[0].mxu0 %v5735
    %v6477 = vpop.f32.mrb[0].mxu0
    %v6478 = vadd.f32 0.0, %v6477
    %v6479 = vpop.f32.mrb[0].mxu0
    %6480 = vmatprep.mubr.f32.mxu0 %v5745
    %6481 = vmatmul.mubr.f32.gmra.mrb[0].mxu0 %v5744
    %v6482 = vpop.f32.mrb[0].mxu0
    %v6483 = vadd.f32 0.0, %v6482
    %v6484 = vpop.f32.mrb[0].mxu0
    %6485 = vmatprep.mubr.f32.mxu0 %v5754
    %6486 = vmatmul.mubr.f32.gmra.mrb[0].mxu0 %v5753
    %v6487 = vpop.f32.mrb[0].mxu0
    %v6488 = vadd.f32 0.0, %v6487
    %v6489 = vpop.f32.mrb[0].mxu0
    %6490 = vmatprep.mubr.f32.mxu0 %v5763
    %6491 = vmatmul.mubr.f32.gmra.mrb[0].mxu0 %v5762
    %v6492 = vpop.f32.mrb[0].mxu0
    %v6493 = vadd.f32 0.0, %v6492
    %v6494 = vpop.f32.mrb[0].mxu0
    %6495 = vmatprep.mubr.f32.mxu0 %v5772
    %6496 = vmatmul.mubr.f32.gmra.mrb[0].mxu0 %v5771
    %v6497 = vpop.f32.mrb[0].mxu0
    %v6498 = vadd.f32 0.0, %v6497
    %v6499 = vpop.f32.mrb[0].mxu0
    %6500 = vmatprep.mubr.f32.mxu0 %v5781
    %6501 = vmatmul.mubr.f32.gmra.mrb[0].mxu0 %v5780
    %v6502 = vpop.f32.mrb[0].mxu0
    %v6503 = vadd.f32 0.0, %v6502
    %v6504 = vpop.f32.mrb[0].mxu0
    %6505 = vmatprep.mubr.f32.mxu0 %v5790
    %6506 = vmatmul.mubr.f32.gmra.mrb[0].mxu0 %v5789
    %v6507 = vpop.f32.mrb[0].mxu0
    %v6508 = vadd.f32 0.0, %v6507
    %v6509 = vpop.f32.mrb[0].mxu0
    %6510 = vmatprep.mubr.f32.mxu0 %v5799
    %6511 = vmatmul.mubr.f32.gmra.mrb[0].mxu0 %v5798
    %v6512 = vpop.f32.mrb[0].mxu0
    %v6513 = vadd.f32 0.0, %v6512
    %v6514 = vpop.f32.mrb[0].mxu0
    %6515 = vmatprep.mubr.f32.mxu0 %v5808
    %6516 = vmatmul.mubr.f32.gmra.mrb[0].mxu0 %v5807
    %v6517 = vpop.f32.mrb[0].mxu0
    %v6518 = vadd.f32 0.0, %v6517
    %v6519 = vpop.f32.mrb[0].mxu0
    %6520 = vmatprep.mubr.f32.mxu0 %v5817
    %6521 = vmatmul.mubr.f32.gmra.mrb[0].mxu0 %v5816
    %v6522 = vpop.f32.mrb[0].mxu0
    %v6523 = vadd.f32 0.0, %v6522
    %v6524 = vpop.f32.mrb[0].mxu0
    %6525 = vmatprep.mubr.f32.mxu0 %v5826
    %6526 = vmatmul.mubr.f32.gmra.mrb[0].mxu0 %v5825
    %v6527 = vpop.f32.mrb[0].mxu0
    %v6528 = vadd.f32 0.0, %v6527
    %v6529 = vpop.f32.mrb[0].mxu0
    %6530 = vmatprep.mubr.f32.mxu0 %v5835
    %6531 = vmatmul.mubr.f32.gmra.mrb[0].mxu0 %v5834
    %v6532 = vpop.f32.mrb[0].mxu0
    %v6533 = vadd.f32 0.0, %v6532
    %v6534 = vpop.f32.mrb[0].mxu0
    %6535 = vmatprep.mubr.f32.mxu0 %v5844
    %6536 = vmatmul.mubr.f32.gmra.mrb[0].mxu0 %v5843
    %v6537 = vpop.f32.mrb[0].mxu0
    %v6538 = vadd.f32 0.0, %v6537
    %v6539 = vpop.f32.mrb[0].mxu0
    %6540 = vmatprep.mubr.f32.mxu0 %v5853
    %6541 = vmatmul.mubr.f32.gmra.mrb[0].mxu0 %v5852
    %v6542 = vpop.f32.mrb[0].mxu0
    %v6543 = vadd.f32 0.0, %v6542
    %v6544 = vpop.f32.mrb[0].mxu0
    %6545 = vmatprep.mubr.f32.mxu0 %v5862
    %6546 = vmatmul.mubr.f32.gmra.mrb[0].mxu0 %v5861
    %v6547 = vpop.f32.mrb[0].mxu0
    %v6548 = vadd.f32 0.0, %v6547
    %v6549 = vpop.f32.mrb[0].mxu0
    %6550 = vmatprep.mubr.f32.mxu0 %v5871
    %6551 = vmatmul.mubr.f32.gmra.mrb[0].mxu0 %v5870
    %v6552 = vpop.f32.mrb[0].mxu0
    %v6553 = vadd.f32 0.0, %v6552
    %v6554 = vpop.f32.mrb[0].mxu0
    %6555 = vmatprep.mubr.f32.mxu0 %v5880
    %6556 = vmatmul.mubr.f32.gmra.mrb[0].mxu0 %v5879
    %v6557 = vpop.f32.mrb[0].mxu0
    %v6558 = vadd.f32 0.0, %v6557
    %v6559 = vpop.f32.mrb[0].mxu0
    %6560 = vmatprep.mubr.f32.mxu0 %v5889
    %6561 = vmatmul.mubr.f32.gmra.mrb[0].mxu0 %v5888
    %v6562 = vpop.f32.mrb[0].mxu0
    %v6563 = vadd.f32 0.0, %v6562
    %v6564 = vpop.f32.mrb[0].mxu0
    %6565 = vmatprep.mubr.f32.mxu0 %v5898
    %6566 = vmatmul.mubr.f32.gmra.mrb[0].mxu0 %v5897
    %v6567 = vpop.f32.mrb[0].mxu0
    %v6568 = vadd.f32 0.0, %v6567
    %v6569 = vpop.f32.mrb[0].mxu0
    %6570 = vmatprep.mubr.f32.mxu0 %v5907
    %6571 = vmatmul.mubr.f32.gmra.mrb[0].mxu0 %v5906
    %v6572 = vpop.f32.mrb[0].mxu0
    %v6573 = vadd.f32 0.0, %v6572
    %v6574 = vpop.f32.mrb[0].mxu0
    %6575 = vmatprep.mubr.f32.mxu0 %v5916
    %6576 = vmatmul.mubr.f32.gmra.mrb[0].mxu0 %v5915
    %v6577 = vpop.f32.mrb[0].mxu0
    %v6578 = vadd.f32 0.0, %v6577
    %v6579 = vpop.f32.mrb[0].mxu0
    %6580 = vmatprep.mubr.f32.mxu0 %v5925
    %6581 = vmatmul.mubr.f32.gmra.mrb[0].mxu0 %v5924
    %v6582 = vpop.f32.mrb[0].mxu0
    %v6583 = vadd.f32 0.0, %v6582
    %v6584 = vpop.f32.mrb[0].mxu0
    %6585 = vmatprep.mubr.f32.mxu0 %v5934
    %6586 = vmatmul.mubr.f32.gmra.mrb[0].mxu0 %v5933
    %v6587 = vpop.f32.mrb[0].mxu0
    %v6588 = vadd.f32 0.0, %v6587
    %v6589 = vpop.f32.mrb[0].mxu0
    %6590 = vmatprep.mubr.f32.mxu0 %v5943
    %6591 = vmatmul.mubr.f32.gmra.mrb[0].mxu0 %v5942
    %v6592 = vpop.f32.mrb[0].mxu0
    %v6593 = vadd.f32 0.0, %v6592
    %v6594 = vpop.f32.mrb[0].mxu0
    %6595 = vmatprep.mubr.f32.mxu0 %v5952
    %6596 = vmatmul.mubr.f32.gmra.mrb[0].mxu0 %v5951
    %v6597 = vpop.f32.mrb[0].mxu0
    %v6598 = vadd.f32 0.0, %v6597
    %v6599 = vpop.f32.mrb[0].mxu0
    %6600 = vmatprep.mubr.f32.mxu0 %v5961
    %6601 = vmatmul.mubr.f32.gmra.mrb[0].mxu0 %v5960
    %v6602 = vpop.f32.mrb[0].mxu0
    %v6603 = vadd.f32 0.0, %v6602
    %v6604 = vpop.f32.mrb[0].mxu0
    %6605 = vmatprep.mubr.f32.mxu0 %v5970
    %6606 = vmatmul.mubr.f32.gmra.mrb[0].mxu0 %v5969
    %v6607 = vpop.f32.mrb[0].mxu0
    %v6608 = vadd.f32 0.0, %v6607
    %v6609 = vpop.f32.mrb[0].mxu0
    %6610 = vmatprep.mubr.f32.mxu0 %v5979
    %6611 = vmatmul.mubr.f32.gmra.mrb[0].mxu0 %v5978
    %v6612 = vpop.f32.mrb[0].mxu0
    %v6613 = vadd.f32 0.0, %v6612
    %v6614 = vpop.f32.mrb[0].mxu0
    %6615 = vmatprep.mubr.f32.mxu0 %v5988
    %6616 = vmatmul.mubr.f32.gmra.mrb[0].mxu0 %v5987
    %v6617 = vpop.f32.mrb[0].mxu0
    %v6618 = vadd.f32 0.0, %v6617
    %v6619 = vpop.f32.mrb[0].mxu0
    %6620 = vmatprep.mubr.f32.mxu0 %v5997
    %6621 = vmatmul.mubr.f32.gmra.mrb[0].mxu0 %v5996
    %v6622 = vpop.f32.mrb[0].mxu0
    %v6623 = vadd.f32 0.0, %v6622
    %v6624 = vpop.f32.mrb[0].mxu0
    %6625 = vmatprep.mubr.f32.mxu0 %v6006
    %6626 = vmatmul.mubr.f32.gmra.mrb[0].mxu0 %v6005
    %v6627 = vpop.f32.mrb[0].mxu0
    %v6628 = vadd.f32 0.0, %v6627
    %v6629 = vpop.f32.mrb[0].mxu0
    %6630 = vmatprep.mubr.f32.mxu0 %v6015
    %6631 = vmatmul.mubr.f32.gmra.mrb[0].mxu0 %v6014
    %v6632 = vpop.f32.mrb[0].mxu0
    %v6633 = vadd.f32 0.0, %v6632
    %v6634 = vpop.f32.mrb[0].mxu0
    %6635 = vmatprep.mubr.f32.mxu0 %v6024
    %6636 = vmatmul.mubr.f32.gmra.mrb[0].mxu0 %v6023
    %v6637 = vpop.f32.mrb[0].mxu0
    %v6638 = vadd.f32 0.0, %v6637
    %v6639 = vpop.f32.mrb[0].mxu0
    %6640 = vmatprep.mubr.f32.mxu0 %v6033
    %6641 = vmatmul.mubr.f32.gmra.mrb[0].mxu0 %v6032
    %v6642 = vpop.f32.mrb[0].mxu0
    %v6643 = vadd.f32 0.0, %v6642
    %v6644 = vpop.f32.mrb[0].mxu0
    %6645 = vmatprep.mubr.f32.mxu0 %v6042
    %6646 = vmatmul.mubr.f32.gmra.mrb[0].mxu0 %v6041
    %v6647 = vpop.f32.mrb[0].mxu0
    %v6648 = vadd.f32 0.0, %v6647
    %v6649 = vpop.f32.mrb[0].mxu0
    %6650 = vmatprep.mubr.f32.mxu0 %v6051
    %6651 = vmatmul.mubr.f32.gmra.mrb[0].mxu0 %v6050
    %v6652 = vpop.f32.mrb[0].mxu0
    %v6653 = vadd.f32 0.0, %v6652
    %v6654 = vpop.f32.mrb[0].mxu0
    %6655 = vmatprep.mubr.f32.mxu0 %v6060
    %6656 = vmatmul.mubr.f32.gmra.mrb[0].mxu0 %v6059
    %v6657 = vpop.f32.mrb[0].mxu0
    %v6658 = vadd.f32 0.0, %v6657
    %v6659 = vpop.f32.mrb[0].mxu0
    %6660 = vmatprep.mubr.f32.mxu0 %v6069
    %6661 = vmatmul.mubr.f32.gmra.mrb[0].mxu0 %v6068
    %v6662 = vpop.f32.mrb[0].mxu0
    %v6663 = vadd.f32 0.0, %v6662
    %v6664 = vpop.f32.mrb[0].mxu0
    %6665 = vmatprep.mubr.f32.mxu0 %v6078
    %6666 = vmatmul.mubr.f32.gmra.mrb[0].mxu0 %v6077
    %v6667 = vpop.f32.mrb[0].mxu0
    %v6668 = vadd.f32 0.0, %v6667
    %v6669 = vpop.f32.mrb[0].mxu0
    %6670 = vmatprep.mubr.f32.mxu0 %v6087
    %6671 = vmatmul.mubr.f32.gmra.mrb[0].mxu0 %v6086
    %v6672 = vpop.f32.mrb[0].mxu0
    %v6673 = vadd.f32 0.0, %v6672
    %v6674 = vpop.f32.mrb[0].mxu0
    %6675 = vmatprep.mubr.f32.mxu0 %v6096
    %6676 = vmatmul.mubr.f32.gmra.mrb[0].mxu0 %v6095
    %v6677 = vpop.f32.mrb[0].mxu0
    %v6678 = vadd.f32 0.0, %v6677
    %v6679 = vpop.f32.mrb[0].mxu0
    %6680 = vmatprep.mubr.f32.mxu0 %v6105
    %6681 = vmatmul.mubr.f32.gmra.mrb[0].mxu0 %v6104
    %v6682 = vpop.f32.mrb[0].mxu0
    %v6683 = vadd.f32 0.0, %v6682
    %v6684 = vpop.f32.mrb[0].mxu0
    %6685 = vmatprep.mubr.f32.mxu0 %v6114
    %6686 = vmatmul.mubr.f32.gmra.mrb[0].mxu0 %v6113
    %v6687 = vpop.f32.mrb[0].mxu0
    %v6688 = vadd.f32 0.0, %v6687
    %v6689 = vpop.f32.mrb[0].mxu0
    %6690 = vmatprep.mubr.f32.mxu0 %v6123
    %6691 = vmatmul.mubr.f32.gmra.mrb[0].mxu0 %v6122
    %v6692 = vpop.f32.mrb[0].mxu0
    %v6693 = vadd.f32 0.0, %v6692
    %v6694 = vpop.f32.mrb[0].mxu0
    %6695 = vmatprep.mubr.f32.mxu0 %v6132
    %6696 = vmatmul.mubr.f32.gmra.mrb[0].mxu0 %v6131
    %v6697 = vpop.f32.mrb[0].mxu0
    %v6698 = vadd.f32 0.0, %v6697
    %v6699 = vpop.f32.mrb[0].mxu0
    %6700 = vmatprep.mubr.f32.mxu0 %v6141
    %6701 = vmatmul.mubr.f32.gmra.mrb[0].mxu0 %v6140
    %v6702 = vpop.f32.mrb[0].mxu0
    %v6703 = vadd.f32 0.0, %v6702
    %v6704 = vpop.f32.mrb[0].mxu0
    %6705 = vmatprep.mubr.f32.mxu0 %v6150
    %6706 = vmatmul.mubr.f32.gmra.mrb[0].mxu0 %v6149
    %v6707 = vpop.f32.mrb[0].mxu0
    %v6708 = vadd.f32 0.0, %v6707
    %v6709 = vpop.f32.mrb[0].mxu0
    %6710 = vmatprep.mubr.f32.mxu0 %v6159
    %6711 = vmatmul.mubr.f32.gmra.mrb[0].mxu0 %v6158
    %v6712 = vpop.f32.mrb[0].mxu0
    %v6713 = vadd.f32 0.0, %v6712
    %v6714 = vpop.f32.mrb[0].mxu0
    %6715 = vmatprep.mubr.f32.mxu0 %v6168
    %6716 = vmatmul.mubr.f32.gmra.mrb[0].mxu0 %v6167
    %v6717 = vpop.f32.mrb[0].mxu0
    %v6718 = vadd.f32 0.0, %v6717
    %v6719 = vpop.f32.mrb[0].mxu0
    %6720 = vmatprep.mubr.f32.mxu0 %v6177
    %6721 = vmatmul.mubr.f32.gmra.mrb[0].mxu0 %v6176
    %v6722 = vpop.f32.mrb[0].mxu0
    %v6723 = vadd.f32 0.0, %v6722
    %v6724 = vpop.f32.mrb[0].mxu0
    %6725 = vmatprep.mubr.f32.mxu0 %v6186
    %6726 = vmatmul.mubr.f32.gmra.mrb[0].mxu0 %v6185
    %v6727 = vpop.f32.mrb[0].mxu0
    %v6728 = vadd.f32 0.0, %v6727
    %v6729 = vpop.f32.mrb[0].mxu0
    %6730 = vmatprep.mubr.f32.mxu0 %v6195
    %6731 = vmatmul.mubr.f32.gmra.mrb[0].mxu0 %v6194
    %v6732 = vpop.f32.mrb[0].mxu0
    %v6733 = vadd.f32 0.0, %v6732
    %v6734 = vpop.f32.mrb[0].mxu0
    %6735 = vmatprep.mubr.f32.mxu0 %v6204
    %6736 = vmatmul.mubr.f32.gmra.mrb[0].mxu0 %v6203
    %v6737 = vpop.f32.mrb[0].mxu0
    %v6738 = vadd.f32 0.0, %v6737
    %v6739 = vpop.f32.mrb[0].mxu0
    %6740 = vdwg.mxu0
    %6741 = vmatprep.subr.mxu0 0.0
    %6742 = vmatpush1.msra.mxu0 %v6244
    %6743 = vmatprep.subr.mxu0 0.0
    %6744 = vmatpush1.msra.mxu0 %v6245
    %6745 = vmatprep.subr.mxu0 0.0
    %6746 = vmatpush1.msra.mxu0 %v6246
    %6747 = vmatprep.subr.mxu0 0.0
    %6748 = vmatpush1.msra.mxu0 %v6247
    %6749 = vmatprep.subr.mxu0 0.0
    %6750 = vmatpush1.msra.mxu0 %v6248
    %6751 = vmatprep.subr.mxu0 0.0
    %6752 = vmatpush1.msra.mxu0 %v6249
    %6753 = vmatprep.subr.mxu0 0.0
    %6754 = vmatpush1.msra.mxu0 %v6250
    %6755 = vmatprep.subr.mxu0 0.0
    %6756 = vmatpush1.msra.mxu0 %v6251
    %6757 = vmatprep.subr.mxu0 0.0
    %6758 = vmatpush1.msra.mxu0 %v6252
    %6759 = vmatprep.subr.mxu0 0.0
    %6760 = vmatpush1.msra.mxu0 %v6253
    %6761 = vmatprep.subr.mxu0 0.0
    %6762 = vmatpush1.msra.mxu0 %v6254
    %6763 = vmatprep.subr.mxu0 0.0
    %6764 = vmatpush1.msra.mxu0 %v6255
    %6765 = vmatprep.subr.mxu0 0.0
    %6766 = vmatpush1.msra.mxu0 %v6256
    %6767 = vmatprep.subr.mxu0 0.0
    %6768 = vmatpush1.msra.mxu0 %v6257
    %6769 = vmatprep.subr.mxu0 0.0
    %6770 = vmatpush1.msra.mxu0 %v6258
    %6771 = vmatprep.subr.mxu0 0.0
    %6772 = vmatpush1.msra.mxu0 %v6259
    %6773 = vmatprep.subr.mxu0 0.0
    %6774 = vmatpush1.msra.mxu0 %v6260
    %6775 = vmatprep.subr.mxu0 0.0
    %6776 = vmatpush1.msra.mxu0 %v6261
    %6777 = vmatprep.subr.mxu0 0.0
    %6778 = vmatpush1.msra.mxu0 %v6262
    %6779 = vmatprep.subr.mxu0 0.0
    %6780 = vmatpush1.msra.mxu0 %v6263
    %6781 = vmatprep.subr.mxu0 0.0
    %6782 = vmatpush1.msra.mxu0 %v6264
    %6783 = vmatprep.subr.mxu0 0.0
    %6784 = vmatpush1.msra.mxu0 %v6265
    %6785 = vmatprep.subr.mxu0 0.0
    %6786 = vmatpush1.msra.mxu0 %v6266
    %6787 = vmatprep.subr.mxu0 0.0
    %6788 = vmatpush1.msra.mxu0 %v6267
    %6789 = vmatprep.subr.mxu0 0.0
    %6790 = vmatpush1.msra.mxu0 %v6268
    %6791 = vmatprep.subr.mxu0 0.0
    %6792 = vmatpush1.msra.mxu0 %v6269
    %6793 = vmatprep.subr.mxu0 0.0
    %6794 = vmatpush1.msra.mxu0 %v6270
    %6795 = vmatprep.subr.mxu0 0.0
    %6796 = vmatpush1.msra.mxu0 %v6271
    %6797 = vmatprep.subr.mxu0 0.0
    %6798 = vmatpush1.msra.mxu0 %v6272
    %6799 = vmatprep.subr.mxu0 0.0
    %6800 = vmatpush1.msra.mxu0 %v6273
    %6801 = vmatprep.subr.mxu0 0.0
    %6802 = vmatpush1.msra.mxu0 %v6274
    %6803 = vmatprep.subr.mxu0 0.0
    %6804 = vmatpush1.msra.mxu0 %v6275
    %6805 = vmatprep.mubr.f32.mxu0 %v5639
    %6806 = vmatmul.mubr.f32.gmra.mrb[0].mxu0 %v5638
    %v6807 = vpop.f32.mrb[0].mxu0
    %v6808 = vadd.f32 %v6423, %v6807
    %v6809 = vpop.f32.mrb[0].mxu0
    %6810 = vmatprep.mubr.f32.mxu0 %v5648
    %6811 = vmatmul.mubr.f32.gmra.mrb[0].mxu0 %v5647
    %v6812 = vpop.f32.mrb[0].mxu0
    %v6813 = vadd.f32 %v6428, %v6812
    %v6814 = vpop.f32.mrb[0].mxu0
    %6815 = vmatprep.mubr.f32.mxu0 %v5657
    %6816 = vmatmul.mubr.f32.gmra.mrb[0].mxu0 %v5656
    %v6817 = vpop.f32.mrb[0].mxu0
    %v6818 = vadd.f32 %v6433, %v6817
    %v6819 = vpop.f32.mrb[0].mxu0
    %6820 = vmatprep.mubr.f32.mxu0 %v5666
    %6821 = vmatmul.mubr.f32.gmra.mrb[0].mxu0 %v5665
    %v6822 = vpop.f32.mrb[0].mxu0
    %v6823 = vadd.f32 %v6438, %v6822
    %v6824 = vpop.f32.mrb[0].mxu0
    %6825 = vmatprep.mubr.f32.mxu0 %v5675
    %6826 = vmatmul.mubr.f32.gmra.mrb[0].mxu0 %v5674
    %v6827 = vpop.f32.mrb[0].mxu0
    %v6828 = vadd.f32 %v6443, %v6827
    %v6829 = vpop.f32.mrb[0].mxu0
    %6830 = vmatprep.mubr.f32.mxu0 %v5684
    %6831 = vmatmul.mubr.f32.gmra.mrb[0].mxu0 %v5683
    %v6832 = vpop.f32.mrb[0].mxu0
    %v6833 = vadd.f32 %v6448, %v6832
    %v6834 = vpop.f32.mrb[0].mxu0
    %6835 = vmatprep.mubr.f32.mxu0 %v5693
    %6836 = vmatmul.mubr.f32.gmra.mrb[0].mxu0 %v5692
    %v6837 = vpop.f32.mrb[0].mxu0
    %v6838 = vadd.f32 %v6453, %v6837
    %v6839 = vpop.f32.mrb[0].mxu0
    %6840 = vmatprep.mubr.f32.mxu0 %v5702
    %6841 = vmatmul.mubr.f32.gmra.mrb[0].mxu0 %v5701
    %v6842 = vpop.f32.mrb[0].mxu0
    %v6843 = vadd.f32 %v6458, %v6842
    %v6844 = vpop.f32.mrb[0].mxu0
    %6845 = vmatprep.mubr.f32.mxu0 %v5711
    %6846 = vmatmul.mubr.f32.gmra.mrb[0].mxu0 %v5710
    %v6847 = vpop.f32.mrb[0].mxu0
    %v6848 = vadd.f32 %v6463, %v6847
    %v6849 = vpop.f32.mrb[0].mxu0
    %6850 = vmatprep.mubr.f32.mxu0 %v5720
    %6851 = vmatmul.mubr.f32.gmra.mrb[0].mxu0 %v5719
    %v6852 = vpop.f32.mrb[0].mxu0
    %v6853 = vadd.f32 %v6468, %v6852
    %v6854 = vpop.f32.mrb[0].mxu0
    %6855 = vmatprep.mubr.f32.mxu0 %v5729
    %6856 = vmatmul.mubr.f32.gmra.mrb[0].mxu0 %v5728
    %v6857 = vpop.f32.mrb[0].mxu0
    %v6858 = vadd.f32 %v6473, %v6857
    %v6859 = vpop.f32.mrb[0].mxu0
    %6860 = vmatprep.mubr.f32.mxu0 %v5738
    %6861 = vmatmul.mubr.f32.gmra.mrb[0].mxu0 %v5737
    %v6862 = vpop.f32.mrb[0].mxu0
    %v6863 = vadd.f32 %v6478, %v6862
    %v6864 = vpop.f32.mrb[0].mxu0
    %6865 = vmatprep.mubr.f32.mxu0 %v5747
    %6866 = vmatmul.mubr.f32.gmra.mrb[0].mxu0 %v5746
    %v6867 = vpop.f32.mrb[0].mxu0
    %v6868 = vadd.f32 %v6483, %v6867
    %v6869 = vpop.f32.mrb[0].mxu0
    %6870 = vmatprep.mubr.f32.mxu0 %v5756
    %6871 = vmatmul.mubr.f32.gmra.mrb[0].mxu0 %v5755
    %v6872 = vpop.f32.mrb[0].mxu0
    %v6873 = vadd.f32 %v6488, %v6872
    %v6874 = vpop.f32.mrb[0].mxu0
    %6875 = vmatprep.mubr.f32.mxu0 %v5765
    %6876 = vmatmul.mubr.f32.gmra.mrb[0].mxu0 %v5764
    %v6877 = vpop.f32.mrb[0].mxu0
    %v6878 = vadd.f32 %v6493, %v6877
    %v6879 = vpop.f32.mrb[0].mxu0
    %6880 = vmatprep.mubr.f32.mxu0 %v5774
    %6881 = vmatmul.mubr.f32.gmra.mrb[0].mxu0 %v5773
    %v6882 = vpop.f32.mrb[0].mxu0
    %v6883 = vadd.f32 %v6498, %v6882
    %v6884 = vpop.f32.mrb[0].mxu0
    %6885 = vmatprep.mubr.f32.mxu0 %v5783
    %6886 = vmatmul.mubr.f32.gmra.mrb[0].mxu0 %v5782
    %v6887 = vpop.f32.mrb[0].mxu0
    %v6888 = vadd.f32 %v6503, %v6887
    %v6889 = vpop.f32.mrb[0].mxu0
    %6890 = vmatprep.mubr.f32.mxu0 %v5792
    %6891 = vmatmul.mubr.f32.gmra.mrb[0].mxu0 %v5791
    %v6892 = vpop.f32.mrb[0].mxu0
    %v6893 = vadd.f32 %v6508, %v6892
    %v6894 = vpop.f32.mrb[0].mxu0
    %6895 = vmatprep.mubr.f32.mxu0 %v5801
    %6896 = vmatmul.mubr.f32.gmra.mrb[0].mxu0 %v5800
    %v6897 = vpop.f32.mrb[0].mxu0
    %v6898 = vadd.f32 %v6513, %v6897
    %v6899 = vpop.f32.mrb[0].mxu0
    %6900 = vmatprep.mubr.f32.mxu0 %v5810
    %6901 = vmatmul.mubr.f32.gmra.mrb[0].mxu0 %v5809
    %v6902 = vpop.f32.mrb[0].mxu0
    %v6903 = vadd.f32 %v6518, %v6902
    %v6904 = vpop.f32.mrb[0].mxu0
    %6905 = vmatprep.mubr.f32.mxu0 %v5819
    %6906 = vmatmul.mubr.f32.gmra.mrb[0].mxu0 %v5818
    %v6907 = vpop.f32.mrb[0].mxu0
    %v6908 = vadd.f32 %v6523, %v6907
    %v6909 = vpop.f32.mrb[0].mxu0
    %6910 = vmatprep.mubr.f32.mxu0 %v5828
    %6911 = vmatmul.mubr.f32.gmra.mrb[0].mxu0 %v5827
    %v6912 = vpop.f32.mrb[0].mxu0
    %v6913 = vadd.f32 %v6528, %v6912
    %v6914 = vpop.f32.mrb[0].mxu0
    %6915 = vmatprep.mubr.f32.mxu0 %v5837
    %6916 = vmatmul.mubr.f32.gmra.mrb[0].mxu0 %v5836
    %v6917 = vpop.f32.mrb[0].mxu0
    %v6918 = vadd.f32 %v6533, %v6917
    %v6919 = vpop.f32.mrb[0].mxu0
    %6920 = vmatprep.mubr.f32.mxu0 %v5846
    %6921 = vmatmul.mubr.f32.gmra.mrb[0].mxu0 %v5845
    %v6922 = vpop.f32.mrb[0].mxu0
    %v6923 = vadd.f32 %v6538, %v6922
    %v6924 = vpop.f32.mrb[0].mxu0
    %6925 = vmatprep.mubr.f32.mxu0 %v5855
    %6926 = vmatmul.mubr.f32.gmra.mrb[0].mxu0 %v5854
    %v6927 = vpop.f32.mrb[0].mxu0
    %v6928 = vadd.f32 %v6543, %v6927
    %v6929 = vpop.f32.mrb[0].mxu0
    %6930 = vmatprep.mubr.f32.mxu0 %v5864
    %6931 = vmatmul.mubr.f32.gmra.mrb[0].mxu0 %v5863
    %v6932 = vpop.f32.mrb[0].mxu0
    %v6933 = vadd.f32 %v6548, %v6932
    %v6934 = vpop.f32.mrb[0].mxu0
    %6935 = vmatprep.mubr.f32.mxu0 %v5873
    %6936 = vmatmul.mubr.f32.gmra.mrb[0].mxu0 %v5872
    %v6937 = vpop.f32.mrb[0].mxu0
    %v6938 = vadd.f32 %v6553, %v6937
    %v6939 = vpop.f32.mrb[0].mxu0
    %6940 = vmatprep.mubr.f32.mxu0 %v5882
    %6941 = vmatmul.mubr.f32.gmra.mrb[0].mxu0 %v5881
    %v6942 = vpop.f32.mrb[0].mxu0
    %v6943 = vadd.f32 %v6558, %v6942
    %v6944 = vpop.f32.mrb[0].mxu0
    %6945 = vmatprep.mubr.f32.mxu0 %v5891
    %6946 = vmatmul.mubr.f32.gmra.mrb[0].mxu0 %v5890
    %v6947 = vpop.f32.mrb[0].mxu0
    %v6948 = vadd.f32 %v6563, %v6947
    %v6949 = vpop.f32.mrb[0].mxu0
    %6950 = vmatprep.mubr.f32.mxu0 %v5900
    %6951 = vmatmul.mubr.f32.gmra.mrb[0].mxu0 %v5899
    %v6952 = vpop.f32.mrb[0].mxu0
    %v6953 = vadd.f32 %v6568, %v6952
    %v6954 = vpop.f32.mrb[0].mxu0
    %6955 = vmatprep.mubr.f32.mxu0 %v5909
    %6956 = vmatmul.mubr.f32.gmra.mrb[0].mxu0 %v5908
    %v6957 = vpop.f32.mrb[0].mxu0
    %v6958 = vadd.f32 %v6573, %v6957
    %v6959 = vpop.f32.mrb[0].mxu0
    %6960 = vmatprep.mubr.f32.mxu0 %v5918
    %6961 = vmatmul.mubr.f32.gmra.mrb[0].mxu0 %v5917
    %v6962 = vpop.f32.mrb[0].mxu0
    %v6963 = vadd.f32 %v6578, %v6962
    %v6964 = vpop.f32.mrb[0].mxu0
    %6965 = vmatprep.mubr.f32.mxu0 %v5927
    %6966 = vmatmul.mubr.f32.gmra.mrb[0].mxu0 %v5926
    %v6967 = vpop.f32.mrb[0].mxu0
    %v6968 = vadd.f32 %v6583, %v6967
    %v6969 = vpop.f32.mrb[0].mxu0
    %6970 = vmatprep.mubr.f32.mxu0 %v5936
    %6971 = vmatmul.mubr.f32.gmra.mrb[0].mxu0 %v5935
    %v6972 = vpop.f32.mrb[0].mxu0
    %v6973 = vadd.f32 %v6588, %v6972
    %v6974 = vpop.f32.mrb[0].mxu0
    %6975 = vmatprep.mubr.f32.mxu0 %v5945
    %6976 = vmatmul.mubr.f32.gmra.mrb[0].mxu0 %v5944
    %v6977 = vpop.f32.mrb[0].mxu0
    %v6978 = vadd.f32 %v6593, %v6977
    %v6979 = vpop.f32.mrb[0].mxu0
    %6980 = vmatprep.mubr.f32.mxu0 %v5954
    %6981 = vmatmul.mubr.f32.gmra.mrb[0].mxu0 %v5953
    %v6982 = vpop.f32.mrb[0].mxu0
    %v6983 = vadd.f32 %v6598, %v6982
    %v6984 = vpop.f32.mrb[0].mxu0
    %6985 = vmatprep.mubr.f32.mxu0 %v5963
    %6986 = vmatmul.mubr.f32.gmra.mrb[0].mxu0 %v5962
    %v6987 = vpop.f32.mrb[0].mxu0
    %v6988 = vadd.f32 %v6603, %v6987
    %v6989 = vpop.f32.mrb[0].mxu0
    %6990 = vmatprep.mubr.f32.mxu0 %v5972
    %6991 = vmatmul.mubr.f32.gmra.mrb[0].mxu0 %v5971
    %v6992 = vpop.f32.mrb[0].mxu0
    %v6993 = vadd.f32 %v6608, %v6992
    %v6994 = vpop.f32.mrb[0].mxu0
    %6995 = vmatprep.mubr.f32.mxu0 %v5981
    %6996 = vmatmul.mubr.f32.gmra.mrb[0].mxu0 %v5980
    %v6997 = vpop.f32.mrb[0].mxu0
    %v6998 = vadd.f32 %v6613, %v6997
    %v6999 = vpop.f32.mrb[0].mxu0
    %7000 = vmatprep.mubr.f32.mxu0 %v5990
    %7001 = vmatmul.mubr.f32.gmra.mrb[0].mxu0 %v5989
    %v7002 = vpop.f32.mrb[0].mxu0
    %v7003 = vadd.f32 %v6618, %v7002
    %v7004 = vpop.f32.mrb[0].mxu0
    %7005 = vmatprep.mubr.f32.mxu0 %v5999
    %7006 = vmatmul.mubr.f32.gmra.mrb[0].mxu0 %v5998
    %v7007 = vpop.f32.mrb[0].mxu0
    %v7008 = vadd.f32 %v6623, %v7007
    %v7009 = vpop.f32.mrb[0].mxu0
    %7010 = vmatprep.mubr.f32.mxu0 %v6008
    %7011 = vmatmul.mubr.f32.gmra.mrb[0].mxu0 %v6007
    %v7012 = vpop.f32.mrb[0].mxu0
    %v7013 = vadd.f32 %v6628, %v7012
    %v7014 = vpop.f32.mrb[0].mxu0
    %7015 = vmatprep.mubr.f32.mxu0 %v6017
    %7016 = vmatmul.mubr.f32.gmra.mrb[0].mxu0 %v6016
    %v7017 = vpop.f32.mrb[0].mxu0
    %v7018 = vadd.f32 %v6633, %v7017
    %v7019 = vpop.f32.mrb[0].mxu0
    %7020 = vmatprep.mubr.f32.mxu0 %v6026
    %7021 = vmatmul.mubr.f32.gmra.mrb[0].mxu0 %v6025
    %v7022 = vpop.f32.mrb[0].mxu0
    %v7023 = vadd.f32 %v6638, %v7022
    %v7024 = vpop.f32.mrb[0].mxu0
    %7025 = vmatprep.mubr.f32.mxu0 %v6035
    %7026 = vmatmul.mubr.f32.gmra.mrb[0].mxu0 %v6034
    %v7027 = vpop.f32.mrb[0].mxu0
    %v7028 = vadd.f32 %v6643, %v7027
    %v7029 = vpop.f32.mrb[0].mxu0
    %7030 = vmatprep.mubr.f32.mxu0 %v6044
    %7031 = vmatmul.mubr.f32.gmra.mrb[0].mxu0 %v6043
    %v7032 = vpop.f32.mrb[0].mxu0
    %v7033 = vadd.f32 %v6648, %v7032
    %v7034 = vpop.f32.mrb[0].mxu0
    %7035 = vmatprep.mubr.f32.mxu0 %v6053
    %7036 = vmatmul.mubr.f32.gmra.mrb[0].mxu0 %v6052
    %v7037 = vpop.f32.mrb[0].mxu0
    %v7038 = vadd.f32 %v6653, %v7037
    %v7039 = vpop.f32.mrb[0].mxu0
    %7040 = vmatprep.mubr.f32.mxu0 %v6062
    %7041 = vmatmul.mubr.f32.gmra.mrb[0].mxu0 %v6061
    %v7042 = vpop.f32.mrb[0].mxu0
    %v7043 = vadd.f32 %v6658, %v7042
    %v7044 = vpop.f32.mrb[0].mxu0
    %7045 = vmatprep.mubr.f32.mxu0 %v6071
    %7046 = vmatmul.mubr.f32.gmra.mrb[0].mxu0 %v6070
    %v7047 = vpop.f32.mrb[0].mxu0
    %v7048 = vadd.f32 %v6663, %v7047
    %v7049 = vpop.f32.mrb[0].mxu0
    %7050 = vmatprep.mubr.f32.mxu0 %v6080
    %7051 = vmatmul.mubr.f32.gmra.mrb[0].mxu0 %v6079
    %v7052 = vpop.f32.mrb[0].mxu0
    %v7053 = vadd.f32 %v6668, %v7052
    %v7054 = vpop.f32.mrb[0].mxu0
    %7055 = vmatprep.mubr.f32.mxu0 %v6089
    %7056 = vmatmul.mubr.f32.gmra.mrb[0].mxu0 %v6088
    %v7057 = vpop.f32.mrb[0].mxu0
    %v7058 = vadd.f32 %v6673, %v7057
    %v7059 = vpop.f32.mrb[0].mxu0
    %7060 = vmatprep.mubr.f32.mxu0 %v6098
    %7061 = vmatmul.mubr.f32.gmra.mrb[0].mxu0 %v6097
    %v7062 = vpop.f32.mrb[0].mxu0
    %v7063 = vadd.f32 %v6678, %v7062
    %v7064 = vpop.f32.mrb[0].mxu0
    %7065 = vmatprep.mubr.f32.mxu0 %v6107
    %7066 = vmatmul.mubr.f32.gmra.mrb[0].mxu0 %v6106
    %v7067 = vpop.f32.mrb[0].mxu0
    %v7068 = vadd.f32 %v6683, %v7067
    %v7069 = vpop.f32.mrb[0].mxu0
    %7070 = vmatprep.mubr.f32.mxu0 %v6116
    %7071 = vmatmul.mubr.f32.gmra.mrb[0].mxu0 %v6115
    %v7072 = vpop.f32.mrb[0].mxu0
    %v7073 = vadd.f32 %v6688, %v7072
    %v7074 = vpop.f32.mrb[0].mxu0
    %7075 = vmatprep.mubr.f32.mxu0 %v6125
    %7076 = vmatmul.mubr.f32.gmra.mrb[0].mxu0 %v6124
    %v7077 = vpop.f32.mrb[0].mxu0
    %v7078 = vadd.f32 %v6693, %v7077
    %v7079 = vpop.f32.mrb[0].mxu0
    %7080 = vmatprep.mubr.f32.mxu0 %v6134
    %7081 = vmatmul.mubr.f32.gmra.mrb[0].mxu0 %v6133
    %v7082 = vpop.f32.mrb[0].mxu0
    %v7083 = vadd.f32 %v6698, %v7082
    %v7084 = vpop.f32.mrb[0].mxu0
    %7085 = vmatprep.mubr.f32.mxu0 %v6143
    %7086 = vmatmul.mubr.f32.gmra.mrb[0].mxu0 %v6142
    %v7087 = vpop.f32.mrb[0].mxu0
    %v7088 = vadd.f32 %v6703, %v7087
    %v7089 = vpop.f32.mrb[0].mxu0
    %7090 = vmatprep.mubr.f32.mxu0 %v6152
    %7091 = vmatmul.mubr.f32.gmra.mrb[0].mxu0 %v6151
    %v7092 = vpop.f32.mrb[0].mxu0
    %v7093 = vadd.f32 %v6708, %v7092
    %v7094 = vpop.f32.mrb[0].mxu0
    %7095 = vmatprep.mubr.f32.mxu0 %v6161
    %7096 = vmatmul.mubr.f32.gmra.mrb[0].mxu0 %v6160
    %v7097 = vpop.f32.mrb[0].mxu0
    %v7098 = vadd.f32 %v6713, %v7097
    %v7099 = vpop.f32.mrb[0].mxu0
    %7100 = vmatprep.mubr.f32.mxu0 %v6170
    %7101 = vmatmul.mubr.f32.gmra.mrb[0].mxu0 %v6169
    %v7102 = vpop.f32.mrb[0].mxu0
    %v7103 = vadd.f32 %v6718, %v7102
    %v7104 = vpop.f32.mrb[0].mxu0
    %7105 = vmatprep.mubr.f32.mxu0 %v6179
    %7106 = vmatmul.mubr.f32.gmra.mrb[0].mxu0 %v6178
    %v7107 = vpop.f32.mrb[0].mxu0
    %v7108 = vadd.f32 %v6723, %v7107
    %v7109 = vpop.f32.mrb[0].mxu0
    %7110 = vmatprep.mubr.f32.mxu0 %v6188
    %7111 = vmatmul.mubr.f32.gmra.mrb[0].mxu0 %v6187
    %v7112 = vpop.f32.mrb[0].mxu0
    %v7113 = vadd.f32 %v6728, %v7112
    %v7114 = vpop.f32.mrb[0].mxu0
    %7115 = vmatprep.mubr.f32.mxu0 %v6197
    %7116 = vmatmul.mubr.f32.gmra.mrb[0].mxu0 %v6196
    %v7117 = vpop.f32.mrb[0].mxu0
    %v7118 = vadd.f32 %v6733, %v7117
    %v7119 = vpop.f32.mrb[0].mxu0
    %7120 = vmatprep.mubr.f32.mxu0 %v6206
    %7121 = vmatmul.mubr.f32.gmra.mrb[0].mxu0 %v6205
    %v7122 = vpop.f32.mrb[0].mxu0
    %v7123 = vadd.f32 %v6738, %v7122
    %v7124 = vpop.f32.mrb[0].mxu0
    %7125 = vdwg.mxu0
    %7126 = vmatprep.subr.mxu0 0.0
    %7127 = vmatpush1.msra.mxu0 %v6276
    %7128 = vmatprep.subr.mxu0 0.0
    %7129 = vmatpush1.msra.mxu0 %v6277
    %7130 = vmatprep.subr.mxu0 0.0
    %7131 = vmatpush1.msra.mxu0 %v6278
    %7132 = vmatprep.subr.mxu0 0.0
    %7133 = vmatpush1.msra.mxu0 %v6279
    %7134 = vmatprep.subr.mxu0 0.0
    %7135 = vmatpush1.msra.mxu0 %v6280
    %7136 = vmatprep.subr.mxu0 0.0
    %7137 = vmatpush1.msra.mxu0 %v6281
    %7138 = vmatprep.subr.mxu0 0.0
    %7139 = vmatpush1.msra.mxu0 %v6282
    %7140 = vmatprep.subr.mxu0 0.0
    %7141 = vmatpush1.msra.mxu0 %v6283
    %7142 = vmatprep.subr.mxu0 0.0
    %7143 = vmatpush1.msra.mxu0 %v6284
    %7144 = vmatprep.subr.mxu0 0.0
    %7145 = vmatpush1.msra.mxu0 %v6285
    %7146 = vmatprep.subr.mxu0 0.0
    %7147 = vmatpush1.msra.mxu0 %v6286
    %7148 = vmatprep.subr.mxu0 0.0
    %7149 = vmatpush1.msra.mxu0 %v6287
    %7150 = vmatprep.subr.mxu0 0.0
    %7151 = vmatpush1.msra.mxu0 %v6288
    %7152 = vmatprep.subr.mxu0 0.0
    %7153 = vmatpush1.msra.mxu0 %v6289
    %7154 = vmatprep.subr.mxu0 0.0
    %7155 = vmatpush1.msra.mxu0 %v6290
    %7156 = vmatprep.subr.mxu0 0.0
    %7157 = vmatpush1.msra.mxu0 %v6291
    %7158 = vmatprep.subr.mxu0 0.0
    %7159 = vmatpush1.msra.mxu0 %v6292
    %7160 = vmatprep.subr.mxu0 0.0
    %7161 = vmatpush1.msra.mxu0 %v6293
    %7162 = vmatprep.subr.mxu0 0.0
    %7163 = vmatpush1.msra.mxu0 %v6294
    %7164 = vmatprep.subr.mxu0 0.0
    %7165 = vmatpush1.msra.mxu0 %v6295
    %7166 = vmatprep.subr.mxu0 0.0
    %7167 = vmatpush1.msra.mxu0 %v6296
    %7168 = vmatprep.subr.mxu0 0.0
    %7169 = vmatpush1.msra.mxu0 %v6297
    %7170 = vmatprep.subr.mxu0 0.0
    %7171 = vmatpush1.msra.mxu0 %v6298
    %7172 = vmatprep.subr.mxu0 0.0
    %7173 = vmatpush1.msra.mxu0 %v6299
    %7174 = vmatprep.subr.mxu0 0.0
    %7175 = vmatpush1.msra.mxu0 %v6300
    %7176 = vmatprep.subr.mxu0 0.0
    %7177 = vmatpush1.msra.mxu0 %v6301
    %7178 = vmatprep.subr.mxu0 0.0
    %7179 = vmatpush1.msra.mxu0 %v6302
    %7180 = vmatprep.subr.mxu0 0.0
    %7181 = vmatpush1.msra.mxu0 %v6303
    %7182 = vmatprep.subr.mxu0 0.0
    %7183 = vmatpush1.msra.mxu0 %v6304
    %7184 = vmatprep.subr.mxu0 0.0
    %7185 = vmatpush1.msra.mxu0 %v6305
    %7186 = vmatprep.subr.mxu0 0.0
    %7187 = vmatpush1.msra.mxu0 %v6306
    %7188 = vmatprep.subr.mxu0 0.0
    %7189 = vmatpush1.msra.mxu0 %v6307
    %7190 = vmatprep.mubr.f32.mxu0 %v5641
    %7191 = vmatmul.mubr.f32.gmra.mrb[0].mxu0 %v5640
    %v7192 = vpop.f32.mrb[0].mxu0
    %v7193 = vadd.f32 %v6808, %v7192
    %v7194 = vpop.f32.mrb[0].mxu0
    %7195 = vmatprep.mubr.f32.mxu0 %v5650
    %7196 = vmatmul.mubr.f32.gmra.mrb[0].mxu0 %v5649
    %v7197 = vpop.f32.mrb[0].mxu0
    %v7198 = vadd.f32 %v6813, %v7197
    %v7199 = vpop.f32.mrb[0].mxu0
    %7200 = vmatprep.mubr.f32.mxu0 %v5659
    %7201 = vmatmul.mubr.f32.gmra.mrb[0].mxu0 %v5658
    %v7202 = vpop.f32.mrb[0].mxu0
    %v7203 = vadd.f32 %v6818, %v7202
    %v7204 = vpop.f32.mrb[0].mxu0
    %7205 = vmatprep.mubr.f32.mxu0 %v5668
    %7206 = vmatmul.mubr.f32.gmra.mrb[0].mxu0 %v5667
    %v7207 = vpop.f32.mrb[0].mxu0
    %v7208 = vadd.f32 %v6823, %v7207
    %v7209 = vpop.f32.mrb[0].mxu0
    %7210 = vmatprep.mubr.f32.mxu0 %v5677
    %7211 = vmatmul.mubr.f32.gmra.mrb[0].mxu0 %v5676
    %v7212 = vpop.f32.mrb[0].mxu0
    %v7213 = vadd.f32 %v6828, %v7212
    %v7214 = vpop.f32.mrb[0].mxu0
    %7215 = vmatprep.mubr.f32.mxu0 %v5686
    %7216 = vmatmul.mubr.f32.gmra.mrb[0].mxu0 %v5685
    %v7217 = vpop.f32.mrb[0].mxu0
    %v7218 = vadd.f32 %v6833, %v7217
    %v7219 = vpop.f32.mrb[0].mxu0
    %7220 = vmatprep.mubr.f32.mxu0 %v5695
    %7221 = vmatmul.mubr.f32.gmra.mrb[0].mxu0 %v5694
    %v7222 = vpop.f32.mrb[0].mxu0
    %v7223 = vadd.f32 %v6838, %v7222
    %v7224 = vpop.f32.mrb[0].mxu0
    %7225 = vmatprep.mubr.f32.mxu0 %v5704
    %7226 = vmatmul.mubr.f32.gmra.mrb[0].mxu0 %v5703
    %v7227 = vpop.f32.mrb[0].mxu0
    %v7228 = vadd.f32 %v6843, %v7227
    %v7229 = vpop.f32.mrb[0].mxu0
    %7230 = vmatprep.mubr.f32.mxu0 %v5713
    %7231 = vmatmul.mubr.f32.gmra.mrb[0].mxu0 %v5712
    %v7232 = vpop.f32.mrb[0].mxu0
    %v7233 = vadd.f32 %v6848, %v7232
    %v7234 = vpop.f32.mrb[0].mxu0
    %7235 = vmatprep.mubr.f32.mxu0 %v5722
    %7236 = vmatmul.mubr.f32.gmra.mrb[0].mxu0 %v5721
    %v7237 = vpop.f32.mrb[0].mxu0
    %v7238 = vadd.f32 %v6853, %v7237
    %v7239 = vpop.f32.mrb[0].mxu0
    %7240 = vmatprep.mubr.f32.mxu0 %v5731
    %7241 = vmatmul.mubr.f32.gmra.mrb[0].mxu0 %v5730
    %v7242 = vpop.f32.mrb[0].mxu0
    %v7243 = vadd.f32 %v6858, %v7242
    %v7244 = vpop.f32.mrb[0].mxu0
    %7245 = vmatprep.mubr.f32.mxu0 %v5740
    %7246 = vmatmul.mubr.f32.gmra.mrb[0].mxu0 %v5739
    %v7247 = vpop.f32.mrb[0].mxu0
    %v7248 = vadd.f32 %v6863, %v7247
    %v7249 = vpop.f32.mrb[0].mxu0
    %7250 = vmatprep.mubr.f32.mxu0 %v5749
    %7251 = vmatmul.mubr.f32.gmra.mrb[0].mxu0 %v5748
    %v7252 = vpop.f32.mrb[0].mxu0
    %v7253 = vadd.f32 %v6868, %v7252
    %v7254 = vpop.f32.mrb[0].mxu0
    %7255 = vmatprep.mubr.f32.mxu0 %v5758
    %7256 = vmatmul.mubr.f32.gmra.mrb[0].mxu0 %v5757
    %v7257 = vpop.f32.mrb[0].mxu0
    %v7258 = vadd.f32 %v6873, %v7257
    %v7259 = vpop.f32.mrb[0].mxu0
    %7260 = vmatprep.mubr.f32.mxu0 %v5767
    %7261 = vmatmul.mubr.f32.gmra.mrb[0].mxu0 %v5766
    %v7262 = vpop.f32.mrb[0].mxu0
    %v7263 = vadd.f32 %v6878, %v7262
    %v7264 = vpop.f32.mrb[0].mxu0
    %7265 = vmatprep.mubr.f32.mxu0 %v5776
    %7266 = vmatmul.mubr.f32.gmra.mrb[0].mxu0 %v5775
    %v7267 = vpop.f32.mrb[0].mxu0
    %v7268 = vadd.f32 %v6883, %v7267
    %v7269 = vpop.f32.mrb[0].mxu0
    %7270 = vmatprep.mubr.f32.mxu0 %v5785
    %7271 = vmatmul.mubr.f32.gmra.mrb[0].mxu0 %v5784
    %v7272 = vpop.f32.mrb[0].mxu0
    %v7273 = vadd.f32 %v6888, %v7272
    %v7274 = vpop.f32.mrb[0].mxu0
    %7275 = vmatprep.mubr.f32.mxu0 %v5794
    %7276 = vmatmul.mubr.f32.gmra.mrb[0].mxu0 %v5793
    %v7277 = vpop.f32.mrb[0].mxu0
    %v7278 = vadd.f32 %v6893, %v7277
    %v7279 = vpop.f32.mrb[0].mxu0
    %7280 = vmatprep.mubr.f32.mxu0 %v5803
    %7281 = vmatmul.mubr.f32.gmra.mrb[0].mxu0 %v5802
    %v7282 = vpop.f32.mrb[0].mxu0
    %v7283 = vadd.f32 %v6898, %v7282
    %v7284 = vpop.f32.mrb[0].mxu0
    %7285 = vmatprep.mubr.f32.mxu0 %v5812
    %7286 = vmatmul.mubr.f32.gmra.mrb[0].mxu0 %v5811
    %v7287 = vpop.f32.mrb[0].mxu0
    %v7288 = vadd.f32 %v6903, %v7287
    %v7289 = vpop.f32.mrb[0].mxu0
    %7290 = vmatprep.mubr.f32.mxu0 %v5821
    %7291 = vmatmul.mubr.f32.gmra.mrb[0].mxu0 %v5820
    %v7292 = vpop.f32.mrb[0].mxu0
    %v7293 = vadd.f32 %v6908, %v7292
    %v7294 = vpop.f32.mrb[0].mxu0
    %7295 = vmatprep.mubr.f32.mxu0 %v5830
    %7296 = vmatmul.mubr.f32.gmra.mrb[0].mxu0 %v5829
    %v7297 = vpop.f32.mrb[0].mxu0
    %v7298 = vadd.f32 %v6913, %v7297
    %v7299 = vpop.f32.mrb[0].mxu0
    %7300 = vmatprep.mubr.f32.mxu0 %v5839
    %7301 = vmatmul.mubr.f32.gmra.mrb[0].mxu0 %v5838
    %v7302 = vpop.f32.mrb[0].mxu0
    %v7303 = vadd.f32 %v6918, %v7302
    %v7304 = vpop.f32.mrb[0].mxu0
    %7305 = vmatprep.mubr.f32.mxu0 %v5848
    %7306 = vmatmul.mubr.f32.gmra.mrb[0].mxu0 %v5847
    %v7307 = vpop.f32.mrb[0].mxu0
    %v7308 = vadd.f32 %v6923, %v7307
    %v7309 = vpop.f32.mrb[0].mxu0
    %7310 = vmatprep.mubr.f32.mxu0 %v5857
    %7311 = vmatmul.mubr.f32.gmra.mrb[0].mxu0 %v5856
    %v7312 = vpop.f32.mrb[0].mxu0
    %v7313 = vadd.f32 %v6928, %v7312
    %v7314 = vpop.f32.mrb[0].mxu0
    %7315 = vmatprep.mubr.f32.mxu0 %v5866
    %7316 = vmatmul.mubr.f32.gmra.mrb[0].mxu0 %v5865
    %v7317 = vpop.f32.mrb[0].mxu0
    %v7318 = vadd.f32 %v6933, %v7317
    %v7319 = vpop.f32.mrb[0].mxu0
    %7320 = vmatprep.mubr.f32.mxu0 %v5875
    %7321 = vmatmul.mubr.f32.gmra.mrb[0].mxu0 %v5874
    %v7322 = vpop.f32.mrb[0].mxu0
    %v7323 = vadd.f32 %v6938, %v7322
    %v7324 = vpop.f32.mrb[0].mxu0
    %7325 = vmatprep.mubr.f32.mxu0 %v5884
    %7326 = vmatmul.mubr.f32.gmra.mrb[0].mxu0 %v5883
    %v7327 = vpop.f32.mrb[0].mxu0
    %v7328 = vadd.f32 %v6943, %v7327
    %v7329 = vpop.f32.mrb[0].mxu0
    %7330 = vmatprep.mubr.f32.mxu0 %v5893
    %7331 = vmatmul.mubr.f32.gmra.mrb[0].mxu0 %v5892
    %v7332 = vpop.f32.mrb[0].mxu0
    %v7333 = vadd.f32 %v6948, %v7332
    %v7334 = vpop.f32.mrb[0].mxu0
    %7335 = vmatprep.mubr.f32.mxu0 %v5902
    %7336 = vmatmul.mubr.f32.gmra.mrb[0].mxu0 %v5901
    %v7337 = vpop.f32.mrb[0].mxu0
    %v7338 = vadd.f32 %v6953, %v7337
    %v7339 = vpop.f32.mrb[0].mxu0
    %7340 = vmatprep.mubr.f32.mxu0 %v5911
    %7341 = vmatmul.mubr.f32.gmra.mrb[0].mxu0 %v5910
    %v7342 = vpop.f32.mrb[0].mxu0
    %v7343 = vadd.f32 %v6958, %v7342
    %v7344 = vpop.f32.mrb[0].mxu0
    %7345 = vmatprep.mubr.f32.mxu0 %v5920
    %7346 = vmatmul.mubr.f32.gmra.mrb[0].mxu0 %v5919
    %v7347 = vpop.f32.mrb[0].mxu0
    %v7348 = vadd.f32 %v6963, %v7347
    %v7349 = vpop.f32.mrb[0].mxu0
    %7350 = vmatprep.mubr.f32.mxu0 %v5929
    %7351 = vmatmul.mubr.f32.gmra.mrb[0].mxu0 %v5928
    %v7352 = vpop.f32.mrb[0].mxu0
    %v7353 = vadd.f32 %v6968, %v7352
    %v7354 = vpop.f32.mrb[0].mxu0
    %7355 = vmatprep.mubr.f32.mxu0 %v5938
    %7356 = vmatmul.mubr.f32.gmra.mrb[0].mxu0 %v5937
    %v7357 = vpop.f32.mrb[0].mxu0
    %v7358 = vadd.f32 %v6973, %v7357
    %v7359 = vpop.f32.mrb[0].mxu0
    %7360 = vmatprep.mubr.f32.mxu0 %v5947
    %7361 = vmatmul.mubr.f32.gmra.mrb[0].mxu0 %v5946
    %v7362 = vpop.f32.mrb[0].mxu0
    %v7363 = vadd.f32 %v6978, %v7362
    %v7364 = vpop.f32.mrb[0].mxu0
    %7365 = vmatprep.mubr.f32.mxu0 %v5956
    %7366 = vmatmul.mubr.f32.gmra.mrb[0].mxu0 %v5955
    %v7367 = vpop.f32.mrb[0].mxu0
    %v7368 = vadd.f32 %v6983, %v7367
    %v7369 = vpop.f32.mrb[0].mxu0
    %7370 = vmatprep.mubr.f32.mxu0 %v5965
    %7371 = vmatmul.mubr.f32.gmra.mrb[0].mxu0 %v5964
    %v7372 = vpop.f32.mrb[0].mxu0
    %v7373 = vadd.f32 %v6988, %v7372
    %v7374 = vpop.f32.mrb[0].mxu0
    %7375 = vmatprep.mubr.f32.mxu0 %v5974
    %7376 = vmatmul.mubr.f32.gmra.mrb[0].mxu0 %v5973
    %v7377 = vpop.f32.mrb[0].mxu0
    %v7378 = vadd.f32 %v6993, %v7377
    %v7379 = vpop.f32.mrb[0].mxu0
    %7380 = vmatprep.mubr.f32.mxu0 %v5983
    %7381 = vmatmul.mubr.f32.gmra.mrb[0].mxu0 %v5982
    %v7382 = vpop.f32.mrb[0].mxu0
    %v7383 = vadd.f32 %v6998, %v7382
    %v7384 = vpop.f32.mrb[0].mxu0
    %7385 = vmatprep.mubr.f32.mxu0 %v5992
    %7386 = vmatmul.mubr.f32.gmra.mrb[0].mxu0 %v5991
    %v7387 = vpop.f32.mrb[0].mxu0
    %v7388 = vadd.f32 %v7003, %v7387
    %v7389 = vpop.f32.mrb[0].mxu0
    %7390 = vmatprep.mubr.f32.mxu0 %v6001
    %7391 = vmatmul.mubr.f32.gmra.mrb[0].mxu0 %v6000
    %v7392 = vpop.f32.mrb[0].mxu0
    %v7393 = vadd.f32 %v7008, %v7392
    %v7394 = vpop.f32.mrb[0].mxu0
    %7395 = vmatprep.mubr.f32.mxu0 %v6010
    %7396 = vmatmul.mubr.f32.gmra.mrb[0].mxu0 %v6009
    %v7397 = vpop.f32.mrb[0].mxu0
    %v7398 = vadd.f32 %v7013, %v7397
    %v7399 = vpop.f32.mrb[0].mxu0
    %7400 = vmatprep.mubr.f32.mxu0 %v6019
    %7401 = vmatmul.mubr.f32.gmra.mrb[0].mxu0 %v6018
    %v7402 = vpop.f32.mrb[0].mxu0
    %v7403 = vadd.f32 %v7018, %v7402
    %v7404 = vpop.f32.mrb[0].mxu0
    %7405 = vmatprep.mubr.f32.mxu0 %v6028
    %7406 = vmatmul.mubr.f32.gmra.mrb[0].mxu0 %v6027
    %v7407 = vpop.f32.mrb[0].mxu0
    %v7408 = vadd.f32 %v7023, %v7407
    %v7409 = vpop.f32.mrb[0].mxu0
    %7410 = vmatprep.mubr.f32.mxu0 %v6037
    %7411 = vmatmul.mubr.f32.gmra.mrb[0].mxu0 %v6036
    %v7412 = vpop.f32.mrb[0].mxu0
    %v7413 = vadd.f32 %v7028, %v7412
    %v7414 = vpop.f32.mrb[0].mxu0
    %7415 = vmatprep.mubr.f32.mxu0 %v6046
    %7416 = vmatmul.mubr.f32.gmra.mrb[0].mxu0 %v6045
    %v7417 = vpop.f32.mrb[0].mxu0
    %v7418 = vadd.f32 %v7033, %v7417
    %v7419 = vpop.f32.mrb[0].mxu0
    %7420 = vmatprep.mubr.f32.mxu0 %v6055
    %7421 = vmatmul.mubr.f32.gmra.mrb[0].mxu0 %v6054
    %v7422 = vpop.f32.mrb[0].mxu0
    %v7423 = vadd.f32 %v7038, %v7422
    %v7424 = vpop.f32.mrb[0].mxu0
    %7425 = vmatprep.mubr.f32.mxu0 %v6064
    %7426 = vmatmul.mubr.f32.gmra.mrb[0].mxu0 %v6063
    %v7427 = vpop.f32.mrb[0].mxu0
    %v7428 = vadd.f32 %v7043, %v7427
    %v7429 = vpop.f32.mrb[0].mxu0
    %7430 = vmatprep.mubr.f32.mxu0 %v6073
    %7431 = vmatmul.mubr.f32.gmra.mrb[0].mxu0 %v6072
    %v7432 = vpop.f32.mrb[0].mxu0
    %v7433 = vadd.f32 %v7048, %v7432
    %v7434 = vpop.f32.mrb[0].mxu0
    %7435 = vmatprep.mubr.f32.mxu0 %v6082
    %7436 = vmatmul.mubr.f32.gmra.mrb[0].mxu0 %v6081
    %v7437 = vpop.f32.mrb[0].mxu0
    %v7438 = vadd.f32 %v7053, %v7437
    %v7439 = vpop.f32.mrb[0].mxu0
    %7440 = vmatprep.mubr.f32.mxu0 %v6091
    %7441 = vmatmul.mubr.f32.gmra.mrb[0].mxu0 %v6090
    %v7442 = vpop.f32.mrb[0].mxu0
    %v7443 = vadd.f32 %v7058, %v7442
    %v7444 = vpop.f32.mrb[0].mxu0
    %7445 = vmatprep.mubr.f32.mxu0 %v6100
    %7446 = vmatmul.mubr.f32.gmra.mrb[0].mxu0 %v6099
    %v7447 = vpop.f32.mrb[0].mxu0
    %v7448 = vadd.f32 %v7063, %v7447
    %v7449 = vpop.f32.mrb[0].mxu0
    %7450 = vmatprep.mubr.f32.mxu0 %v6109
    %7451 = vmatmul.mubr.f32.gmra.mrb[0].mxu0 %v6108
    %v7452 = vpop.f32.mrb[0].mxu0
    %v7453 = vadd.f32 %v7068, %v7452
    %v7454 = vpop.f32.mrb[0].mxu0
    %7455 = vmatprep.mubr.f32.mxu0 %v6118
    %7456 = vmatmul.mubr.f32.gmra.mrb[0].mxu0 %v6117
    %v7457 = vpop.f32.mrb[0].mxu0
    %v7458 = vadd.f32 %v7073, %v7457
    %v7459 = vpop.f32.mrb[0].mxu0
    %7460 = vmatprep.mubr.f32.mxu0 %v6127
    %7461 = vmatmul.mubr.f32.gmra.mrb[0].mxu0 %v6126
    %v7462 = vpop.f32.mrb[0].mxu0
    %v7463 = vadd.f32 %v7078, %v7462
    %v7464 = vpop.f32.mrb[0].mxu0
    %7465 = vmatprep.mubr.f32.mxu0 %v6136
    %7466 = vmatmul.mubr.f32.gmra.mrb[0].mxu0 %v6135
    %v7467 = vpop.f32.mrb[0].mxu0
    %v7468 = vadd.f32 %v7083, %v7467
    %v7469 = vpop.f32.mrb[0].mxu0
    %7470 = vmatprep.mubr.f32.mxu0 %v6145
    %7471 = vmatmul.mubr.f32.gmra.mrb[0].mxu0 %v6144
    %v7472 = vpop.f32.mrb[0].mxu0
    %v7473 = vadd.f32 %v7088, %v7472
    %v7474 = vpop.f32.mrb[0].mxu0
    %7475 = vmatprep.mubr.f32.mxu0 %v6154
    %7476 = vmatmul.mubr.f32.gmra.mrb[0].mxu0 %v6153
    %v7477 = vpop.f32.mrb[0].mxu0
    %v7478 = vadd.f32 %v7093, %v7477
    %v7479 = vpop.f32.mrb[0].mxu0
    %7480 = vmatprep.mubr.f32.mxu0 %v6163
    %7481 = vmatmul.mubr.f32.gmra.mrb[0].mxu0 %v6162
    %v7482 = vpop.f32.mrb[0].mxu0
    %v7483 = vadd.f32 %v7098, %v7482
    %v7484 = vpop.f32.mrb[0].mxu0
    %7485 = vmatprep.mubr.f32.mxu0 %v6172
    %7486 = vmatmul.mubr.f32.gmra.mrb[0].mxu0 %v6171
    %v7487 = vpop.f32.mrb[0].mxu0
    %v7488 = vadd.f32 %v7103, %v7487
    %v7489 = vpop.f32.mrb[0].mxu0
    %7490 = vmatprep.mubr.f32.mxu0 %v6181
    %7491 = vmatmul.mubr.f32.gmra.mrb[0].mxu0 %v6180
    %v7492 = vpop.f32.mrb[0].mxu0
    %v7493 = vadd.f32 %v7108, %v7492
    %v7494 = vpop.f32.mrb[0].mxu0
    %7495 = vmatprep.mubr.f32.mxu0 %v6190
    %7496 = vmatmul.mubr.f32.gmra.mrb[0].mxu0 %v6189
    %v7497 = vpop.f32.mrb[0].mxu0
    %v7498 = vadd.f32 %v7113, %v7497
    %v7499 = vpop.f32.mrb[0].mxu0
    %7500 = vmatprep.mubr.f32.mxu0 %v6199
    %7501 = vmatmul.mubr.f32.gmra.mrb[0].mxu0 %v6198
    %v7502 = vpop.f32.mrb[0].mxu0
    %v7503 = vadd.f32 %v7118, %v7502
    %v7504 = vpop.f32.mrb[0].mxu0
    %7505 = vmatprep.mubr.f32.mxu0 %v6208
    %7506 = vmatmul.mubr.f32.gmra.mrb[0].mxu0 %v6207
    %v7507 = vpop.f32.mrb[0].mxu0
    %v7508 = vadd.f32 %v7123, %v7507
    %v7509 = vpop.f32.mrb[0].mxu0
    %7510 = vdwg.mxu0
    %7511 = vmatprep.subr.mxu0 0.0
    %7512 = vmatpush1.msra.mxu0 %v6308
    %7513 = vmatprep.subr.mxu0 0.0
    %7514 = vmatpush1.msra.mxu0 %v6309
    %7515 = vmatprep.subr.mxu0 0.0
    %7516 = vmatpush1.msra.mxu0 %v6310
    %7517 = vmatprep.subr.mxu0 0.0
    %7518 = vmatpush1.msra.mxu0 %v6311
    %7519 = vmatprep.subr.mxu0 0.0
    %7520 = vmatpush1.msra.mxu0 %v6312
    %7521 = vmatprep.subr.mxu0 0.0
    %7522 = vmatpush1.msra.mxu0 %v6313
    %7523 = vmatprep.subr.mxu0 0.0
    %7524 = vmatpush1.msra.mxu0 %v6314
    %7525 = vmatprep.subr.mxu0 0.0
    %7526 = vmatpush1.msra.mxu0 %v6315
    %7527 = vmatprep.subr.mxu0 0.0
    %7528 = vmatpush1.msra.mxu0 %v6316
    %7529 = vmatprep.subr.mxu0 0.0
    %7530 = vmatpush1.msra.mxu0 %v6317
    %7531 = vmatprep.subr.mxu0 0.0
    %7532 = vmatpush1.msra.mxu0 %v6318
    %7533 = vmatprep.subr.mxu0 0.0
    %7534 = vmatpush1.msra.mxu0 %v6319
    %7535 = vmatprep.subr.mxu0 0.0
    %7536 = vmatpush1.msra.mxu0 %v6320
    %7537 = vmatprep.subr.mxu0 0.0
    %7538 = vmatpush1.msra.mxu0 %v6321
    %7539 = vmatprep.subr.mxu0 0.0
    %7540 = vmatpush1.msra.mxu0 %v6322
    %7541 = vmatprep.subr.mxu0 0.0
    %7542 = vmatpush1.msra.mxu0 %v6323
    %7543 = vmatprep.subr.mxu0 0.0
    %7544 = vmatpush1.msra.mxu0 %v6324
    %7545 = vmatprep.subr.mxu0 0.0
    %7546 = vmatpush1.msra.mxu0 %v6325
    %7547 = vmatprep.subr.mxu0 0.0
    %7548 = vmatpush1.msra.mxu0 %v6326
    %7549 = vmatprep.subr.mxu0 0.0
    %7550 = vmatpush1.msra.mxu0 %v6327
    %7551 = vmatprep.subr.mxu0 0.0
    %7552 = vmatpush1.msra.mxu0 %v6328
    %7553 = vmatprep.subr.mxu0 0.0
    %7554 = vmatpush1.msra.mxu0 %v6329
    %7555 = vmatprep.subr.mxu0 0.0
    %7556 = vmatpush1.msra.mxu0 %v6330
    %7557 = vmatprep.subr.mxu0 0.0
    %7558 = vmatpush1.msra.mxu0 %v6331
    %7559 = vmatprep.subr.mxu0 0.0
    %7560 = vmatpush1.msra.mxu0 %v6332
    %7561 = vmatprep.subr.mxu0 0.0
    %7562 = vmatpush1.msra.mxu0 %v6333
    %7563 = vmatprep.subr.mxu0 0.0
    %7564 = vmatpush1.msra.mxu0 %v6334
    %7565 = vmatprep.subr.mxu0 0.0
    %7566 = vmatpush1.msra.mxu0 %v6335
    %7567 = vmatprep.subr.mxu0 0.0
    %7568 = vmatpush1.msra.mxu0 %v6336
    %7569 = vmatprep.subr.mxu0 0.0
    %7570 = vmatpush1.msra.mxu0 %v6337
    %7571 = vmatprep.subr.mxu0 0.0
    %7572 = vmatpush1.msra.mxu0 %v6338
    %7573 = vmatprep.subr.mxu0 0.0
    %7574 = vmatpush1.msra.mxu0 %v6339
    %7575 = vmatprep.mubr.f32.mxu0 %v5643
    %7576 = vmatmul.mubr.f32.gmra.mrb[0].mxu0 %v5642
    %v7577 = vpop.f32.mrb[0].mxu0
    %v7578 = vadd.f32 %v7193, %v7577
    %v7579 = vpop.f32.mrb[0].mxu0
    %7580 = vmatprep.mubr.f32.mxu0 %v5652
    %7581 = vmatmul.mubr.f32.gmra.mrb[0].mxu0 %v5651
    %v7582 = vpop.f32.mrb[0].mxu0
    %v7583 = vadd.f32 %v7198, %v7582
    %v7584 = vpop.f32.mrb[0].mxu0
    %7585 = vmatprep.mubr.f32.mxu0 %v5661
    %7586 = vmatmul.mubr.f32.gmra.mrb[0].mxu0 %v5660
    %v7587 = vpop.f32.mrb[0].mxu0
    %v7588 = vadd.f32 %v7203, %v7587
    %v7589 = vpop.f32.mrb[0].mxu0
    %7590 = vmatprep.mubr.f32.mxu0 %v5670
    %7591 = vmatmul.mubr.f32.gmra.mrb[0].mxu0 %v5669
    %v7592 = vpop.f32.mrb[0].mxu0
    %v7593 = vadd.f32 %v7208, %v7592
    %v7594 = vpop.f32.mrb[0].mxu0
    %7595 = vmatprep.mubr.f32.mxu0 %v5679
    %7596 = vmatmul.mubr.f32.gmra.mrb[0].mxu0 %v5678
    %v7597 = vpop.f32.mrb[0].mxu0
    %v7598 = vadd.f32 %v7213, %v7597
    %v7599 = vpop.f32.mrb[0].mxu0
    %7600 = vmatprep.mubr.f32.mxu0 %v5688
    %7601 = vmatmul.mubr.f32.gmra.mrb[0].mxu0 %v5687
    %v7602 = vpop.f32.mrb[0].mxu0
    %v7603 = vadd.f32 %v7218, %v7602
    %v7604 = vpop.f32.mrb[0].mxu0
    %7605 = vmatprep.mubr.f32.mxu0 %v5697
    %7606 = vmatmul.mubr.f32.gmra.mrb[0].mxu0 %v5696
    %v7607 = vpop.f32.mrb[0].mxu0
    %v7608 = vadd.f32 %v7223, %v7607
    %v7609 = vpop.f32.mrb[0].mxu0
    %7610 = vmatprep.mubr.f32.mxu0 %v5706
    %7611 = vmatmul.mubr.f32.gmra.mrb[0].mxu0 %v5705
    %v7612 = vpop.f32.mrb[0].mxu0
    %v7613 = vadd.f32 %v7228, %v7612
    %v7614 = vpop.f32.mrb[0].mxu0
    %7615 = vmatprep.mubr.f32.mxu0 %v5715
    %7616 = vmatmul.mubr.f32.gmra.mrb[0].mxu0 %v5714
    %v7617 = vpop.f32.mrb[0].mxu0
    %v7618 = vadd.f32 %v7233, %v7617
    %v7619 = vpop.f32.mrb[0].mxu0
    %7620 = vmatprep.mubr.f32.mxu0 %v5724
    %7621 = vmatmul.mubr.f32.gmra.mrb[0].mxu0 %v5723
    %v7622 = vpop.f32.mrb[0].mxu0
    %v7623 = vadd.f32 %v7238, %v7622
    %v7624 = vpop.f32.mrb[0].mxu0
    %7625 = vmatprep.mubr.f32.mxu0 %v5733
    %7626 = vmatmul.mubr.f32.gmra.mrb[0].mxu0 %v5732
    %v7627 = vpop.f32.mrb[0].mxu0
    %v7628 = vadd.f32 %v7243, %v7627
    %v7629 = vpop.f32.mrb[0].mxu0
    %7630 = vmatprep.mubr.f32.mxu0 %v5742
    %7631 = vmatmul.mubr.f32.gmra.mrb[0].mxu0 %v5741
    %v7632 = vpop.f32.mrb[0].mxu0
    %v7633 = vadd.f32 %v7248, %v7632
    %v7634 = vpop.f32.mrb[0].mxu0
    %7635 = vmatprep.mubr.f32.mxu0 %v5751
    %7636 = vmatmul.mubr.f32.gmra.mrb[0].mxu0 %v5750
    %v7637 = vpop.f32.mrb[0].mxu0
    %v7638 = vadd.f32 %v7253, %v7637
    %v7639 = vpop.f32.mrb[0].mxu0
    %7640 = vmatprep.mubr.f32.mxu0 %v5760
    %7641 = vmatmul.mubr.f32.gmra.mrb[0].mxu0 %v5759
    %v7642 = vpop.f32.mrb[0].mxu0
    %v7643 = vadd.f32 %v7258, %v7642
    %v7644 = vpop.f32.mrb[0].mxu0
    %7645 = vmatprep.mubr.f32.mxu0 %v5769
    %7646 = vmatmul.mubr.f32.gmra.mrb[0].mxu0 %v5768
    %v7647 = vpop.f32.mrb[0].mxu0
    %v7648 = vadd.f32 %v7263, %v7647
    %v7649 = vpop.f32.mrb[0].mxu0
    %7650 = vmatprep.mubr.f32.mxu0 %v5778
    %7651 = vmatmul.mubr.f32.gmra.mrb[0].mxu0 %v5777
    %v7652 = vpop.f32.mrb[0].mxu0
    %v7653 = vadd.f32 %v7268, %v7652
    %v7654 = vpop.f32.mrb[0].mxu0
    %7655 = vmatprep.mubr.f32.mxu0 %v5787
    %7656 = vmatmul.mubr.f32.gmra.mrb[0].mxu0 %v5786
    %v7657 = vpop.f32.mrb[0].mxu0
    %v7658 = vadd.f32 %v7273, %v7657
    %v7659 = vpop.f32.mrb[0].mxu0
    %7660 = vmatprep.mubr.f32.mxu0 %v5796
    %7661 = vmatmul.mubr.f32.gmra.mrb[0].mxu0 %v5795
    %v7662 = vpop.f32.mrb[0].mxu0
    %v7663 = vadd.f32 %v7278, %v7662
    %v7664 = vpop.f32.mrb[0].mxu0
    %7665 = vmatprep.mubr.f32.mxu0 %v5805
    %7666 = vmatmul.mubr.f32.gmra.mrb[0].mxu0 %v5804
    %v7667 = vpop.f32.mrb[0].mxu0
    %v7668 = vadd.f32 %v7283, %v7667
    %v7669 = vpop.f32.mrb[0].mxu0
    %7670 = vmatprep.mubr.f32.mxu0 %v5814
    %7671 = vmatmul.mubr.f32.gmra.mrb[0].mxu0 %v5813
    %v7672 = vpop.f32.mrb[0].mxu0
    %v7673 = vadd.f32 %v7288, %v7672
    %v7674 = vpop.f32.mrb[0].mxu0
    %7675 = vmatprep.mubr.f32.mxu0 %v5823
    %7676 = vmatmul.mubr.f32.gmra.mrb[0].mxu0 %v5822
    %v7677 = vpop.f32.mrb[0].mxu0
    %v7678 = vadd.f32 %v7293, %v7677
    %v7679 = vpop.f32.mrb[0].mxu0
    %7680 = vmatprep.mubr.f32.mxu0 %v5832
    %7681 = vmatmul.mubr.f32.gmra.mrb[0].mxu0 %v5831
    %v7682 = vpop.f32.mrb[0].mxu0
    %v7683 = vadd.f32 %v7298, %v7682
    %v7684 = vpop.f32.mrb[0].mxu0
    %7685 = vmatprep.mubr.f32.mxu0 %v5841
    %7686 = vmatmul.mubr.f32.gmra.mrb[0].mxu0 %v5840
    %v7687 = vpop.f32.mrb[0].mxu0
    %v7688 = vadd.f32 %v7303, %v7687
    %v7689 = vpop.f32.mrb[0].mxu0
    %7690 = vmatprep.mubr.f32.mxu0 %v5850
    %7691 = vmatmul.mubr.f32.gmra.mrb[0].mxu0 %v5849
    %v7692 = vpop.f32.mrb[0].mxu0
    %v7693 = vadd.f32 %v7308, %v7692
    %v7694 = vpop.f32.mrb[0].mxu0
    %7695 = vmatprep.mubr.f32.mxu0 %v5859
    %7696 = vmatmul.mubr.f32.gmra.mrb[0].mxu0 %v5858
    %v7697 = vpop.f32.mrb[0].mxu0
    %v7698 = vadd.f32 %v7313, %v7697
    %v7699 = vpop.f32.mrb[0].mxu0
    %7700 = vmatprep.mubr.f32.mxu0 %v5868
    %7701 = vmatmul.mubr.f32.gmra.mrb[0].mxu0 %v5867
    %v7702 = vpop.f32.mrb[0].mxu0
    %v7703 = vadd.f32 %v7318, %v7702
    %v7704 = vpop.f32.mrb[0].mxu0
    %7705 = vmatprep.mubr.f32.mxu0 %v5877
    %7706 = vmatmul.mubr.f32.gmra.mrb[0].mxu0 %v5876
    %v7707 = vpop.f32.mrb[0].mxu0
    %v7708 = vadd.f32 %v7323, %v7707
    %v7709 = vpop.f32.mrb[0].mxu0
    %7710 = vmatprep.mubr.f32.mxu0 %v5886
    %7711 = vmatmul.mubr.f32.gmra.mrb[0].mxu0 %v5885
    %v7712 = vpop.f32.mrb[0].mxu0
    %v7713 = vadd.f32 %v7328, %v7712
    %v7714 = vpop.f32.mrb[0].mxu0
    %7715 = vmatprep.mubr.f32.mxu0 %v5895
    %7716 = vmatmul.mubr.f32.gmra.mrb[0].mxu0 %v5894
    %v7717 = vpop.f32.mrb[0].mxu0
    %v7718 = vadd.f32 %v7333, %v7717
    %v7719 = vpop.f32.mrb[0].mxu0
    %7720 = vmatprep.mubr.f32.mxu0 %v5904
    %7721 = vmatmul.mubr.f32.gmra.mrb[0].mxu0 %v5903
    %v7722 = vpop.f32.mrb[0].mxu0
    %v7723 = vadd.f32 %v7338, %v7722
    %v7724 = vpop.f32.mrb[0].mxu0
    %7725 = vmatprep.mubr.f32.mxu0 %v5913
    %7726 = vmatmul.mubr.f32.gmra.mrb[0].mxu0 %v5912
    %v7727 = vpop.f32.mrb[0].mxu0
    %v7728 = vadd.f32 %v7343, %v7727
    %v7729 = vpop.f32.mrb[0].mxu0
    %7730 = vmatprep.mubr.f32.mxu0 %v5922
    %7731 = vmatmul.mubr.f32.gmra.mrb[0].mxu0 %v5921
    %v7732 = vpop.f32.mrb[0].mxu0
    %v7733 = vadd.f32 %v7348, %v7732
    %v7734 = vpop.f32.mrb[0].mxu0
    %7735 = vmatprep.mubr.f32.mxu0 %v5931
    %7736 = vmatmul.mubr.f32.gmra.mrb[0].mxu0 %v5930
    %v7737 = vpop.f32.mrb[0].mxu0
    %v7738 = vadd.f32 %v7353, %v7737
    %v7739 = vpop.f32.mrb[0].mxu0
    %7740 = vmatprep.mubr.f32.mxu0 %v5940
    %7741 = vmatmul.mubr.f32.gmra.mrb[0].mxu0 %v5939
    %v7742 = vpop.f32.mrb[0].mxu0
    %v7743 = vadd.f32 %v7358, %v7742
    %v7744 = vpop.f32.mrb[0].mxu0
    %7745 = vmatprep.mubr.f32.mxu0 %v5949
    %7746 = vmatmul.mubr.f32.gmra.mrb[0].mxu0 %v5948
    %v7747 = vpop.f32.mrb[0].mxu0
    %v7748 = vadd.f32 %v7363, %v7747
    %v7749 = vpop.f32.mrb[0].mxu0
    %7750 = vmatprep.mubr.f32.mxu0 %v5958
    %7751 = vmatmul.mubr.f32.gmra.mrb[0].mxu0 %v5957
    %v7752 = vpop.f32.mrb[0].mxu0
    %v7753 = vadd.f32 %v7368, %v7752
    %v7754 = vpop.f32.mrb[0].mxu0
    %7755 = vmatprep.mubr.f32.mxu0 %v5967
    %7756 = vmatmul.mubr.f32.gmra.mrb[0].mxu0 %v5966
    %v7757 = vpop.f32.mrb[0].mxu0
    %v7758 = vadd.f32 %v7373, %v7757
    %v7759 = vpop.f32.mrb[0].mxu0
    %7760 = vmatprep.mubr.f32.mxu0 %v5976
    %7761 = vmatmul.mubr.f32.gmra.mrb[0].mxu0 %v5975
    %v7762 = vpop.f32.mrb[0].mxu0
    %v7763 = vadd.f32 %v7378, %v7762
    %v7764 = vpop.f32.mrb[0].mxu0
    %7765 = vmatprep.mubr.f32.mxu0 %v5985
    %7766 = vmatmul.mubr.f32.gmra.mrb[0].mxu0 %v5984
    %v7767 = vpop.f32.mrb[0].mxu0
    %v7768 = vadd.f32 %v7383, %v7767
    %v7769 = vpop.f32.mrb[0].mxu0
    %7770 = vmatprep.mubr.f32.mxu0 %v5994
    %7771 = vmatmul.mubr.f32.gmra.mrb[0].mxu0 %v5993
    %v7772 = vpop.f32.mrb[0].mxu0
    %v7773 = vadd.f32 %v7388, %v7772
    %v7774 = vpop.f32.mrb[0].mxu0
    %7775 = vmatprep.mubr.f32.mxu0 %v6003
    %7776 = vmatmul.mubr.f32.gmra.mrb[0].mxu0 %v6002
    %v7777 = vpop.f32.mrb[0].mxu0
    %v7778 = vadd.f32 %v7393, %v7777
    %v7779 = vpop.f32.mrb[0].mxu0
    %7780 = vmatprep.mubr.f32.mxu0 %v6012
    %7781 = vmatmul.mubr.f32.gmra.mrb[0].mxu0 %v6011
    %v7782 = vpop.f32.mrb[0].mxu0
    %v7783 = vadd.f32 %v7398, %v7782
    %v7784 = vpop.f32.mrb[0].mxu0
    %7785 = vmatprep.mubr.f32.mxu0 %v6021
    %7786 = vmatmul.mubr.f32.gmra.mrb[0].mxu0 %v6020
    %v7787 = vpop.f32.mrb[0].mxu0
    %v7788 = vadd.f32 %v7403, %v7787
    %v7789 = vpop.f32.mrb[0].mxu0
    %7790 = vmatprep.mubr.f32.mxu0 %v6030
    %7791 = vmatmul.mubr.f32.gmra.mrb[0].mxu0 %v6029
    %v7792 = vpop.f32.mrb[0].mxu0
    %v7793 = vadd.f32 %v7408, %v7792
    %v7794 = vpop.f32.mrb[0].mxu0
    %7795 = vmatprep.mubr.f32.mxu0 %v6039
    %7796 = vmatmul.mubr.f32.gmra.mrb[0].mxu0 %v6038
    %v7797 = vpop.f32.mrb[0].mxu0
    %v7798 = vadd.f32 %v7413, %v7797
    %v7799 = vpop.f32.mrb[0].mxu0
    %7800 = vmatprep.mubr.f32.mxu0 %v6048
    %7801 = vmatmul.mubr.f32.gmra.mrb[0].mxu0 %v6047
    %v7802 = vpop.f32.mrb[0].mxu0
    %v7803 = vadd.f32 %v7418, %v7802
    %v7804 = vpop.f32.mrb[0].mxu0
    %7805 = vmatprep.mubr.f32.mxu0 %v6057
    %7806 = vmatmul.mubr.f32.gmra.mrb[0].mxu0 %v6056
    %v7807 = vpop.f32.mrb[0].mxu0
    %v7808 = vadd.f32 %v7423, %v7807
    %v7809 = vpop.f32.mrb[0].mxu0
    %7810 = vmatprep.mubr.f32.mxu0 %v6066
    %7811 = vmatmul.mubr.f32.gmra.mrb[0].mxu0 %v6065
    %v7812 = vpop.f32.mrb[0].mxu0
    %v7813 = vadd.f32 %v7428, %v7812
    %v7814 = vpop.f32.mrb[0].mxu0
    %7815 = vmatprep.mubr.f32.mxu0 %v6075
    %7816 = vmatmul.mubr.f32.gmra.mrb[0].mxu0 %v6074
    %v7817 = vpop.f32.mrb[0].mxu0
    %v7818 = vadd.f32 %v7433, %v7817
    %v7819 = vpop.f32.mrb[0].mxu0
    %7820 = vmatprep.mubr.f32.mxu0 %v6084
    %7821 = vmatmul.mubr.f32.gmra.mrb[0].mxu0 %v6083
    %v7822 = vpop.f32.mrb[0].mxu0
    %v7823 = vadd.f32 %v7438, %v7822
    %v7824 = vpop.f32.mrb[0].mxu0
    %7825 = vmatprep.mubr.f32.mxu0 %v6093
    %7826 = vmatmul.mubr.f32.gmra.mrb[0].mxu0 %v6092
    %v7827 = vpop.f32.mrb[0].mxu0
    %v7828 = vadd.f32 %v7443, %v7827
    %v7829 = vpop.f32.mrb[0].mxu0
    %7830 = vmatprep.mubr.f32.mxu0 %v6102
    %7831 = vmatmul.mubr.f32.gmra.mrb[0].mxu0 %v6101
    %v7832 = vpop.f32.mrb[0].mxu0
    %v7833 = vadd.f32 %v7448, %v7832
    %v7834 = vpop.f32.mrb[0].mxu0
    %7835 = vmatprep.mubr.f32.mxu0 %v6111
    %7836 = vmatmul.mubr.f32.gmra.mrb[0].mxu0 %v6110
    %v7837 = vpop.f32.mrb[0].mxu0
    %v7838 = vadd.f32 %v7453, %v7837
    %v7839 = vpop.f32.mrb[0].mxu0
    %7840 = vmatprep.mubr.f32.mxu0 %v6120
    %7841 = vmatmul.mubr.f32.gmra.mrb[0].mxu0 %v6119
    %v7842 = vpop.f32.mrb[0].mxu0
    %v7843 = vadd.f32 %v7458, %v7842
    %v7844 = vpop.f32.mrb[0].mxu0
    %7845 = vmatprep.mubr.f32.mxu0 %v6129
    %7846 = vmatmul.mubr.f32.gmra.mrb[0].mxu0 %v6128
    %v7847 = vpop.f32.mrb[0].mxu0
    %v7848 = vadd.f32 %v7463, %v7847
    %v7849 = vpop.f32.mrb[0].mxu0
    %7850 = vmatprep.mubr.f32.mxu0 %v6138
    %7851 = vmatmul.mubr.f32.gmra.mrb[0].mxu0 %v6137
    %v7852 = vpop.f32.mrb[0].mxu0
    %v7853 = vadd.f32 %v7468, %v7852
    %v7854 = vpop.f32.mrb[0].mxu0
    %7855 = vmatprep.mubr.f32.mxu0 %v6147
    %7856 = vmatmul.mubr.f32.gmra.mrb[0].mxu0 %v6146
    %v7857 = vpop.f32.mrb[0].mxu0
    %v7858 = vadd.f32 %v7473, %v7857
    %v7859 = vpop.f32.mrb[0].mxu0
    %7860 = vmatprep.mubr.f32.mxu0 %v6156
    %7861 = vmatmul.mubr.f32.gmra.mrb[0].mxu0 %v6155
    %v7862 = vpop.f32.mrb[0].mxu0
    %v7863 = vadd.f32 %v7478, %v7862
    %v7864 = vpop.f32.mrb[0].mxu0
    %7865 = vmatprep.mubr.f32.mxu0 %v6165
    %7866 = vmatmul.mubr.f32.gmra.mrb[0].mxu0 %v6164
    %v7867 = vpop.f32.mrb[0].mxu0
    %v7868 = vadd.f32 %v7483, %v7867
    %v7869 = vpop.f32.mrb[0].mxu0
    %7870 = vmatprep.mubr.f32.mxu0 %v6174
    %7871 = vmatmul.mubr.f32.gmra.mrb[0].mxu0 %v6173
    %v7872 = vpop.f32.mrb[0].mxu0
    %v7873 = vadd.f32 %v7488, %v7872
    %v7874 = vpop.f32.mrb[0].mxu0
    %7875 = vmatprep.mubr.f32.mxu0 %v6183
    %7876 = vmatmul.mubr.f32.gmra.mrb[0].mxu0 %v6182
    %v7877 = vpop.f32.mrb[0].mxu0
    %v7878 = vadd.f32 %v7493, %v7877
    %v7879 = vpop.f32.mrb[0].mxu0
    %7880 = vmatprep.mubr.f32.mxu0 %v6192
    %7881 = vmatmul.mubr.f32.gmra.mrb[0].mxu0 %v6191
    %v7882 = vpop.f32.mrb[0].mxu0
    %v7883 = vadd.f32 %v7498, %v7882
    %v7884 = vpop.f32.mrb[0].mxu0
    %7885 = vmatprep.mubr.f32.mxu0 %v6201
    %7886 = vmatmul.mubr.f32.gmra.mrb[0].mxu0 %v6200
    %v7887 = vpop.f32.mrb[0].mxu0
    %v7888 = vadd.f32 %v7503, %v7887
    %v7889 = vpop.f32.mrb[0].mxu0
    %7890 = vmatprep.mubr.f32.mxu0 %v6210
    %7891 = vmatmul.mubr.f32.gmra.mrb[0].mxu0 %v6209
    %v7892 = vpop.f32.mrb[0].mxu0
    %v7893 = vadd.f32 %v7508, %v7892
    %v7894 = vpop.f32.mrb[0].mxu0
    %7895 = vdwg.mxu0
    %7896 = vmatprep.subr.mxu0 0.0
    %7897 = vmatpush1.msra.mxu0 %v6340
    %7898 = vmatprep.subr.mxu0 0.0
    %7899 = vmatpush1.msra.mxu0 %v6341
    %7900 = vmatprep.subr.mxu0 0.0
    %7901 = vmatpush1.msra.mxu0 %v6342
    %7902 = vmatprep.subr.mxu0 0.0
    %7903 = vmatpush1.msra.mxu0 %v6343
    %7904 = vmatprep.subr.mxu0 0.0
    %7905 = vmatpush1.msra.mxu0 %v6344
    %7906 = vmatprep.subr.mxu0 0.0
    %7907 = vmatpush1.msra.mxu0 %v6345
    %7908 = vmatprep.subr.mxu0 0.0
    %7909 = vmatpush1.msra.mxu0 %v6346
    %7910 = vmatprep.subr.mxu0 0.0
    %7911 = vmatpush1.msra.mxu0 %v6347
    %7912 = vmatprep.subr.mxu0 0.0
    %7913 = vmatpush1.msra.mxu0 %v6348
    %7914 = vmatprep.subr.mxu0 0.0
    %7915 = vmatpush1.msra.mxu0 %v6349
    %7916 = vmatprep.subr.mxu0 0.0
    %7917 = vmatpush1.msra.mxu0 %v6350
    %7918 = vmatprep.subr.mxu0 0.0
    %7919 = vmatpush1.msra.mxu0 %v6351
    %7920 = vmatprep.subr.mxu0 0.0
    %7921 = vmatpush1.msra.mxu0 %v6352
    %7922 = vmatprep.subr.mxu0 0.0
    %7923 = vmatpush1.msra.mxu0 %v6353
    %7924 = vmatprep.subr.mxu0 0.0
    %7925 = vmatpush1.msra.mxu0 %v6354
    %7926 = vmatprep.subr.mxu0 0.0
    %7927 = vmatpush1.msra.mxu0 %v6355
    %7928 = vmatprep.subr.mxu0 0.0
    %7929 = vmatpush1.msra.mxu0 0.0
    %7930 = vmatprep.subr.mxu0 0.0
    %7931 = vmatpush1.msra.mxu0 0.0
    %7932 = vmatprep.subr.mxu0 0.0
    %7933 = vmatpush1.msra.mxu0 0.0
    %7934 = vmatprep.subr.mxu0 0.0
    %7935 = vmatpush1.msra.mxu0 0.0
    %7936 = vmatprep.subr.mxu0 0.0
    %7937 = vmatpush1.msra.mxu0 0.0
    %7938 = vmatprep.subr.mxu0 0.0
    %7939 = vmatpush1.msra.mxu0 0.0
    %7940 = vmatprep.subr.mxu0 0.0
    %7941 = vmatpush1.msra.mxu0 0.0
    %7942 = vmatprep.subr.mxu0 0.0
    %7943 = vmatpush1.msra.mxu0 0.0
    %7944 = vmatprep.subr.mxu0 0.0
    %7945 = vmatpush1.msra.mxu0 0.0
    %7946 = vmatprep.subr.mxu0 0.0
    %7947 = vmatpush1.msra.mxu0 0.0
    %7948 = vmatprep.subr.mxu0 0.0
    %7949 = vmatpush1.msra.mxu0 0.0
    %7950 = vmatprep.subr.mxu0 0.0
    %7951 = vmatpush1.msra.mxu0 0.0
    %7952 = vmatprep.subr.mxu0 0.0
    %7953 = vmatpush1.msra.mxu0 0.0
    %7954 = vmatprep.subr.mxu0 0.0
    %7955 = vmatpush1.msra.mxu0 0.0
    %7956 = vmatprep.subr.mxu0 0.0
    %7957 = vmatpush1.msra.mxu0 0.0
    %7958 = vmatprep.subr.mxu0 0.0
    %7959 = vmatpush1.msra.mxu0 0.0
    %7960 = vmatprep.mubr.f32.mxu0 0.0
    %7961 = vmatmul.mubr.f32.gmra.mrb[0].mxu0 %v5644
    %v7962 = vpop.f32.mrb[0].mxu0
    %v7963 = vadd.f32 %v7578, %v7962
    %v7964 = vpop.f32.mrb[0].mxu0
    %7965 = vmatprep.mubr.f32.mxu0 0.0
    %7966 = vmatmul.mubr.f32.gmra.mrb[0].mxu0 %v5653
    %v7967 = vpop.f32.mrb[0].mxu0
    %v7968 = vadd.f32 %v7583, %v7967
    %v7969 = vpop.f32.mrb[0].mxu0
    %7970 = vmatprep.mubr.f32.mxu0 0.0
    %7971 = vmatmul.mubr.f32.gmra.mrb[0].mxu0 %v5662
    %v7972 = vpop.f32.mrb[0].mxu0
    %v7973 = vadd.f32 %v7588, %v7972
    %v7974 = vpop.f32.mrb[0].mxu0
    %7975 = vmatprep.mubr.f32.mxu0 0.0
    %7976 = vmatmul.mubr.f32.gmra.mrb[0].mxu0 %v5671
    %v7977 = vpop.f32.mrb[0].mxu0
    %v7978 = vadd.f32 %v7593, %v7977
    %v7979 = vpop.f32.mrb[0].mxu0
    %7980 = vmatprep.mubr.f32.mxu0 0.0
    %7981 = vmatmul.mubr.f32.gmra.mrb[0].mxu0 %v5680
    %v7982 = vpop.f32.mrb[0].mxu0
    %v7983 = vadd.f32 %v7598, %v7982
    %v7984 = vpop.f32.mrb[0].mxu0
    %7985 = vmatprep.mubr.f32.mxu0 0.0
    %7986 = vmatmul.mubr.f32.gmra.mrb[0].mxu0 %v5689
    %v7987 = vpop.f32.mrb[0].mxu0
    %v7988 = vadd.f32 %v7603, %v7987
    %v7989 = vpop.f32.mrb[0].mxu0
    %7990 = vmatprep.mubr.f32.mxu0 0.0
    %7991 = vmatmul.mubr.f32.gmra.mrb[0].mxu0 %v5698
    %v7992 = vpop.f32.mrb[0].mxu0
    %v7993 = vadd.f32 %v7608, %v7992
    %v7994 = vpop.f32.mrb[0].mxu0
    %7995 = vmatprep.mubr.f32.mxu0 0.0
    %7996 = vmatmul.mubr.f32.gmra.mrb[0].mxu0 %v5707
    %v7997 = vpop.f32.mrb[0].mxu0
    %v7998 = vadd.f32 %v7613, %v7997
    %v7999 = vpop.f32.mrb[0].mxu0
    %8000 = vmatprep.mubr.f32.mxu0 0.0
    %8001 = vmatmul.mubr.f32.gmra.mrb[0].mxu0 %v5716
    %v8002 = vpop.f32.mrb[0].mxu0
    %v8003 = vadd.f32 %v7618, %v8002
    %v8004 = vpop.f32.mrb[0].mxu0
    %8005 = vmatprep.mubr.f32.mxu0 0.0
    %8006 = vmatmul.mubr.f32.gmra.mrb[0].mxu0 %v5725
    %v8007 = vpop.f32.mrb[0].mxu0
    %v8008 = vadd.f32 %v7623, %v8007
    %v8009 = vpop.f32.mrb[0].mxu0
    %8010 = vmatprep.mubr.f32.mxu0 0.0
    %8011 = vmatmul.mubr.f32.gmra.mrb[0].mxu0 %v5734
    %v8012 = vpop.f32.mrb[0].mxu0
    %v8013 = vadd.f32 %v7628, %v8012
    %v8014 = vpop.f32.mrb[0].mxu0
    %8015 = vmatprep.mubr.f32.mxu0 0.0
    %8016 = vmatmul.mubr.f32.gmra.mrb[0].mxu0 %v5743
    %v8017 = vpop.f32.mrb[0].mxu0
    %v8018 = vadd.f32 %v7633, %v8017
    %v8019 = vpop.f32.mrb[0].mxu0
    %8020 = vmatprep.mubr.f32.mxu0 0.0
    %8021 = vmatmul.mubr.f32.gmra.mrb[0].mxu0 %v5752
    %v8022 = vpop.f32.mrb[0].mxu0
    %v8023 = vadd.f32 %v7638, %v8022
    %v8024 = vpop.f32.mrb[0].mxu0
    %8025 = vmatprep.mubr.f32.mxu0 0.0
    %8026 = vmatmul.mubr.f32.gmra.mrb[0].mxu0 %v5761
    %v8027 = vpop.f32.mrb[0].mxu0
    %v8028 = vadd.f32 %v7643, %v8027
    %v8029 = vpop.f32.mrb[0].mxu0
    %8030 = vmatprep.mubr.f32.mxu0 0.0
    %8031 = vmatmul.mubr.f32.gmra.mrb[0].mxu0 %v5770
    %v8032 = vpop.f32.mrb[0].mxu0
    %v8033 = vadd.f32 %v7648, %v8032
    %v8034 = vpop.f32.mrb[0].mxu0
    %8035 = vmatprep.mubr.f32.mxu0 0.0
    %8036 = vmatmul.mubr.f32.gmra.mrb[0].mxu0 %v5779
    %v8037 = vpop.f32.mrb[0].mxu0
    %v8038 = vadd.f32 %v7653, %v8037
    %v8039 = vpop.f32.mrb[0].mxu0
    %8040 = vmatprep.mubr.f32.mxu0 0.0
    %8041 = vmatmul.mubr.f32.gmra.mrb[0].mxu0 %v5788
    %v8042 = vpop.f32.mrb[0].mxu0
    %v8043 = vadd.f32 %v7658, %v8042
    %v8044 = vpop.f32.mrb[0].mxu0
    %8045 = vmatprep.mubr.f32.mxu0 0.0
    %8046 = vmatmul.mubr.f32.gmra.mrb[0].mxu0 %v5797
    %v8047 = vpop.f32.mrb[0].mxu0
    %v8048 = vadd.f32 %v7663, %v8047
    %v8049 = vpop.f32.mrb[0].mxu0
    %8050 = vmatprep.mubr.f32.mxu0 0.0
    %8051 = vmatmul.mubr.f32.gmra.mrb[0].mxu0 %v5806
    %v8052 = vpop.f32.mrb[0].mxu0
    %v8053 = vadd.f32 %v7668, %v8052
    %v8054 = vpop.f32.mrb[0].mxu0
    %8055 = vmatprep.mubr.f32.mxu0 0.0
    %8056 = vmatmul.mubr.f32.gmra.mrb[0].mxu0 %v5815
    %v8057 = vpop.f32.mrb[0].mxu0
    %v8058 = vadd.f32 %v7673, %v8057
    %v8059 = vpop.f32.mrb[0].mxu0
    %8060 = vmatprep.mubr.f32.mxu0 0.0
    %8061 = vmatmul.mubr.f32.gmra.mrb[0].mxu0 %v5824
    %v8062 = vpop.f32.mrb[0].mxu0
    %v8063 = vadd.f32 %v7678, %v8062
    %v8064 = vpop.f32.mrb[0].mxu0
    %8065 = vmatprep.mubr.f32.mxu0 0.0
    %8066 = vmatmul.mubr.f32.gmra.mrb[0].mxu0 %v5833
    %v8067 = vpop.f32.mrb[0].mxu0
    %v8068 = vadd.f32 %v7683, %v8067
    %v8069 = vpop.f32.mrb[0].mxu0
    %8070 = vmatprep.mubr.f32.mxu0 0.0
    %8071 = vmatmul.mubr.f32.gmra.mrb[0].mxu0 %v5842
    %v8072 = vpop.f32.mrb[0].mxu0
    %v8073 = vadd.f32 %v7688, %v8072
    %v8074 = vpop.f32.mrb[0].mxu0
    %8075 = vmatprep.mubr.f32.mxu0 0.0
    %8076 = vmatmul.mubr.f32.gmra.mrb[0].mxu0 %v5851
    %v8077 = vpop.f32.mrb[0].mxu0
    %v8078 = vadd.f32 %v7693, %v8077
    %v8079 = vpop.f32.mrb[0].mxu0
    %8080 = vmatprep.mubr.f32.mxu0 0.0
    %8081 = vmatmul.mubr.f32.gmra.mrb[0].mxu0 %v5860
    %v8082 = vpop.f32.mrb[0].mxu0
    %v8083 = vadd.f32 %v7698, %v8082
    %v8084 = vpop.f32.mrb[0].mxu0
    %8085 = vmatprep.mubr.f32.mxu0 0.0
    %8086 = vmatmul.mubr.f32.gmra.mrb[0].mxu0 %v5869
    %v8087 = vpop.f32.mrb[0].mxu0
    %v8088 = vadd.f32 %v7703, %v8087
    %v8089 = vpop.f32.mrb[0].mxu0
    %8090 = vmatprep.mubr.f32.mxu0 0.0
    %8091 = vmatmul.mubr.f32.gmra.mrb[0].mxu0 %v5878
    %v8092 = vpop.f32.mrb[0].mxu0
    %v8093 = vadd.f32 %v7708, %v8092
    %v8094 = vpop.f32.mrb[0].mxu0
    %8095 = vmatprep.mubr.f32.mxu0 0.0
    %8096 = vmatmul.mubr.f32.gmra.mrb[0].mxu0 %v5887
    %v8097 = vpop.f32.mrb[0].mxu0
    %v8098 = vadd.f32 %v7713, %v8097
    %v8099 = vpop.f32.mrb[0].mxu0
    %8100 = vmatprep.mubr.f32.mxu0 0.0
    %8101 = vmatmul.mubr.f32.gmra.mrb[0].mxu0 %v5896
    %v8102 = vpop.f32.mrb[0].mxu0
    %v8103 = vadd.f32 %v7718, %v8102
    %v8104 = vpop.f32.mrb[0].mxu0
    %8105 = vmatprep.mubr.f32.mxu0 0.0
    %8106 = vmatmul.mubr.f32.gmra.mrb[0].mxu0 %v5905
    %v8107 = vpop.f32.mrb[0].mxu0
    %v8108 = vadd.f32 %v7723, %v8107
    %v8109 = vpop.f32.mrb[0].mxu0
    %8110 = vmatprep.mubr.f32.mxu0 0.0
    %8111 = vmatmul.mubr.f32.gmra.mrb[0].mxu0 %v5914
    %v8112 = vpop.f32.mrb[0].mxu0
    %v8113 = vadd.f32 %v7728, %v8112
    %v8114 = vpop.f32.mrb[0].mxu0
    %8115 = vmatprep.mubr.f32.mxu0 0.0
    %8116 = vmatmul.mubr.f32.gmra.mrb[0].mxu0 %v5923
    %v8117 = vpop.f32.mrb[0].mxu0
    %v8118 = vadd.f32 %v7733, %v8117
    %v8119 = vpop.f32.mrb[0].mxu0
    %8120 = vmatprep.mubr.f32.mxu0 0.0
    %8121 = vmatmul.mubr.f32.gmra.mrb[0].mxu0 %v5932
    %v8122 = vpop.f32.mrb[0].mxu0
    %v8123 = vadd.f32 %v7738, %v8122
    %v8124 = vpop.f32.mrb[0].mxu0
    %8125 = vmatprep.mubr.f32.mxu0 0.0
    %8126 = vmatmul.mubr.f32.gmra.mrb[0].mxu0 %v5941
    %v8127 = vpop.f32.mrb[0].mxu0
    %v8128 = vadd.f32 %v7743, %v8127
    %v8129 = vpop.f32.mrb[0].mxu0
    %8130 = vmatprep.mubr.f32.mxu0 0.0
    %8131 = vmatmul.mubr.f32.gmra.mrb[0].mxu0 %v5950
    %v8132 = vpop.f32.mrb[0].mxu0
    %v8133 = vadd.f32 %v7748, %v8132
    %v8134 = vpop.f32.mrb[0].mxu0
    %8135 = vmatprep.mubr.f32.mxu0 0.0
    %8136 = vmatmul.mubr.f32.gmra.mrb[0].mxu0 %v5959
    %v8137 = vpop.f32.mrb[0].mxu0
    %v8138 = vadd.f32 %v7753, %v8137
    %v8139 = vpop.f32.mrb[0].mxu0
    %8140 = vmatprep.mubr.f32.mxu0 0.0
    %8141 = vmatmul.mubr.f32.gmra.mrb[0].mxu0 %v5968
    %v8142 = vpop.f32.mrb[0].mxu0
    %v8143 = vadd.f32 %v7758, %v8142
    %v8144 = vpop.f32.mrb[0].mxu0
    %8145 = vmatprep.mubr.f32.mxu0 0.0
    %8146 = vmatmul.mubr.f32.gmra.mrb[0].mxu0 %v5977
    %v8147 = vpop.f32.mrb[0].mxu0
    %v8148 = vadd.f32 %v7763, %v8147
    %v8149 = vpop.f32.mrb[0].mxu0
    %8150 = vmatprep.mubr.f32.mxu0 0.0
    %8151 = vmatmul.mubr.f32.gmra.mrb[0].mxu0 %v5986
    %v8152 = vpop.f32.mrb[0].mxu0
    %v8153 = vadd.f32 %v7768, %v8152
    %v8154 = vpop.f32.mrb[0].mxu0
    %8155 = vmatprep.mubr.f32.mxu0 0.0
    %8156 = vmatmul.mubr.f32.gmra.mrb[0].mxu0 %v5995
    %v8157 = vpop.f32.mrb[0].mxu0
    %v8158 = vadd.f32 %v7773, %v8157
    %v8159 = vpop.f32.mrb[0].mxu0
    %8160 = vmatprep.mubr.f32.mxu0 0.0
    %8161 = vmatmul.mubr.f32.gmra.mrb[0].mxu0 %v6004
    %v8162 = vpop.f32.mrb[0].mxu0
    %v8163 = vadd.f32 %v7778, %v8162
    %v8164 = vpop.f32.mrb[0].mxu0
    %8165 = vmatprep.mubr.f32.mxu0 0.0
    %8166 = vmatmul.mubr.f32.gmra.mrb[0].mxu0 %v6013
    %v8167 = vpop.f32.mrb[0].mxu0
    %v8168 = vadd.f32 %v7783, %v8167
    %v8169 = vpop.f32.mrb[0].mxu0
    %8170 = vmatprep.mubr.f32.mxu0 0.0
    %8171 = vmatmul.mubr.f32.gmra.mrb[0].mxu0 %v6022
    %v8172 = vpop.f32.mrb[0].mxu0
    %v8173 = vadd.f32 %v7788, %v8172
    %v8174 = vpop.f32.mrb[0].mxu0
    %8175 = vmatprep.mubr.f32.mxu0 0.0
    %8176 = vmatmul.mubr.f32.gmra.mrb[0].mxu0 %v6031
    %v8177 = vpop.f32.mrb[0].mxu0
    %v8178 = vadd.f32 %v7793, %v8177
    %v8179 = vpop.f32.mrb[0].mxu0
    %8180 = vmatprep.mubr.f32.mxu0 0.0
    %8181 = vmatmul.mubr.f32.gmra.mrb[0].mxu0 %v6040
    %v8182 = vpop.f32.mrb[0].mxu0
    %v8183 = vadd.f32 %v7798, %v8182
    %v8184 = vpop.f32.mrb[0].mxu0
    %8185 = vmatprep.mubr.f32.mxu0 0.0
    %8186 = vmatmul.mubr.f32.gmra.mrb[0].mxu0 %v6049
    %v8187 = vpop.f32.mrb[0].mxu0
    %v8188 = vadd.f32 %v7803, %v8187
    %v8189 = vpop.f32.mrb[0].mxu0
    %8190 = vmatprep.mubr.f32.mxu0 0.0
    %8191 = vmatmul.mubr.f32.gmra.mrb[0].mxu0 %v6058
    %v8192 = vpop.f32.mrb[0].mxu0
    %v8193 = vadd.f32 %v7808, %v8192
    %v8194 = vpop.f32.mrb[0].mxu0
    %8195 = vmatprep.mubr.f32.mxu0 0.0
    %8196 = vmatmul.mubr.f32.gmra.mrb[0].mxu0 %v6067
    %v8197 = vpop.f32.mrb[0].mxu0
    %v8198 = vadd.f32 %v7813, %v8197
    %v8199 = vpop.f32.mrb[0].mxu0
    %8200 = vmatprep.mubr.f32.mxu0 0.0
    %8201 = vmatmul.mubr.f32.gmra.mrb[0].mxu0 %v6076
    %v8202 = vpop.f32.mrb[0].mxu0
    %v8203 = vadd.f32 %v7818, %v8202
    %v8204 = vpop.f32.mrb[0].mxu0
    %8205 = vmatprep.mubr.f32.mxu0 0.0
    %8206 = vmatmul.mubr.f32.gmra.mrb[0].mxu0 %v6085
    %v8207 = vpop.f32.mrb[0].mxu0
    %v8208 = vadd.f32 %v7823, %v8207
    %v8209 = vpop.f32.mrb[0].mxu0
    %8210 = vmatprep.mubr.f32.mxu0 0.0
    %8211 = vmatmul.mubr.f32.gmra.mrb[0].mxu0 %v6094
    %v8212 = vpop.f32.mrb[0].mxu0
    %v8213 = vadd.f32 %v7828, %v8212
    %v8214 = vpop.f32.mrb[0].mxu0
    %8215 = vmatprep.mubr.f32.mxu0 0.0
    %8216 = vmatmul.mubr.f32.gmra.mrb[0].mxu0 %v6103
    %v8217 = vpop.f32.mrb[0].mxu0
    %v8218 = vadd.f32 %v7833, %v8217
    %v8219 = vpop.f32.mrb[0].mxu0
    %8220 = vmatprep.mubr.f32.mxu0 0.0
    %8221 = vmatmul.mubr.f32.gmra.mrb[0].mxu0 %v6112
    %v8222 = vpop.f32.mrb[0].mxu0
    %v8223 = vadd.f32 %v7838, %v8222
    %v8224 = vpop.f32.mrb[0].mxu0
    %8225 = vmatprep.mubr.f32.mxu0 0.0
    %8226 = vmatmul.mubr.f32.gmra.mrb[0].mxu0 %v6121
    %v8227 = vpop.f32.mrb[0].mxu0
    %v8228 = vadd.f32 %v7843, %v8227
    %v8229 = vpop.f32.mrb[0].mxu0
    %8230 = vmatprep.mubr.f32.mxu0 0.0
    %8231 = vmatmul.mubr.f32.gmra.mrb[0].mxu0 %v6130
    %v8232 = vpop.f32.mrb[0].mxu0
    %v8233 = vadd.f32 %v7848, %v8232
    %v8234 = vpop.f32.mrb[0].mxu0
    %8235 = vmatprep.mubr.f32.mxu0 0.0
    %8236 = vmatmul.mubr.f32.gmra.mrb[0].mxu0 %v6139
    %v8237 = vpop.f32.mrb[0].mxu0
    %v8238 = vadd.f32 %v7853, %v8237
    %v8239 = vpop.f32.mrb[0].mxu0
    %8240 = vmatprep.mubr.f32.mxu0 0.0
    %8241 = vmatmul.mubr.f32.gmra.mrb[0].mxu0 %v6148
    %v8242 = vpop.f32.mrb[0].mxu0
    %v8243 = vadd.f32 %v7858, %v8242
    %v8244 = vpop.f32.mrb[0].mxu0
    %8245 = vmatprep.mubr.f32.mxu0 0.0
    %8246 = vmatmul.mubr.f32.gmra.mrb[0].mxu0 %v6157
    %v8247 = vpop.f32.mrb[0].mxu0
    %v8248 = vadd.f32 %v7863, %v8247
    %v8249 = vpop.f32.mrb[0].mxu0
    %8250 = vmatprep.mubr.f32.mxu0 0.0
    %8251 = vmatmul.mubr.f32.gmra.mrb[0].mxu0 %v6166
    %v8252 = vpop.f32.mrb[0].mxu0
    %v8253 = vadd.f32 %v7868, %v8252
    %v8254 = vpop.f32.mrb[0].mxu0
    %8255 = vmatprep.mubr.f32.mxu0 0.0
    %8256 = vmatmul.mubr.f32.gmra.mrb[0].mxu0 %v6175
    %v8257 = vpop.f32.mrb[0].mxu0
    %v8258 = vadd.f32 %v7873, %v8257
    %v8259 = vpop.f32.mrb[0].mxu0
    %8260 = vmatprep.mubr.f32.mxu0 0.0
    %8261 = vmatmul.mubr.f32.gmra.mrb[0].mxu0 %v6184
    %v8262 = vpop.f32.mrb[0].mxu0
    %v8263 = vadd.f32 %v7878, %v8262
    %v8264 = vpop.f32.mrb[0].mxu0
    %8265 = vmatprep.mubr.f32.mxu0 0.0
    %8266 = vmatmul.mubr.f32.gmra.mrb[0].mxu0 %v6193
    %v8267 = vpop.f32.mrb[0].mxu0
    %v8268 = vadd.f32 %v7883, %v8267
    %v8269 = vpop.f32.mrb[0].mxu0
    %8270 = vmatprep.mubr.f32.mxu0 0.0
    %8271 = vmatmul.mubr.f32.gmra.mrb[0].mxu0 %v6202
    %v8272 = vpop.f32.mrb[0].mxu0
    %v8273 = vadd.f32 %v7888, %v8272
    %v8274 = vpop.f32.mrb[0].mxu0
    %8275 = vmatprep.mubr.f32.mxu0 0.0
    %8276 = vmatmul.mubr.f32.gmra.mrb[0].mxu0 %v6211
    %v8277 = vpop.f32.mrb[0].mxu0
    %v8278 = vadd.f32 %v7893, %v8277
    %v8279 = vpop.f32.mrb[0].mxu0
    %8280 = vdwg.mxu0
    %v8281 = vadd.f32 %v7963, %v7968
    %v8282 = vadd.f32 %v8281, %v7973
    %v8283 = vadd.f32 %v8282, %v7978
    %v8284 = vadd.f32 %v8283, %v7983
    %v8285 = vadd.f32 %v8284, %v7988
    %v8286 = vadd.f32 %v8285, %v7993
    %v8287 = vadd.f32 %v8286, %v7998
    %v8288 = vadd.f32 %v8287, %v8003
    %v8289 = vadd.f32 %v8288, %v8008
    %v8290 = vadd.f32 %v8289, %v8013
    %v8291 = vadd.f32 %v8290, %v8018
    %v8292 = vadd.f32 %v8291, %v8023
    %v8293 = vadd.f32 %v8292, %v8028
    %v8294 = vadd.f32 %v8293, %v8033
    %v8295 = vadd.f32 %v8294, %v8038
    %v8296 = vadd.f32 %v8295, %v8043
    %v8297 = vadd.f32 %v8296, %v8048
    %v8298 = vadd.f32 %v8297, %v8053
    %v8299 = vadd.f32 %v8298, %v8058
    %v8300 = vadd.f32 %v8299, %v8063
    %v8301 = vadd.f32 %v8300, %v8068
    %v8302 = vadd.f32 %v8301, %v8073
    %v8303 = vadd.f32 %v8302, %v8078
    %v8304 = vadd.f32 %v8303, %v8083
    %v8305 = vadd.f32 %v8304, %v8088
    %v8306 = vadd.f32 %v8305, %v8093
    %v8307 = vadd.f32 %v8306, %v8098
    %v8308 = vadd.f32 %v8307, %v8103
    %v8309 = vadd.f32 %v8308, %v8108
    %v8310 = vadd.f32 %v8309, %v8113
    %v8311 = vadd.f32 %v8310, %v8118
    %v8312 = vadd.f32 %v8311, %v8123
    %v8313 = vadd.f32 %v8312, %v8128
    %v8314 = vadd.f32 %v8313, %v8133
    %v8315 = vadd.f32 %v8314, %v8138
    %v8316 = vadd.f32 %v8315, %v8143
    %v8317 = vadd.f32 %v8316, %v8148
    %v8318 = vadd.f32 %v8317, %v8153
    %v8319 = vadd.f32 %v8318, %v8158
    %v8320 = vadd.f32 %v8319, %v8163
    %v8321 = vadd.f32 %v8320, %v8168
    %v8322 = vadd.f32 %v8321, %v8173
    %v8323 = vadd.f32 %v8322, %v8178
    %v8324 = vadd.f32 %v8323, %v8183
    %v8325 = vadd.f32 %v8324, %v8188
    %v8326 = vadd.f32 %v8325, %v8193
    %v8327 = vadd.f32 %v8326, %v8198
    %v8328 = vadd.f32 %v8327, %v8203
    %v8329 = vadd.f32 %v8328, %v8208
    %v8330 = vadd.f32 %v8329, %v8213
    %v8331 = vadd.f32 %v8330, %v8218
    %v8332 = vadd.f32 %v8331, %v8223
    %v8333 = vadd.f32 %v8332, %v8228
    %v8334 = vadd.f32 %v8333, %v8233
    %v8335 = vadd.f32 %v8334, %v8238
    %v8336 = vadd.f32 %v8335, %v8243
    %v8337 = vadd.f32 %v8336, %v8248
    %v8338 = vadd.f32 %v8337, %v8253
    %v8339 = vadd.f32 %v8338, %v8258
    %v8340 = vadd.f32 %v8339, %v8263
    %v8341 = vadd.f32 %v8340, %v8268
    %v8342 = vadd.f32 %v8341, %v8273
    %v8343 = vadd.f32 %v8342, %v8278
    %v8344 = vrot.slane %v8343, 4
    %v8345 = vadd.f32 %v8343, %v8344
    %v8346 = vrot.slane %v8345, 2
    %v8347 = vadd.f32 %v8345, %v8346
    %v8348 = vrot.slane %v8347, 1
    %v8349 = vadd.f32 %v8347, %v8348
    %v8350 = vmul.f32 %v8349, %v3926
    %v8351 = vsub.f32 %v7963, %v8350
    %v8352 = vsub.f32 %v7968, %v8350
    %v8353 = vsub.f32 %v7973, %v8350
    %v8354 = vsub.f32 %v7978, %v8350
    %v8355 = vsub.f32 %v7983, %v8350
    %v8356 = vsub.f32 %v7988, %v8350
    %v8357 = vsub.f32 %v7993, %v8350
    %v8358 = vsub.f32 %v7998, %v8350
    %v8359 = vsub.f32 %v8003, %v8350
    %v8360 = vsub.f32 %v8008, %v8350
    %v8361 = vsub.f32 %v8013, %v8350
    %v8362 = vsub.f32 %v8018, %v8350
    %v8363 = vsub.f32 %v8023, %v8350
    %v8364 = vsub.f32 %v8028, %v8350
    %v8365 = vsub.f32 %v8033, %v8350
    %v8366 = vsub.f32 %v8038, %v8350
    %v8367 = vsub.f32 %v8043, %v8350
    %v8368 = vsub.f32 %v8048, %v8350
    %v8369 = vsub.f32 %v8053, %v8350
    %v8370 = vsub.f32 %v8058, %v8350
    %v8371 = vsub.f32 %v8063, %v8350
    %v8372 = vsub.f32 %v8068, %v8350
    %v8373 = vsub.f32 %v8073, %v8350
    %v8374 = vsub.f32 %v8078, %v8350
    %v8375 = vsub.f32 %v8083, %v8350
    %v8376 = vsub.f32 %v8088, %v8350
    %v8377 = vsub.f32 %v8093, %v8350
    %v8378 = vsub.f32 %v8098, %v8350
    %v8379 = vsub.f32 %v8103, %v8350
    %v8380 = vsub.f32 %v8108, %v8350
    %v8381 = vsub.f32 %v8113, %v8350
    %v8382 = vsub.f32 %v8118, %v8350
    %v8383 = vsub.f32 %v8123, %v8350
    %v8384 = vsub.f32 %v8128, %v8350
    %v8385 = vsub.f32 %v8133, %v8350
    %v8386 = vsub.f32 %v8138, %v8350
    %v8387 = vsub.f32 %v8143, %v8350
    %v8388 = vsub.f32 %v8148, %v8350
    %v8389 = vsub.f32 %v8153, %v8350
    %v8390 = vsub.f32 %v8158, %v8350
    %v8391 = vsub.f32 %v8163, %v8350
    %v8392 = vsub.f32 %v8168, %v8350
    %v8393 = vsub.f32 %v8173, %v8350
    %v8394 = vsub.f32 %v8178, %v8350
    %v8395 = vsub.f32 %v8183, %v8350
    %v8396 = vsub.f32 %v8188, %v8350
    %v8397 = vsub.f32 %v8193, %v8350
    %v8398 = vsub.f32 %v8198, %v8350
    %v8399 = vsub.f32 %v8203, %v8350
    %v8400 = vsub.f32 %v8208, %v8350
    %v8401 = vsub.f32 %v8213, %v8350
    %v8402 = vsub.f32 %v8218, %v8350
    %v8403 = vsub.f32 %v8223, %v8350
    %v8404 = vsub.f32 %v8228, %v8350
    %v8405 = vsub.f32 %v8233, %v8350
    %v8406 = vsub.f32 %v8238, %v8350
    %v8407 = vsub.f32 %v8243, %v8350
    %v8408 = vsub.f32 %v8248, %v8350
    %v8409 = vsub.f32 %v8253, %v8350
    %v8410 = vsub.f32 %v8258, %v8350
    %v8411 = vsub.f32 %v8263, %v8350
    %v8412 = vsub.f32 %v8268, %v8350
    %v8413 = vsub.f32 %v8273, %v8350
    %v8414 = vsub.f32 %v8278, %v8350
    %v8415 = vmul.f32 %v8351, %v8351
    %v8416 = vmul.f32 %v8352, %v8352
    %v8417 = vmul.f32 %v8353, %v8353
    %v8418 = vmul.f32 %v8354, %v8354
    %v8419 = vmul.f32 %v8355, %v8355
    %v8420 = vmul.f32 %v8356, %v8356
    %v8421 = vmul.f32 %v8357, %v8357
    %v8422 = vmul.f32 %v8358, %v8358
    %v8423 = vmul.f32 %v8359, %v8359
    %v8424 = vmul.f32 %v8360, %v8360
    %v8425 = vmul.f32 %v8361, %v8361
    %v8426 = vmul.f32 %v8362, %v8362
    %v8427 = vmul.f32 %v8363, %v8363
    %v8428 = vmul.f32 %v8364, %v8364
    %v8429 = vmul.f32 %v8365, %v8365
    %v8430 = vmul.f32 %v8366, %v8366
    %v8431 = vmul.f32 %v8367, %v8367
    %v8432 = vmul.f32 %v8368, %v8368
    %v8433 = vmul.f32 %v8369, %v8369
    %v8434 = vmul.f32 %v8370, %v8370
    %v8435 = vmul.f32 %v8371, %v8371
    %v8436 = vmul.f32 %v8372, %v8372
    %v8437 = vmul.f32 %v8373, %v8373
    %v8438 = vmul.f32 %v8374, %v8374
    %v8439 = vmul.f32 %v8375, %v8375
    %v8440 = vmul.f32 %v8376, %v8376
    %v8441 = vmul.f32 %v8377, %v8377
    %v8442 = vmul.f32 %v8378, %v8378
    %v8443 = vmul.f32 %v8379, %v8379
    %v8444 = vmul.f32 %v8380, %v8380
    %v8445 = vmul.f32 %v8381, %v8381
    %v8446 = vmul.f32 %v8382, %v8382
    %v8447 = vmul.f32 %v8383, %v8383
    %v8448 = vmul.f32 %v8384, %v8384
    %v8449 = vmul.f32 %v8385, %v8385
    %v8450 = vmul.f32 %v8386, %v8386
    %v8451 = vmul.f32 %v8387, %v8387
    %v8452 = vmul.f32 %v8388, %v8388
    %v8453 = vmul.f32 %v8389, %v8389
    %v8454 = vmul.f32 %v8390, %v8390
    %v8455 = vmul.f32 %v8391, %v8391
    %v8456 = vmul.f32 %v8392, %v8392
    %v8457 = vmul.f32 %v8393, %v8393
    %v8458 = vmul.f32 %v8394, %v8394
    %v8459 = vmul.f32 %v8395, %v8395
    %v8460 = vmul.f32 %v8396, %v8396
    %v8461 = vmul.f32 %v8397, %v8397
    %v8462 = vmul.f32 %v8398, %v8398
    %v8463 = vmul.f32 %v8399, %v8399
    %v8464 = vmul.f32 %v8400, %v8400
    %v8465 = vmul.f32 %v8401, %v8401
    %v8466 = vmul.f32 %v8402, %v8402
    %v8467 = vmul.f32 %v8403, %v8403
    %v8468 = vmul.f32 %v8404, %v8404
    %v8469 = vmul.f32 %v8405, %v8405
    %v8470 = vmul.f32 %v8406, %v8406
    %v8471 = vmul.f32 %v8407, %v8407
    %v8472 = vmul.f32 %v8408, %v8408
    %v8473 = vmul.f32 %v8409, %v8409
    %v8474 = vmul.f32 %v8410, %v8410
    %v8475 = vmul.f32 %v8411, %v8411
    %v8476 = vmul.f32 %v8412, %v8412
    %v8477 = vmul.f32 %v8413, %v8413
    %v8478 = vmul.f32 %v8414, %v8414
    %v8479 = vadd.f32 %v8415, %v8416
    %v8480 = vadd.f32 %v8479, %v8417
    %v8481 = vadd.f32 %v8480, %v8418
    %v8482 = vadd.f32 %v8481, %v8419
    %v8483 = vadd.f32 %v8482, %v8420
    %v8484 = vadd.f32 %v8483, %v8421
    %v8485 = vadd.f32 %v8484, %v8422
    %v8486 = vadd.f32 %v8485, %v8423
    %v8487 = vadd.f32 %v8486, %v8424
    %v8488 = vadd.f32 %v8487, %v8425
    %v8489 = vadd.f32 %v8488, %v8426
    %v8490 = vadd.f32 %v8489, %v8427
    %v8491 = vadd.f32 %v8490, %v8428
    %v8492 = vadd.f32 %v8491, %v8429
    %v8493 = vadd.f32 %v8492, %v8430
    %v8494 = vadd.f32 %v8493, %v8431
    %v8495 = vadd.f32 %v8494, %v8432
    %v8496 = vadd.f32 %v8495, %v8433
    %v8497 = vadd.f32 %v8496, %v8434
    %v8498 = vadd.f32 %v8497, %v8435
    %v8499 = vadd.f32 %v8498, %v8436
    %v8500 = vadd.f32 %v8499, %v8437
    %v8501 = vadd.f32 %v8500, %v8438
    %v8502 = vadd.f32 %v8501, %v8439
    %v8503 = vadd.f32 %v8502, %v8440
    %v8504 = vadd.f32 %v8503, %v8441
    %v8505 = vadd.f32 %v8504, %v8442
    %v8506 = vadd.f32 %v8505, %v8443
    %v8507 = vadd.f32 %v8506, %v8444
    %v8508 = vadd.f32 %v8507, %v8445
    %v8509 = vadd.f32 %v8508, %v8446
    %v8510 = vadd.f32 %v8509, %v8447
    %v8511 = vadd.f32 %v8510, %v8448
    %v8512 = vadd.f32 %v8511, %v8449
    %v8513 = vadd.f32 %v8512, %v8450
    %v8514 = vadd.f32 %v8513, %v8451
    %v8515 = vadd.f32 %v8514, %v8452
    %v8516 = vadd.f32 %v8515, %v8453
    %v8517 = vadd.f32 %v8516, %v8454
    %v8518 = vadd.f32 %v8517, %v8455
    %v8519 = vadd.f32 %v8518, %v8456
    %v8520 = vadd.f32 %v8519, %v8457
    %v8521 = vadd.f32 %v8520, %v8458
    %v8522 = vadd.f32 %v8521, %v8459
    %v8523 = vadd.f32 %v8522, %v8460
    %v8524 = vadd.f32 %v8523, %v8461
    %v8525 = vadd.f32 %v8524, %v8462
    %v8526 = vadd.f32 %v8525, %v8463
    %v8527 = vadd.f32 %v8526, %v8464
    %v8528 = vadd.f32 %v8527, %v8465
    %v8529 = vadd.f32 %v8528, %v8466
    %v8530 = vadd.f32 %v8529, %v8467
    %v8531 = vadd.f32 %v8530, %v8468
    %v8532 = vadd.f32 %v8531, %v8469
    %v8533 = vadd.f32 %v8532, %v8470
    %v8534 = vadd.f32 %v8533, %v8471
    %v8535 = vadd.f32 %v8534, %v8472
    %v8536 = vadd.f32 %v8535, %v8473
    %v8537 = vadd.f32 %v8536, %v8474
    %v8538 = vadd.f32 %v8537, %v8475
    %v8539 = vadd.f32 %v8538, %v8476
    %v8540 = vadd.f32 %v8539, %v8477
    %v8541 = vadd.f32 %v8540, %v8478
    %v8542 = vrot.slane %v8541, 4
    %v8543 = vadd.f32 %v8541, %v8542
    %v8544 = vrot.slane %v8543, 2
    %v8545 = vadd.f32 %v8543, %v8544
    %v8546 = vrot.slane %v8545, 1
    %v8547 = vadd.f32 %v8545, %v8546
    %v8548 = vmul.f32 %v8547, %v3926
    %v8549 = vadd.f32 %v8548, 1e-05
    %v8550 = vrsqrt.pop %v8549
    %v8551 = vld [vmem:[%s6] sm:$0x1]
    %v8552 = vmul.f32 %v8550, %v8551
    %v8553 = vlaneseq
    %v8554 = vshrl.u32 %v8553, 7
    %v8555 = vsub.s32 0, %v8554
    %v8556 = vrot.slane %v8552, %v8555
    %v8557 = vmul.f32 %v8351, %v8556
    %v8558 = vmul.f32 %v8352, %v8556
    %v8559 = vmul.f32 %v8353, %v8556
    %v8560 = vmul.f32 %v8354, %v8556
    %v8561 = vmul.f32 %v8355, %v8556
    %v8562 = vmul.f32 %v8356, %v8556
    %v8563 = vmul.f32 %v8357, %v8556
    %v8564 = vmul.f32 %v8358, %v8556
    %v8565 = vmul.f32 %v8359, %v8556
    %v8566 = vmul.f32 %v8360, %v8556
    %v8567 = vmul.f32 %v8361, %v8556
    %v8568 = vmul.f32 %v8362, %v8556
    %v8569 = vmul.f32 %v8363, %v8556
    %v8570 = vmul.f32 %v8364, %v8556
    %v8571 = vmul.f32 %v8365, %v8556
    %v8572 = vmul.f32 %v8366, %v8556
    %v8573 = vmul.f32 %v8367, %v8556
    %v8574 = vmul.f32 %v8368, %v8556
    %v8575 = vmul.f32 %v8369, %v8556
    %v8576 = vmul.f32 %v8370, %v8556
    %v8577 = vmul.f32 %v8371, %v8556
    %v8578 = vmul.f32 %v8372, %v8556
    %v8579 = vmul.f32 %v8373, %v8556
    %v8580 = vmul.f32 %v8374, %v8556
    %v8581 = vmul.f32 %v8375, %v8556
    %v8582 = vmul.f32 %v8376, %v8556
    %v8583 = vmul.f32 %v8377, %v8556
    %v8584 = vmul.f32 %v8378, %v8556
    %v8585 = vmul.f32 %v8379, %v8556
    %v8586 = vmul.f32 %v8380, %v8556
    %v8587 = vmul.f32 %v8381, %v8556
    %v8588 = vmul.f32 %v8382, %v8556
    %v8589 = vmul.f32 %v8383, %v8556
    %v8590 = vmul.f32 %v8384, %v8556
    %v8591 = vmul.f32 %v8385, %v8556
    %v8592 = vmul.f32 %v8386, %v8556
    %v8593 = vmul.f32 %v8387, %v8556
    %v8594 = vmul.f32 %v8388, %v8556
    %v8595 = vmul.f32 %v8389, %v8556
    %v8596 = vmul.f32 %v8390, %v8556
    %v8597 = vmul.f32 %v8391, %v8556
    %v8598 = vmul.f32 %v8392, %v8556
    %v8599 = vmul.f32 %v8393, %v8556
    %v8600 = vmul.f32 %v8394, %v8556
    %v8601 = vmul.f32 %v8395, %v8556
    %v8602 = vmul.f32 %v8396, %v8556
    %v8603 = vmul.f32 %v8397, %v8556
    %v8604 = vmul.f32 %v8398, %v8556
    %v8605 = vmul.f32 %v8399, %v8556
    %v8606 = vmul.f32 %v8400, %v8556
    %v8607 = vmul.f32 %v8401, %v8556
    %v8608 = vmul.f32 %v8402, %v8556
    %v8609 = vmul.f32 %v8403, %v8556
    %v8610 = vmul.f32 %v8404, %v8556
    %v8611 = vmul.f32 %v8405, %v8556
    %v8612 = vmul.f32 %v8406, %v8556
    %v8613 = vmul.f32 %v8407, %v8556
    %v8614 = vmul.f32 %v8408, %v8556
    %v8615 = vmul.f32 %v8409, %v8556
    %v8616 = vmul.f32 %v8410, %v8556
    %v8617 = vmul.f32 %v8411, %v8556
    %v8618 = vmul.f32 %v8412, %v8556
    %v8619 = vmul.f32 %v8413, %v8556
    %v8620 = vmul.f32 %v8414, %v8556
    %v8621 = vld [vmem:[%s7] sm:$0x1]
    %v8623 = vlaneseq
    %v8624 = vshrl.u32 %v8623, 7
    %v8625 = vsub.s32 0, %v8624
    %v8626 = vrot.slane %v8621, %v8625
    %v8628 = vadd.f32 %v8557, %v8626
    %v8629 = vadd.f32 %v8558, %v8626
    %v8630 = vadd.f32 %v8559, %v8626
    %v8631 = vadd.f32 %v8560, %v8626
    %v8632 = vadd.f32 %v8561, %v8626
    %v8633 = vadd.f32 %v8562, %v8626
    %v8634 = vadd.f32 %v8563, %v8626
    %v8635 = vadd.f32 %v8564, %v8626
    %v8636 = vadd.f32 %v8565, %v8626
    %v8637 = vadd.f32 %v8566, %v8626
    %v8638 = vadd.f32 %v8567, %v8626
    %v8639 = vadd.f32 %v8568, %v8626
    %v8640 = vadd.f32 %v8569, %v8626
    %v8641 = vadd.f32 %v8570, %v8626
    %v8642 = vadd.f32 %v8571, %v8626
    %v8643 = vadd.f32 %v8572, %v8626
    %v8644 = vadd.f32 %v8573, %v8626
    %v8645 = vadd.f32 %v8574, %v8626
    %v8646 = vadd.f32 %v8575, %v8626
    %v8647 = vadd.f32 %v8576, %v8626
    %v8648 = vadd.f32 %v8577, %v8626
    %v8649 = vadd.f32 %v8578, %v8626
    %v8650 = vadd.f32 %v8579, %v8626
    %v8651 = vadd.f32 %v8580, %v8626
    %v8652 = vadd.f32 %v8581, %v8626
    %v8653 = vadd.f32 %v8582, %v8626
    %v8654 = vadd.f32 %v8583, %v8626
    %v8655 = vadd.f32 %v8584, %v8626
    %v8656 = vadd.f32 %v8585, %v8626
    %v8657 = vadd.f32 %v8586, %v8626
    %v8658 = vadd.f32 %v8587, %v8626
    %v8659 = vadd.f32 %v8588, %v8626
    %v8660 = vadd.f32 %v8589, %v8626
    %v8661 = vadd.f32 %v8590, %v8626
    %v8662 = vadd.f32 %v8591, %v8626
    %v8663 = vadd.f32 %v8592, %v8626
    %v8664 = vadd.f32 %v8593, %v8626
    %v8665 = vadd.f32 %v8594, %v8626
    %v8666 = vadd.f32 %v8595, %v8626
    %v8667 = vadd.f32 %v8596, %v8626
    %v8668 = vadd.f32 %v8597, %v8626
    %v8669 = vadd.f32 %v8598, %v8626
    %v8670 = vadd.f32 %v8599, %v8626
    %v8671 = vadd.f32 %v8600, %v8626
    %v8672 = vadd.f32 %v8601, %v8626
    %v8673 = vadd.f32 %v8602, %v8626
    %v8674 = vadd.f32 %v8603, %v8626
    %v8675 = vadd.f32 %v8604, %v8626
    %v8676 = vadd.f32 %v8605, %v8626
    %v8677 = vadd.f32 %v8606, %v8626
    %v8678 = vadd.f32 %v8607, %v8626
    %v8679 = vadd.f32 %v8608, %v8626
    %v8680 = vadd.f32 %v8609, %v8626
    %v8681 = vadd.f32 %v8610, %v8626
    %v8682 = vadd.f32 %v8611, %v8626
    %v8683 = vadd.f32 %v8612, %v8626
    %v8684 = vadd.f32 %v8613, %v8626
    %v8685 = vadd.f32 %v8614, %v8626
    %v8686 = vadd.f32 %v8615, %v8626
    %v8687 = vadd.f32 %v8616, %v8626
    %v8688 = vadd.f32 %v8617, %v8626
    %v8689 = vadd.f32 %v8618, %v8626
    %v8690 = vadd.f32 %v8619, %v8626
    %v8691 = vadd.f32 %v8620, %v8626
    %v8692 = vld [vmem:[#allocation4] sm:$0xff]
    %v8693 = vld [vmem:[#allocation4 + $0x8] sm:$0xff]
    %v8694 = vld [vmem:[#allocation4 + $0x10] sm:$0xff]
    %v8695 = vld [vmem:[#allocation4 + $0x18] sm:$0xff]
    %v8696 = vld [vmem:[#allocation4 + $0x20] sm:$0xff]
    %v8697 = vld [vmem:[#allocation4 + $0x28] sm:$0xff]
    %v8698 = vld [vmem:[#allocation4 + $0x30] sm:$0xff]
    %v8699 = vld [vmem:[#allocation4 + $0x38] sm:$0xff]
    %v8700 = vld [vmem:[#allocation4 + $0x40] sm:$0xff]
    %v8701 = vld [vmem:[#allocation4 + $0x48] sm:$0xff]
    %v8702 = vld [vmem:[#allocation4 + $0x50] sm:$0xff]
    %v8703 = vld [vmem:[#allocation4 + $0x58] sm:$0xff]
    %v8704 = vld [vmem:[#allocation4 + $0x60] sm:$0xff]
    %v8705 = vld [vmem:[#allocation4 + $0x68] sm:$0xff]
    %v8706 = vld [vmem:[#allocation4 + $0x70] sm:$0xff]
    %v8707 = vld [vmem:[#allocation4 + $0x78] sm:$0xff]
    %v8708 = vld [vmem:[#allocation4 + $0x80] sm:$0xff]
    %v8709 = vld [vmem:[#allocation4 + $0x88] sm:$0xff]
    %v8710 = vld [vmem:[#allocation4 + $0x90] sm:$0xff]
    %v8711 = vld [vmem:[#allocation4 + $0x98] sm:$0xff]
    %v8712 = vld [vmem:[#allocation4 + $0xa0] sm:$0xff]
    %v8713 = vld [vmem:[#allocation4 + $0xa8] sm:$0xff]
    %v8714 = vld [vmem:[#allocation4 + $0xb0] sm:$0xff]
    %v8715 = vld [vmem:[#allocation4 + $0xb8] sm:$0xff]
    %v8716 = vld [vmem:[#allocation4 + $0xc0] sm:$0xff]
    %v8717 = vld [vmem:[#allocation4 + $0xc8] sm:$0xff]
    %v8718 = vld [vmem:[#allocation4 + $0xd0] sm:$0xff]
    %v8719 = vld [vmem:[#allocation4 + $0xd8] sm:$0xff]
    %v8720 = vld [vmem:[#allocation4 + $0xe0] sm:$0xff]
    %v8721 = vld [vmem:[#allocation4 + $0xe8] sm:$0xff]
    %v8722 = vld [vmem:[#allocation4 + $0xf0] sm:$0xff]
    %v8723 = vld [vmem:[#allocation4 + $0xf8] sm:$0xff]
    %v8724 = vld [vmem:[#allocation4 + $0x100] sm:$0xff]
    %v8725 = vld [vmem:[#allocation4 + $0x108] sm:$0xff]
    %v8726 = vld [vmem:[#allocation4 + $0x110] sm:$0xff]
    %v8727 = vld [vmem:[#allocation4 + $0x118] sm:$0xff]
    %v8728 = vld [vmem:[#allocation4 + $0x120] sm:$0xff]
    %v8729 = vld [vmem:[#allocation4 + $0x128] sm:$0xff]
    %v8730 = vld [vmem:[#allocation4 + $0x130] sm:$0xff]
    %v8731 = vld [vmem:[#allocation4 + $0x138] sm:$0xff]
    %v8732 = vld [vmem:[#allocation4 + $0x140] sm:$0xff]
    %v8733 = vld [vmem:[#allocation4 + $0x148] sm:$0xff]
    %v8734 = vld [vmem:[#allocation4 + $0x150] sm:$0xff]
    %v8735 = vld [vmem:[#allocation4 + $0x158] sm:$0xff]
    %v8736 = vld [vmem:[#allocation4 + $0x160] sm:$0xff]
    %v8737 = vld [vmem:[#allocation4 + $0x168] sm:$0xff]
    %v8738 = vld [vmem:[#allocation4 + $0x170] sm:$0xff]
    %v8739 = vld [vmem:[#allocation4 + $0x178] sm:$0xff]
    %v8740 = vld [vmem:[#allocation4 + $0x180] sm:$0xff]
    %v8741 = vld [vmem:[#allocation4 + $0x188] sm:$0xff]
    %v8742 = vld [vmem:[#allocation4 + $0x190] sm:$0xff]
    %v8743 = vld [vmem:[#allocation4 + $0x198] sm:$0xff]
    %v8744 = vld [vmem:[#allocation4 + $0x1a0] sm:$0xff]
    %v8745 = vld [vmem:[#allocation4 + $0x1a8] sm:$0xff]
    %v8746 = vld [vmem:[#allocation4 + $0x1b0] sm:$0xff]
    %v8747 = vld [vmem:[#allocation4 + $0x1b8] sm:$0xff]
    %v8748 = vld [vmem:[#allocation4 + $0x1c0] sm:$0xff]
    %v8749 = vld [vmem:[#allocation4 + $0x1c8] sm:$0xff]
    %v8750 = vld [vmem:[#allocation4 + $0x1d0] sm:$0xff]
    %v8751 = vld [vmem:[#allocation4 + $0x1d8] sm:$0xff]
    %v8752 = vld [vmem:[#allocation4 + $0x1e0] sm:$0xff]
    %v8753 = vld [vmem:[#allocation4 + $0x1e8] sm:$0xff]
    %v8754 = vld [vmem:[#allocation4 + $0x1f0] sm:$0xff]
    %v8755 = vld [vmem:[#allocation4 + $0x1f8] sm:$0xff]
    %v8756 = vadd.f32 %v8628, %v8692
    %v8757 = vadd.f32 %v8629, %v8693
    %v8758 = vadd.f32 %v8630, %v8694
    %v8759 = vadd.f32 %v8631, %v8695
    %v8760 = vadd.f32 %v8632, %v8696
    %v8761 = vadd.f32 %v8633, %v8697
    %v8762 = vadd.f32 %v8634, %v8698
    %v8763 = vadd.f32 %v8635, %v8699
    %v8764 = vadd.f32 %v8636, %v8700
    %v8765 = vadd.f32 %v8637, %v8701
    %v8766 = vadd.f32 %v8638, %v8702
    %v8767 = vadd.f32 %v8639, %v8703
    %v8768 = vadd.f32 %v8640, %v8704
    %v8769 = vadd.f32 %v8641, %v8705
    %v8770 = vadd.f32 %v8642, %v8706
    %v8771 = vadd.f32 %v8643, %v8707
    %v8772 = vadd.f32 %v8644, %v8708
    %v8773 = vadd.f32 %v8645, %v8709
    %v8774 = vadd.f32 %v8646, %v8710
    %v8775 = vadd.f32 %v8647, %v8711
    %v8776 = vadd.f32 %v8648, %v8712
    %v8777 = vadd.f32 %v8649, %v8713
    %v8778 = vadd.f32 %v8650, %v8714
    %v8779 = vadd.f32 %v8651, %v8715
    %v8780 = vadd.f32 %v8652, %v8716
    %v8781 = vadd.f32 %v8653, %v8717
    %v8782 = vadd.f32 %v8654, %v8718
    %v8783 = vadd.f32 %v8655, %v8719
    %v8784 = vadd.f32 %v8656, %v8720
    %v8785 = vadd.f32 %v8657, %v8721
    %v8786 = vadd.f32 %v8658, %v8722
    %v8787 = vadd.f32 %v8659, %v8723
    %v8788 = vadd.f32 %v8660, %v8724
    %v8789 = vadd.f32 %v8661, %v8725
    %v8790 = vadd.f32 %v8662, %v8726
    %v8791 = vadd.f32 %v8663, %v8727
    %v8792 = vadd.f32 %v8664, %v8728
    %v8793 = vadd.f32 %v8665, %v8729
    %v8794 = vadd.f32 %v8666, %v8730
    %v8795 = vadd.f32 %v8667, %v8731
    %v8796 = vadd.f32 %v8668, %v8732
    %v8797 = vadd.f32 %v8669, %v8733
    %v8798 = vadd.f32 %v8670, %v8734
    %v8799 = vadd.f32 %v8671, %v8735
    %v8800 = vadd.f32 %v8672, %v8736
    %v8801 = vadd.f32 %v8673, %v8737
    %v8802 = vadd.f32 %v8674, %v8738
    %v8803 = vadd.f32 %v8675, %v8739
    %v8804 = vadd.f32 %v8676, %v8740
    %v8805 = vadd.f32 %v8677, %v8741
    %v8806 = vadd.f32 %v8678, %v8742
    %v8807 = vadd.f32 %v8679, %v8743
    %v8808 = vadd.f32 %v8680, %v8744
    %v8809 = vadd.f32 %v8681, %v8745
    %v8810 = vadd.f32 %v8682, %v8746
    %v8811 = vadd.f32 %v8683, %v8747
    %v8812 = vadd.f32 %v8684, %v8748
    %v8813 = vadd.f32 %v8685, %v8749
    %v8814 = vadd.f32 %v8686, %v8750
    %v8815 = vadd.f32 %v8687, %v8751
    %v8816 = vadd.f32 %v8688, %v8752
    %v8817 = vadd.f32 %v8689, %v8753
    %v8818 = vadd.f32 %v8690, %v8754
    %v8819 = vadd.f32 %v8691, %v8755
    %v8820 = vmax.f32 %v8756, 0.0
    %v8821 = vmax.f32 %v8757, 0.0
    %v8822 = vmax.f32 %v8758, 0.0
    %v8823 = vmax.f32 %v8759, 0.0
    %v8824 = vmax.f32 %v8760, 0.0
    %v8825 = vmax.f32 %v8761, 0.0
    %v8826 = vmax.f32 %v8762, 0.0
    %v8827 = vmax.f32 %v8763, 0.0
    %v8828 = vmax.f32 %v8764, 0.0
    %v8829 = vmax.f32 %v8765, 0.0
    %v8830 = vmax.f32 %v8766, 0.0
    %v8831 = vmax.f32 %v8767, 0.0
    %v8832 = vmax.f32 %v8768, 0.0
    %v8833 = vmax.f32 %v8769, 0.0
    %v8834 = vmax.f32 %v8770, 0.0
    %v8835 = vmax.f32 %v8771, 0.0
    %v8836 = vmax.f32 %v8772, 0.0
    %v8837 = vmax.f32 %v8773, 0.0
    %v8838 = vmax.f32 %v8774, 0.0
    %v8839 = vmax.f32 %v8775, 0.0
    %v8840 = vmax.f32 %v8776, 0.0
    %v8841 = vmax.f32 %v8777, 0.0
    %v8842 = vmax.f32 %v8778, 0.0
    %v8843 = vmax.f32 %v8779, 0.0
    %v8844 = vmax.f32 %v8780, 0.0
    %v8845 = vmax.f32 %v8781, 0.0
    %v8846 = vmax.f32 %v8782, 0.0
    %v8847 = vmax.f32 %v8783, 0.0
    %v8848 = vmax.f32 %v8784, 0.0
    %v8849 = vmax.f32 %v8785, 0.0
    %v8850 = vmax.f32 %v8786, 0.0
    %v8851 = vmax.f32 %v8787, 0.0
    %v8852 = vmax.f32 %v8788, 0.0
    %v8853 = vmax.f32 %v8789, 0.0
    %v8854 = vmax.f32 %v8790, 0.0
    %v8855 = vmax.f32 %v8791, 0.0
    %v8856 = vmax.f32 %v8792, 0.0
    %v8857 = vmax.f32 %v8793, 0.0
    %v8858 = vmax.f32 %v8794, 0.0
    %v8859 = vmax.f32 %v8795, 0.0
    %v8860 = vmax.f32 %v8796, 0.0
    %v8861 = vmax.f32 %v8797, 0.0
    %v8862 = vmax.f32 %v8798, 0.0
    %v8863 = vmax.f32 %v8799, 0.0
    %v8864 = vmax.f32 %v8800, 0.0
    %v8865 = vmax.f32 %v8801, 0.0
    %v8866 = vmax.f32 %v8802, 0.0
    %v8867 = vmax.f32 %v8803, 0.0
    %v8868 = vmax.f32 %v8804, 0.0
    %v8869 = vmax.f32 %v8805, 0.0
    %v8870 = vmax.f32 %v8806, 0.0
    %v8871 = vmax.f32 %v8807, 0.0
    %v8872 = vmax.f32 %v8808, 0.0
    %v8873 = vmax.f32 %v8809, 0.0
    %v8874 = vmax.f32 %v8810, 0.0
    %v8875 = vmax.f32 %v8811, 0.0
    %v8876 = vmax.f32 %v8812, 0.0
    %v8877 = vmax.f32 %v8813, 0.0
    %v8878 = vmax.f32 %v8814, 0.0
    %v8879 = vmax.f32 %v8815, 0.0
    %v8880 = vmax.f32 %v8816, 0.0
    %v8881 = vmax.f32 %v8817, 0.0
    %v8882 = vmax.f32 %v8818, 0.0
    %v8883 = vmax.f32 %v8819, 0.0
    %8884 = vst [vmem:[#allocation9] sm:$0xff] %v8820
    %8885 = vst [vmem:[#allocation9 + $0x8] sm:$0xff] %v8821
    %8886 = vst [vmem:[#allocation9 + $0x10] sm:$0xff] %v8822
    %8887 = vst [vmem:[#allocation9 + $0x18] sm:$0xff] %v8823
    %8888 = vst [vmem:[#allocation9 + $0x20] sm:$0xff] %v8824
    %8889 = vst [vmem:[#allocation9 + $0x28] sm:$0xff] %v8825
    %8890 = vst [vmem:[#allocation9 + $0x30] sm:$0xff] %v8826
    %8891 = vst [vmem:[#allocation9 + $0x38] sm:$0xff] %v8827
    %8892 = vst [vmem:[#allocation9 + $0x40] sm:$0xff] %v8828
    %8893 = vst [vmem:[#allocation9 + $0x48] sm:$0xff] %v8829
    %8894 = vst [vmem:[#allocation9 + $0x50] sm:$0xff] %v8830
    %8895 = vst [vmem:[#allocation9 + $0x58] sm:$0xff] %v8831
    %8896 = vst [vmem:[#allocation9 + $0x60] sm:$0xff] %v8832
    %8897 = vst [vmem:[#allocation9 + $0x68] sm:$0xff] %v8833
    %8898 = vst [vmem:[#allocation9 + $0x70] sm:$0xff] %v8834
    %8899 = vst [vmem:[#allocation9 + $0x78] sm:$0xff] %v8835
    %8900 = vst [vmem:[#allocation9 + $0x80] sm:$0xff] %v8836
    %8901 = vst [vmem:[#allocation9 + $0x88] sm:$0xff] %v8837
    %8902 = vst [vmem:[#allocation9 + $0x90] sm:$0xff] %v8838
    %8903 = vst [vmem:[#allocation9 + $0x98] sm:$0xff] %v8839
    %8904 = vst [vmem:[#allocation9 + $0xa0] sm:$0xff] %v8840
    %8905 = vst [vmem:[#allocation9 + $0xa8] sm:$0xff] %v8841
    %8906 = vst [vmem:[#allocation9 + $0xb0] sm:$0xff] %v8842
    %8907 = vst [vmem:[#allocation9 + $0xb8] sm:$0xff] %v8843
    %8908 = vst [vmem:[#allocation9 + $0xc0] sm:$0xff] %v8844
    %8909 = vst [vmem:[#allocation9 + $0xc8] sm:$0xff] %v8845
    %8910 = vst [vmem:[#allocation9 + $0xd0] sm:$0xff] %v8846
    %8911 = vst [vmem:[#allocation9 + $0xd8] sm:$0xff] %v8847
    %8912 = vst [vmem:[#allocation9 + $0xe0] sm:$0xff] %v8848
    %8913 = vst [vmem:[#allocation9 + $0xe8] sm:$0xff] %v8849
    %8914 = vst [vmem:[#allocation9 + $0xf0] sm:$0xff] %v8850
    %8915 = vst [vmem:[#allocation9 + $0xf8] sm:$0xff] %v8851
    %8916 = vst [vmem:[#allocation9 + $0x100] sm:$0xff] %v8852
    %8917 = vst [vmem:[#allocation9 + $0x108] sm:$0xff] %v8853
    %8918 = vst [vmem:[#allocation9 + $0x110] sm:$0xff] %v8854
    %8919 = vst [vmem:[#allocation9 + $0x118] sm:$0xff] %v8855
    %8920 = vst [vmem:[#allocation9 + $0x120] sm:$0xff] %v8856
    %8921 = vst [vmem:[#allocation9 + $0x128] sm:$0xff] %v8857
    %8922 = vst [vmem:[#allocation9 + $0x130] sm:$0xff] %v8858
    %8923 = vst [vmem:[#allocation9 + $0x138] sm:$0xff] %v8859
    %8924 = vst [vmem:[#allocation9 + $0x140] sm:$0xff] %v8860
    %8925 = vst [vmem:[#allocation9 + $0x148] sm:$0xff] %v8861
    %8926 = vst [vmem:[#allocation9 + $0x150] sm:$0xff] %v8862
    %8927 = vst [vmem:[#allocation9 + $0x158] sm:$0xff] %v8863
    %8928 = vst [vmem:[#allocation9 + $0x160] sm:$0xff] %v8864
    %8929 = vst [vmem:[#allocation9 + $0x168] sm:$0xff] %v8865
    %8930 = vst [vmem:[#allocation9 + $0x170] sm:$0xff] %v8866
    %8931 = vst [vmem:[#allocation9 + $0x178] sm:$0xff] %v8867
    %8932 = vst [vmem:[#allocation9 + $0x180] sm:$0xff] %v8868
    %8933 = vst [vmem:[#allocation9 + $0x188] sm:$0xff] %v8869
    %8934 = vst [vmem:[#allocation9 + $0x190] sm:$0xff] %v8870
    %8935 = vst [vmem:[#allocation9 + $0x198] sm:$0xff] %v8871
    %8936 = vst [vmem:[#allocation9 + $0x1a0] sm:$0xff] %v8872
    %8937 = vst [vmem:[#allocation9 + $0x1a8] sm:$0xff] %v8873
    %8938 = vst [vmem:[#allocation9 + $0x1b0] sm:$0xff] %v8874
    %8939 = vst [vmem:[#allocation9 + $0x1b8] sm:$0xff] %v8875
    %8940 = vst [vmem:[#allocation9 + $0x1c0] sm:$0xff] %v8876
    %8941 = vst [vmem:[#allocation9 + $0x1c8] sm:$0xff] %v8877
    %8942 = vst [vmem:[#allocation9 + $0x1d0] sm:$0xff] %v8878
    %8943 = vst [vmem:[#allocation9 + $0x1d8] sm:$0xff] %v8879
    %8944 = vst [vmem:[#allocation9 + $0x1e0] sm:$0xff] %v8880
    %8945 = vst [vmem:[#allocation9 + $0x1e8] sm:$0xff] %v8881
    %8946 = vst [vmem:[#allocation9 + $0x1f0] sm:$0xff] %v8882
    %8947 = vst [vmem:[#allocation9 + $0x1f8] sm:$0xff] %v8883
    // Predicated region
    $region42: #{tpu_custom_call.1} parent=1 // pred_check
      _
    $region43: #{tpu_custom_call.1} parent=1 // pred_check_branch
      %8949 = sbr.rel (0) target = $region45
    $region44: #{tpu_custom_call.1} parent=1 // pred_region
      %s8951 = ssub.s32 8192, 8192
      %8952 = vsyncadd [#allocation6], %s8951
      %s8953 = sshll.u32 [#allocation9], 4
      %s8954 = int_to_ptr.vmem [resolvable:$true] %s8953
      %8959 = dma.vmem_to_hbm [thread:$0]  %s8954, 8192, %s8, [#allocation6], 128, 128, 8
    $region45: #{tpu_custom_call.1} parent=1 // pred_fallthru
      _
    // Predicated region
    $region46: #{tpu_custom_call.1} parent=1 // pred_check
      _
    $region47: #{tpu_custom_call.1} parent=1 // pred_check_branch
      %8961 = sbr.rel (0) target = $region49
    $region48: #{tpu_custom_call.1} parent=1 // pred_region
      %8962 = dma.done [#allocation6], 8192
    $region49: #{tpu_custom_call.1} parent=1 // pred_fallthru
      _
    %8963 = vsyncpa [#allocation5], 1
    %8964 = vsyncpa [#allocation8], 1
    %8965 = vsyncpa [#allocation6], 1

</llo_original>
